<compile_context>
chip_gen: v7x
topology: tpu7x:2x2x1
jax: 0.10.0
libtpu: 0.0.40
codegen_flags: <defaults>
</compile_context>

<pallas_src>
import numpy as np
import jax
import jax.numpy as jnp
from jax.experimental import pallas as pl
from jax.experimental.pallas import tpu as pltpu

B = 2              # batch
D = 256            # feature_dim
D2 = D // 2        # feature_dim // 2
L = 8              # prompt_length
H = 4              # attention heads
DH = D // H        # head dim (64)
NSEQ = 2 * B       # pos + neg branches stacked -> 4 sequences
NROW = NSEQ * L    # 32 prompt rows of (D,)
SCALE = 1.0 / float(np.sqrt(DH))
LN_EPS = 1e-5      # nn.LayerNorm default
NORM_EPS = 1e-12   # F.normalize default
INV_SQRT2 = 0.7071067811865476

_HEAD_SHIFT = NROW.bit_length() - 1          # 32 -> 5
assert (1 << _HEAD_SHIFT) == NROW and (NSEQ & (NSEQ - 1)) == 0


def _offsets(*sizes):
    offs, o = [], 0
    for s in sizes:
        offs.append(o)
        o += s
    return offs + [o]


# lane offsets inside the packed bf16 weight slab (all multiples of 128)
(OW1, OW2, OQKV, OOR, OPW2, ONW2, WMAT_COLS) = _offsets(D, D2, 3 * D, D, L * D, L * D)
# lane offsets inside the packed f32 bias/gamma/beta row (all multiples of 128)
(VB1, VG1, VBE1, VB2, VG2, VBE2,
 VGB1, VGG1, VGBE1, VBQKV, VBOR, VPB2, VNB2, VECS_COLS) = _offsets(
    D, D, D, D2, D2, D2, 2 * D, 2 * D, 2 * D, 3 * D, D, L * D, L * D)


# ----------------------------- math helpers (usable in- and out-of-kernel) ---

def _erf(x):
    # Abramowitz & Stegun 7.1.26 polynomial (max abs err ~1.5e-7, ~= f32 eps).
    # TODO(synk): switch to lax.erf if/when erf_p gets a guaranteed Mosaic lowering.
    p = 0.3275911
    a1, a2, a3, a4, a5 = 0.254829592, -0.284496736, 1.421413741, -1.453152027, 1.061405429
    sign = jnp.where(x >= 0.0, 1.0, -1.0)
    ax = jnp.abs(x)
    t = 1.0 / (1.0 + p * ax)
    poly = ((((a5 * t + a4) * t + a3) * t + a2) * t + a1) * t
    return sign * (1.0 - poly * jnp.exp(-ax * ax))


def _gelu(x):
    # exact (erf-based) GELU, matching torch.nn.GELU() default
    return 0.5 * x * (1.0 + _erf(x * INV_SQRT2))


def _layernorm(x, gamma, beta):
    mu = jnp.mean(x, axis=-1, keepdims=True)
    var = jnp.mean((x - mu) * (x - mu), axis=-1, keepdims=True)
    return (x - mu) * jax.lax.rsqrt(var + LN_EPS) * gamma + beta


# ------------------------------------------------------------ fused kernel ---

def fused_kernel(x_ref, wmat_ref, wg1_ref, vecs_ref, o_ref, prompts_scr):
    """feature_encoder + both generators + masked batched MHA + residual + normalize."""
    f32 = jnp.float32
    bf16 = jnp.bfloat16

    def wm(col, n):                      # bf16 weight slab, lanes [col, col+n)
        return wmat_ref[:, col:col + n]

    def vec(col, n):                     # f32 bias/gamma/beta row, lanes [col, col+n)
        return vecs_ref[:, col:col + n]

    def mmb(a, w):                       # bf16 x bf16 MXU matmul, f32 accumulate
        return jnp.dot(a.astype(bf16), w, preferred_element_type=f32)

    # ---- feature encoder (Dropout = identity in eval mode) ----
    x = x_ref[...]                                                         # (B, D) f32
    h = _gelu(_layernorm(mmb(x, wm(OW1, D)) + vec(VB1, D),
                         vec(VG1, D), vec(VBE1, D)))                       # (B, D)
    enc = _gelu(_layernorm(mmb(h, wm(OW2, D2)) + vec(VB2, D2),
                           vec(VG2, D2), vec(VBE2, D2)))                   # (B, D2)

    # ---- pos|neg generator layer 1 (packed into one (D2, 2D) matmul) ----
    g = mmb(enc, wg1_ref[...]) + vec(VGB1, 2 * D)                          # (B, 2D)
    gp = _gelu(_layernorm(g[:, :D], vec(VGG1, D), vec(VGBE1, D)))          # (B, D)
    gn = _gelu(_layernorm(g[:, D:], vec(VGG1 + D, D), vec(VGBE1 + D, D)))  # (B, D)

    # ---- generator layer 2 + re-layout to rows r = l*NSEQ + n (n = branch*B + b) ----
    # Each branch is generated and immediately scattered as 8 lane-aligned (B, D)
    # blocks so neither (B, L*D) flat tensor stays live across the whole epilogue.
    def gen_rows(gin, wcol, bcol, n0):
        flat = mmb(gin, wm(wcol, L * D)) + vec(bcol, L * D)                # (B, L*D)
        for l in range(L):
            prompts_scr[l * NSEQ + n0:l * NSEQ + n0 + B, :] = flat[:, l * D:(l + 1) * D]

    gen_rows(gp, OPW2, VPB2, 0)    # positive branch -> rows l*NSEQ + {0..B-1}
    gen_rows(gn, ONW2, VNB2, B)    # negative branch -> rows l*NSEQ + {B..NSEQ-1}
    prompts = prompts_scr[...]                                             # (NROW, D) f32

    # ---- fused QKV projection for both branches / all sequences at once ----
    qkv = mmb(prompts, wm(OQKV, 3 * D)) + vec(VBQKV, 3 * D)                # (NROW, 3D)

    def split_heads(m):   # (NROW, D) -> (H*NROW, DH); row = hh*NROW + l*NSEQ + n
        return jnp.concatenate([m[:, hh * DH:(hh + 1) * DH] for hh in range(H)], axis=0)

    q_all = split_heads(qkv[:, 0:D])                                       # (128, 64)
    k_all = split_heads(qkv[:, D:2 * D])
    v_all = split_heads(qkv[:, 2 * D:3 * D])

    # ---- ONE masked score matmul over all (head, seq) pairs + full-vreg softmax ----
    s = jnp.einsum('qd,kd->qk', q_all, k_all,
                   preferred_element_type=f32) * SCALE                     # (128, 128)
    ri = jax.lax.broadcasted_iota(jnp.int32, (H * NROW, H * NROW), 0)
    ci = jax.lax.broadcasted_iota(jnp.int32, (H * NROW, H * NROW), 1)
    # same head: i // NROW == j // NROW ; same sequence: i % NSEQ == j % NSEQ
    same = ((ri >> _HEAD_SHIFT) == (ci >> _HEAD_SHIFT)) & \
           ((ri & (NSEQ - 1)) == (ci & (NSEQ - 1)))
    s = jnp.where(same, s, -1e30)
    s = s - jnp.max(s, axis=-1, keepdims=True)
    e = jnp.exp(s)
    p = e * pl.reciprocal(jnp.sum(e, axis=-1, keepdims=True), approx=True)
    ctx = jnp.dot(p, v_all, preferred_element_type=f32)                    # (128, 64)

    # ---- head merge + folded out_proj.residual_proj + residual ----
    # ctx2d @ w_or == sum_h ctx[h-block] @ w_or[h*DH:(h+1)*DH, :]; the per-head form
    # avoids an unaligned 64-lane concatenate and only costs 4 tiny MXU dispatches.
    y = prompts + vec(VBOR, D)
    for hh in range(H):
        ctx_h = ctx[hh * NROW:(hh + 1) * NROW, :]                          # (NROW, DH)
        w_or_h = wmat_ref[hh * DH:(hh + 1) * DH, OOR:OOR + D]              # (DH, D) bf16
        y = y + jnp.dot(ctx_h.astype(bf16), w_or_h, preferred_element_type=f32)

    # ---- F.normalize(dim=-1) with eps clamp ----
    ssq = jnp.sum(y * y, axis=-1, keepdims=True)
    y = y * jax.lax.rsqrt(jnp.maximum(ssq, NORM_EPS * NORM_EPS))

    o_ref[...] = y                                                         # one lane-dense store


# ----------------------------------------------------------------- wrapper ---

def pack_params(p):
    """One-time (outside the hot path) weight packing, folding and bf16 cast."""
    f32 = jnp.float32
    wqkv = jnp.concatenate([p["wq"], p["wk"], p["wv"]], axis=1)            # (D, 3D)
    bqkv = jnp.concatenate([p["bq"], p["bk"], p["bv"]], axis=1)            # (1, 3D)
    # fold out_proj . residual_proj offline (f32 product, single bf16 cast)
    w_or = p["wo"].astype(f32) @ p["wr"].astype(f32)                       # (D, D)
    b_or = p["bo"].astype(f32) @ p["wr"].astype(f32) + p["br"]             # (1, D)

    wmat = jnp.concatenate(
        [p["enc_w1"], p["enc_w2"], wqkv, w_or, p["pos_w2"], p["neg_w2"]],
        axis=1).astype(jnp.bfloat16)                                       # (D, 5504)
    wg1 = jnp.concatenate([p["pos_w1"], p["neg_w1"]],
                          axis=1).astype(jnp.bfloat16)                     # (D2, 2D)
    vecs = jnp.concatenate(
        [p["enc_b1"], p["enc_g1"], p["enc_be1"],
         p["enc_b2"], p["enc_g2"], p["enc_be2"],
         jnp.concatenate([p["pos_b1"], p["neg_b1"]], axis=1),
         jnp.concatenate([p["pos_g"], p["neg_g"]], axis=1),
         jnp.concatenate([p["pos_be"], p["neg_be"]], axis=1),
         bqkv, b_or, p["pos_b2"], p["neg_b2"]],
        axis=1).astype(f32)                                                # (1, 7808)

    assert wmat.shape == (D, WMAT_COLS)
    assert wg1.shape == (D2, 2 * D)
    assert vecs.shape == (1, VECS_COLS)
    return {"wmat": wmat, "wg1": wg1, "vecs": vecs}


def prompt_generation_forward(image_features, packed):
    y = pl.pallas_call(
        fused_kernel,
        out_shape=jax.ShapeDtypeStruct((NROW, D), jnp.float32),
        scratch_shapes=[pltpu.VMEM((NROW, D), jnp.float32)],
        compiler_params=pltpu.CompilerParams(vmem_limit_bytes=24 * 1024 * 1024),
    )(image_features, packed["wmat"], packed["wg1"], packed["vecs"])
    # Layout plumbing only (tiny XLA ops): kernel rows are r = l*NSEQ + n.
    y3 = y.reshape(L, NSEQ, D)
    pos = jnp.transpose(y3[:, 0:B, :], (1, 0, 2))                          # (B, L, D)
    neg = jnp.transpose(y3[:, B:NSEQ, :], (1, 0, 2))                       # (B, L, D)
    return pos, neg


# ------------------------------------------------------ reference (plain JAX) ---

def reference_forward(x, p):
    h = _gelu(_layernorm(x @ p["enc_w1"] + p["enc_b1"], p["enc_g1"], p["enc_be1"]))
    enc = _gelu(_layernorm(h @ p["enc_w2"] + p["enc_b2"], p["enc_g2"], p["enc_be2"]))

    def gen(pre):
        t = _gelu(_layernorm(enc @ p[pre + "_w1"] + p[pre + "_b1"],
                             p[pre + "_g"], p[pre + "_be"]))
        return (t @ p[pre + "_w2"] + p[pre + "_b2"]).reshape(B, L, D)

    def attn(xp):
        q = (xp @ p["wq"] + p["bq"]).reshape(B, L, H, DH).transpose(0, 2, 1, 3)
        k = (xp @ p["wk"] + p["bk"]).reshape(B, L, H, DH).transpose(0, 2, 1, 3)
        v = (xp @ p["wv"] + p["bv"]).reshape(B, L, H, DH).transpose(0, 2, 1, 3)
        s = jnp.einsum("bhqd,bhkd->bhqk", q, k) * SCALE
        a = jax.nn.softmax(s, axis=-1)
        o = jnp.einsum("bhqk,bhkd->bhqd", a, v).transpose(0, 2, 1, 3).reshape(B, L, D)
        o = o @ p["wo"] + p["bo"]
        y = xp + (o @ p["wr"] + p["br"])
        nrm = jnp.sqrt(jnp.sum(y * y, axis=-1, keepdims=True))
        return y / jnp.maximum(nrm, NORM_EPS)

    return attn(gen("pos")), attn(gen("neg"))


# ------------------------------------------------------------------- params ---

def _xavier(key, fan_in, fan_out):
    limit = float(np.sqrt(6.0 / (fan_in + fan_out)))
    return jax.random.uniform(key, (fan_in, fan_out), jnp.float32, -limit, limit)


def make_params(key):
    ks = jax.random.split(key, 11)
    zeros = lambda n: jnp.zeros((1, n), jnp.float32)
    ones = lambda n: jnp.ones((1, n), jnp.float32)
    return {
        # feature_encoder
        "enc_w1": _xavier(ks[0], D, D),  "enc_b1": zeros(D),
        "enc_g1": ones(D),               "enc_be1": zeros(D),
        "enc_w2": _xavier(ks[1], D, D2), "enc_b2": zeros(D2),
        "enc_g2": ones(D2),              "enc_be2": zeros(D2),
        # positive_generator
        "pos_w1": _xavier(ks[2], D2, D), "pos_b1": zeros(D),
        "pos_g": ones(D),                "pos_be": zeros(D),
        "pos_w2": _xavier(ks[3], D, L * D), "pos_b2": zeros(L * D),
        # negative_generator
        "neg_w1": _xavier(ks[4], D2, D), "neg_b1": zeros(D),
        "neg_g": ones(D),                "neg_be": zeros(D),
        "neg_w2": _xavier(ks[5], D, L * D), "neg_b2": zeros(L * D),
        # nn.MultiheadAttention in_proj (q/k/v) + out_proj; biases zero-init
        "wq": _xavier(ks[6], D, D), "bq": zeros(D),
        "wk": _xavier(ks[7], D, D), "bk": zeros(D),
        "wv": _xavier(ks[8], D, D), "bv": zeros(D),
        "wo": _xavier(ks[9], D, D), "bo": zeros(D),
        # residual_proj
        "wr": _xavier(ks[10], D, D), "br": zeros(D),
    }


# --------------------------------------------------------------------- main ---

if __name__ == "__main__":
    key = jax.random.PRNGKey(0)
    pkey, xkey = jax.random.split(key)
    params = make_params(pkey)
    image_features = jax.random.normal(xkey, (B, D), jnp.float32)

    packed = pack_params(params)        # one-time packing, outside the hot path

    fwd = jax.jit(prompt_generation_forward)
    pos, neg = fwd(image_features, packed)
    jax.block_until_ready((pos, neg))

    assert pos.shape == (B, L, D) and neg.shape == (B, L, D)

    ref_pos, ref_neg = reference_forward(image_features, params)
    np.testing.assert_allclose(np.asarray(pos), np.asarray(ref_pos), atol=2e-2, rtol=0)
    np.testing.assert_allclose(np.asarray(neg), np.asarray(ref_neg), atol=2e-2, rtol=0)

    print("KERNEL_OK")
</pallas_src>

<mosaic_0001>
module attributes {stable_mosaic.version = 11 : i64} {
  func.func @fused_kernel(%arg0: memref<2x256xf32, #tpu.memory_space<vmem>>, %arg1: memref<256x5504xbf16, #tpu.memory_space<vmem>>, %arg2: memref<128x512xbf16, #tpu.memory_space<vmem>>, %arg3: memref<1x7808xf32, #tpu.memory_space<vmem>>, %arg4: memref<32x256xf32, #tpu.memory_space<vmem>>, %arg5: memref<32x256xf32, #tpu.memory_space<vmem>>) attributes {dimension_semantics = [], scalar_prefetch = 0 : i64, scratch_operands = 1 : i64, tpu.core_type = #tpu.core_type<tc>} {
    %c0 = arith.constant 0 : index
    %c0_0 = arith.constant 0 : index
    %0 = vector.load %arg0[%c0, %c0_0] : memref<2x256xf32, #tpu.memory_space<vmem>>, vector<2x256xf32>
    %c0_1 = arith.constant 0 : index
    %c0_2 = arith.constant 0 : index
    %1 = vector.load %arg1[%c0_1, %c0_2] : memref<256x5504xbf16, #tpu.memory_space<vmem>>, vector<256x256xbf16>
    %2 = arith.truncf %0 : vector<2x256xf32> to vector<2x256xbf16>
    %cst = arith.constant dense<0.000000e+00> : vector<2x256xf32>
    %3 = tpu.matmul %2, %1, %cst {dimension_numbers = #tpu.dot_dimension_numbers<[1], [0], [0], [1], [0, 0, 1, 1], [], []>} : vector<2x256xbf16>, vector<256x256xbf16>, vector<2x256xf32> -> vector<2x256xf32>
    %c0_3 = arith.constant 0 : index
    %c0_4 = arith.constant 0 : index
    %4 = vector.load %arg3[%c0_3, %c0_4] : memref<1x7808xf32, #tpu.memory_space<vmem>>, vector<1x256xf32>
    %5 = vector.broadcast %4 : vector<1x256xf32> to vector<2x256xf32>
    %6 = arith.addf %3, %5 : vector<2x256xf32>
    %c0_5 = arith.constant 0 : index
    %c256 = arith.constant 256 : index
    %7 = vector.load %arg3[%c0_5, %c256] : memref<1x7808xf32, #tpu.memory_space<vmem>>, vector<1x256xf32>
    %c0_6 = arith.constant 0 : index
    %c512 = arith.constant 512 : index
    %8 = vector.load %arg3[%c0_6, %c512] : memref<1x7808xf32, #tpu.memory_space<vmem>>, vector<1x256xf32>
    %cst_7 = arith.constant dense<0.000000e+00> : vector<2xf32>
    %9 = vector.multi_reduction <add>, %6, %cst_7 [1] : vector<2x256xf32> to vector<2xf32>
    %10 = vector.shape_cast %9 : vector<2xf32> to vector<2x1xf32>
    %cst_8 = arith.constant 2.560000e+02 : f32
    %11 = vector.broadcast %cst_8 : f32 to vector<2x1xf32>
    %12 = arith.divf %10, %11 : vector<2x1xf32>
    %13 = vector.broadcast %12 : vector<2x1xf32> to vector<2x256xf32>
    %14 = arith.subf %6, %13 : vector<2x256xf32>
    %15 = vector.broadcast %12 : vector<2x1xf32> to vector<2x256xf32>
    %16 = arith.subf %6, %15 : vector<2x256xf32>
    %17 = arith.mulf %14, %16 : vector<2x256xf32>
    %cst_9 = arith.constant dense<0.000000e+00> : vector<2xf32>
    %18 = vector.multi_reduction <add>, %17, %cst_9 [1] : vector<2x256xf32> to vector<2xf32>
    %19 = vector.shape_cast %18 : vector<2xf32> to vector<2x1xf32>
    %cst_10 = arith.constant 2.560000e+02 : f32
    %20 = vector.broadcast %cst_10 : f32 to vector<2x1xf32>
    %21 = arith.divf %19, %20 : vector<2x1xf32>
    %22 = vector.broadcast %12 : vector<2x1xf32> to vector<2x256xf32>
    %23 = arith.subf %6, %22 : vector<2x256xf32>
    %cst_11 = arith.constant 9.99999974E-6 : f32
    %24 = vector.broadcast %cst_11 : f32 to vector<2x1xf32>
    %25 = arith.addf %21, %24 : vector<2x1xf32>
    %26 = math.rsqrt %25 : vector<2x1xf32>
    %27 = vector.broadcast %26 : vector<2x1xf32> to vector<2x256xf32>
    %28 = arith.mulf %23, %27 : vector<2x256xf32>
    %29 = vector.broadcast %7 : vector<1x256xf32> to vector<2x256xf32>
    %30 = arith.mulf %28, %29 : vector<2x256xf32>
    %31 = vector.broadcast %8 : vector<1x256xf32> to vector<2x256xf32>
    %32 = arith.addf %30, %31 : vector<2x256xf32>
    %cst_12 = arith.constant 5.000000e-01 : f32
    %33 = vector.broadcast %cst_12 : f32 to vector<2x256xf32>
    %34 = arith.mulf %33, %32 : vector<2x256xf32>
    %cst_13 = arith.constant 0.707106769 : f32
    %35 = vector.broadcast %cst_13 : f32 to vector<2x256xf32>
    %36 = arith.mulf %32, %35 : vector<2x256xf32>
    %cst_14 = arith.constant 0.000000e+00 : f32
    %37 = vector.broadcast %cst_14 : f32 to vector<2x256xf32>
    %38 = arith.cmpf oge, %36, %37 : vector<2x256xf32>
    %cst_15 = arith.constant 1.000000e+00 : f32
    %cst_16 = arith.constant -1.000000e+00 : f32
    %39 = vector.broadcast %cst_15 : f32 to vector<2x256xf32>
    %40 = vector.broadcast %cst_16 : f32 to vector<2x256xf32>
    %41 = arith.select %38, %39, %40 : vector<2x256xi1>, vector<2x256xf32>
    %42 = math.absf %36 : vector<2x256xf32>
    %cst_17 = arith.constant 0.327591091 : f32
    %43 = vector.broadcast %cst_17 : f32 to vector<2x256xf32>
    %44 = arith.mulf %43, %42 : vector<2x256xf32>
    %cst_18 = arith.constant 1.000000e+00 : f32
    %45 = vector.broadcast %cst_18 : f32 to vector<2x256xf32>
    %46 = arith.addf %45, %44 : vector<2x256xf32>
    %cst_19 = arith.constant 1.000000e+00 : f32
    %47 = vector.broadcast %cst_19 : f32 to vector<2x256xf32>
    %48 = arith.divf %47, %46 : vector<2x256xf32>
    %cst_20 = arith.constant 1.06140542 : f32
    %49 = vector.broadcast %cst_20 : f32 to vector<2x256xf32>
    %50 = arith.mulf %49, %48 : vector<2x256xf32>
    %cst_21 = arith.constant -1.45315206 : f32
    %51 = vector.broadcast %cst_21 : f32 to vector<2x256xf32>
    %52 = arith.addf %50, %51 : vector<2x256xf32>
    %53 = arith.mulf %52, %48 : vector<2x256xf32>
    %cst_22 = arith.constant 1.42141378 : f32
    %54 = vector.broadcast %cst_22 : f32 to vector<2x256xf32>
    %55 = arith.addf %53, %54 : vector<2x256xf32>
    %56 = arith.mulf %55, %48 : vector<2x256xf32>
    %cst_23 = arith.constant -0.284496725 : f32
    %57 = vector.broadcast %cst_23 : f32 to vector<2x256xf32>
    %58 = arith.addf %56, %57 : vector<2x256xf32>
    %59 = arith.mulf %58, %48 : vector<2x256xf32>
    %cst_24 = arith.constant 0.254829586 : f32
    %60 = vector.broadcast %cst_24 : f32 to vector<2x256xf32>
    %61 = arith.addf %59, %60 : vector<2x256xf32>
    %62 = arith.mulf %61, %48 : vector<2x256xf32>
    %cst_25 = arith.constant 0.000000e+00 : f32
    %63 = vector.broadcast %cst_25 : f32 to vector<2x256xf32>
    %64 = arith.subf %63, %42 : vector<2x256xf32>
    %65 = arith.mulf %64, %42 : vector<2x256xf32>
    %66 = math.exp %65 : vector<2x256xf32>
    %67 = arith.mulf %62, %66 : vector<2x256xf32>
    %cst_26 = arith.constant 1.000000e+00 : f32
    %68 = vector.broadcast %cst_26 : f32 to vector<2x256xf32>
    %69 = arith.subf %68, %67 : vector<2x256xf32>
    %70 = arith.mulf %41, %69 : vector<2x256xf32>
    %cst_27 = arith.constant 1.000000e+00 : f32
    %71 = vector.broadcast %cst_27 : f32 to vector<2x256xf32>
    %72 = arith.addf %71, %70 : vector<2x256xf32>
    %73 = arith.mulf %34, %72 : vector<2x256xf32>
    %c0_28 = arith.constant 0 : index
    %c256_29 = arith.constant 256 : index
    %74 = vector.load %arg1[%c0_28, %c256_29] : memref<256x5504xbf16, #tpu.memory_space<vmem>>, vector<256x128xbf16>
    %75 = arith.truncf %73 : vector<2x256xf32> to vector<2x256xbf16>
    %cst_30 = arith.constant dense<0.000000e+00> : vector<2x128xf32>
    %76 = tpu.matmul %75, %74, %cst_30 {dimension_numbers = #tpu.dot_dimension_numbers<[1], [0], [0], [1], [0, 0, 1, 1], [], []>} : vector<2x256xbf16>, vector<256x128xbf16>, vector<2x128xf32> -> vector<2x128xf32>
    %c0_31 = arith.constant 0 : index
    %c768 = arith.constant 768 : index
    %77 = vector.load %arg3[%c0_31, %c768] : memref<1x7808xf32, #tpu.memory_space<vmem>>, vector<1x128xf32>
    %78 = vector.broadcast %77 : vector<1x128xf32> to vector<2x128xf32>
    %79 = arith.addf %76, %78 : vector<2x128xf32>
    %c0_32 = arith.constant 0 : index
    %c896 = arith.constant 896 : index
    %80 = vector.load %arg3[%c0_32, %c896] : memref<1x7808xf32, #tpu.memory_space<vmem>>, vector<1x128xf32>
    %c0_33 = arith.constant 0 : index
    %c1024 = arith.constant 1024 : index
    %81 = vector.load %arg3[%c0_33, %c1024] : memref<1x7808xf32, #tpu.memory_space<vmem>>, vector<1x128xf32>
    %cst_34 = arith.constant dense<0.000000e+00> : vector<2xf32>
    %82 = vector.multi_reduction <add>, %79, %cst_34 [1] : vector<2x128xf32> to vector<2xf32>
    %83 = vector.shape_cast %82 : vector<2xf32> to vector<2x1xf32>
    %cst_35 = arith.constant 1.280000e+02 : f32
    %84 = vector.broadcast %cst_35 : f32 to vector<2x1xf32>
    %85 = arith.divf %83, %84 : vector<2x1xf32>
    %86 = vector.broadcast %85 : vector<2x1xf32> to vector<2x128xf32>
    %87 = arith.subf %79, %86 : vector<2x128xf32>
    %88 = vector.broadcast %85 : vector<2x1xf32> to vector<2x128xf32>
    %89 = arith.subf %79, %88 : vector<2x128xf32>
    %90 = arith.mulf %87, %89 : vector<2x128xf32>
    %cst_36 = arith.constant dense<0.000000e+00> : vector<2xf32>
    %91 = vector.multi_reduction <add>, %90, %cst_36 [1] : vector<2x128xf32> to vector<2xf32>
    %92 = vector.shape_cast %91 : vector<2xf32> to vector<2x1xf32>
    %cst_37 = arith.constant 1.280000e+02 : f32
    %93 = vector.broadcast %cst_37 : f32 to vector<2x1xf32>
    %94 = arith.divf %92, %93 : vector<2x1xf32>
    %95 = vector.broadcast %85 : vector<2x1xf32> to vector<2x128xf32>
    %96 = arith.subf %79, %95 : vector<2x128xf32>
    %cst_38 = arith.constant 9.99999974E-6 : f32
    %97 = vector.broadcast %cst_38 : f32 to vector<2x1xf32>
    %98 = arith.addf %94, %97 : vector<2x1xf32>
    %99 = math.rsqrt %98 : vector<2x1xf32>
    %100 = vector.broadcast %99 : vector<2x1xf32> to vector<2x128xf32>
    %101 = arith.mulf %96, %100 : vector<2x128xf32>
    %102 = vector.broadcast %80 : vector<1x128xf32> to vector<2x128xf32>
    %103 = arith.mulf %101, %102 : vector<2x128xf32>
    %104 = vector.broadcast %81 : vector<1x128xf32> to vector<2x128xf32>
    %105 = arith.addf %103, %104 : vector<2x128xf32>
    %cst_39 = arith.constant 5.000000e-01 : f32
    %106 = vector.broadcast %cst_39 : f32 to vector<2x128xf32>
    %107 = arith.mulf %106, %105 : vector<2x128xf32>
    %cst_40 = arith.constant 0.707106769 : f32
    %108 = vector.broadcast %cst_40 : f32 to vector<2x128xf32>
    %109 = arith.mulf %105, %108 : vector<2x128xf32>
    %cst_41 = arith.constant 0.000000e+00 : f32
    %110 = vector.broadcast %cst_41 : f32 to vector<2x128xf32>
    %111 = arith.cmpf oge, %109, %110 : vector<2x128xf32>
    %cst_42 = arith.constant 1.000000e+00 : f32
    %cst_43 = arith.constant -1.000000e+00 : f32
    %112 = vector.broadcast %cst_42 : f32 to vector<2x128xf32>
    %113 = vector.broadcast %cst_43 : f32 to vector<2x128xf32>
    %114 = arith.select %111, %112, %113 : vector<2x128xi1>, vector<2x128xf32>
    %115 = math.absf %109 : vector<2x128xf32>
    %cst_44 = arith.constant 0.327591091 : f32
    %116 = vector.broadcast %cst_44 : f32 to vector<2x128xf32>
    %117 = arith.mulf %116, %115 : vector<2x128xf32>
    %cst_45 = arith.constant 1.000000e+00 : f32
    %118 = vector.broadcast %cst_45 : f32 to vector<2x128xf32>
    %119 = arith.addf %118, %117 : vector<2x128xf32>
    %cst_46 = arith.constant 1.000000e+00 : f32
    %120 = vector.broadcast %cst_46 : f32 to vector<2x128xf32>
    %121 = arith.divf %120, %119 : vector<2x128xf32>
    %cst_47 = arith.constant 1.06140542 : f32
    %122 = vector.broadcast %cst_47 : f32 to vector<2x128xf32>
    %123 = arith.mulf %122, %121 : vector<2x128xf32>
    %cst_48 = arith.constant -1.45315206 : f32
    %124 = vector.broadcast %cst_48 : f32 to vector<2x128xf32>
    %125 = arith.addf %123, %124 : vector<2x128xf32>
    %126 = arith.mulf %125, %121 : vector<2x128xf32>
    %cst_49 = arith.constant 1.42141378 : f32
    %127 = vector.broadcast %cst_49 : f32 to vector<2x128xf32>
    %128 = arith.addf %126, %127 : vector<2x128xf32>
    %129 = arith.mulf %128, %121 : vector<2x128xf32>
    %cst_50 = arith.constant -0.284496725 : f32
    %130 = vector.broadcast %cst_50 : f32 to vector<2x128xf32>
    %131 = arith.addf %129, %130 : vector<2x128xf32>
    %132 = arith.mulf %131, %121 : vector<2x128xf32>
    %cst_51 = arith.constant 0.254829586 : f32
    %133 = vector.broadcast %cst_51 : f32 to vector<2x128xf32>
    %134 = arith.addf %132, %133 : vector<2x128xf32>
    %135 = arith.mulf %134, %121 : vector<2x128xf32>
    %cst_52 = arith.constant 0.000000e+00 : f32
    %136 = vector.broadcast %cst_52 : f32 to vector<2x128xf32>
    %137 = arith.subf %136, %115 : vector<2x128xf32>
    %138 = arith.mulf %137, %115 : vector<2x128xf32>
    %139 = math.exp %138 : vector<2x128xf32>
    %140 = arith.mulf %135, %139 : vector<2x128xf32>
    %cst_53 = arith.constant 1.000000e+00 : f32
    %141 = vector.broadcast %cst_53 : f32 to vector<2x128xf32>
    %142 = arith.subf %141, %140 : vector<2x128xf32>
    %143 = arith.mulf %114, %142 : vector<2x128xf32>
    %cst_54 = arith.constant 1.000000e+00 : f32
    %144 = vector.broadcast %cst_54 : f32 to vector<2x128xf32>
    %145 = arith.addf %144, %143 : vector<2x128xf32>
    %146 = arith.mulf %107, %145 : vector<2x128xf32>
    %c0_55 = arith.constant 0 : index
    %c0_56 = arith.constant 0 : index
    %147 = vector.load %arg2[%c0_55, %c0_56] : memref<128x512xbf16, #tpu.memory_space<vmem>>, vector<128x512xbf16>
    %148 = arith.truncf %146 : vector<2x128xf32> to vector<2x128xbf16>
    %cst_57 = arith.constant dense<0.000000e+00> : vector<2x512xf32>
    %149 = tpu.matmul %148, %147, %cst_57 {dimension_numbers = #tpu.dot_dimension_numbers<[1], [0], [0], [1], [0, 0, 1, 1], [], []>} : vector<2x128xbf16>, vector<128x512xbf16>, vector<2x512xf32> -> vector<2x512xf32>
    %c0_58 = arith.constant 0 : index
    %c1152 = arith.constant 1152 : index
    %150 = vector.load %arg3[%c0_58, %c1152] : memref<1x7808xf32, #tpu.memory_space<vmem>>, vector<1x512xf32>
    %151 = vector.broadcast %150 : vector<1x512xf32> to vector<2x512xf32>
    %152 = arith.addf %149, %151 : vector<2x512xf32>
    %153 = vector.extract_strided_slice %152 {offsets = [0, 0], sizes = [2, 256], strides = [1, 1]} : vector<2x512xf32> to vector<2x256xf32>
    %c0_59 = arith.constant 0 : index
    %c1664 = arith.constant 1664 : index
    %154 = vector.load %arg3[%c0_59, %c1664] : memref<1x7808xf32, #tpu.memory_space<vmem>>, vector<1x256xf32>
    %c0_60 = arith.constant 0 : index
    %c2176 = arith.constant 2176 : index
    %155 = vector.load %arg3[%c0_60, %c2176] : memref<1x7808xf32, #tpu.memory_space<vmem>>, vector<1x256xf32>
    %cst_61 = arith.constant dense<0.000000e+00> : vector<2xf32>
    %156 = vector.multi_reduction <add>, %153, %cst_61 [1] : vector<2x256xf32> to vector<2xf32>
    %157 = vector.shape_cast %156 : vector<2xf32> to vector<2x1xf32>
    %cst_62 = arith.constant 2.560000e+02 : f32
    %158 = vector.broadcast %cst_62 : f32 to vector<2x1xf32>
    %159 = arith.divf %157, %158 : vector<2x1xf32>
    %160 = vector.broadcast %159 : vector<2x1xf32> to vector<2x256xf32>
    %161 = arith.subf %153, %160 : vector<2x256xf32>
    %162 = vector.broadcast %159 : vector<2x1xf32> to vector<2x256xf32>
    %163 = arith.subf %153, %162 : vector<2x256xf32>
    %164 = arith.mulf %161, %163 : vector<2x256xf32>
    %cst_63 = arith.constant dense<0.000000e+00> : vector<2xf32>
    %165 = vector.multi_reduction <add>, %164, %cst_63 [1] : vector<2x256xf32> to vector<2xf32>
    %166 = vector.shape_cast %165 : vector<2xf32> to vector<2x1xf32>
    %cst_64 = arith.constant 2.560000e+02 : f32
    %167 = vector.broadcast %cst_64 : f32 to vector<2x1xf32>
    %168 = arith.divf %166, %167 : vector<2x1xf32>
    %169 = vector.broadcast %159 : vector<2x1xf32> to vector<2x256xf32>
    %170 = arith.subf %153, %169 : vector<2x256xf32>
    %cst_65 = arith.constant 9.99999974E-6 : f32
    %171 = vector.broadcast %cst_65 : f32 to vector<2x1xf32>
    %172 = arith.addf %168, %171 : vector<2x1xf32>
    %173 = math.rsqrt %172 : vector<2x1xf32>
    %174 = vector.broadcast %173 : vector<2x1xf32> to vector<2x256xf32>
    %175 = arith.mulf %170, %174 : vector<2x256xf32>
    %176 = vector.broadcast %154 : vector<1x256xf32> to vector<2x256xf32>
    %177 = arith.mulf %175, %176 : vector<2x256xf32>
    %178 = vector.broadcast %155 : vector<1x256xf32> to vector<2x256xf32>
    %179 = arith.addf %177, %178 : vector<2x256xf32>
    %cst_66 = arith.constant 5.000000e-01 : f32
    %180 = vector.broadcast %cst_66 : f32 to vector<2x256xf32>
    %181 = arith.mulf %180, %179 : vector<2x256xf32>
    %cst_67 = arith.constant 0.707106769 : f32
    %182 = vector.broadcast %cst_67 : f32 to vector<2x256xf32>
    %183 = arith.mulf %179, %182 : vector<2x256xf32>
    %cst_68 = arith.constant 0.000000e+00 : f32
    %184 = vector.broadcast %cst_68 : f32 to vector<2x256xf32>
    %185 = arith.cmpf oge, %183, %184 : vector<2x256xf32>
    %cst_69 = arith.constant 1.000000e+00 : f32
    %cst_70 = arith.constant -1.000000e+00 : f32
    %186 = vector.broadcast %cst_69 : f32 to vector<2x256xf32>
    %187 = vector.broadcast %cst_70 : f32 to vector<2x256xf32>
    %188 = arith.select %185, %186, %187 : vector<2x256xi1>, vector<2x256xf32>
    %189 = math.absf %183 : vector<2x256xf32>
    %cst_71 = arith.constant 0.327591091 : f32
    %190 = vector.broadcast %cst_71 : f32 to vector<2x256xf32>
    %191 = arith.mulf %190, %189 : vector<2x256xf32>
    %cst_72 = arith.constant 1.000000e+00 : f32
    %192 = vector.broadcast %cst_72 : f32 to vector<2x256xf32>
    %193 = arith.addf %192, %191 : vector<2x256xf32>
    %cst_73 = arith.constant 1.000000e+00 : f32
    %194 = vector.broadcast %cst_73 : f32 to vector<2x256xf32>
    %195 = arith.divf %194, %193 : vector<2x256xf32>
    %cst_74 = arith.constant 1.06140542 : f32
    %196 = vector.broadcast %cst_74 : f32 to vector<2x256xf32>
    %197 = arith.mulf %196, %195 : vector<2x256xf32>
    %cst_75 = arith.constant -1.45315206 : f32
    %198 = vector.broadcast %cst_75 : f32 to vector<2x256xf32>
    %199 = arith.addf %197, %198 : vector<2x256xf32>
    %200 = arith.mulf %199, %195 : vector<2x256xf32>
    %cst_76 = arith.constant 1.42141378 : f32
    %201 = vector.broadcast %cst_76 : f32 to vector<2x256xf32>
    %202 = arith.addf %200, %201 : vector<2x256xf32>
    %203 = arith.mulf %202, %195 : vector<2x256xf32>
    %cst_77 = arith.constant -0.284496725 : f32
    %204 = vector.broadcast %cst_77 : f32 to vector<2x256xf32>
    %205 = arith.addf %203, %204 : vector<2x256xf32>
    %206 = arith.mulf %205, %195 : vector<2x256xf32>
    %cst_78 = arith.constant 0.254829586 : f32
    %207 = vector.broadcast %cst_78 : f32 to vector<2x256xf32>
    %208 = arith.addf %206, %207 : vector<2x256xf32>
    %209 = arith.mulf %208, %195 : vector<2x256xf32>
    %cst_79 = arith.constant 0.000000e+00 : f32
    %210 = vector.broadcast %cst_79 : f32 to vector<2x256xf32>
    %211 = arith.subf %210, %189 : vector<2x256xf32>
    %212 = arith.mulf %211, %189 : vector<2x256xf32>
    %213 = math.exp %212 : vector<2x256xf32>
    %214 = arith.mulf %209, %213 : vector<2x256xf32>
    %cst_80 = arith.constant 1.000000e+00 : f32
    %215 = vector.broadcast %cst_80 : f32 to vector<2x256xf32>
    %216 = arith.subf %215, %214 : vector<2x256xf32>
    %217 = arith.mulf %188, %216 : vector<2x256xf32>
    %cst_81 = arith.constant 1.000000e+00 : f32
    %218 = vector.broadcast %cst_81 : f32 to vector<2x256xf32>
    %219 = arith.addf %218, %217 : vector<2x256xf32>
    %220 = arith.mulf %181, %219 : vector<2x256xf32>
    %221 = vector.extract_strided_slice %152 {offsets = [0, 256], sizes = [2, 256], strides = [1, 1]} : vector<2x512xf32> to vector<2x256xf32>
    %c0_82 = arith.constant 0 : index
    %c1920 = arith.constant 1920 : index
    %222 = vector.load %arg3[%c0_82, %c1920] : memref<1x7808xf32, #tpu.memory_space<vmem>>, vector<1x256xf32>
    %c0_83 = arith.constant 0 : index
    %c2432 = arith.constant 2432 : index
    %223 = vector.load %arg3[%c0_83, %c2432] : memref<1x7808xf32, #tpu.memory_space<vmem>>, vector<1x256xf32>
    %cst_84 = arith.constant dense<0.000000e+00> : vector<2xf32>
    %224 = vector.multi_reduction <add>, %221, %cst_84 [1] : vector<2x256xf32> to vector<2xf32>
    %225 = vector.shape_cast %224 : vector<2xf32> to vector<2x1xf32>
    %cst_85 = arith.constant 2.560000e+02 : f32
    %226 = vector.broadcast %cst_85 : f32 to vector<2x1xf32>
    %227 = arith.divf %225, %226 : vector<2x1xf32>
    %228 = vector.broadcast %227 : vector<2x1xf32> to vector<2x256xf32>
    %229 = arith.subf %221, %228 : vector<2x256xf32>
    %230 = vector.broadcast %227 : vector<2x1xf32> to vector<2x256xf32>
    %231 = arith.subf %221, %230 : vector<2x256xf32>
    %232 = arith.mulf %229, %231 : vector<2x256xf32>
    %cst_86 = arith.constant dense<0.000000e+00> : vector<2xf32>
    %233 = vector.multi_reduction <add>, %232, %cst_86 [1] : vector<2x256xf32> to vector<2xf32>
    %234 = vector.shape_cast %233 : vector<2xf32> to vector<2x1xf32>
    %cst_87 = arith.constant 2.560000e+02 : f32
    %235 = vector.broadcast %cst_87 : f32 to vector<2x1xf32>
    %236 = arith.divf %234, %235 : vector<2x1xf32>
    %237 = vector.broadcast %227 : vector<2x1xf32> to vector<2x256xf32>
    %238 = arith.subf %221, %237 : vector<2x256xf32>
    %cst_88 = arith.constant 9.99999974E-6 : f32
    %239 = vector.broadcast %cst_88 : f32 to vector<2x1xf32>
    %240 = arith.addf %236, %239 : vector<2x1xf32>
    %241 = math.rsqrt %240 : vector<2x1xf32>
    %242 = vector.broadcast %241 : vector<2x1xf32> to vector<2x256xf32>
    %243 = arith.mulf %238, %242 : vector<2x256xf32>
    %244 = vector.broadcast %222 : vector<1x256xf32> to vector<2x256xf32>
    %245 = arith.mulf %243, %244 : vector<2x256xf32>
    %246 = vector.broadcast %223 : vector<1x256xf32> to vector<2x256xf32>
    %247 = arith.addf %245, %246 : vector<2x256xf32>
    %cst_89 = arith.constant 5.000000e-01 : f32
    %248 = vector.broadcast %cst_89 : f32 to vector<2x256xf32>
    %249 = arith.mulf %248, %247 : vector<2x256xf32>
    %cst_90 = arith.constant 0.707106769 : f32
    %250 = vector.broadcast %cst_90 : f32 to vector<2x256xf32>
    %251 = arith.mulf %247, %250 : vector<2x256xf32>
    %cst_91 = arith.constant 0.000000e+00 : f32
    %252 = vector.broadcast %cst_91 : f32 to vector<2x256xf32>
    %253 = arith.cmpf oge, %251, %252 : vector<2x256xf32>
    %cst_92 = arith.constant 1.000000e+00 : f32
    %cst_93 = arith.constant -1.000000e+00 : f32
    %254 = vector.broadcast %cst_92 : f32 to vector<2x256xf32>
    %255 = vector.broadcast %cst_93 : f32 to vector<2x256xf32>
    %256 = arith.select %253, %254, %255 : vector<2x256xi1>, vector<2x256xf32>
    %257 = math.absf %251 : vector<2x256xf32>
    %cst_94 = arith.constant 0.327591091 : f32
    %258 = vector.broadcast %cst_94 : f32 to vector<2x256xf32>
    %259 = arith.mulf %258, %257 : vector<2x256xf32>
    %cst_95 = arith.constant 1.000000e+00 : f32
    %260 = vector.broadcast %cst_95 : f32 to vector<2x256xf32>
    %261 = arith.addf %260, %259 : vector<2x256xf32>
    %cst_96 = arith.constant 1.000000e+00 : f32
    %262 = vector.broadcast %cst_96 : f32 to vector<2x256xf32>
    %263 = arith.divf %262, %261 : vector<2x256xf32>
    %cst_97 = arith.constant 1.06140542 : f32
    %264 = vector.broadcast %cst_97 : f32 to vector<2x256xf32>
    %265 = arith.mulf %264, %263 : vector<2x256xf32>
    %cst_98 = arith.constant -1.45315206 : f32
    %266 = vector.broadcast %cst_98 : f32 to vector<2x256xf32>
    %267 = arith.addf %265, %266 : vector<2x256xf32>
    %268 = arith.mulf %267, %263 : vector<2x256xf32>
    %cst_99 = arith.constant 1.42141378 : f32
    %269 = vector.broadcast %cst_99 : f32 to vector<2x256xf32>
    %270 = arith.addf %268, %269 : vector<2x256xf32>
    %271 = arith.mulf %270, %263 : vector<2x256xf32>
    %cst_100 = arith.constant -0.284496725 : f32
    %272 = vector.broadcast %cst_100 : f32 to vector<2x256xf32>
    %273 = arith.addf %271, %272 : vector<2x256xf32>
    %274 = arith.mulf %273, %263 : vector<2x256xf32>
    %cst_101 = arith.constant 0.254829586 : f32
    %275 = vector.broadcast %cst_101 : f32 to vector<2x256xf32>
    %276 = arith.addf %274, %275 : vector<2x256xf32>
    %277 = arith.mulf %276, %263 : vector<2x256xf32>
    %cst_102 = arith.constant 0.000000e+00 : f32
    %278 = vector.broadcast %cst_102 : f32 to vector<2x256xf32>
    %279 = arith.subf %278, %257 : vector<2x256xf32>
    %280 = arith.mulf %279, %257 : vector<2x256xf32>
    %281 = math.exp %280 : vector<2x256xf32>
    %282 = arith.mulf %277, %281 : vector<2x256xf32>
    %cst_103 = arith.constant 1.000000e+00 : f32
    %283 = vector.broadcast %cst_103 : f32 to vector<2x256xf32>
    %284 = arith.subf %283, %282 : vector<2x256xf32>
    %285 = arith.mulf %256, %284 : vector<2x256xf32>
    %cst_104 = arith.constant 1.000000e+00 : f32
    %286 = vector.broadcast %cst_104 : f32 to vector<2x256xf32>
    %287 = arith.addf %286, %285 : vector<2x256xf32>
    %288 = arith.mulf %249, %287 : vector<2x256xf32>
    %c0_105 = arith.constant 0 : index
    %c1408 = arith.constant 1408 : index
    %289 = vector.load %arg1[%c0_105, %c1408] : memref<256x5504xbf16, #tpu.memory_space<vmem>>, vector<256x2048xbf16>
    %290 = arith.truncf %220 : vector<2x256xf32> to vector<2x256xbf16>
    %cst_106 = arith.constant dense<0.000000e+00> : vector<2x2048xf32>
    %291 = tpu.matmul %290, %289, %cst_106 {dimension_numbers = #tpu.dot_dimension_numbers<[1], [0], [0], [1], [0, 0, 1, 1], [], []>} : vector<2x256xbf16>, vector<256x2048xbf16>, vector<2x2048xf32> -> vector<2x2048xf32>
    %c0_107 = arith.constant 0 : index
    %c3712 = arith.constant 3712 : index
    %292 = vector.load %arg3[%c0_107, %c3712] : memref<1x7808xf32, #tpu.memory_space<vmem>>, vector<1x2048xf32>
    %293 = vector.broadcast %292 : vector<1x2048xf32> to vector<2x2048xf32>
    %294 = arith.addf %291, %293 : vector<2x2048xf32>
    %295 = vector.extract_strided_slice %294 {offsets = [0, 0], sizes = [2, 256], strides = [1, 1]} : vector<2x2048xf32> to vector<2x256xf32>
    %c0_108 = arith.constant 0 : index
    %c0_109 = arith.constant 0 : index
    %296 = vector.load %arg5[%c0_108, %c0_109] : memref<32x256xf32, #tpu.memory_space<vmem>>, vector<2x256xf32>
    tpu.vector_store %arg5[%c0_108, %c0_109], %295 {strides = array<i32>} : memref<32x256xf32, #tpu.memory_space<vmem>>, vector<2x256xf32>,
    %297 = vector.extract_strided_slice %294 {offsets = [0, 256], sizes = [2, 256], strides = [1, 1]} : vector<2x2048xf32> to vector<2x256xf32>
    %c4 = arith.constant 4 : index
    %c0_110 = arith.constant 0 : index
    %298 = vector.load %arg5[%c4, %c0_110] : memref<32x256xf32, #tpu.memory_space<vmem>>, vector<2x256xf32>
    tpu.vector_store %arg5[%c4, %c0_110], %297 {strides = array<i32>} : memref<32x256xf32, #tpu.memory_space<vmem>>, vector<2x256xf32>,
    %299 = vector.extract_strided_slice %294 {offsets = [0, 512], sizes = [2, 256], strides = [1, 1]} : vector<2x2048xf32> to vector<2x256xf32>
    %c8 = arith.constant 8 : index
    %c0_111 = arith.constant 0 : index
    %300 = vector.load %arg5[%c8, %c0_111] : memref<32x256xf32, #tpu.memory_space<vmem>>, vector<2x256xf32>
    tpu.vector_store %arg5[%c8, %c0_111], %299 {strides = array<i32>} : memref<32x256xf32, #tpu.memory_space<vmem>>, vector<2x256xf32>,
    %301 = vector.extract_strided_slice %294 {offsets = [0, 768], sizes = [2, 256], strides = [1, 1]} : vector<2x2048xf32> to vector<2x256xf32>
    %c12 = arith.constant 12 : index
    %c0_112 = arith.constant 0 : index
    %302 = vector.load %arg5[%c12, %c0_112] : memref<32x256xf32, #tpu.memory_space<vmem>>, vector<2x256xf32>
    tpu.vector_store %arg5[%c12, %c0_112], %301 {strides = array<i32>} : memref<32x256xf32, #tpu.memory_space<vmem>>, vector<2x256xf32>,
    %303 = vector.extract_strided_slice %294 {offsets = [0, 1024], sizes = [2, 256], strides = [1, 1]} : vector<2x2048xf32> to vector<2x256xf32>
    %c16 = arith.constant 16 : index
    %c0_113 = arith.constant 0 : index
    %304 = vector.load %arg5[%c16, %c0_113] : memref<32x256xf32, #tpu.memory_space<vmem>>, vector<2x256xf32>
    tpu.vector_store %arg5[%c16, %c0_113], %303 {strides = array<i32>} : memref<32x256xf32, #tpu.memory_space<vmem>>, vector<2x256xf32>,
    %305 = vector.extract_strided_slice %294 {offsets = [0, 1280], sizes = [2, 256], strides = [1, 1]} : vector<2x2048xf32> to vector<2x256xf32>
    %c20 = arith.constant 20 : index
    %c0_114 = arith.constant 0 : index
    %306 = vector.load %arg5[%c20, %c0_114] : memref<32x256xf32, #tpu.memory_space<vmem>>, vector<2x256xf32>
    tpu.vector_store %arg5[%c20, %c0_114], %305 {strides = array<i32>} : memref<32x256xf32, #tpu.memory_space<vmem>>, vector<2x256xf32>,
    %307 = vector.extract_strided_slice %294 {offsets = [0, 1536], sizes = [2, 256], strides = [1, 1]} : vector<2x2048xf32> to vector<2x256xf32>
    %c24 = arith.constant 24 : index
    %c0_115 = arith.constant 0 : index
    %308 = vector.load %arg5[%c24, %c0_115] : memref<32x256xf32, #tpu.memory_space<vmem>>, vector<2x256xf32>
    tpu.vector_store %arg5[%c24, %c0_115], %307 {strides = array<i32>} : memref<32x256xf32, #tpu.memory_space<vmem>>, vector<2x256xf32>,
    %309 = vector.extract_strided_slice %294 {offsets = [0, 1792], sizes = [2, 256], strides = [1, 1]} : vector<2x2048xf32> to vector<2x256xf32>
    %c28 = arith.constant 28 : index
    %c0_116 = arith.constant 0 : index
    %310 = vector.load %arg5[%c28, %c0_116] : memref<32x256xf32, #tpu.memory_space<vmem>>, vector<2x256xf32>
    tpu.vector_store %arg5[%c28, %c0_116], %309 {strides = array<i32>} : memref<32x256xf32, #tpu.memory_space<vmem>>, vector<2x256xf32>,
    %c0_117 = arith.constant 0 : index
    %c3456 = arith.constant 3456 : index
    %311 = vector.load %arg1[%c0_117, %c3456] : memref<256x5504xbf16, #tpu.memory_space<vmem>>, vector<256x2048xbf16>
    %312 = arith.truncf %288 : vector<2x256xf32> to vector<2x256xbf16>
    %cst_118 = arith.constant dense<0.000000e+00> : vector<2x2048xf32>
    %313 = tpu.matmul %312, %311, %cst_118 {dimension_numbers = #tpu.dot_dimension_numbers<[1], [0], [0], [1], [0, 0, 1, 1], [], []>} : vector<2x256xbf16>, vector<256x2048xbf16>, vector<2x2048xf32> -> vector<2x2048xf32>
    %c0_119 = arith.constant 0 : index
    %c5760 = arith.constant 5760 : index
    %314 = vector.load %arg3[%c0_119, %c5760] : memref<1x7808xf32, #tpu.memory_space<vmem>>, vector<1x2048xf32>
    %315 = vector.broadcast %314 : vector<1x2048xf32> to vector<2x2048xf32>
    %316 = arith.addf %313, %315 : vector<2x2048xf32>
    %317 = vector.extract_strided_slice %316 {offsets = [0, 0], sizes = [2, 256], strides = [1, 1]} : vector<2x2048xf32> to vector<2x256xf32>
    %c2 = arith.constant 2 : index
    %c0_120 = arith.constant 0 : index
    %318 = vector.load %arg5[%c2, %c0_120] : memref<32x256xf32, #tpu.memory_space<vmem>>, vector<2x256xf32>
    tpu.vector_store %arg5[%c2, %c0_120], %317 {strides = array<i32>} : memref<32x256xf32, #tpu.memory_space<vmem>>, vector<2x256xf32>,
    %319 = vector.extract_strided_slice %316 {offsets = [0, 256], sizes = [2, 256], strides = [1, 1]} : vector<2x2048xf32> to vector<2x256xf32>
    %c6 = arith.constant 6 : index
    %c0_121 = arith.constant 0 : index
    %320 = vector.load %arg5[%c6, %c0_121] : memref<32x256xf32, #tpu.memory_space<vmem>>, vector<2x256xf32>
    tpu.vector_store %arg5[%c6, %c0_121], %319 {strides = array<i32>} : memref<32x256xf32, #tpu.memory_space<vmem>>, vector<2x256xf32>,
    %321 = vector.extract_strided_slice %316 {offsets = [0, 512], sizes = [2, 256], strides = [1, 1]} : vector<2x2048xf32> to vector<2x256xf32>
    %c10 = arith.constant 10 : index
    %c0_122 = arith.constant 0 : index
    %322 = vector.load %arg5[%c10, %c0_122] : memref<32x256xf32, #tpu.memory_space<vmem>>, vector<2x256xf32>
    tpu.vector_store %arg5[%c10, %c0_122], %321 {strides = array<i32>} : memref<32x256xf32, #tpu.memory_space<vmem>>, vector<2x256xf32>,
    %323 = vector.extract_strided_slice %316 {offsets = [0, 768], sizes = [2, 256], strides = [1, 1]} : vector<2x2048xf32> to vector<2x256xf32>
    %c14 = arith.constant 14 : index
    %c0_123 = arith.constant 0 : index
    %324 = vector.load %arg5[%c14, %c0_123] : memref<32x256xf32, #tpu.memory_space<vmem>>, vector<2x256xf32>
    tpu.vector_store %arg5[%c14, %c0_123], %323 {strides = array<i32>} : memref<32x256xf32, #tpu.memory_space<vmem>>, vector<2x256xf32>,
    %325 = vector.extract_strided_slice %316 {offsets = [0, 1024], sizes = [2, 256], strides = [1, 1]} : vector<2x2048xf32> to vector<2x256xf32>
    %c18 = arith.constant 18 : index
    %c0_124 = arith.constant 0 : index
    %326 = vector.load %arg5[%c18, %c0_124] : memref<32x256xf32, #tpu.memory_space<vmem>>, vector<2x256xf32>
    tpu.vector_store %arg5[%c18, %c0_124], %325 {strides = array<i32>} : memref<32x256xf32, #tpu.memory_space<vmem>>, vector<2x256xf32>,
    %327 = vector.extract_strided_slice %316 {offsets = [0, 1280], sizes = [2, 256], strides = [1, 1]} : vector<2x2048xf32> to vector<2x256xf32>
    %c22 = arith.constant 22 : index
    %c0_125 = arith.constant 0 : index
    %328 = vector.load %arg5[%c22, %c0_125] : memref<32x256xf32, #tpu.memory_space<vmem>>, vector<2x256xf32>
    tpu.vector_store %arg5[%c22, %c0_125], %327 {strides = array<i32>} : memref<32x256xf32, #tpu.memory_space<vmem>>, vector<2x256xf32>,
    %329 = vector.extract_strided_slice %316 {offsets = [0, 1536], sizes = [2, 256], strides = [1, 1]} : vector<2x2048xf32> to vector<2x256xf32>
    %c26 = arith.constant 26 : index
    %c0_126 = arith.constant 0 : index
    %330 = vector.load %arg5[%c26, %c0_126] : memref<32x256xf32, #tpu.memory_space<vmem>>, vector<2x256xf32>
    tpu.vector_store %arg5[%c26, %c0_126], %329 {strides = array<i32>} : memref<32x256xf32, #tpu.memory_space<vmem>>, vector<2x256xf32>,
    %331 = vector.extract_strided_slice %316 {offsets = [0, 1792], sizes = [2, 256], strides = [1, 1]} : vector<2x2048xf32> to vector<2x256xf32>
    %c30 = arith.constant 30 : index
    %c0_127 = arith.constant 0 : index
    %332 = vector.load %arg5[%c30, %c0_127] : memref<32x256xf32, #tpu.memory_space<vmem>>, vector<2x256xf32>
    tpu.vector_store %arg5[%c30, %c0_127], %331 {strides = array<i32>} : memref<32x256xf32, #tpu.memory_space<vmem>>, vector<2x256xf32>,
    %c0_128 = arith.constant 0 : index
    %c0_129 = arith.constant 0 : index
    %333 = vector.load %arg5[%c0_128, %c0_129] : memref<32x256xf32, #tpu.memory_space<vmem>>, vector<32x256xf32>
    %c0_130 = arith.constant 0 : index
    %c384 = arith.constant 384 : index
    %334 = vector.load %arg1[%c0_130, %c384] : memref<256x5504xbf16, #tpu.memory_space<vmem>>, vector<256x768xbf16>
    %335 = arith.truncf %333 : vector<32x256xf32> to vector<32x256xbf16>
    %cst_131 = arith.constant dense<0.000000e+00> : vector<32x768xf32>
    %336 = tpu.matmul %335, %334, %cst_131 {dimension_numbers = #tpu.dot_dimension_numbers<[1], [0], [0], [1], [0, 0, 1, 1], [], []>} : vector<32x256xbf16>, vector<256x768xbf16>, vector<32x768xf32> -> vector<32x768xf32>
    %c0_132 = arith.constant 0 : index
    %c2688 = arith.constant 2688 : index
    %337 = vector.load %arg3[%c0_132, %c2688] : memref<1x7808xf32, #tpu.memory_space<vmem>>, vector<1x768xf32>
    %338 = vector.broadcast %337 : vector<1x768xf32> to vector<32x768xf32>
    %339 = arith.addf %336, %338 : vector<32x768xf32>
    %340 = vector.extract_strided_slice %339 {offsets = [0, 0], sizes = [32, 256], strides = [1, 1]} : vector<32x768xf32> to vector<32x256xf32>
    %341 = vector.extract_strided_slice %340 {offsets = [0, 0], sizes = [32, 64], strides = [1, 1]} : vector<32x256xf32> to vector<32x64xf32>
    %342 = vector.extract_strided_slice %340 {offsets = [0, 64], sizes = [32, 64], strides = [1, 1]} : vector<32x256xf32> to vector<32x64xf32>
    %343 = vector.extract_strided_slice %340 {offsets = [0, 128], sizes = [32, 64], strides = [1, 1]} : vector<32x256xf32> to vector<32x64xf32>
    %344 = vector.extract_strided_slice %340 {offsets = [0, 192], sizes = [32, 64], strides = [1, 1]} : vector<32x256xf32> to vector<32x64xf32>
    %345 = tpu.concatenate %341, %342, %343, %344 in 0 : vector<32x64xf32>, vector<32x64xf32>, vector<32x64xf32>, vector<32x64xf32> -> vector<128x64xf32>
    %346 = vector.extract_strided_slice %339 {offsets = [0, 256], sizes = [32, 256], strides = [1, 1]} : vector<32x768xf32> to vector<32x256xf32>
    %347 = vector.extract_strided_slice %346 {offsets = [0, 0], sizes = [32, 64], strides = [1, 1]} : vector<32x256xf32> to vector<32x64xf32>
    %348 = vector.extract_strided_slice %346 {offsets = [0, 64], sizes = [32, 64], strides = [1, 1]} : vector<32x256xf32> to vector<32x64xf32>
    %349 = vector.extract_strided_slice %346 {offsets = [0, 128], sizes = [32, 64], strides = [1, 1]} : vector<32x256xf32> to vector<32x64xf32>
    %350 = vector.extract_strided_slice %346 {offsets = [0, 192], sizes = [32, 64], strides = [1, 1]} : vector<32x256xf32> to vector<32x64xf32>
    %351 = tpu.concatenate %347, %348, %349, %350 in 0 : vector<32x64xf32>, vector<32x64xf32>, vector<32x64xf32>, vector<32x64xf32> -> vector<128x64xf32>
    %352 = vector.extract_strided_slice %339 {offsets = [0, 512], sizes = [32, 256], strides = [1, 1]} : vector<32x768xf32> to vector<32x256xf32>
    %353 = vector.extract_strided_slice %352 {offsets = [0, 0], sizes = [32, 64], strides = [1, 1]} : vector<32x256xf32> to vector<32x64xf32>
    %354 = vector.extract_strided_slice %352 {offsets = [0, 64], sizes = [32, 64], strides = [1, 1]} : vector<32x256xf32> to vector<32x64xf32>
    %355 = vector.extract_strided_slice %352 {offsets = [0, 128], sizes = [32, 64], strides = [1, 1]} : vector<32x256xf32> to vector<32x64xf32>
    %356 = vector.extract_strided_slice %352 {offsets = [0, 192], sizes = [32, 64], strides = [1, 1]} : vector<32x256xf32> to vector<32x64xf32>
    %357 = tpu.concatenate %353, %354, %355, %356 in 0 : vector<32x64xf32>, vector<32x64xf32>, vector<32x64xf32>, vector<32x64xf32> -> vector<128x64xf32>
    "tpu.trace_start"() <{level = 10 : i32, message = "qd,kd->qk"}> : () -> ()
    %cst_133 = arith.constant dense<0.000000e+00> : vector<128x128xf32>
    %358 = tpu.matmul %345, %351, %cst_133 {dimension_numbers = #tpu.dot_dimension_numbers<[1], [1], [0], [0], [0, 0, 1, 0], [], []>} : vector<128x64xf32>, vector<128x64xf32>, vector<128x128xf32> -> vector<128x128xf32>
    "tpu.trace_stop"() : () -> ()
    %cst_134 = arith.constant 1.250000e-01 : f32
    %359 = vector.broadcast %cst_134 : f32 to vector<128x128xf32>
    %360 = arith.mulf %358, %359 : vector<128x128xf32>
    %361 = tpu.iota {dimensions = array<i32: 0>} : vector<128x128xi32>
    %362 = tpu.iota {dimensions = array<i32: 1>} : vector<128x128xi32>
    %c5_i32 = arith.constant 5 : i32
    %363 = vector.broadcast %c5_i32 : i32 to vector<128x128xi32>
    %364 = arith.shrsi %361, %363 : vector<128x128xi32>
    %c5_i32_135 = arith.constant 5 : i32
    %365 = vector.broadcast %c5_i32_135 : i32 to vector<128x128xi32>
    %366 = arith.shrsi %362, %365 : vector<128x128xi32>
    %367 = arith.cmpi eq, %364, %366 : vector<128x128xi32>
    %c3_i32 = arith.constant 3 : i32
    %368 = vector.broadcast %c3_i32 : i32 to vector<128x128xi32>
    %369 = arith.andi %361, %368 : vector<128x128xi32>
    %c3_i32_136 = arith.constant 3 : i32
    %370 = vector.broadcast %c3_i32_136 : i32 to vector<128x128xi32>
    %371 = arith.andi %362, %370 : vector<128x128xi32>
    %372 = arith.cmpi eq, %369, %371 : vector<128x128xi32>
    %373 = arith.andi %367, %372 : vector<128x128xi1>
    %cst_137 = arith.constant -1.000000e+30 : f32
    %374 = vector.broadcast %cst_137 : f32 to vector<128x128xf32>
    %375 = arith.select %373, %360, %374 : vector<128x128xi1>, vector<128x128xf32>
    %cst_138 = arith.constant dense<0xFF800000> : vector<128xf32>
    %376 = vector.multi_reduction <maximumf>, %375, %cst_138 [1] : vector<128x128xf32> to vector<128xf32>
    %377 = vector.shape_cast %376 : vector<128xf32> to vector<128x1xf32>
    %378 = vector.broadcast %377 : vector<128x1xf32> to vector<128x128xf32>
    %379 = arith.subf %375, %378 : vector<128x128xf32>
    %380 = math.exp %379 : vector<128x128xf32>
    %cst_139 = arith.constant dense<0.000000e+00> : vector<128xf32>
    %381 = vector.multi_reduction <add>, %380, %cst_139 [1] : vector<128x128xf32> to vector<128xf32>
    %382 = vector.shape_cast %381 : vector<128xf32> to vector<128x1xf32>
    %383 = tpu.reciprocal %382 {approx = true} : vector<128x1xf32> -> vector<128x1xf32>
    %384 = vector.broadcast %383 : vector<128x1xf32> to vector<128x128xf32>
    %385 = arith.mulf %380, %384 : vector<128x128xf32>
    %cst_140 = arith.constant dense<0.000000e+00> : vector<128x64xf32>
    %386 = tpu.matmul %385, %357, %cst_140 {dimension_numbers = #tpu.dot_dimension_numbers<[1], [0], [0], [1], [0, 0, 1, 1], [], []>} : vector<128x128xf32>, vector<128x64xf32>, vector<128x64xf32> -> vector<128x64xf32>
    %c0_141 = arith.constant 0 : index
    %c3456_142 = arith.constant 3456 : index
    %387 = vector.load %arg3[%c0_141, %c3456_142] : memref<1x7808xf32, #tpu.memory_space<vmem>>, vector<1x256xf32>
    %388 = vector.broadcast %387 : vector<1x256xf32> to vector<32x256xf32>
    %389 = arith.addf %333, %388 : vector<32x256xf32>
    %390 = vector.extract_strided_slice %386 {offsets = [0, 0], sizes = [32, 64], strides = [1, 1]} : vector<128x64xf32> to vector<32x64xf32>
    %c0_143 = arith.constant 0 : index
    %c1152_144 = arith.constant 1152 : index
    %391 = vector.load %arg1[%c0_143, %c1152_144] : memref<256x5504xbf16, #tpu.memory_space<vmem>>, vector<64x256xbf16>
    %392 = arith.truncf %390 : vector<32x64xf32> to vector<32x64xbf16>
    %cst_145 = arith.constant dense<0.000000e+00> : vector<32x256xf32>
    %393 = tpu.matmul %392, %391, %cst_145 {dimension_numbers = #tpu.dot_dimension_numbers<[1], [0], [0], [1], [0, 0, 1, 1], [], []>} : vector<32x64xbf16>, vector<64x256xbf16>, vector<32x256xf32> -> vector<32x256xf32>
    %394 = arith.addf %389, %393 : vector<32x256xf32>
    %395 = vector.extract_strided_slice %386 {offsets = [32, 0], sizes = [32, 64], strides = [1, 1]} : vector<128x64xf32> to vector<32x64xf32>
    %c64 = arith.constant 64 : index
    %c1152_146 = arith.constant 1152 : index
    %396 = vector.load %arg1[%c64, %c1152_146] : memref<256x5504xbf16, #tpu.memory_space<vmem>>, vector<64x256xbf16>
    %397 = arith.truncf %395 : vector<32x64xf32> to vector<32x64xbf16>
    %cst_147 = arith.constant dense<0.000000e+00> : vector<32x256xf32>
    %398 = tpu.matmul %397, %396, %cst_147 {dimension_numbers = #tpu.dot_dimension_numbers<[1], [0], [0], [1], [0, 0, 1, 1], [], []>} : vector<32x64xbf16>, vector<64x256xbf16>, vector<32x256xf32> -> vector<32x256xf32>
    %399 = arith.addf %394, %398 : vector<32x256xf32>
    %400 = vector.extract_strided_slice %386 {offsets = [64, 0], sizes = [32, 64], strides = [1, 1]} : vector<128x64xf32> to vector<32x64xf32>
    %c128 = arith.constant 128 : index
    %c1152_148 = arith.constant 1152 : index
    %401 = vector.load %arg1[%c128, %c1152_148] : memref<256x5504xbf16, #tpu.memory_space<vmem>>, vector<64x256xbf16>
    %402 = arith.truncf %400 : vector<32x64xf32> to vector<32x64xbf16>
    %cst_149 = arith.constant dense<0.000000e+00> : vector<32x256xf32>
    %403 = tpu.matmul %402, %401, %cst_149 {dimension_numbers = #tpu.dot_dimension_numbers<[1], [0], [0], [1], [0, 0, 1, 1], [], []>} : vector<32x64xbf16>, vector<64x256xbf16>, vector<32x256xf32> -> vector<32x256xf32>
    %404 = arith.addf %399, %403 : vector<32x256xf32>
    %405 = vector.extract_strided_slice %386 {offsets = [96, 0], sizes = [32, 64], strides = [1, 1]} : vector<128x64xf32> to vector<32x64xf32>
    %c192 = arith.constant 192 : index
    %c1152_150 = arith.constant 1152 : index
    %406 = vector.load %arg1[%c192, %c1152_150] : memref<256x5504xbf16, #tpu.memory_space<vmem>>, vector<64x256xbf16>
    %407 = arith.truncf %405 : vector<32x64xf32> to vector<32x64xbf16>
    %cst_151 = arith.constant dense<0.000000e+00> : vector<32x256xf32>
    %408 = tpu.matmul %407, %406, %cst_151 {dimension_numbers = #tpu.dot_dimension_numbers<[1], [0], [0], [1], [0, 0, 1, 1], [], []>} : vector<32x64xbf16>, vector<64x256xbf16>, vector<32x256xf32> -> vector<32x256xf32>
    %409 = arith.addf %404, %408 : vector<32x256xf32>
    %410 = arith.mulf %409, %409 : vector<32x256xf32>
    %cst_152 = arith.constant dense<0.000000e+00> : vector<32xf32>
    %411 = vector.multi_reduction <add>, %410, %cst_152 [1] : vector<32x256xf32> to vector<32xf32>
    %412 = vector.shape_cast %411 : vector<32xf32> to vector<32x1xf32>
    %cst_153 = arith.constant 1.000000e-24 : f32
    %413 = vector.broadcast %cst_153 : f32 to vector<32x1xf32>
    %414 = arith.maximumf %412, %413 : vector<32x1xf32>
    %415 = math.rsqrt %414 : vector<32x1xf32>
    %416 = vector.broadcast %415 : vector<32x1xf32> to vector<32x256xf32>
    %417 = arith.mulf %409, %416 : vector<32x256xf32>
    %c0_154 = arith.constant 0 : index
    %c0_155 = arith.constant 0 : index
    %418 = vector.load %arg4[%c0_154, %c0_155] : memref<32x256xf32, #tpu.memory_space<vmem>>, vector<32x256xf32>
    tpu.vector_store %arg4[%c0_154, %c0_155], %417 {strides = array<i32>} : memref<32x256xf32, #tpu.memory_space<vmem>>, vector<32x256xf32>,
    return
  }
}

</mosaic_0001>

<llo_original>
// kernel: prompt_generation_forward.1
$region0: #{prompt_generation_forward.1}
  #allocation0 [shape = 'u32[]', space=smem, size = 0x4, offset = 0x4, fixed_abs, tag = 'smem constant byte address 0x4 - core index']
  #allocation1 [shape = 'u32[144,128]{1,0:T(1,128)}', space=vmem, size = 0x12000, scoped, tag = 'internal scratch']
  #allocation2 [shape = 'f32[32,256]{1,0:T(8,128)}', space=vmem, size = 0x8000, scoped, tag = 'scratch operand']
  %s0 = inlined_call_operand.hbm [shape: f32[2,256], index: 0, kind: input, shape index: {}]
  %s1 = inlined_call_operand.hbm [shape: bf16[256,5504], index: 1, kind: input, shape index: {}]
  %s2 = inlined_call_operand.hbm [shape: bf16[128,512], index: 2, kind: input, shape index: {}]
  %s3 = inlined_call_operand.hbm [shape: f32[1,7808], index: 3, kind: input, shape index: {}]
  %s4 = inlined_call_operand.vmem [shape: f32[32,256], index: 4, kind: output, shape index: {}]
  %s5 = sld [smem:[#allocation0]]
  $region42: #{prompt_generation_forward.1} parent=0
    _
  %s7 = ssub.s32 1, %s5
  %s8 = scalar_select 0, %s7, %s5
  $region1: #{prompt_generation_forward.1} parent=0
    #allocation3 [shape = 'u8[2048]{0}', space=vmem, size = 0x800, scoped, tag = 'input window, operand 0, single buffered']
    #allocation4 [shape = 's32[1]{0}', space=sflag, size = 0x4, scoped, tag = 'scoped memory for prompt_generation_forward.1']
    #allocation5 [shape = 'u8[2818048]{0}', space=vmem, size = 0x2b0000, scoped, tag = 'input window, operand 1, single buffered']
    #allocation6 [shape = 's32[1]{0}', space=sflag, size = 0x4, scoped, tag = 'scoped memory for prompt_generation_forward.1']
    #allocation7 [shape = 'u8[131072]{0}', space=vmem, size = 0x20000, scoped, tag = 'input window, operand 2, single buffered']
    #allocation8 [shape = 'u8[31232]{0}', space=vmem, size = 0x7c00, scoped, tag = 'input window, operand 3, single buffered']
    #allocation9 [shape = 's32[1]{0}', space=sflag, size = 0x4, scoped, tag = 'scoped memory for prompt_generation_forward.1']
    %9 = vsyncpa [#allocation4], 0
    %10 = vsyncpa [#allocation6], 0
    %11 = vsyncpa [#allocation9], 0
    // Predicated region
    $region2: #{prompt_generation_forward.1} parent=1 // pred_check
      _
    $region3: #{prompt_generation_forward.1} parent=1 // pred_check_branch
      %13 = sbr.rel (0) target = $region5
    $region4: #{prompt_generation_forward.1} parent=1 // pred_region
      %s15 = ssub.s32 64, 64
      %16 = vsyncadd [#allocation4], %s15
      %s18 = sshll.u32 [#allocation3], 4
      %s19 = int_to_ptr.vmem [resolvable:$true] %s18
      %21 = dma.hbm_to_vmem [thread:$0]  %s0, 64, %s19, [#allocation4]
    $region5: #{prompt_generation_forward.1} parent=1 // pred_fallthru
      _
    // Predicated region
    $region6: #{prompt_generation_forward.1} parent=1 // pred_check
      _
    $region7: #{prompt_generation_forward.1} parent=1 // pred_check_branch
      %23 = sbr.rel (0) target = $region9
    $region8: #{prompt_generation_forward.1} parent=1 // pred_region
      %s25 = ssub.s32 88064, 88064
      %26 = vsyncadd [#allocation6], %s25
      %s27 = sshll.u32 [#allocation5], 4
      %s28 = int_to_ptr.vmem [resolvable:$true] %s27
      %33 = dma.hbm_to_vmem [thread:$0]  %s1, 88064, %s28, [#allocation6], 2752, 2752, 172
    $region9: #{prompt_generation_forward.1} parent=1 // pred_fallthru
      _
    // Predicated region
    $region10: #{prompt_generation_forward.1} parent=1 // pred_check
      _
    $region11: #{prompt_generation_forward.1} parent=1 // pred_check_branch
      %35 = sbr.rel (0) target = $region13
    $region12: #{prompt_generation_forward.1} parent=1 // pred_region
      %s37 = ssub.s32 4096, 4096
      %38 = vsyncadd [#allocation6], %s37
      %s39 = sshll.u32 [#allocation7], 4
      %s40 = int_to_ptr.vmem [resolvable:$true] %s39
      %45 = dma.hbm_to_vmem [thread:$0]  %s2, 4096, %s40, [#allocation6], 256, 256, 16
    $region13: #{prompt_generation_forward.1} parent=1 // pred_fallthru
      _
    // Predicated region
    $region14: #{prompt_generation_forward.1} parent=1 // pred_check
      _
    $region15: #{prompt_generation_forward.1} parent=1 // pred_check_branch
      %47 = sbr.rel (0) target = $region17
    $region16: #{prompt_generation_forward.1} parent=1 // pred_region
      %s49 = ssub.s32 976, 976
      %50 = vsyncadd [#allocation9], %s49
      %s52 = sshll.u32 [#allocation8], 4
      %s53 = int_to_ptr.vmem [resolvable:$true] %s52
      %55 = dma.hbm_to_vmem [thread:$0]  %s3, 976, %s53, [#allocation9]
    $region17: #{prompt_generation_forward.1} parent=1 // pred_fallthru
      _
    // Predicated region
    $region18: #{prompt_generation_forward.1} parent=1 // pred_check
      _
    $region19: #{prompt_generation_forward.1} parent=1 // pred_check_branch
      %57 = sbr.rel (0) target = $region21
    $region20: #{prompt_generation_forward.1} parent=1 // pred_region
      %58 = dma.done [#allocation4], 64
    $region21: #{prompt_generation_forward.1} parent=1 // pred_fallthru
      _
    // Predicated region
    $region22: #{prompt_generation_forward.1} parent=1 // pred_check
      _
    $region23: #{prompt_generation_forward.1} parent=1 // pred_check_branch
      %60 = sbr.rel (0) target = $region25
    $region24: #{prompt_generation_forward.1} parent=1 // pred_region
      %61 = dma.done [#allocation6], 88064
    $region25: #{prompt_generation_forward.1} parent=1 // pred_fallthru
      _
    // Predicated region
    $region26: #{prompt_generation_forward.1} parent=1 // pred_check
      _
    $region27: #{prompt_generation_forward.1} parent=1 // pred_check_branch
      %63 = sbr.rel (0) target = $region29
    $region28: #{prompt_generation_forward.1} parent=1 // pred_region
      %64 = dma.done [#allocation6], 4096
    $region29: #{prompt_generation_forward.1} parent=1 // pred_fallthru
      _
    // Predicated region
    $region30: #{prompt_generation_forward.1} parent=1 // pred_check
      _
    $region31: #{prompt_generation_forward.1} parent=1 // pred_check_branch
      %66 = sbr.rel (0) target = $region33
    $region32: #{prompt_generation_forward.1} parent=1 // pred_region
      %67 = dma.done [#allocation9], 976
    $region33: #{prompt_generation_forward.1} parent=1 // pred_fallthru
      _
    %v69 = vld [vmem:[#allocation3] sm:$0xf]
    %v70 = vld [vmem:[#allocation5] sm:$0xff]
    %v71 = vld [vmem:[#allocation5 + $0xac] sm:$0xff]
    %v72 = vld [vmem:[#allocation5 + $0x158] sm:$0xff]
    %v73 = vld [vmem:[#allocation5 + $0x204] sm:$0xff]
    %v74 = vld [vmem:[#allocation5 + $0x2b0] sm:$0xff]
    %v75 = vld [vmem:[#allocation5 + $0x35c] sm:$0xff]
    %v76 = vld [vmem:[#allocation5 + $0x408] sm:$0xff]
    %v77 = vld [vmem:[#allocation5 + $0x4b4] sm:$0xff]
    %v78 = vld [vmem:[#allocation5 + $0x560] sm:$0xff]
    %v79 = vld [vmem:[#allocation5 + $0x60c] sm:$0xff]
    %v80 = vld [vmem:[#allocation5 + $0x6b8] sm:$0xff]
    %v81 = vld [vmem:[#allocation5 + $0x764] sm:$0xff]
    %v82 = vld [vmem:[#allocation5 + $0x810] sm:$0xff]
    %v83 = vld [vmem:[#allocation5 + $0x8bc] sm:$0xff]
    %v84 = vld [vmem:[#allocation5 + $0x968] sm:$0xff]
    %v85 = vld [vmem:[#allocation5 + $0xa14] sm:$0xff]
    %v86 = vld [vmem:[#allocation5 + $0xac0] sm:$0xff]
    %v87 = vld [vmem:[#allocation5 + $0xb6c] sm:$0xff]
    %v88 = vld [vmem:[#allocation5 + $0xc18] sm:$0xff]
    %v89 = vld [vmem:[#allocation5 + $0xcc4] sm:$0xff]
    %v90 = vld [vmem:[#allocation5 + $0xd70] sm:$0xff]
    %v91 = vld [vmem:[#allocation5 + $0xe1c] sm:$0xff]
    %v92 = vld [vmem:[#allocation5 + $0xec8] sm:$0xff]
    %v93 = vld [vmem:[#allocation5 + $0xf74] sm:$0xff]
    %v94 = vld [vmem:[#allocation5 + $0x1020] sm:$0xff]
    %v95 = vld [vmem:[#allocation5 + $0x10cc] sm:$0xff]
    %v96 = vld [vmem:[#allocation5 + $0x1178] sm:$0xff]
    %v97 = vld [vmem:[#allocation5 + $0x1224] sm:$0xff]
    %v98 = vld [vmem:[#allocation5 + $0x12d0] sm:$0xff]
    %v99 = vld [vmem:[#allocation5 + $0x137c] sm:$0xff]
    %v100 = vld [vmem:[#allocation5 + $0x1428] sm:$0xff]
    %v101 = vld [vmem:[#allocation5 + $0x14d4] sm:$0xff]
    %v104 = vunpack.c.l.s4 1983009808
    %v105 = vunpack.c.0.s8 %v104
    %v106 = vlaneseq
    %v107 = vshrl.u32 %v106, 7
    %v108 = vsub.s32 %v105, %v107
    %v109 = vrot.slane %v69, %v108
    %v110 = vcombine.high %v109, %v109
    %v113 = vpack.c.bf16 %v109, %v109
    %v114 = vpack.c.bf16 %v110, %v110
    %v115 = vld [vmem:[#allocation8] sm:$0x3]
    %v117 = vlaneseq
    %v118 = vshrl.u32 %v117, 7
    %v119 = vsub.s32 0, %v118
    %v120 = vrot.slane %v115, %v119
    %v121 = vlaneseq
    %v122 = vshrl.u32 %v121, 7
    %v123 = vsub.s32 1, %v122
    %v124 = vrot.slane %v115, %v123
    %v159 = vunpack.c.l.b16 %v70
    %v160 = vunpack.c.h.b16 %v70
    %v161 = vunpack.c.l.b16 %v71
    %v162 = vunpack.c.h.b16 %v71
    %v163 = vunpack.c.l.b16 %v72
    %v164 = vunpack.c.h.b16 %v72
    %v165 = vunpack.c.l.b16 %v73
    %v166 = vunpack.c.h.b16 %v73
    %v167 = vunpack.c.l.b16 %v74
    %v168 = vunpack.c.h.b16 %v74
    %v169 = vunpack.c.l.b16 %v75
    %v170 = vunpack.c.h.b16 %v75
    %v171 = vunpack.c.l.b16 %v76
    %v172 = vunpack.c.h.b16 %v76
    %v173 = vunpack.c.l.b16 %v77
    %v174 = vunpack.c.h.b16 %v77
    %v175 = vunpack.c.l.b16 %v78
    %v176 = vunpack.c.h.b16 %v78
    %v177 = vunpack.c.l.b16 %v79
    %v178 = vunpack.c.h.b16 %v79
    %v179 = vunpack.c.l.b16 %v80
    %v180 = vunpack.c.h.b16 %v80
    %v181 = vunpack.c.l.b16 %v81
    %v182 = vunpack.c.h.b16 %v81
    %v183 = vunpack.c.l.b16 %v82
    %v184 = vunpack.c.h.b16 %v82
    %v185 = vunpack.c.l.b16 %v83
    %v186 = vunpack.c.h.b16 %v83
    %v187 = vunpack.c.l.b16 %v84
    %v188 = vunpack.c.h.b16 %v84
    %v189 = vunpack.c.l.b16 %v85
    %v190 = vunpack.c.h.b16 %v85
    %v191 = vunpack.c.l.b16 %v86
    %v192 = vunpack.c.h.b16 %v86
    %v193 = vunpack.c.l.b16 %v87
    %v194 = vunpack.c.h.b16 %v87
    %v195 = vunpack.c.l.b16 %v88
    %v196 = vunpack.c.h.b16 %v88
    %v197 = vunpack.c.l.b16 %v89
    %v198 = vunpack.c.h.b16 %v89
    %v199 = vunpack.c.l.b16 %v90
    %v200 = vunpack.c.h.b16 %v90
    %v201 = vunpack.c.l.b16 %v91
    %v202 = vunpack.c.h.b16 %v91
    %v203 = vunpack.c.l.b16 %v92
    %v204 = vunpack.c.h.b16 %v92
    %v205 = vunpack.c.l.b16 %v93
    %v206 = vunpack.c.h.b16 %v93
    %v207 = vunpack.c.l.b16 %v94
    %v208 = vunpack.c.h.b16 %v94
    %v209 = vunpack.c.l.b16 %v95
    %v210 = vunpack.c.h.b16 %v95
    %v211 = vunpack.c.l.b16 %v96
    %v212 = vunpack.c.h.b16 %v96
    %v213 = vunpack.c.l.b16 %v97
    %v214 = vunpack.c.h.b16 %v97
    %v215 = vunpack.c.l.b16 %v98
    %v216 = vunpack.c.h.b16 %v98
    %v217 = vunpack.c.l.b16 %v99
    %v218 = vunpack.c.h.b16 %v99
    %v219 = vunpack.c.l.b16 %v100
    %v220 = vunpack.c.h.b16 %v100
    %v221 = vunpack.c.l.b16 %v101
    %v222 = vunpack.c.h.b16 %v101
    %v223 = vpack.c.b16 %v161, %v159
    %v224 = vpack.c.b16 %v162, %v160
    %v225 = vpack.c.b16 %v165, %v163
    %v226 = vpack.c.b16 %v166, %v164
    %v227 = vpack.c.b16 %v169, %v167
    %v228 = vpack.c.b16 %v170, %v168
    %v229 = vpack.c.b16 %v173, %v171
    %v230 = vpack.c.b16 %v174, %v172
    %v231 = vpack.c.b16 %v177, %v175
    %v232 = vpack.c.b16 %v178, %v176
    %v233 = vpack.c.b16 %v181, %v179
    %v234 = vpack.c.b16 %v182, %v180
    %v235 = vpack.c.b16 %v185, %v183
    %v236 = vpack.c.b16 %v186, %v184
    %v237 = vpack.c.b16 %v189, %v187
    %v238 = vpack.c.b16 %v190, %v188
    %v239 = vpack.c.b16 %v193, %v191
    %v240 = vpack.c.b16 %v194, %v192
    %v241 = vpack.c.b16 %v197, %v195
    %v242 = vpack.c.b16 %v198, %v196
    %v243 = vpack.c.b16 %v201, %v199
    %v244 = vpack.c.b16 %v202, %v200
    %v245 = vpack.c.b16 %v205, %v203
    %v246 = vpack.c.b16 %v206, %v204
    %v247 = vpack.c.b16 %v209, %v207
    %v248 = vpack.c.b16 %v210, %v208
    %v249 = vpack.c.b16 %v213, %v211
    %v250 = vpack.c.b16 %v214, %v212
    %v251 = vpack.c.b16 %v217, %v215
    %v252 = vpack.c.b16 %v218, %v216
    %v253 = vpack.c.b16 %v221, %v219
    %v254 = vpack.c.b16 %v222, %v220
    %287 = vmatprep.subr.bf16.mxu0 %v224
    %288 = vmatpush1.bf16.msra.mxu0 %v223
    %289 = vmatprep.subr.bf16.mxu0 %v226
    %290 = vmatpush1.bf16.msra.mxu0 %v225
    %291 = vmatprep.subr.bf16.mxu0 %v228
    %292 = vmatpush1.bf16.msra.mxu0 %v227
    %293 = vmatprep.subr.bf16.mxu0 %v230
    %294 = vmatpush1.bf16.msra.mxu0 %v229
    %295 = vmatprep.subr.bf16.mxu0 %v232
    %296 = vmatpush1.bf16.msra.mxu0 %v231
    %297 = vmatprep.subr.bf16.mxu0 %v234
    %298 = vmatpush1.bf16.msra.mxu0 %v233
    %299 = vmatprep.subr.bf16.mxu0 %v236
    %300 = vmatpush1.bf16.msra.mxu0 %v235
    %301 = vmatprep.subr.bf16.mxu0 %v238
    %302 = vmatpush1.bf16.msra.mxu0 %v237
    %303 = vmatprep.subr.bf16.mxu0 %v240
    %304 = vmatpush1.bf16.msra.mxu0 %v239
    %305 = vmatprep.subr.bf16.mxu0 %v242
    %306 = vmatpush1.bf16.msra.mxu0 %v241
    %307 = vmatprep.subr.bf16.mxu0 %v244
    %308 = vmatpush1.bf16.msra.mxu0 %v243
    %309 = vmatprep.subr.bf16.mxu0 %v246
    %310 = vmatpush1.bf16.msra.mxu0 %v245
    %311 = vmatprep.subr.bf16.mxu0 %v248
    %312 = vmatpush1.bf16.msra.mxu0 %v247
    %313 = vmatprep.subr.bf16.mxu0 %v250
    %314 = vmatpush1.bf16.msra.mxu0 %v249
    %315 = vmatprep.subr.bf16.mxu0 %v252
    %316 = vmatpush1.bf16.msra.mxu0 %v251
    %317 = vmatprep.subr.bf16.mxu0 %v254
    %318 = vmatpush1.bf16.msra.mxu0 %v253
    %319 = vmatprep.mubr.bf16.mxu0 %v114
    %320 = vmatmul.mubr.bf16.gmra.mrb[0].mxu0 %v113
    %v321 = vpop.f32.mrb[0].mxu0
    %v322 = vadd.f32 %v120, %v321
    %v323 = vpop.f32.mrb[0].mxu0
    %v324 = vadd.f32 %v124, %v323
    %v325 = vpop.f32.mrb[0].mxu0
    %v326 = vpop.f32.mrb[0].mxu0
    %327 = vdwg.mxu0
    %v328 = vld [vmem:[#allocation8 + $0x2] sm:$0x3]
    %v329 = vld [vmem:[#allocation8 + $0x4] sm:$0x3]
    %vm330 = vcmask 1041408
    %v331 = vsel %vm330, %v322, 0.0
    %v332 = vsel %vm330, %v324, 0.0
    %v333 = vadd.f32 %v331, %v332
    %334 = vadd.xlane.f32.xlu0 %v333
    %v335 = vpop.xlane.xlu0 %334
    %v336 = vrcp.pop 256.0
    %v337 = vmul.f32 %v335, %v336
    %v338 = vsub.f32 %v322, %v337
    %v339 = vsub.f32 %v324, %v337
    %v340 = vmul.f32 %v338, %v338
    %v341 = vmul.f32 %v339, %v339
    %v342 = vsel %vm330, %v340, 0.0
    %v343 = vsel %vm330, %v341, 0.0
    %v344 = vadd.f32 %v342, %v343
    %345 = vadd.xlane.f32.xlu0 %v344
    %v346 = vpop.xlane.xlu0 %345
    %v347 = vmul.f32 %v346, %v336
    %v348 = vadd.f32 %v347, 1e-05
    %v349 = vrsqrt.pop %v348
    %v350 = vmul.f32 %v338, %v349
    %v351 = vmul.f32 %v339, %v349
    %v353 = vlaneseq
    %v354 = vshrl.u32 %v353, 7
    %v355 = vsub.s32 0, %v354
    %v356 = vrot.slane %v328, %v355
    %v357 = vlaneseq
    %v358 = vshrl.u32 %v357, 7
    %v359 = vsub.s32 1, %v358
    %v360 = vrot.slane %v328, %v359
    %v363 = vmul.f32 %v350, %v356
    %v364 = vmul.f32 %v351, %v360
    %v366 = vlaneseq
    %v367 = vshrl.u32 %v366, 7
    %v368 = vsub.s32 0, %v367
    %v369 = vrot.slane %v329, %v368
    %v370 = vlaneseq
    %v371 = vshrl.u32 %v370, 7
    %v372 = vsub.s32 1, %v371
    %v373 = vrot.slane %v329, %v372
    %v376 = vadd.f32 %v363, %v369
    %v377 = vadd.f32 %v364, %v373
    %v378 = vmul.f32 %v376, 0.5
    %v379 = vmul.f32 %v377, 0.5
    %v380 = vmul.f32 %v376, 0.70710677
    %v381 = vmul.f32 %v377, 0.70710677
    %vm382 = vcmp.ge.f32.partialorder %v380, 0.0
    %vm383 = vcmp.ge.f32.partialorder %v381, 0.0
    %v384 = vsel %vm382, 1.0, -1.0
    %v385 = vsel %vm383, 1.0, -1.0
    %v386 = vand.u32 2147483647, %v380
    %v387 = vand.u32 2147483647, %v381
    %v388 = vmul.f32 %v386, 0.3275911
    %v389 = vmul.f32 %v387, 0.3275911
    %v390 = vadd.f32 %v388, 1.0
    %v391 = vadd.f32 %v389, 1.0
    %v392 = vrcp.pop %v390
    %v393 = vmul.f32 1.0, %v392
    %v394 = vrcp.pop %v391
    %v395 = vmul.f32 1.0, %v394
    %v396 = vmul.f32 %v393, 1.0614054
    %v397 = vmul.f32 %v395, 1.0614054
    %v398 = vadd.f32 %v396, -1.4531521
    %v399 = vadd.f32 %v397, -1.4531521
    %v400 = vmul.f32 %v398, %v393
    %v401 = vmul.f32 %v399, %v395
    %v402 = vadd.f32 %v400, 1.4214138
    %v403 = vadd.f32 %v401, 1.4214138
    %v404 = vmul.f32 %v402, %v393
    %v405 = vmul.f32 %v403, %v395
    %v406 = vadd.f32 %v404, -0.28449672
    %v407 = vadd.f32 %v405, -0.28449672
    %v408 = vmul.f32 %v406, %v393
    %v409 = vmul.f32 %v407, %v395
    %v410 = vadd.f32 %v408, 0.2548296
    %v411 = vadd.f32 %v409, 0.2548296
    %v412 = vmul.f32 %v410, %v393
    %v413 = vmul.f32 %v411, %v395
    %v414 = vsub.f32 0.0, %v386
    %v415 = vsub.f32 0.0, %v387
    %v416 = vmul.f32 %v414, %v386
    %v417 = vmul.f32 %v415, %v387
    %v418 = vmul.f32 %v416, 1.442695
    %v419 = vpow.pop %v418
    %v420 = vmul.f32 %v417, 1.442695
    %v421 = vpow.pop %v420
    %v422 = vmul.f32 %v412, %v419
    %v423 = vmul.f32 %v413, %v421
    %v424 = vsub.f32 1.0, %v422
    %v425 = vsub.f32 1.0, %v423
    %v426 = vmul.f32 %v384, %v424
    %v427 = vmul.f32 %v385, %v425
    %v428 = vadd.f32 %v426, 1.0
    %v429 = vadd.f32 %v427, 1.0
    %v430 = vmul.f32 %v378, %v428
    %v431 = vmul.f32 %v379, %v429
    %v432 = vld [vmem:[#allocation5 + $0x8] sm:$0xf]
    %v433 = vld [vmem:[#allocation5 + $0xb4] sm:$0xf]
    %v434 = vld [vmem:[#allocation5 + $0x160] sm:$0xf]
    %v435 = vld [vmem:[#allocation5 + $0x20c] sm:$0xf]
    %v436 = vld [vmem:[#allocation5 + $0x2b8] sm:$0xf]
    %v437 = vld [vmem:[#allocation5 + $0x364] sm:$0xf]
    %v438 = vld [vmem:[#allocation5 + $0x410] sm:$0xf]
    %v439 = vld [vmem:[#allocation5 + $0x4bc] sm:$0xf]
    %v440 = vld [vmem:[#allocation5 + $0x568] sm:$0xf]
    %v441 = vld [vmem:[#allocation5 + $0x614] sm:$0xf]
    %v442 = vld [vmem:[#allocation5 + $0x6c0] sm:$0xf]
    %v443 = vld [vmem:[#allocation5 + $0x76c] sm:$0xf]
    %v444 = vld [vmem:[#allocation5 + $0x818] sm:$0xf]
    %v445 = vld [vmem:[#allocation5 + $0x8c4] sm:$0xf]
    %v446 = vld [vmem:[#allocation5 + $0x970] sm:$0xf]
    %v447 = vld [vmem:[#allocation5 + $0xa1c] sm:$0xf]
    %v448 = vld [vmem:[#allocation5 + $0xac8] sm:$0xf]
    %v449 = vld [vmem:[#allocation5 + $0xb74] sm:$0xf]
    %v450 = vld [vmem:[#allocation5 + $0xc20] sm:$0xf]
    %v451 = vld [vmem:[#allocation5 + $0xccc] sm:$0xf]
    %v452 = vld [vmem:[#allocation5 + $0xd78] sm:$0xf]
    %v453 = vld [vmem:[#allocation5 + $0xe24] sm:$0xf]
    %v454 = vld [vmem:[#allocation5 + $0xed0] sm:$0xf]
    %v455 = vld [vmem:[#allocation5 + $0xf7c] sm:$0xf]
    %v456 = vld [vmem:[#allocation5 + $0x1028] sm:$0xf]
    %v457 = vld [vmem:[#allocation5 + $0x10d4] sm:$0xf]
    %v458 = vld [vmem:[#allocation5 + $0x1180] sm:$0xf]
    %v459 = vld [vmem:[#allocation5 + $0x122c] sm:$0xf]
    %v460 = vld [vmem:[#allocation5 + $0x12d8] sm:$0xf]
    %v461 = vld [vmem:[#allocation5 + $0x1384] sm:$0xf]
    %v462 = vld [vmem:[#allocation5 + $0x1430] sm:$0xf]
    %v463 = vld [vmem:[#allocation5 + $0x14dc] sm:$0xf]
    %v464 = vpack.c.bf16 %v430, %v430
    %v465 = vpack.c.bf16 %v431, %v431
    %v466 = vld [vmem:[#allocation8 + $0x6] sm:$0x1]
    %v468 = vlaneseq
    %v469 = vshrl.u32 %v468, 7
    %v470 = vsub.s32 0, %v469
    %v471 = vrot.slane %v466, %v470
    %v505 = vunpack.c.l.b16 %v432
    %v506 = vunpack.c.l.b16 %v433
    %v507 = vunpack.c.l.b16 %v434
    %v508 = vunpack.c.l.b16 %v435
    %v509 = vunpack.c.l.b16 %v436
    %v510 = vunpack.c.l.b16 %v437
    %v511 = vunpack.c.l.b16 %v438
    %v512 = vunpack.c.l.b16 %v439
    %v513 = vunpack.c.l.b16 %v440
    %v514 = vunpack.c.l.b16 %v441
    %v515 = vunpack.c.l.b16 %v442
    %v516 = vunpack.c.l.b16 %v443
    %v517 = vunpack.c.l.b16 %v444
    %v518 = vunpack.c.l.b16 %v445
    %v519 = vunpack.c.l.b16 %v446
    %v520 = vunpack.c.l.b16 %v447
    %v521 = vunpack.c.l.b16 %v448
    %v522 = vunpack.c.l.b16 %v449
    %v523 = vunpack.c.l.b16 %v450
    %v524 = vunpack.c.l.b16 %v451
    %v525 = vunpack.c.l.b16 %v452
    %v526 = vunpack.c.l.b16 %v453
    %v527 = vunpack.c.l.b16 %v454
    %v528 = vunpack.c.l.b16 %v455
    %v529 = vunpack.c.l.b16 %v456
    %v530 = vunpack.c.l.b16 %v457
    %v531 = vunpack.c.l.b16 %v458
    %v532 = vunpack.c.l.b16 %v459
    %v533 = vunpack.c.l.b16 %v460
    %v534 = vunpack.c.l.b16 %v461
    %v535 = vunpack.c.l.b16 %v462
    %v536 = vunpack.c.l.b16 %v463
    %v537 = vpack.c.b16 %v506, %v505
    %v538 = vpack.c.b16 %v508, %v507
    %v539 = vpack.c.b16 %v510, %v509
    %v540 = vpack.c.b16 %v512, %v511
    %v541 = vpack.c.b16 %v514, %v513
    %v542 = vpack.c.b16 %v516, %v515
    %v543 = vpack.c.b16 %v518, %v517
    %v544 = vpack.c.b16 %v520, %v519
    %v545 = vpack.c.b16 %v522, %v521
    %v546 = vpack.c.b16 %v524, %v523
    %v547 = vpack.c.b16 %v526, %v525
    %v548 = vpack.c.b16 %v528, %v527
    %v549 = vpack.c.b16 %v530, %v529
    %v550 = vpack.c.b16 %v532, %v531
    %v551 = vpack.c.b16 %v534, %v533
    %v552 = vpack.c.b16 %v536, %v535
    %569 = vmatprep.subr.bf16.mxu0 0
    %570 = vmatpush1.bf16.msra.mxu0 %v537
    %571 = vmatprep.subr.bf16.mxu0 0
    %572 = vmatpush1.bf16.msra.mxu0 %v538
    %573 = vmatprep.subr.bf16.mxu0 0
    %574 = vmatpush1.bf16.msra.mxu0 %v539
    %575 = vmatprep.subr.bf16.mxu0 0
    %576 = vmatpush1.bf16.msra.mxu0 %v540
    %577 = vmatprep.subr.bf16.mxu0 0
    %578 = vmatpush1.bf16.msra.mxu0 %v541
    %579 = vmatprep.subr.bf16.mxu0 0
    %580 = vmatpush1.bf16.msra.mxu0 %v542
    %581 = vmatprep.subr.bf16.mxu0 0
    %582 = vmatpush1.bf16.msra.mxu0 %v543
    %583 = vmatprep.subr.bf16.mxu0 0
    %584 = vmatpush1.bf16.msra.mxu0 %v544
    %585 = vmatprep.subr.bf16.mxu0 0
    %586 = vmatpush1.bf16.msra.mxu0 %v545
    %587 = vmatprep.subr.bf16.mxu0 0
    %588 = vmatpush1.bf16.msra.mxu0 %v546
    %589 = vmatprep.subr.bf16.mxu0 0
    %590 = vmatpush1.bf16.msra.mxu0 %v547
    %591 = vmatprep.subr.bf16.mxu0 0
    %592 = vmatpush1.bf16.msra.mxu0 %v548
    %593 = vmatprep.subr.bf16.mxu0 0
    %594 = vmatpush1.bf16.msra.mxu0 %v549
    %595 = vmatprep.subr.bf16.mxu0 0
    %596 = vmatpush1.bf16.msra.mxu0 %v550
    %597 = vmatprep.subr.bf16.mxu0 0
    %598 = vmatpush1.bf16.msra.mxu0 %v551
    %599 = vmatprep.subr.bf16.mxu0 0
    %600 = vmatpush1.bf16.msra.mxu0 %v552
    %601 = vmatprep.mubr.bf16.mxu0 %v465
    %602 = vmatmul.mubr.bf16.gmra.mrb[0].mxu0 %v464
    %v603 = vpop.f32.mrb[0].mxu0
    %v604 = vadd.f32 %v471, %v603
    %v605 = vpop.f32.mrb[0].mxu0
    %v606 = vpop.f32.mrb[0].mxu0
    %v607 = vpop.f32.mrb[0].mxu0
    %608 = vdwg.mxu0
    %v609 = vld [vmem:[#allocation8 + $0x7] sm:$0x1]
    %v610 = vld [vmem:[#allocation8 + $0x8] sm:$0x1]
    %v611 = vsel %vm330, %v604, 0.0
    %612 = vadd.xlane.f32.xlu0 %v611
    %v613 = vpop.xlane.xlu0 %612
    %v614 = vrcp.pop 128.0
    %v615 = vmul.f32 %v613, %v614
    %v616 = vsub.f32 %v604, %v615
    %v617 = vmul.f32 %v616, %v616
    %v618 = vsel %vm330, %v617, 0.0
    %619 = vadd.xlane.f32.xlu0 %v618
    %v620 = vpop.xlane.xlu0 %619
    %v621 = vmul.f32 %v620, %v614
    %v622 = vadd.f32 %v621, 1e-05
    %v623 = vrsqrt.pop %v622
    %v624 = vmul.f32 %v616, %v623
    %v626 = vlaneseq
    %v627 = vshrl.u32 %v626, 7
    %v628 = vsub.s32 0, %v627
    %v629 = vrot.slane %v609, %v628
    %v631 = vmul.f32 %v624, %v629
    %v633 = vlaneseq
    %v634 = vshrl.u32 %v633, 7
    %v635 = vsub.s32 0, %v634
    %v636 = vrot.slane %v610, %v635
    %v638 = vadd.f32 %v631, %v636
    %v639 = vmul.f32 %v638, 0.5
    %v640 = vmul.f32 %v638, 0.70710677
    %vm641 = vcmp.ge.f32.partialorder %v640, 0.0
    %v642 = vsel %vm641, 1.0, -1.0
    %v643 = vand.u32 2147483647, %v640
    %v644 = vmul.f32 %v643, 0.3275911
    %v645 = vadd.f32 %v644, 1.0
    %v646 = vrcp.pop %v645
    %v647 = vmul.f32 1.0, %v646
    %v648 = vmul.f32 %v647, 1.0614054
    %v649 = vadd.f32 %v648, -1.4531521
    %v650 = vmul.f32 %v649, %v647
    %v651 = vadd.f32 %v650, 1.4214138
    %v652 = vmul.f32 %v651, %v647
    %v653 = vadd.f32 %v652, -0.28449672
    %v654 = vmul.f32 %v653, %v647
    %v655 = vadd.f32 %v654, 0.2548296
    %v656 = vmul.f32 %v655, %v647
    %v657 = vsub.f32 0.0, %v643
    %v658 = vmul.f32 %v657, %v643
    %v659 = vmul.f32 %v658, 1.442695
    %v660 = vpow.pop %v659
    %v661 = vmul.f32 %v656, %v660
    %v662 = vsub.f32 1.0, %v661
    %v663 = vmul.f32 %v642, %v662
    %v664 = vadd.f32 %v663, 1.0
    %v665 = vmul.f32 %v639, %v664
    %v666 = vld [vmem:[#allocation7] sm:$0xff]
    %v667 = vld [vmem:[#allocation7 + $0x8] sm:$0xff]
    %v668 = vld [vmem:[#allocation7 + $0x10] sm:$0xff]
    %v669 = vld [vmem:[#allocation7 + $0x18] sm:$0xff]
    %v670 = vld [vmem:[#allocation7 + $0x20] sm:$0xff]
    %v671 = vld [vmem:[#allocation7 + $0x28] sm:$0xff]
    %v672 = vld [vmem:[#allocation7 + $0x30] sm:$0xff]
    %v673 = vld [vmem:[#allocation7 + $0x38] sm:$0xff]
    %v674 = vld [vmem:[#allocation7 + $0x40] sm:$0xff]
    %v675 = vld [vmem:[#allocation7 + $0x48] sm:$0xff]
    %v676 = vld [vmem:[#allocation7 + $0x50] sm:$0xff]
    %v677 = vld [vmem:[#allocation7 + $0x58] sm:$0xff]
    %v678 = vld [vmem:[#allocation7 + $0x60] sm:$0xff]
    %v679 = vld [vmem:[#allocation7 + $0x68] sm:$0xff]
    %v680 = vld [vmem:[#allocation7 + $0x70] sm:$0xff]
    %v681 = vld [vmem:[#allocation7 + $0x78] sm:$0xff]
    %v682 = vld [vmem:[#allocation7 + $0x80] sm:$0xff]
    %v683 = vld [vmem:[#allocation7 + $0x88] sm:$0xff]
    %v684 = vld [vmem:[#allocation7 + $0x90] sm:$0xff]
    %v685 = vld [vmem:[#allocation7 + $0x98] sm:$0xff]
    %v686 = vld [vmem:[#allocation7 + $0xa0] sm:$0xff]
    %v687 = vld [vmem:[#allocation7 + $0xa8] sm:$0xff]
    %v688 = vld [vmem:[#allocation7 + $0xb0] sm:$0xff]
    %v689 = vld [vmem:[#allocation7 + $0xb8] sm:$0xff]
    %v690 = vld [vmem:[#allocation7 + $0xc0] sm:$0xff]
    %v691 = vld [vmem:[#allocation7 + $0xc8] sm:$0xff]
    %v692 = vld [vmem:[#allocation7 + $0xd0] sm:$0xff]
    %v693 = vld [vmem:[#allocation7 + $0xd8] sm:$0xff]
    %v694 = vld [vmem:[#allocation7 + $0xe0] sm:$0xff]
    %v695 = vld [vmem:[#allocation7 + $0xe8] sm:$0xff]
    %v696 = vld [vmem:[#allocation7 + $0xf0] sm:$0xff]
    %v697 = vld [vmem:[#allocation7 + $0xf8] sm:$0xff]
    %v698 = vpack.c.bf16 %v665, %v665
    %v699 = vld [vmem:[#allocation8 + $0x9] sm:$0xf]
    %v701 = vlaneseq
    %v702 = vshrl.u32 %v701, 7
    %v703 = vsub.s32 0, %v702
    %v704 = vrot.slane %v699, %v703
    %v705 = vlaneseq
    %v706 = vshrl.u32 %v705, 7
    %v707 = vsub.s32 1, %v706
    %v708 = vrot.slane %v699, %v707
    %v709 = vlaneseq
    %v710 = vshrl.u32 %v709, 7
    %v711 = vsub.s32 2, %v710
    %v712 = vrot.slane %v699, %v711
    %v713 = vlaneseq
    %v714 = vshrl.u32 %v713, 7
    %v715 = vsub.s32 3, %v714
    %v716 = vrot.slane %v699, %v715
    %v753 = vunpack.c.l.b16 %v666
    %v754 = vunpack.c.h.b16 %v666
    %v755 = vunpack.c.l.b16 %v667
    %v756 = vunpack.c.h.b16 %v667
    %v757 = vunpack.c.l.b16 %v668
    %v758 = vunpack.c.h.b16 %v668
    %v759 = vunpack.c.l.b16 %v669
    %v760 = vunpack.c.h.b16 %v669
    %v761 = vunpack.c.l.b16 %v670
    %v762 = vunpack.c.h.b16 %v670
    %v763 = vunpack.c.l.b16 %v671
    %v764 = vunpack.c.h.b16 %v671
    %v765 = vunpack.c.l.b16 %v672
    %v766 = vunpack.c.h.b16 %v672
    %v767 = vunpack.c.l.b16 %v673
    %v768 = vunpack.c.h.b16 %v673
    %v769 = vunpack.c.l.b16 %v674
    %v770 = vunpack.c.h.b16 %v674
    %v771 = vunpack.c.l.b16 %v675
    %v772 = vunpack.c.h.b16 %v675
    %v773 = vunpack.c.l.b16 %v676
    %v774 = vunpack.c.h.b16 %v676
    %v775 = vunpack.c.l.b16 %v677
    %v776 = vunpack.c.h.b16 %v677
    %v777 = vunpack.c.l.b16 %v678
    %v778 = vunpack.c.h.b16 %v678
    %v779 = vunpack.c.l.b16 %v679
    %v780 = vunpack.c.h.b16 %v679
    %v781 = vunpack.c.l.b16 %v680
    %v782 = vunpack.c.h.b16 %v680
    %v783 = vunpack.c.l.b16 %v681
    %v784 = vunpack.c.h.b16 %v681
    %v785 = vunpack.c.l.b16 %v682
    %v786 = vunpack.c.h.b16 %v682
    %v787 = vunpack.c.l.b16 %v683
    %v788 = vunpack.c.h.b16 %v683
    %v789 = vunpack.c.l.b16 %v684
    %v790 = vunpack.c.h.b16 %v684
    %v791 = vunpack.c.l.b16 %v685
    %v792 = vunpack.c.h.b16 %v685
    %v793 = vunpack.c.l.b16 %v686
    %v794 = vunpack.c.h.b16 %v686
    %v795 = vunpack.c.l.b16 %v687
    %v796 = vunpack.c.h.b16 %v687
    %v797 = vunpack.c.l.b16 %v688
    %v798 = vunpack.c.h.b16 %v688
    %v799 = vunpack.c.l.b16 %v689
    %v800 = vunpack.c.h.b16 %v689
    %v801 = vunpack.c.l.b16 %v690
    %v802 = vunpack.c.h.b16 %v690
    %v803 = vunpack.c.l.b16 %v691
    %v804 = vunpack.c.h.b16 %v691
    %v805 = vunpack.c.l.b16 %v692
    %v806 = vunpack.c.h.b16 %v692
    %v807 = vunpack.c.l.b16 %v693
    %v808 = vunpack.c.h.b16 %v693
    %v809 = vunpack.c.l.b16 %v694
    %v810 = vunpack.c.h.b16 %v694
    %v811 = vunpack.c.l.b16 %v695
    %v812 = vunpack.c.h.b16 %v695
    %v813 = vunpack.c.l.b16 %v696
    %v814 = vunpack.c.h.b16 %v696
    %v815 = vunpack.c.l.b16 %v697
    %v816 = vunpack.c.h.b16 %v697
    %v817 = vpack.c.b16 %v757, %v753
    %v818 = vpack.c.b16 %v758, %v754
    %v819 = vpack.c.b16 %v759, %v755
    %v820 = vpack.c.b16 %v760, %v756
    %v821 = vpack.c.b16 %v765, %v761
    %v822 = vpack.c.b16 %v766, %v762
    %v823 = vpack.c.b16 %v767, %v763
    %v824 = vpack.c.b16 %v768, %v764
    %v825 = vpack.c.b16 %v773, %v769
    %v826 = vpack.c.b16 %v774, %v770
    %v827 = vpack.c.b16 %v775, %v771
    %v828 = vpack.c.b16 %v776, %v772
    %v829 = vpack.c.b16 %v781, %v777
    %v830 = vpack.c.b16 %v782, %v778
    %v831 = vpack.c.b16 %v783, %v779
    %v832 = vpack.c.b16 %v784, %v780
    %v833 = vpack.c.b16 %v789, %v785
    %v834 = vpack.c.b16 %v790, %v786
    %v835 = vpack.c.b16 %v791, %v787
    %v836 = vpack.c.b16 %v792, %v788
    %v837 = vpack.c.b16 %v797, %v793
    %v838 = vpack.c.b16 %v798, %v794
    %v839 = vpack.c.b16 %v799, %v795
    %v840 = vpack.c.b16 %v800, %v796
    %v841 = vpack.c.b16 %v805, %v801
    %v842 = vpack.c.b16 %v806, %v802
    %v843 = vpack.c.b16 %v807, %v803
    %v844 = vpack.c.b16 %v808, %v804
    %v845 = vpack.c.b16 %v813, %v809
    %v846 = vpack.c.b16 %v814, %v810
    %v847 = vpack.c.b16 %v815, %v811
    %v848 = vpack.c.b16 %v816, %v812
    %881 = vmatprep.subr.bf16.mxu0 %v818
    %882 = vmatpush1.bf16.msra.mxu0 %v817
    %883 = vmatprep.subr.bf16.mxu0 %v822
    %884 = vmatpush1.bf16.msra.mxu0 %v821
    %885 = vmatprep.subr.bf16.mxu0 %v826
    %886 = vmatpush1.bf16.msra.mxu0 %v825
    %887 = vmatprep.subr.bf16.mxu0 %v830
    %888 = vmatpush1.bf16.msra.mxu0 %v829
    %889 = vmatprep.subr.bf16.mxu0 %v834
    %890 = vmatpush1.bf16.msra.mxu0 %v833
    %891 = vmatprep.subr.bf16.mxu0 %v838
    %892 = vmatpush1.bf16.msra.mxu0 %v837
    %893 = vmatprep.subr.bf16.mxu0 %v842
    %894 = vmatpush1.bf16.msra.mxu0 %v841
    %895 = vmatprep.subr.bf16.mxu0 %v846
    %896 = vmatpush1.bf16.msra.mxu0 %v845
    %897 = vmatprep.subr.bf16.mxu0 0
    %898 = vmatpush1.bf16.msra.mxu0 0
    %899 = vmatprep.subr.bf16.mxu0 0
    %900 = vmatpush1.bf16.msra.mxu0 0
    %901 = vmatprep.subr.bf16.mxu0 0
    %902 = vmatpush1.bf16.msra.mxu0 0
    %903 = vmatprep.subr.bf16.mxu0 0
    %904 = vmatpush1.bf16.msra.mxu0 0
    %905 = vmatprep.subr.bf16.mxu0 0
    %906 = vmatpush1.bf16.msra.mxu0 0
    %907 = vmatprep.subr.bf16.mxu0 0
    %908 = vmatpush1.bf16.msra.mxu0 0
    %909 = vmatprep.subr.bf16.mxu0 0
    %910 = vmatpush1.bf16.msra.mxu0 0
    %911 = vmatprep.subr.bf16.mxu0 0
    %912 = vmatpush1.bf16.msra.mxu0 0
    %913 = vmatprep.mubr.bf16.mxu0 0
    %914 = vmatmul.mubr.bf16.gmra.mrb[0].mxu0 %v698
    %v915 = vpop.f32.mrb[0].mxu0
    %v916 = vadd.f32 %v704, %v915
    %v917 = vpop.f32.mrb[0].mxu0
    %v918 = vadd.f32 %v708, %v917
    %v919 = vpop.f32.mrb[0].mxu0
    %v920 = vpop.f32.mrb[0].mxu0
    %921 = vdwg.mxu0
    %922 = vmatprep.subr.bf16.mxu0 %v820
    %923 = vmatpush1.bf16.msra.mxu0 %v819
    %924 = vmatprep.subr.bf16.mxu0 %v824
    %925 = vmatpush1.bf16.msra.mxu0 %v823
    %926 = vmatprep.subr.bf16.mxu0 %v828
    %927 = vmatpush1.bf16.msra.mxu0 %v827
    %928 = vmatprep.subr.bf16.mxu0 %v832
    %929 = vmatpush1.bf16.msra.mxu0 %v831
    %930 = vmatprep.subr.bf16.mxu0 %v836
    %931 = vmatpush1.bf16.msra.mxu0 %v835
    %932 = vmatprep.subr.bf16.mxu0 %v840
    %933 = vmatpush1.bf16.msra.mxu0 %v839
    %934 = vmatprep.subr.bf16.mxu0 %v844
    %935 = vmatpush1.bf16.msra.mxu0 %v843
    %936 = vmatprep.subr.bf16.mxu0 %v848
    %937 = vmatpush1.bf16.msra.mxu0 %v847
    %938 = vmatprep.subr.bf16.mxu0 0
    %939 = vmatpush1.bf16.msra.mxu0 0
    %940 = vmatprep.subr.bf16.mxu0 0
    %941 = vmatpush1.bf16.msra.mxu0 0
    %942 = vmatprep.subr.bf16.mxu0 0
    %943 = vmatpush1.bf16.msra.mxu0 0
    %944 = vmatprep.subr.bf16.mxu0 0
    %945 = vmatpush1.bf16.msra.mxu0 0
    %946 = vmatprep.subr.bf16.mxu0 0
    %947 = vmatpush1.bf16.msra.mxu0 0
    %948 = vmatprep.subr.bf16.mxu0 0
    %949 = vmatpush1.bf16.msra.mxu0 0
    %950 = vmatprep.subr.bf16.mxu0 0
    %951 = vmatpush1.bf16.msra.mxu0 0
    %952 = vmatprep.subr.bf16.mxu0 0
    %953 = vmatpush1.bf16.msra.mxu0 0
    %954 = vmatprep.mubr.bf16.mxu0 0
    %955 = vmatmul.mubr.bf16.gmra.mrb[0].mxu0 %v698
    %v956 = vpop.f32.mrb[0].mxu0
    %v957 = vadd.f32 %v712, %v956
    %v958 = vpop.f32.mrb[0].mxu0
    %v959 = vadd.f32 %v716, %v958
    %v960 = vpop.f32.mrb[0].mxu0
    %v961 = vpop.f32.mrb[0].mxu0
    %962 = vdwg.mxu0
    %v963 = vld [vmem:[#allocation8 + $0xd] sm:$0x3]
    %v964 = vld [vmem:[#allocation8 + $0x11] sm:$0x3]
    %v965 = vsel %vm330, %v916, 0.0
    %v966 = vsel %vm330, %v918, 0.0
    %v967 = vadd.f32 %v965, %v966
    %968 = vadd.xlane.f32.xlu0 %v967
    %v969 = vpop.xlane.xlu0 %968
    %v970 = vmul.f32 %v969, %v336
    %v971 = vsub.f32 %v916, %v970
    %v972 = vsub.f32 %v918, %v970
    %v973 = vmul.f32 %v971, %v971
    %v974 = vmul.f32 %v972, %v972
    %v975 = vsel %vm330, %v973, 0.0
    %v976 = vsel %vm330, %v974, 0.0
    %v977 = vadd.f32 %v975, %v976
    %978 = vadd.xlane.f32.xlu0 %v977
    %v979 = vpop.xlane.xlu0 %978
    %v980 = vmul.f32 %v979, %v336
    %v981 = vadd.f32 %v980, 1e-05
    %v982 = vrsqrt.pop %v981
    %v983 = vmul.f32 %v971, %v982
    %v984 = vmul.f32 %v972, %v982
    %v986 = vlaneseq
    %v987 = vshrl.u32 %v986, 7
    %v988 = vsub.s32 0, %v987
    %v989 = vrot.slane %v963, %v988
    %v990 = vlaneseq
    %v991 = vshrl.u32 %v990, 7
    %v992 = vsub.s32 1, %v991
    %v993 = vrot.slane %v963, %v992
    %v996 = vmul.f32 %v983, %v989
    %v997 = vmul.f32 %v984, %v993
    %v999 = vlaneseq
    %v1000 = vshrl.u32 %v999, 7
    %v1001 = vsub.s32 0, %v1000
    %v1002 = vrot.slane %v964, %v1001
    %v1003 = vlaneseq
    %v1004 = vshrl.u32 %v1003, 7
    %v1005 = vsub.s32 1, %v1004
    %v1006 = vrot.slane %v964, %v1005
    %v1009 = vadd.f32 %v996, %v1002
    %v1010 = vadd.f32 %v997, %v1006
    %v1011 = vmul.f32 %v1009, 0.5
    %v1012 = vmul.f32 %v1010, 0.5
    %v1013 = vmul.f32 %v1009, 0.70710677
    %v1014 = vmul.f32 %v1010, 0.70710677
    %vm1015 = vcmp.ge.f32.partialorder %v1013, 0.0
    %vm1016 = vcmp.ge.f32.partialorder %v1014, 0.0
    %v1017 = vsel %vm1015, 1.0, -1.0
    %v1018 = vsel %vm1016, 1.0, -1.0
    %v1019 = vand.u32 2147483647, %v1013
    %v1020 = vand.u32 2147483647, %v1014
    %v1021 = vmul.f32 %v1019, 0.3275911
    %v1022 = vmul.f32 %v1020, 0.3275911
    %v1023 = vadd.f32 %v1021, 1.0
    %v1024 = vadd.f32 %v1022, 1.0
    %v1025 = vrcp.pop %v1023
    %v1026 = vmul.f32 1.0, %v1025
    %v1027 = vrcp.pop %v1024
    %v1028 = vmul.f32 1.0, %v1027
    %v1029 = vmul.f32 %v1026, 1.0614054
    %v1030 = vmul.f32 %v1028, 1.0614054
    %v1031 = vadd.f32 %v1029, -1.4531521
    %v1032 = vadd.f32 %v1030, -1.4531521
    %v1033 = vmul.f32 %v1031, %v1026
    %v1034 = vmul.f32 %v1032, %v1028
    %v1035 = vadd.f32 %v1033, 1.4214138
    %v1036 = vadd.f32 %v1034, 1.4214138
    %v1037 = vmul.f32 %v1035, %v1026
    %v1038 = vmul.f32 %v1036, %v1028
    %v1039 = vadd.f32 %v1037, -0.28449672
    %v1040 = vadd.f32 %v1038, -0.28449672
    %v1041 = vmul.f32 %v1039, %v1026
    %v1042 = vmul.f32 %v1040, %v1028
    %v1043 = vadd.f32 %v1041, 0.2548296
    %v1044 = vadd.f32 %v1042, 0.2548296
    %v1045 = vmul.f32 %v1043, %v1026
    %v1046 = vmul.f32 %v1044, %v1028
    %v1047 = vsub.f32 0.0, %v1019
    %v1048 = vsub.f32 0.0, %v1020
    %v1049 = vmul.f32 %v1047, %v1019
    %v1050 = vmul.f32 %v1048, %v1020
    %v1051 = vmul.f32 %v1049, 1.442695
    %v1052 = vpow.pop %v1051
    %v1053 = vmul.f32 %v1050, 1.442695
    %v1054 = vpow.pop %v1053
    %v1055 = vmul.f32 %v1045, %v1052
    %v1056 = vmul.f32 %v1046, %v1054
    %v1057 = vsub.f32 1.0, %v1055
    %v1058 = vsub.f32 1.0, %v1056
    %v1059 = vmul.f32 %v1017, %v1057
    %v1060 = vmul.f32 %v1018, %v1058
    %v1061 = vadd.f32 %v1059, 1.0
    %v1062 = vadd.f32 %v1060, 1.0
    %v1063 = vmul.f32 %v1011, %v1061
    %v1064 = vmul.f32 %v1012, %v1062
    %v1065 = vld [vmem:[#allocation8 + $0xf] sm:$0x3]
    %v1066 = vld [vmem:[#allocation8 + $0x13] sm:$0x3]
    %v1067 = vsel %vm330, %v957, 0.0
    %v1068 = vsel %vm330, %v959, 0.0
    %v1069 = vadd.f32 %v1067, %v1068
    %1070 = vadd.xlane.f32.xlu0 %v1069
    %v1071 = vpop.xlane.xlu0 %1070
    %v1072 = vmul.f32 %v1071, %v336
    %v1073 = vsub.f32 %v957, %v1072
    %v1074 = vsub.f32 %v959, %v1072
    %v1075 = vmul.f32 %v1073, %v1073
    %v1076 = vmul.f32 %v1074, %v1074
    %v1077 = vsel %vm330, %v1075, 0.0
    %v1078 = vsel %vm330, %v1076, 0.0
    %v1079 = vadd.f32 %v1077, %v1078
    %1080 = vadd.xlane.f32.xlu0 %v1079
    %v1081 = vpop.xlane.xlu0 %1080
    %v1082 = vmul.f32 %v1081, %v336
    %v1083 = vadd.f32 %v1082, 1e-05
    %v1084 = vrsqrt.pop %v1083
    %v1085 = vmul.f32 %v1073, %v1084
    %v1086 = vmul.f32 %v1074, %v1084
    %v1088 = vlaneseq
    %v1089 = vshrl.u32 %v1088, 7
    %v1090 = vsub.s32 0, %v1089
    %v1091 = vrot.slane %v1065, %v1090
    %v1092 = vlaneseq
    %v1093 = vshrl.u32 %v1092, 7
    %v1094 = vsub.s32 1, %v1093
    %v1095 = vrot.slane %v1065, %v1094
    %v1098 = vmul.f32 %v1085, %v1091
    %v1099 = vmul.f32 %v1086, %v1095
    %v1101 = vlaneseq
    %v1102 = vshrl.u32 %v1101, 7
    %v1103 = vsub.s32 0, %v1102
    %v1104 = vrot.slane %v1066, %v1103
    %v1105 = vlaneseq
    %v1106 = vshrl.u32 %v1105, 7
    %v1107 = vsub.s32 1, %v1106
    %v1108 = vrot.slane %v1066, %v1107
    %v1111 = vadd.f32 %v1098, %v1104
    %v1112 = vadd.f32 %v1099, %v1108
    %v1113 = vmul.f32 %v1111, 0.5
    %v1114 = vmul.f32 %v1112, 0.5
    %v1115 = vmul.f32 %v1111, 0.70710677
    %v1116 = vmul.f32 %v1112, 0.70710677
    %vm1117 = vcmp.ge.f32.partialorder %v1115, 0.0
    %vm1118 = vcmp.ge.f32.partialorder %v1116, 0.0
    %v1119 = vsel %vm1117, 1.0, -1.0
    %v1120 = vsel %vm1118, 1.0, -1.0
    %v1121 = vand.u32 2147483647, %v1115
    %v1122 = vand.u32 2147483647, %v1116
    %v1123 = vmul.f32 %v1121, 0.3275911
    %v1124 = vmul.f32 %v1122, 0.3275911
    %v1125 = vadd.f32 %v1123, 1.0
    %v1126 = vadd.f32 %v1124, 1.0
    %v1127 = vrcp.pop %v1125
    %v1128 = vmul.f32 1.0, %v1127
    %v1129 = vrcp.pop %v1126
    %v1130 = vmul.f32 1.0, %v1129
    %v1131 = vmul.f32 %v1128, 1.0614054
    %v1132 = vmul.f32 %v1130, 1.0614054
    %v1133 = vadd.f32 %v1131, -1.4531521
    %v1134 = vadd.f32 %v1132, -1.4531521
    %v1135 = vmul.f32 %v1133, %v1128
    %v1136 = vmul.f32 %v1134, %v1130
    %v1137 = vadd.f32 %v1135, 1.4214138
    %v1138 = vadd.f32 %v1136, 1.4214138
    %v1139 = vmul.f32 %v1137, %v1128
    %v1140 = vmul.f32 %v1138, %v1130
    %v1141 = vadd.f32 %v1139, -0.28449672
    %v1142 = vadd.f32 %v1140, -0.28449672
    %v1143 = vmul.f32 %v1141, %v1128
    %v1144 = vmul.f32 %v1142, %v1130
    %v1145 = vadd.f32 %v1143, 0.2548296
    %v1146 = vadd.f32 %v1144, 0.2548296
    %v1147 = vmul.f32 %v1145, %v1128
    %v1148 = vmul.f32 %v1146, %v1130
    %v1149 = vsub.f32 0.0, %v1121
    %v1150 = vsub.f32 0.0, %v1122
    %v1151 = vmul.f32 %v1149, %v1121
    %v1152 = vmul.f32 %v1150, %v1122
    %v1153 = vmul.f32 %v1151, 1.442695
    %v1154 = vpow.pop %v1153
    %v1155 = vmul.f32 %v1152, 1.442695
    %v1156 = vpow.pop %v1155
    %v1157 = vmul.f32 %v1147, %v1154
    %v1158 = vmul.f32 %v1148, %v1156
    %v1159 = vsub.f32 1.0, %v1157
    %v1160 = vsub.f32 1.0, %v1158
    %v1161 = vmul.f32 %v1119, %v1159
    %v1162 = vmul.f32 %v1120, %v1160
    %v1163 = vadd.f32 %v1161, 1.0
    %v1164 = vadd.f32 %v1162, 1.0
    %v1165 = vmul.f32 %v1113, %v1163
    %v1166 = vmul.f32 %v1114, %v1164
    %v1167 = vld [vmem:[#allocation5 + $0x2c] sm:$0xff]
    %v1168 = vld [vmem:[#allocation5 + $0x34] sm:$0xff]
    %v1169 = vld [vmem:[#allocation5 + $0x3c] sm:$0xff]
    %v1170 = vld [vmem:[#allocation5 + $0x44] sm:$0xff]
    %v1171 = vld [vmem:[#allocation5 + $0x4c] sm:$0xff]
    %v1172 = vld [vmem:[#allocation5 + $0x54] sm:$0xff]
    %v1173 = vld [vmem:[#allocation5 + $0x5c] sm:$0xff]
    %v1174 = vld [vmem:[#allocation5 + $0x64] sm:$0xff]
    %v1175 = vld [vmem:[#allocation5 + $0xd8] sm:$0xff]
    %v1176 = vld [vmem:[#allocation5 + $0xe0] sm:$0xff]
    %v1177 = vld [vmem:[#allocation5 + $0xe8] sm:$0xff]
    %v1178 = vld [vmem:[#allocation5 + $0xf0] sm:$0xff]
    %v1179 = vld [vmem:[#allocation5 + $0xf8] sm:$0xff]
    %v1180 = vld [vmem:[#allocation5 + $0x100] sm:$0xff]
    %v1181 = vld [vmem:[#allocation5 + $0x108] sm:$0xff]
    %v1182 = vld [vmem:[#allocation5 + $0x110] sm:$0xff]
    %v1183 = vld [vmem:[#allocation5 + $0x184] sm:$0xff]
    %v1184 = vld [vmem:[#allocation5 + $0x18c] sm:$0xff]
    %v1185 = vld [vmem:[#allocation5 + $0x194] sm:$0xff]
    %v1186 = vld [vmem:[#allocation5 + $0x19c] sm:$0xff]
    %v1187 = vld [vmem:[#allocation5 + $0x1a4] sm:$0xff]
    %v1188 = vld [vmem:[#allocation5 + $0x1ac] sm:$0xff]
    %v1189 = vld [vmem:[#allocation5 + $0x1b4] sm:$0xff]
    %v1190 = vld [vmem:[#allocation5 + $0x1bc] sm:$0xff]
    %v1191 = vld [vmem:[#allocation5 + $0x230] sm:$0xff]
    %v1192 = vld [vmem:[#allocation5 + $0x238] sm:$0xff]
    %v1193 = vld [vmem:[#allocation5 + $0x240] sm:$0xff]
    %v1194 = vld [vmem:[#allocation5 + $0x248] sm:$0xff]
    %v1195 = vld [vmem:[#allocation5 + $0x250] sm:$0xff]
    %v1196 = vld [vmem:[#allocation5 + $0x258] sm:$0xff]
    %v1197 = vld [vmem:[#allocation5 + $0x260] sm:$0xff]
    %v1198 = vld [vmem:[#allocation5 + $0x268] sm:$0xff]
    %v1199 = vld [vmem:[#allocation5 + $0x2dc] sm:$0xff]
    %v1200 = vld [vmem:[#allocation5 + $0x2e4] sm:$0xff]
    %v1201 = vld [vmem:[#allocation5 + $0x2ec] sm:$0xff]
    %v1202 = vld [vmem:[#allocation5 + $0x2f4] sm:$0xff]
    %v1203 = vld [vmem:[#allocation5 + $0x2fc] sm:$0xff]
    %v1204 = vld [vmem:[#allocation5 + $0x304] sm:$0xff]
    %v1205 = vld [vmem:[#allocation5 + $0x30c] sm:$0xff]
    %v1206 = vld [vmem:[#allocation5 + $0x314] sm:$0xff]
    %v1207 = vld [vmem:[#allocation5 + $0x388] sm:$0xff]
    %v1208 = vld [vmem:[#allocation5 + $0x390] sm:$0xff]
    %v1209 = vld [vmem:[#allocation5 + $0x398] sm:$0xff]
    %v1210 = vld [vmem:[#allocation5 + $0x3a0] sm:$0xff]
    %v1211 = vld [vmem:[#allocation5 + $0x3a8] sm:$0xff]
    %v1212 = vld [vmem:[#allocation5 + $0x3b0] sm:$0xff]
    %v1213 = vld [vmem:[#allocation5 + $0x3b8] sm:$0xff]
    %v1214 = vld [vmem:[#allocation5 + $0x3c0] sm:$0xff]
    %v1215 = vld [vmem:[#allocation5 + $0x434] sm:$0xff]
    %v1216 = vld [vmem:[#allocation5 + $0x43c] sm:$0xff]
    %v1217 = vld [vmem:[#allocation5 + $0x444] sm:$0xff]
    %v1218 = vld [vmem:[#allocation5 + $0x44c] sm:$0xff]
    %v1219 = vld [vmem:[#allocation5 + $0x454] sm:$0xff]
    %v1220 = vld [vmem:[#allocation5 + $0x45c] sm:$0xff]
    %v1221 = vld [vmem:[#allocation5 + $0x464] sm:$0xff]
    %v1222 = vld [vmem:[#allocation5 + $0x46c] sm:$0xff]
    %v1223 = vld [vmem:[#allocation5 + $0x4e0] sm:$0xff]
    %v1224 = vld [vmem:[#allocation5 + $0x4e8] sm:$0xff]
    %v1225 = vld [vmem:[#allocation5 + $0x4f0] sm:$0xff]
    %v1226 = vld [vmem:[#allocation5 + $0x4f8] sm:$0xff]
    %v1227 = vld [vmem:[#allocation5 + $0x500] sm:$0xff]
    %v1228 = vld [vmem:[#allocation5 + $0x508] sm:$0xff]
    %v1229 = vld [vmem:[#allocation5 + $0x510] sm:$0xff]
    %v1230 = vld [vmem:[#allocation5 + $0x518] sm:$0xff]
    %v1231 = vld [vmem:[#allocation5 + $0x58c] sm:$0xff]
    %v1232 = vld [vmem:[#allocation5 + $0x594] sm:$0xff]
    %v1233 = vld [vmem:[#allocation5 + $0x59c] sm:$0xff]
    %v1234 = vld [vmem:[#allocation5 + $0x5a4] sm:$0xff]
    %v1235 = vld [vmem:[#allocation5 + $0x5ac] sm:$0xff]
    %v1236 = vld [vmem:[#allocation5 + $0x5b4] sm:$0xff]
    %v1237 = vld [vmem:[#allocation5 + $0x5bc] sm:$0xff]
    %v1238 = vld [vmem:[#allocation5 + $0x5c4] sm:$0xff]
    %v1239 = vld [vmem:[#allocation5 + $0x638] sm:$0xff]
    %v1240 = vld [vmem:[#allocation5 + $0x640] sm:$0xff]
    %v1241 = vld [vmem:[#allocation5 + $0x648] sm:$0xff]
    %v1242 = vld [vmem:[#allocation5 + $0x650] sm:$0xff]
    %v1243 = vld [vmem:[#allocation5 + $0x658] sm:$0xff]
    %v1244 = vld [vmem:[#allocation5 + $0x660] sm:$0xff]
    %v1245 = vld [vmem:[#allocation5 + $0x668] sm:$0xff]
    %v1246 = vld [vmem:[#allocation5 + $0x670] sm:$0xff]
    %v1247 = vld [vmem:[#allocation5 + $0x6e4] sm:$0xff]
    %v1248 = vld [vmem:[#allocation5 + $0x6ec] sm:$0xff]
    %v1249 = vld [vmem:[#allocation5 + $0x6f4] sm:$0xff]
    %v1250 = vld [vmem:[#allocation5 + $0x6fc] sm:$0xff]
    %v1251 = vld [vmem:[#allocation5 + $0x704] sm:$0xff]
    %v1252 = vld [vmem:[#allocation5 + $0x70c] sm:$0xff]
    %v1253 = vld [vmem:[#allocation5 + $0x714] sm:$0xff]
    %v1254 = vld [vmem:[#allocation5 + $0x71c] sm:$0xff]
    %v1255 = vld [vmem:[#allocation5 + $0x790] sm:$0xff]
    %v1256 = vld [vmem:[#allocation5 + $0x798] sm:$0xff]
    %v1257 = vld [vmem:[#allocation5 + $0x7a0] sm:$0xff]
    %v1258 = vld [vmem:[#allocation5 + $0x7a8] sm:$0xff]
    %v1259 = vld [vmem:[#allocation5 + $0x7b0] sm:$0xff]
    %v1260 = vld [vmem:[#allocation5 + $0x7b8] sm:$0xff]
    %v1261 = vld [vmem:[#allocation5 + $0x7c0] sm:$0xff]
    %v1262 = vld [vmem:[#allocation5 + $0x7c8] sm:$0xff]
    %v1263 = vld [vmem:[#allocation5 + $0x83c] sm:$0xff]
    %v1264 = vld [vmem:[#allocation5 + $0x844] sm:$0xff]
    %v1265 = vld [vmem:[#allocation5 + $0x84c] sm:$0xff]
    %v1266 = vld [vmem:[#allocation5 + $0x854] sm:$0xff]
    %v1267 = vld [vmem:[#allocation5 + $0x85c] sm:$0xff]
    %v1268 = vld [vmem:[#allocation5 + $0x864] sm:$0xff]
    %v1269 = vld [vmem:[#allocation5 + $0x86c] sm:$0xff]
    %v1270 = vld [vmem:[#allocation5 + $0x874] sm:$0xff]
    %v1271 = vld [vmem:[#allocation5 + $0x8e8] sm:$0xff]
    %v1272 = vld [vmem:[#allocation5 + $0x8f0] sm:$0xff]
    %v1273 = vld [vmem:[#allocation5 + $0x8f8] sm:$0xff]
    %v1274 = vld [vmem:[#allocation5 + $0x900] sm:$0xff]
    %v1275 = vld [vmem:[#allocation5 + $0x908] sm:$0xff]
    %v1276 = vld [vmem:[#allocation5 + $0x910] sm:$0xff]
    %v1277 = vld [vmem:[#allocation5 + $0x918] sm:$0xff]
    %v1278 = vld [vmem:[#allocation5 + $0x920] sm:$0xff]
    %v1279 = vld [vmem:[#allocation5 + $0x994] sm:$0xff]
    %v1280 = vld [vmem:[#allocation5 + $0x99c] sm:$0xff]
    %v1281 = vld [vmem:[#allocation5 + $0x9a4] sm:$0xff]
    %v1282 = vld [vmem:[#allocation5 + $0x9ac] sm:$0xff]
    %v1283 = vld [vmem:[#allocation5 + $0x9b4] sm:$0xff]
    %v1284 = vld [vmem:[#allocation5 + $0x9bc] sm:$0xff]
    %v1285 = vld [vmem:[#allocation5 + $0x9c4] sm:$0xff]
    %v1286 = vld [vmem:[#allocation5 + $0x9cc] sm:$0xff]
    %v1287 = vld [vmem:[#allocation5 + $0xa40] sm:$0xff]
    %v1288 = vld [vmem:[#allocation5 + $0xa48] sm:$0xff]
    %v1289 = vld [vmem:[#allocation5 + $0xa50] sm:$0xff]
    %v1290 = vld [vmem:[#allocation5 + $0xa58] sm:$0xff]
    %v1291 = vld [vmem:[#allocation5 + $0xa60] sm:$0xff]
    %v1292 = vld [vmem:[#allocation5 + $0xa68] sm:$0xff]
    %v1293 = vld [vmem:[#allocation5 + $0xa70] sm:$0xff]
    %v1294 = vld [vmem:[#allocation5 + $0xa78] sm:$0xff]
    %v1295 = vld [vmem:[#allocation5 + $0xaec] sm:$0xff]
    %v1296 = vld [vmem:[#allocation5 + $0xaf4] sm:$0xff]
    %v1297 = vld [vmem:[#allocation5 + $0xafc] sm:$0xff]
    %v1298 = vld [vmem:[#allocation5 + $0xb04] sm:$0xff]
    %v1299 = vld [vmem:[#allocation5 + $0xb0c] sm:$0xff]
    %v1300 = vld [vmem:[#allocation5 + $0xb14] sm:$0xff]
    %v1301 = vld [vmem:[#allocation5 + $0xb1c] sm:$0xff]
    %v1302 = vld [vmem:[#allocation5 + $0xb24] sm:$0xff]
    %v1303 = vld [vmem:[#allocation5 + $0xb98] sm:$0xff]
    %v1304 = vld [vmem:[#allocation5 + $0xba0] sm:$0xff]
    %v1305 = vld [vmem:[#allocation5 + $0xba8] sm:$0xff]
    %v1306 = vld [vmem:[#allocation5 + $0xbb0] sm:$0xff]
    %v1307 = vld [vmem:[#allocation5 + $0xbb8] sm:$0xff]
    %v1308 = vld [vmem:[#allocation5 + $0xbc0] sm:$0xff]
    %v1309 = vld [vmem:[#allocation5 + $0xbc8] sm:$0xff]
    %v1310 = vld [vmem:[#allocation5 + $0xbd0] sm:$0xff]
    %v1311 = vld [vmem:[#allocation5 + $0xc44] sm:$0xff]
    %v1312 = vld [vmem:[#allocation5 + $0xc4c] sm:$0xff]
    %v1313 = vld [vmem:[#allocation5 + $0xc54] sm:$0xff]
    %v1314 = vld [vmem:[#allocation5 + $0xc5c] sm:$0xff]
    %v1315 = vld [vmem:[#allocation5 + $0xc64] sm:$0xff]
    %v1316 = vld [vmem:[#allocation5 + $0xc6c] sm:$0xff]
    %v1317 = vld [vmem:[#allocation5 + $0xc74] sm:$0xff]
    %v1318 = vld [vmem:[#allocation5 + $0xc7c] sm:$0xff]
    %v1319 = vld [vmem:[#allocation5 + $0xcf0] sm:$0xff]
    %v1320 = vld [vmem:[#allocation5 + $0xcf8] sm:$0xff]
    %v1321 = vld [vmem:[#allocation5 + $0xd00] sm:$0xff]
    %v1322 = vld [vmem:[#allocation5 + $0xd08] sm:$0xff]
    %v1323 = vld [vmem:[#allocation5 + $0xd10] sm:$0xff]
    %v1324 = vld [vmem:[#allocation5 + $0xd18] sm:$0xff]
    %v1325 = vld [vmem:[#allocation5 + $0xd20] sm:$0xff]
    %v1326 = vld [vmem:[#allocation5 + $0xd28] sm:$0xff]
    %v1327 = vld [vmem:[#allocation5 + $0xd9c] sm:$0xff]
    %v1328 = vld [vmem:[#allocation5 + $0xda4] sm:$0xff]
    %v1329 = vld [vmem:[#allocation5 + $0xdac] sm:$0xff]
    %v1330 = vld [vmem:[#allocation5 + $0xdb4] sm:$0xff]
    %v1331 = vld [vmem:[#allocation5 + $0xdbc] sm:$0xff]
    %v1332 = vld [vmem:[#allocation5 + $0xdc4] sm:$0xff]
    %v1333 = vld [vmem:[#allocation5 + $0xdcc] sm:$0xff]
    %v1334 = vld [vmem:[#allocation5 + $0xdd4] sm:$0xff]
    %v1335 = vld [vmem:[#allocation5 + $0xe48] sm:$0xff]
    %v1336 = vld [vmem:[#allocation5 + $0xe50] sm:$0xff]
    %v1337 = vld [vmem:[#allocation5 + $0xe58] sm:$0xff]
    %v1338 = vld [vmem:[#allocation5 + $0xe60] sm:$0xff]
    %v1339 = vld [vmem:[#allocation5 + $0xe68] sm:$0xff]
    %v1340 = vld [vmem:[#allocation5 + $0xe70] sm:$0xff]
    %v1341 = vld [vmem:[#allocation5 + $0xe78] sm:$0xff]
    %v1342 = vld [vmem:[#allocation5 + $0xe80] sm:$0xff]
    %v1343 = vld [vmem:[#allocation5 + $0xef4] sm:$0xff]
    %v1344 = vld [vmem:[#allocation5 + $0xefc] sm:$0xff]
    %v1345 = vld [vmem:[#allocation5 + $0xf04] sm:$0xff]
    %v1346 = vld [vmem:[#allocation5 + $0xf0c] sm:$0xff]
    %v1347 = vld [vmem:[#allocation5 + $0xf14] sm:$0xff]
    %v1348 = vld [vmem:[#allocation5 + $0xf1c] sm:$0xff]
    %v1349 = vld [vmem:[#allocation5 + $0xf24] sm:$0xff]
    %v1350 = vld [vmem:[#allocation5 + $0xf2c] sm:$0xff]
    %v1351 = vld [vmem:[#allocation5 + $0xfa0] sm:$0xff]
    %v1352 = vld [vmem:[#allocation5 + $0xfa8] sm:$0xff]
    %v1353 = vld [vmem:[#allocation5 + $0xfb0] sm:$0xff]
    %v1354 = vld [vmem:[#allocation5 + $0xfb8] sm:$0xff]
    %v1355 = vld [vmem:[#allocation5 + $0xfc0] sm:$0xff]
    %v1356 = vld [vmem:[#allocation5 + $0xfc8] sm:$0xff]
    %v1357 = vld [vmem:[#allocation5 + $0xfd0] sm:$0xff]
    %v1358 = vld [vmem:[#allocation5 + $0xfd8] sm:$0xff]
    %v1359 = vld [vmem:[#allocation5 + $0x104c] sm:$0xff]
    %v1360 = vld [vmem:[#allocation5 + $0x1054] sm:$0xff]
    %v1361 = vld [vmem:[#allocation5 + $0x105c] sm:$0xff]
    %v1362 = vld [vmem:[#allocation5 + $0x1064] sm:$0xff]
    %v1363 = vld [vmem:[#allocation5 + $0x106c] sm:$0xff]
    %v1364 = vld [vmem:[#allocation5 + $0x1074] sm:$0xff]
    %v1365 = vld [vmem:[#allocation5 + $0x107c] sm:$0xff]
    %v1366 = vld [vmem:[#allocation5 + $0x1084] sm:$0xff]
    %v1367 = vld [vmem:[#allocation5 + $0x10f8] sm:$0xff]
    %v1368 = vld [vmem:[#allocation5 + $0x1100] sm:$0xff]
    %v1369 = vld [vmem:[#allocation5 + $0x1108] sm:$0xff]
    %v1370 = vld [vmem:[#allocation5 + $0x1110] sm:$0xff]
    %v1371 = vld [vmem:[#allocation5 + $0x1118] sm:$0xff]
    %v1372 = vld [vmem:[#allocation5 + $0x1120] sm:$0xff]
    %v1373 = vld [vmem:[#allocation5 + $0x1128] sm:$0xff]
    %v1374 = vld [vmem:[#allocation5 + $0x1130] sm:$0xff]
    %v1375 = vld [vmem:[#allocation5 + $0x11a4] sm:$0xff]
    %v1376 = vld [vmem:[#allocation5 + $0x11ac] sm:$0xff]
    %v1377 = vld [vmem:[#allocation5 + $0x11b4] sm:$0xff]
    %v1378 = vld [vmem:[#allocation5 + $0x11bc] sm:$0xff]
    %v1379 = vld [vmem:[#allocation5 + $0x11c4] sm:$0xff]
    %v1380 = vld [vmem:[#allocation5 + $0x11cc] sm:$0xff]
    %v1381 = vld [vmem:[#allocation5 + $0x11d4] sm:$0xff]
    %v1382 = vld [vmem:[#allocation5 + $0x11dc] sm:$0xff]
    %v1383 = vld [vmem:[#allocation5 + $0x1250] sm:$0xff]
    %v1384 = vld [vmem:[#allocation5 + $0x1258] sm:$0xff]
    %v1385 = vld [vmem:[#allocation5 + $0x1260] sm:$0xff]
    %v1386 = vld [vmem:[#allocation5 + $0x1268] sm:$0xff]
    %v1387 = vld [vmem:[#allocation5 + $0x1270] sm:$0xff]
    %v1388 = vld [vmem:[#allocation5 + $0x1278] sm:$0xff]
    %v1389 = vld [vmem:[#allocation5 + $0x1280] sm:$0xff]
    %v1390 = vld [vmem:[#allocation5 + $0x1288] sm:$0xff]
    %v1391 = vld [vmem:[#allocation5 + $0x12fc] sm:$0xff]
    %v1392 = vld [vmem:[#allocation5 + $0x1304] sm:$0xff]
    %v1393 = vld [vmem:[#allocation5 + $0x130c] sm:$0xff]
    %v1394 = vld [vmem:[#allocation5 + $0x1314] sm:$0xff]
    %v1395 = vld [vmem:[#allocation5 + $0x131c] sm:$0xff]
    %v1396 = vld [vmem:[#allocation5 + $0x1324] sm:$0xff]
    %v1397 = vld [vmem:[#allocation5 + $0x132c] sm:$0xff]
    %v1398 = vld [vmem:[#allocation5 + $0x1334] sm:$0xff]
    %v1399 = vld [vmem:[#allocation5 + $0x13a8] sm:$0xff]
    %v1400 = vld [vmem:[#allocation5 + $0x13b0] sm:$0xff]
    %v1401 = vld [vmem:[#allocation5 + $0x13b8] sm:$0xff]
    %v1402 = vld [vmem:[#allocation5 + $0x13c0] sm:$0xff]
    %v1403 = vld [vmem:[#allocation5 + $0x13c8] sm:$0xff]
    %v1404 = vld [vmem:[#allocation5 + $0x13d0] sm:$0xff]
    %v1405 = vld [vmem:[#allocation5 + $0x13d8] sm:$0xff]
    %v1406 = vld [vmem:[#allocation5 + $0x13e0] sm:$0xff]
    %v1407 = vld [vmem:[#allocation5 + $0x1454] sm:$0xff]
    %v1408 = vld [vmem:[#allocation5 + $0x145c] sm:$0xff]
    %v1409 = vld [vmem:[#allocation5 + $0x1464] sm:$0xff]
    %v1410 = vld [vmem:[#allocation5 + $0x146c] sm:$0xff]
    %v1411 = vld [vmem:[#allocation5 + $0x1474] sm:$0xff]
    %v1412 = vld [vmem:[#allocation5 + $0x147c] sm:$0xff]
    %v1413 = vld [vmem:[#allocation5 + $0x1484] sm:$0xff]
    %v1414 = vld [vmem:[#allocation5 + $0x148c] sm:$0xff]
    %v1415 = vld [vmem:[#allocation5 + $0x1500] sm:$0xff]
    %v1416 = vld [vmem:[#allocation5 + $0x1508] sm:$0xff]
    %v1417 = vld [vmem:[#allocation5 + $0x1510] sm:$0xff]
    %v1418 = vld [vmem:[#allocation5 + $0x1518] sm:$0xff]
    %v1419 = vld [vmem:[#allocation5 + $0x1520] sm:$0xff]
    %v1420 = vld [vmem:[#allocation5 + $0x1528] sm:$0xff]
    %v1421 = vld [vmem:[#allocation5 + $0x1530] sm:$0xff]
    %v1422 = vld [vmem:[#allocation5 + $0x1538] sm:$0xff]
    %v1423 = vpack.c.bf16 %v1063, %v1063
    %v1424 = vpack.c.bf16 %v1064, %v1064
    %v1425 = vld [vmem:[#allocation8 + $0x1d] sm:$0xff]
    %v1426 = vld [vmem:[#allocation8 + $0x25] sm:$0xff]
    %v1429 = vlaneseq
    %v1430 = vshrl.u32 %v1429, 7
    %v1431 = vsub.s32 0, %v1430
    %v1432 = vrot.slane %v1425, %v1431
    %v1433 = vlaneseq
    %v1434 = vshrl.u32 %v1433, 7
    %v1435 = vsub.s32 1, %v1434
    %v1436 = vrot.slane %v1425, %v1435
    %v1437 = vlaneseq
    %v1438 = vshrl.u32 %v1437, 7
    %v1439 = vsub.s32 2, %v1438
    %v1440 = vrot.slane %v1425, %v1439
    %v1441 = vlaneseq
    %v1442 = vshrl.u32 %v1441, 7
    %v1443 = vsub.s32 3, %v1442
    %v1444 = vrot.slane %v1425, %v1443
    %v1445 = vlaneseq
    %v1446 = vshrl.u32 %v1445, 7
    %v1447 = vsub.s32 4, %v1446
    %v1448 = vrot.slane %v1425, %v1447
    %v1449 = vlaneseq
    %v1450 = vshrl.u32 %v1449, 7
    %v1451 = vsub.s32 5, %v1450
    %v1452 = vrot.slane %v1425, %v1451
    %v1453 = vlaneseq
    %v1454 = vshrl.u32 %v1453, 7
    %v1455 = vsub.s32 6, %v1454
    %v1456 = vrot.slane %v1425, %v1455
    %v1457 = vlaneseq
    %v1458 = vshrl.u32 %v1457, 7
    %v1459 = vsub.s32 7, %v1458
    %v1460 = vrot.slane %v1425, %v1459
    %v1461 = vlaneseq
    %v1462 = vshrl.u32 %v1461, 7
    %v1463 = vsub.s32 0, %v1462
    %v1464 = vrot.slane %v1426, %v1463
    %v1465 = vlaneseq
    %v1466 = vshrl.u32 %v1465, 7
    %v1467 = vsub.s32 1, %v1466
    %v1468 = vrot.slane %v1426, %v1467
    %v1469 = vlaneseq
    %v1470 = vshrl.u32 %v1469, 7
    %v1471 = vsub.s32 2, %v1470
    %v1472 = vrot.slane %v1426, %v1471
    %v1473 = vlaneseq
    %v1474 = vshrl.u32 %v1473, 7
    %v1475 = vsub.s32 3, %v1474
    %v1476 = vrot.slane %v1426, %v1475
    %v1477 = vlaneseq
    %v1478 = vshrl.u32 %v1477, 7
    %v1479 = vsub.s32 4, %v1478
    %v1480 = vrot.slane %v1426, %v1479
    %v1481 = vlaneseq
    %v1482 = vshrl.u32 %v1481, 7
    %v1483 = vsub.s32 5, %v1482
    %v1484 = vrot.slane %v1426, %v1483
    %v1485 = vlaneseq
    %v1486 = vshrl.u32 %v1485, 7
    %v1487 = vsub.s32 6, %v1486
    %v1488 = vrot.slane %v1426, %v1487
    %v1489 = vlaneseq
    %v1490 = vshrl.u32 %v1489, 7
    %v1491 = vsub.s32 7, %v1490
    %v1492 = vrot.slane %v1426, %v1491
    %v1765 = vunpack.c.l.b16 %v1167
    %v1766 = vunpack.c.h.b16 %v1167
    %v1767 = vunpack.c.l.b16 %v1168
    %v1768 = vunpack.c.h.b16 %v1168
    %v1769 = vunpack.c.l.b16 %v1169
    %v1770 = vunpack.c.h.b16 %v1169
    %v1771 = vunpack.c.l.b16 %v1170
    %v1772 = vunpack.c.h.b16 %v1170
    %v1773 = vunpack.c.l.b16 %v1171
    %v1774 = vunpack.c.h.b16 %v1171
    %v1775 = vunpack.c.l.b16 %v1172
    %v1776 = vunpack.c.h.b16 %v1172
    %v1777 = vunpack.c.l.b16 %v1173
    %v1778 = vunpack.c.h.b16 %v1173
    %v1779 = vunpack.c.l.b16 %v1174
    %v1780 = vunpack.c.h.b16 %v1174
    %v1781 = vunpack.c.l.b16 %v1175
    %v1782 = vunpack.c.h.b16 %v1175
    %v1783 = vunpack.c.l.b16 %v1176
    %v1784 = vunpack.c.h.b16 %v1176
    %v1785 = vunpack.c.l.b16 %v1177
    %v1786 = vunpack.c.h.b16 %v1177
    %v1787 = vunpack.c.l.b16 %v1178
    %v1788 = vunpack.c.h.b16 %v1178
    %v1789 = vunpack.c.l.b16 %v1179
    %v1790 = vunpack.c.h.b16 %v1179
    %v1791 = vunpack.c.l.b16 %v1180
    %v1792 = vunpack.c.h.b16 %v1180
    %v1793 = vunpack.c.l.b16 %v1181
    %v1794 = vunpack.c.h.b16 %v1181
    %v1795 = vunpack.c.l.b16 %v1182
    %v1796 = vunpack.c.h.b16 %v1182
    %v1797 = vunpack.c.l.b16 %v1183
    %v1798 = vunpack.c.h.b16 %v1183
    %v1799 = vunpack.c.l.b16 %v1184
    %v1800 = vunpack.c.h.b16 %v1184
    %v1801 = vunpack.c.l.b16 %v1185
    %v1802 = vunpack.c.h.b16 %v1185
    %v1803 = vunpack.c.l.b16 %v1186
    %v1804 = vunpack.c.h.b16 %v1186
    %v1805 = vunpack.c.l.b16 %v1187
    %v1806 = vunpack.c.h.b16 %v1187
    %v1807 = vunpack.c.l.b16 %v1188
    %v1808 = vunpack.c.h.b16 %v1188
    %v1809 = vunpack.c.l.b16 %v1189
    %v1810 = vunpack.c.h.b16 %v1189
    %v1811 = vunpack.c.l.b16 %v1190
    %v1812 = vunpack.c.h.b16 %v1190
    %v1813 = vunpack.c.l.b16 %v1191
    %v1814 = vunpack.c.h.b16 %v1191
    %v1815 = vunpack.c.l.b16 %v1192
    %v1816 = vunpack.c.h.b16 %v1192
    %v1817 = vunpack.c.l.b16 %v1193
    %v1818 = vunpack.c.h.b16 %v1193
    %v1819 = vunpack.c.l.b16 %v1194
    %v1820 = vunpack.c.h.b16 %v1194
    %v1821 = vunpack.c.l.b16 %v1195
    %v1822 = vunpack.c.h.b16 %v1195
    %v1823 = vunpack.c.l.b16 %v1196
    %v1824 = vunpack.c.h.b16 %v1196
    %v1825 = vunpack.c.l.b16 %v1197
    %v1826 = vunpack.c.h.b16 %v1197
    %v1827 = vunpack.c.l.b16 %v1198
    %v1828 = vunpack.c.h.b16 %v1198
    %v1829 = vunpack.c.l.b16 %v1199
    %v1830 = vunpack.c.h.b16 %v1199
    %v1831 = vunpack.c.l.b16 %v1200
    %v1832 = vunpack.c.h.b16 %v1200
    %v1833 = vunpack.c.l.b16 %v1201
    %v1834 = vunpack.c.h.b16 %v1201
    %v1835 = vunpack.c.l.b16 %v1202
    %v1836 = vunpack.c.h.b16 %v1202
    %v1837 = vunpack.c.l.b16 %v1203
    %v1838 = vunpack.c.h.b16 %v1203
    %v1839 = vunpack.c.l.b16 %v1204
    %v1840 = vunpack.c.h.b16 %v1204
    %v1841 = vunpack.c.l.b16 %v1205
    %v1842 = vunpack.c.h.b16 %v1205
    %v1843 = vunpack.c.l.b16 %v1206
    %v1844 = vunpack.c.h.b16 %v1206
    %v1845 = vunpack.c.l.b16 %v1207
    %v1846 = vunpack.c.h.b16 %v1207
    %v1847 = vunpack.c.l.b16 %v1208
    %v1848 = vunpack.c.h.b16 %v1208
    %v1849 = vunpack.c.l.b16 %v1209
    %v1850 = vunpack.c.h.b16 %v1209
    %v1851 = vunpack.c.l.b16 %v1210
    %v1852 = vunpack.c.h.b16 %v1210
    %v1853 = vunpack.c.l.b16 %v1211
    %v1854 = vunpack.c.h.b16 %v1211
    %v1855 = vunpack.c.l.b16 %v1212
    %v1856 = vunpack.c.h.b16 %v1212
    %v1857 = vunpack.c.l.b16 %v1213
    %v1858 = vunpack.c.h.b16 %v1213
    %v1859 = vunpack.c.l.b16 %v1214
    %v1860 = vunpack.c.h.b16 %v1214
    %v1861 = vunpack.c.l.b16 %v1215
    %v1862 = vunpack.c.h.b16 %v1215
    %v1863 = vunpack.c.l.b16 %v1216
    %v1864 = vunpack.c.h.b16 %v1216
    %v1865 = vunpack.c.l.b16 %v1217
    %v1866 = vunpack.c.h.b16 %v1217
    %v1867 = vunpack.c.l.b16 %v1218
    %v1868 = vunpack.c.h.b16 %v1218
    %v1869 = vunpack.c.l.b16 %v1219
    %v1870 = vunpack.c.h.b16 %v1219
    %v1871 = vunpack.c.l.b16 %v1220
    %v1872 = vunpack.c.h.b16 %v1220
    %v1873 = vunpack.c.l.b16 %v1221
    %v1874 = vunpack.c.h.b16 %v1221
    %v1875 = vunpack.c.l.b16 %v1222
    %v1876 = vunpack.c.h.b16 %v1222
    %v1877 = vunpack.c.l.b16 %v1223
    %v1878 = vunpack.c.h.b16 %v1223
    %v1879 = vunpack.c.l.b16 %v1224
    %v1880 = vunpack.c.h.b16 %v1224
    %v1881 = vunpack.c.l.b16 %v1225
    %v1882 = vunpack.c.h.b16 %v1225
    %v1883 = vunpack.c.l.b16 %v1226
    %v1884 = vunpack.c.h.b16 %v1226
    %v1885 = vunpack.c.l.b16 %v1227
    %v1886 = vunpack.c.h.b16 %v1227
    %v1887 = vunpack.c.l.b16 %v1228
    %v1888 = vunpack.c.h.b16 %v1228
    %v1889 = vunpack.c.l.b16 %v1229
    %v1890 = vunpack.c.h.b16 %v1229
    %v1891 = vunpack.c.l.b16 %v1230
    %v1892 = vunpack.c.h.b16 %v1230
    %v1893 = vunpack.c.l.b16 %v1231
    %v1894 = vunpack.c.h.b16 %v1231
    %v1895 = vunpack.c.l.b16 %v1232
    %v1896 = vunpack.c.h.b16 %v1232
    %v1897 = vunpack.c.l.b16 %v1233
    %v1898 = vunpack.c.h.b16 %v1233
    %v1899 = vunpack.c.l.b16 %v1234
    %v1900 = vunpack.c.h.b16 %v1234
    %v1901 = vunpack.c.l.b16 %v1235
    %v1902 = vunpack.c.h.b16 %v1235
    %v1903 = vunpack.c.l.b16 %v1236
    %v1904 = vunpack.c.h.b16 %v1236
    %v1905 = vunpack.c.l.b16 %v1237
    %v1906 = vunpack.c.h.b16 %v1237
    %v1907 = vunpack.c.l.b16 %v1238
    %v1908 = vunpack.c.h.b16 %v1238
    %v1909 = vunpack.c.l.b16 %v1239
    %v1910 = vunpack.c.h.b16 %v1239
    %v1911 = vunpack.c.l.b16 %v1240
    %v1912 = vunpack.c.h.b16 %v1240
    %v1913 = vunpack.c.l.b16 %v1241
    %v1914 = vunpack.c.h.b16 %v1241
    %v1915 = vunpack.c.l.b16 %v1242
    %v1916 = vunpack.c.h.b16 %v1242
    %v1917 = vunpack.c.l.b16 %v1243
    %v1918 = vunpack.c.h.b16 %v1243
    %v1919 = vunpack.c.l.b16 %v1244
    %v1920 = vunpack.c.h.b16 %v1244
    %v1921 = vunpack.c.l.b16 %v1245
    %v1922 = vunpack.c.h.b16 %v1245
    %v1923 = vunpack.c.l.b16 %v1246
    %v1924 = vunpack.c.h.b16 %v1246
    %v1925 = vunpack.c.l.b16 %v1247
    %v1926 = vunpack.c.h.b16 %v1247
    %v1927 = vunpack.c.l.b16 %v1248
    %v1928 = vunpack.c.h.b16 %v1248
    %v1929 = vunpack.c.l.b16 %v1249
    %v1930 = vunpack.c.h.b16 %v1249
    %v1931 = vunpack.c.l.b16 %v1250
    %v1932 = vunpack.c.h.b16 %v1250
    %v1933 = vunpack.c.l.b16 %v1251
    %v1934 = vunpack.c.h.b16 %v1251
    %v1935 = vunpack.c.l.b16 %v1252
    %v1936 = vunpack.c.h.b16 %v1252
    %v1937 = vunpack.c.l.b16 %v1253
    %v1938 = vunpack.c.h.b16 %v1253
    %v1939 = vunpack.c.l.b16 %v1254
    %v1940 = vunpack.c.h.b16 %v1254
    %v1941 = vunpack.c.l.b16 %v1255
    %v1942 = vunpack.c.h.b16 %v1255
    %v1943 = vunpack.c.l.b16 %v1256
    %v1944 = vunpack.c.h.b16 %v1256
    %v1945 = vunpack.c.l.b16 %v1257
    %v1946 = vunpack.c.h.b16 %v1257
    %v1947 = vunpack.c.l.b16 %v1258
    %v1948 = vunpack.c.h.b16 %v1258
    %v1949 = vunpack.c.l.b16 %v1259
    %v1950 = vunpack.c.h.b16 %v1259
    %v1951 = vunpack.c.l.b16 %v1260
    %v1952 = vunpack.c.h.b16 %v1260
    %v1953 = vunpack.c.l.b16 %v1261
    %v1954 = vunpack.c.h.b16 %v1261
    %v1955 = vunpack.c.l.b16 %v1262
    %v1956 = vunpack.c.h.b16 %v1262
    %v1957 = vunpack.c.l.b16 %v1263
    %v1958 = vunpack.c.h.b16 %v1263
    %v1959 = vunpack.c.l.b16 %v1264
    %v1960 = vunpack.c.h.b16 %v1264
    %v1961 = vunpack.c.l.b16 %v1265
    %v1962 = vunpack.c.h.b16 %v1265
    %v1963 = vunpack.c.l.b16 %v1266
    %v1964 = vunpack.c.h.b16 %v1266
    %v1965 = vunpack.c.l.b16 %v1267
    %v1966 = vunpack.c.h.b16 %v1267
    %v1967 = vunpack.c.l.b16 %v1268
    %v1968 = vunpack.c.h.b16 %v1268
    %v1969 = vunpack.c.l.b16 %v1269
    %v1970 = vunpack.c.h.b16 %v1269
    %v1971 = vunpack.c.l.b16 %v1270
    %v1972 = vunpack.c.h.b16 %v1270
    %v1973 = vunpack.c.l.b16 %v1271
    %v1974 = vunpack.c.h.b16 %v1271
    %v1975 = vunpack.c.l.b16 %v1272
    %v1976 = vunpack.c.h.b16 %v1272
    %v1977 = vunpack.c.l.b16 %v1273
    %v1978 = vunpack.c.h.b16 %v1273
    %v1979 = vunpack.c.l.b16 %v1274
    %v1980 = vunpack.c.h.b16 %v1274
    %v1981 = vunpack.c.l.b16 %v1275
    %v1982 = vunpack.c.h.b16 %v1275
    %v1983 = vunpack.c.l.b16 %v1276
    %v1984 = vunpack.c.h.b16 %v1276
    %v1985 = vunpack.c.l.b16 %v1277
    %v1986 = vunpack.c.h.b16 %v1277
    %v1987 = vunpack.c.l.b16 %v1278
    %v1988 = vunpack.c.h.b16 %v1278
    %v1989 = vunpack.c.l.b16 %v1279
    %v1990 = vunpack.c.h.b16 %v1279
    %v1991 = vunpack.c.l.b16 %v1280
    %v1992 = vunpack.c.h.b16 %v1280
    %v1993 = vunpack.c.l.b16 %v1281
    %v1994 = vunpack.c.h.b16 %v1281
    %v1995 = vunpack.c.l.b16 %v1282
    %v1996 = vunpack.c.h.b16 %v1282
    %v1997 = vunpack.c.l.b16 %v1283
    %v1998 = vunpack.c.h.b16 %v1283
    %v1999 = vunpack.c.l.b16 %v1284
    %v2000 = vunpack.c.h.b16 %v1284
    %v2001 = vunpack.c.l.b16 %v1285
    %v2002 = vunpack.c.h.b16 %v1285
    %v2003 = vunpack.c.l.b16 %v1286
    %v2004 = vunpack.c.h.b16 %v1286
    %v2005 = vunpack.c.l.b16 %v1287
    %v2006 = vunpack.c.h.b16 %v1287
    %v2007 = vunpack.c.l.b16 %v1288
    %v2008 = vunpack.c.h.b16 %v1288
    %v2009 = vunpack.c.l.b16 %v1289
    %v2010 = vunpack.c.h.b16 %v1289
    %v2011 = vunpack.c.l.b16 %v1290
    %v2012 = vunpack.c.h.b16 %v1290
    %v2013 = vunpack.c.l.b16 %v1291
    %v2014 = vunpack.c.h.b16 %v1291
    %v2015 = vunpack.c.l.b16 %v1292
    %v2016 = vunpack.c.h.b16 %v1292
    %v2017 = vunpack.c.l.b16 %v1293
    %v2018 = vunpack.c.h.b16 %v1293
    %v2019 = vunpack.c.l.b16 %v1294
    %v2020 = vunpack.c.h.b16 %v1294
    %v2021 = vunpack.c.l.b16 %v1295
    %v2022 = vunpack.c.h.b16 %v1295
    %v2023 = vunpack.c.l.b16 %v1296
    %v2024 = vunpack.c.h.b16 %v1296
    %v2025 = vunpack.c.l.b16 %v1297
    %v2026 = vunpack.c.h.b16 %v1297
    %v2027 = vunpack.c.l.b16 %v1298
    %v2028 = vunpack.c.h.b16 %v1298
    %v2029 = vunpack.c.l.b16 %v1299
    %v2030 = vunpack.c.h.b16 %v1299
    %v2031 = vunpack.c.l.b16 %v1300
    %v2032 = vunpack.c.h.b16 %v1300
    %v2033 = vunpack.c.l.b16 %v1301
    %v2034 = vunpack.c.h.b16 %v1301
    %v2035 = vunpack.c.l.b16 %v1302
    %v2036 = vunpack.c.h.b16 %v1302
    %v2037 = vunpack.c.l.b16 %v1303
    %v2038 = vunpack.c.h.b16 %v1303
    %v2039 = vunpack.c.l.b16 %v1304
    %v2040 = vunpack.c.h.b16 %v1304
    %v2041 = vunpack.c.l.b16 %v1305
    %v2042 = vunpack.c.h.b16 %v1305
    %v2043 = vunpack.c.l.b16 %v1306
    %v2044 = vunpack.c.h.b16 %v1306
    %v2045 = vunpack.c.l.b16 %v1307
    %v2046 = vunpack.c.h.b16 %v1307
    %v2047 = vunpack.c.l.b16 %v1308
    %v2048 = vunpack.c.h.b16 %v1308
    %v2049 = vunpack.c.l.b16 %v1309
    %v2050 = vunpack.c.h.b16 %v1309
    %v2051 = vunpack.c.l.b16 %v1310
    %v2052 = vunpack.c.h.b16 %v1310
    %v2053 = vunpack.c.l.b16 %v1311
    %v2054 = vunpack.c.h.b16 %v1311
    %v2055 = vunpack.c.l.b16 %v1312
    %v2056 = vunpack.c.h.b16 %v1312
    %v2057 = vunpack.c.l.b16 %v1313
    %v2058 = vunpack.c.h.b16 %v1313
    %v2059 = vunpack.c.l.b16 %v1314
    %v2060 = vunpack.c.h.b16 %v1314
    %v2061 = vunpack.c.l.b16 %v1315
    %v2062 = vunpack.c.h.b16 %v1315
    %v2063 = vunpack.c.l.b16 %v1316
    %v2064 = vunpack.c.h.b16 %v1316
    %v2065 = vunpack.c.l.b16 %v1317
    %v2066 = vunpack.c.h.b16 %v1317
    %v2067 = vunpack.c.l.b16 %v1318
    %v2068 = vunpack.c.h.b16 %v1318
    %v2069 = vunpack.c.l.b16 %v1319
    %v2070 = vunpack.c.h.b16 %v1319
    %v2071 = vunpack.c.l.b16 %v1320
    %v2072 = vunpack.c.h.b16 %v1320
    %v2073 = vunpack.c.l.b16 %v1321
    %v2074 = vunpack.c.h.b16 %v1321
    %v2075 = vunpack.c.l.b16 %v1322
    %v2076 = vunpack.c.h.b16 %v1322
    %v2077 = vunpack.c.l.b16 %v1323
    %v2078 = vunpack.c.h.b16 %v1323
    %v2079 = vunpack.c.l.b16 %v1324
    %v2080 = vunpack.c.h.b16 %v1324
    %v2081 = vunpack.c.l.b16 %v1325
    %v2082 = vunpack.c.h.b16 %v1325
    %v2083 = vunpack.c.l.b16 %v1326
    %v2084 = vunpack.c.h.b16 %v1326
    %v2085 = vunpack.c.l.b16 %v1327
    %v2086 = vunpack.c.h.b16 %v1327
    %v2087 = vunpack.c.l.b16 %v1328
    %v2088 = vunpack.c.h.b16 %v1328
    %v2089 = vunpack.c.l.b16 %v1329
    %v2090 = vunpack.c.h.b16 %v1329
    %v2091 = vunpack.c.l.b16 %v1330
    %v2092 = vunpack.c.h.b16 %v1330
    %v2093 = vunpack.c.l.b16 %v1331
    %v2094 = vunpack.c.h.b16 %v1331
    %v2095 = vunpack.c.l.b16 %v1332
    %v2096 = vunpack.c.h.b16 %v1332
    %v2097 = vunpack.c.l.b16 %v1333
    %v2098 = vunpack.c.h.b16 %v1333
    %v2099 = vunpack.c.l.b16 %v1334
    %v2100 = vunpack.c.h.b16 %v1334
    %v2101 = vunpack.c.l.b16 %v1335
    %v2102 = vunpack.c.h.b16 %v1335
    %v2103 = vunpack.c.l.b16 %v1336
    %v2104 = vunpack.c.h.b16 %v1336
    %v2105 = vunpack.c.l.b16 %v1337
    %v2106 = vunpack.c.h.b16 %v1337
    %v2107 = vunpack.c.l.b16 %v1338
    %v2108 = vunpack.c.h.b16 %v1338
    %v2109 = vunpack.c.l.b16 %v1339
    %v2110 = vunpack.c.h.b16 %v1339
    %v2111 = vunpack.c.l.b16 %v1340
    %v2112 = vunpack.c.h.b16 %v1340
    %v2113 = vunpack.c.l.b16 %v1341
    %v2114 = vunpack.c.h.b16 %v1341
    %v2115 = vunpack.c.l.b16 %v1342
    %v2116 = vunpack.c.h.b16 %v1342
    %v2117 = vunpack.c.l.b16 %v1343
    %v2118 = vunpack.c.h.b16 %v1343
    %v2119 = vunpack.c.l.b16 %v1344
    %v2120 = vunpack.c.h.b16 %v1344
    %v2121 = vunpack.c.l.b16 %v1345
    %v2122 = vunpack.c.h.b16 %v1345
    %v2123 = vunpack.c.l.b16 %v1346
    %v2124 = vunpack.c.h.b16 %v1346
    %v2125 = vunpack.c.l.b16 %v1347
    %v2126 = vunpack.c.h.b16 %v1347
    %v2127 = vunpack.c.l.b16 %v1348
    %v2128 = vunpack.c.h.b16 %v1348
    %v2129 = vunpack.c.l.b16 %v1349
    %v2130 = vunpack.c.h.b16 %v1349
    %v2131 = vunpack.c.l.b16 %v1350
    %v2132 = vunpack.c.h.b16 %v1350
    %v2133 = vunpack.c.l.b16 %v1351
    %v2134 = vunpack.c.h.b16 %v1351
    %v2135 = vunpack.c.l.b16 %v1352
    %v2136 = vunpack.c.h.b16 %v1352
    %v2137 = vunpack.c.l.b16 %v1353
    %v2138 = vunpack.c.h.b16 %v1353
    %v2139 = vunpack.c.l.b16 %v1354
    %v2140 = vunpack.c.h.b16 %v1354
    %v2141 = vunpack.c.l.b16 %v1355
    %v2142 = vunpack.c.h.b16 %v1355
    %v2143 = vunpack.c.l.b16 %v1356
    %v2144 = vunpack.c.h.b16 %v1356
    %v2145 = vunpack.c.l.b16 %v1357
    %v2146 = vunpack.c.h.b16 %v1357
    %v2147 = vunpack.c.l.b16 %v1358
    %v2148 = vunpack.c.h.b16 %v1358
    %v2149 = vunpack.c.l.b16 %v1359
    %v2150 = vunpack.c.h.b16 %v1359
    %v2151 = vunpack.c.l.b16 %v1360
    %v2152 = vunpack.c.h.b16 %v1360
    %v2153 = vunpack.c.l.b16 %v1361
    %v2154 = vunpack.c.h.b16 %v1361
    %v2155 = vunpack.c.l.b16 %v1362
    %v2156 = vunpack.c.h.b16 %v1362
    %v2157 = vunpack.c.l.b16 %v1363
    %v2158 = vunpack.c.h.b16 %v1363
    %v2159 = vunpack.c.l.b16 %v1364
    %v2160 = vunpack.c.h.b16 %v1364
    %v2161 = vunpack.c.l.b16 %v1365
    %v2162 = vunpack.c.h.b16 %v1365
    %v2163 = vunpack.c.l.b16 %v1366
    %v2164 = vunpack.c.h.b16 %v1366
    %v2165 = vunpack.c.l.b16 %v1367
    %v2166 = vunpack.c.h.b16 %v1367
    %v2167 = vunpack.c.l.b16 %v1368
    %v2168 = vunpack.c.h.b16 %v1368
    %v2169 = vunpack.c.l.b16 %v1369
    %v2170 = vunpack.c.h.b16 %v1369
    %v2171 = vunpack.c.l.b16 %v1370
    %v2172 = vunpack.c.h.b16 %v1370
    %v2173 = vunpack.c.l.b16 %v1371
    %v2174 = vunpack.c.h.b16 %v1371
    %v2175 = vunpack.c.l.b16 %v1372
    %v2176 = vunpack.c.h.b16 %v1372
    %v2177 = vunpack.c.l.b16 %v1373
    %v2178 = vunpack.c.h.b16 %v1373
    %v2179 = vunpack.c.l.b16 %v1374
    %v2180 = vunpack.c.h.b16 %v1374
    %v2181 = vunpack.c.l.b16 %v1375
    %v2182 = vunpack.c.h.b16 %v1375
    %v2183 = vunpack.c.l.b16 %v1376
    %v2184 = vunpack.c.h.b16 %v1376
    %v2185 = vunpack.c.l.b16 %v1377
    %v2186 = vunpack.c.h.b16 %v1377
    %v2187 = vunpack.c.l.b16 %v1378
    %v2188 = vunpack.c.h.b16 %v1378
    %v2189 = vunpack.c.l.b16 %v1379
    %v2190 = vunpack.c.h.b16 %v1379
    %v2191 = vunpack.c.l.b16 %v1380
    %v2192 = vunpack.c.h.b16 %v1380
    %v2193 = vunpack.c.l.b16 %v1381
    %v2194 = vunpack.c.h.b16 %v1381
    %v2195 = vunpack.c.l.b16 %v1382
    %v2196 = vunpack.c.h.b16 %v1382
    %v2197 = vunpack.c.l.b16 %v1383
    %v2198 = vunpack.c.h.b16 %v1383
    %v2199 = vunpack.c.l.b16 %v1384
    %v2200 = vunpack.c.h.b16 %v1384
    %v2201 = vunpack.c.l.b16 %v1385
    %v2202 = vunpack.c.h.b16 %v1385
    %v2203 = vunpack.c.l.b16 %v1386
    %v2204 = vunpack.c.h.b16 %v1386
    %v2205 = vunpack.c.l.b16 %v1387
    %v2206 = vunpack.c.h.b16 %v1387
    %v2207 = vunpack.c.l.b16 %v1388
    %v2208 = vunpack.c.h.b16 %v1388
    %v2209 = vunpack.c.l.b16 %v1389
    %v2210 = vunpack.c.h.b16 %v1389
    %v2211 = vunpack.c.l.b16 %v1390
    %v2212 = vunpack.c.h.b16 %v1390
    %v2213 = vunpack.c.l.b16 %v1391
    %v2214 = vunpack.c.h.b16 %v1391
    %v2215 = vunpack.c.l.b16 %v1392
    %v2216 = vunpack.c.h.b16 %v1392
    %v2217 = vunpack.c.l.b16 %v1393
    %v2218 = vunpack.c.h.b16 %v1393
    %v2219 = vunpack.c.l.b16 %v1394
    %v2220 = vunpack.c.h.b16 %v1394
    %v2221 = vunpack.c.l.b16 %v1395
    %v2222 = vunpack.c.h.b16 %v1395
    %v2223 = vunpack.c.l.b16 %v1396
    %v2224 = vunpack.c.h.b16 %v1396
    %v2225 = vunpack.c.l.b16 %v1397
    %v2226 = vunpack.c.h.b16 %v1397
    %v2227 = vunpack.c.l.b16 %v1398
    %v2228 = vunpack.c.h.b16 %v1398
    %v2229 = vunpack.c.l.b16 %v1399
    %v2230 = vunpack.c.h.b16 %v1399
    %v2231 = vunpack.c.l.b16 %v1400
    %v2232 = vunpack.c.h.b16 %v1400
    %v2233 = vunpack.c.l.b16 %v1401
    %v2234 = vunpack.c.h.b16 %v1401
    %v2235 = vunpack.c.l.b16 %v1402
    %v2236 = vunpack.c.h.b16 %v1402
    %v2237 = vunpack.c.l.b16 %v1403
    %v2238 = vunpack.c.h.b16 %v1403
    %v2239 = vunpack.c.l.b16 %v1404
    %v2240 = vunpack.c.h.b16 %v1404
    %v2241 = vunpack.c.l.b16 %v1405
    %v2242 = vunpack.c.h.b16 %v1405
    %v2243 = vunpack.c.l.b16 %v1406
    %v2244 = vunpack.c.h.b16 %v1406
    %v2245 = vunpack.c.l.b16 %v1407
    %v2246 = vunpack.c.h.b16 %v1407
    %v2247 = vunpack.c.l.b16 %v1408
    %v2248 = vunpack.c.h.b16 %v1408
    %v2249 = vunpack.c.l.b16 %v1409
    %v2250 = vunpack.c.h.b16 %v1409
    %v2251 = vunpack.c.l.b16 %v1410
    %v2252 = vunpack.c.h.b16 %v1410
    %v2253 = vunpack.c.l.b16 %v1411
    %v2254 = vunpack.c.h.b16 %v1411
    %v2255 = vunpack.c.l.b16 %v1412
    %v2256 = vunpack.c.h.b16 %v1412
    %v2257 = vunpack.c.l.b16 %v1413
    %v2258 = vunpack.c.h.b16 %v1413
    %v2259 = vunpack.c.l.b16 %v1414
    %v2260 = vunpack.c.h.b16 %v1414
    %v2261 = vunpack.c.l.b16 %v1415
    %v2262 = vunpack.c.h.b16 %v1415
    %v2263 = vunpack.c.l.b16 %v1416
    %v2264 = vunpack.c.h.b16 %v1416
    %v2265 = vunpack.c.l.b16 %v1417
    %v2266 = vunpack.c.h.b16 %v1417
    %v2267 = vunpack.c.l.b16 %v1418
    %v2268 = vunpack.c.h.b16 %v1418
    %v2269 = vunpack.c.l.b16 %v1419
    %v2270 = vunpack.c.h.b16 %v1419
    %v2271 = vunpack.c.l.b16 %v1420
    %v2272 = vunpack.c.h.b16 %v1420
    %v2273 = vunpack.c.l.b16 %v1421
    %v2274 = vunpack.c.h.b16 %v1421
    %v2275 = vunpack.c.l.b16 %v1422
    %v2276 = vunpack.c.h.b16 %v1422
    %v2277 = vpack.c.b16 %v1781, %v1765
    %v2278 = vpack.c.b16 %v1782, %v1766
    %v2279 = vpack.c.b16 %v1783, %v1767
    %v2280 = vpack.c.b16 %v1784, %v1768
    %v2281 = vpack.c.b16 %v1785, %v1769
    %v2282 = vpack.c.b16 %v1786, %v1770
    %v2283 = vpack.c.b16 %v1787, %v1771
    %v2284 = vpack.c.b16 %v1788, %v1772
    %v2285 = vpack.c.b16 %v1789, %v1773
    %v2286 = vpack.c.b16 %v1790, %v1774
    %v2287 = vpack.c.b16 %v1791, %v1775
    %v2288 = vpack.c.b16 %v1792, %v1776
    %v2289 = vpack.c.b16 %v1793, %v1777
    %v2290 = vpack.c.b16 %v1794, %v1778
    %v2291 = vpack.c.b16 %v1795, %v1779
    %v2292 = vpack.c.b16 %v1796, %v1780
    %v2293 = vpack.c.b16 %v1813, %v1797
    %v2294 = vpack.c.b16 %v1814, %v1798
    %v2295 = vpack.c.b16 %v1815, %v1799
    %v2296 = vpack.c.b16 %v1816, %v1800
    %v2297 = vpack.c.b16 %v1817, %v1801
    %v2298 = vpack.c.b16 %v1818, %v1802
    %v2299 = vpack.c.b16 %v1819, %v1803
    %v2300 = vpack.c.b16 %v1820, %v1804
    %v2301 = vpack.c.b16 %v1821, %v1805
    %v2302 = vpack.c.b16 %v1822, %v1806
    %v2303 = vpack.c.b16 %v1823, %v1807
    %v2304 = vpack.c.b16 %v1824, %v1808
    %v2305 = vpack.c.b16 %v1825, %v1809
    %v2306 = vpack.c.b16 %v1826, %v1810
    %v2307 = vpack.c.b16 %v1827, %v1811
    %v2308 = vpack.c.b16 %v1828, %v1812
    %v2309 = vpack.c.b16 %v1845, %v1829
    %v2310 = vpack.c.b16 %v1846, %v1830
    %v2311 = vpack.c.b16 %v1847, %v1831
    %v2312 = vpack.c.b16 %v1848, %v1832
    %v2313 = vpack.c.b16 %v1849, %v1833
    %v2314 = vpack.c.b16 %v1850, %v1834
    %v2315 = vpack.c.b16 %v1851, %v1835
    %v2316 = vpack.c.b16 %v1852, %v1836
    %v2317 = vpack.c.b16 %v1853, %v1837
    %v2318 = vpack.c.b16 %v1854, %v1838
    %v2319 = vpack.c.b16 %v1855, %v1839
    %v2320 = vpack.c.b16 %v1856, %v1840
    %v2321 = vpack.c.b16 %v1857, %v1841
    %v2322 = vpack.c.b16 %v1858, %v1842
    %v2323 = vpack.c.b16 %v1859, %v1843
    %v2324 = vpack.c.b16 %v1860, %v1844
    %v2325 = vpack.c.b16 %v1877, %v1861
    %v2326 = vpack.c.b16 %v1878, %v1862
    %v2327 = vpack.c.b16 %v1879, %v1863
    %v2328 = vpack.c.b16 %v1880, %v1864
    %v2329 = vpack.c.b16 %v1881, %v1865
    %v2330 = vpack.c.b16 %v1882, %v1866
    %v2331 = vpack.c.b16 %v1883, %v1867
    %v2332 = vpack.c.b16 %v1884, %v1868
    %v2333 = vpack.c.b16 %v1885, %v1869
    %v2334 = vpack.c.b16 %v1886, %v1870
    %v2335 = vpack.c.b16 %v1887, %v1871
    %v2336 = vpack.c.b16 %v1888, %v1872
    %v2337 = vpack.c.b16 %v1889, %v1873
    %v2338 = vpack.c.b16 %v1890, %v1874
    %v2339 = vpack.c.b16 %v1891, %v1875
    %v2340 = vpack.c.b16 %v1892, %v1876
    %v2341 = vpack.c.b16 %v1909, %v1893
    %v2342 = vpack.c.b16 %v1910, %v1894
    %v2343 = vpack.c.b16 %v1911, %v1895
    %v2344 = vpack.c.b16 %v1912, %v1896
    %v2345 = vpack.c.b16 %v1913, %v1897
    %v2346 = vpack.c.b16 %v1914, %v1898
    %v2347 = vpack.c.b16 %v1915, %v1899
    %v2348 = vpack.c.b16 %v1916, %v1900
    %v2349 = vpack.c.b16 %v1917, %v1901
    %v2350 = vpack.c.b16 %v1918, %v1902
    %v2351 = vpack.c.b16 %v1919, %v1903
    %v2352 = vpack.c.b16 %v1920, %v1904
    %v2353 = vpack.c.b16 %v1921, %v1905
    %v2354 = vpack.c.b16 %v1922, %v1906
    %v2355 = vpack.c.b16 %v1923, %v1907
    %v2356 = vpack.c.b16 %v1924, %v1908
    %v2357 = vpack.c.b16 %v1941, %v1925
    %v2358 = vpack.c.b16 %v1942, %v1926
    %v2359 = vpack.c.b16 %v1943, %v1927
    %v2360 = vpack.c.b16 %v1944, %v1928
    %v2361 = vpack.c.b16 %v1945, %v1929
    %v2362 = vpack.c.b16 %v1946, %v1930
    %v2363 = vpack.c.b16 %v1947, %v1931
    %v2364 = vpack.c.b16 %v1948, %v1932
    %v2365 = vpack.c.b16 %v1949, %v1933
    %v2366 = vpack.c.b16 %v1950, %v1934
    %v2367 = vpack.c.b16 %v1951, %v1935
    %v2368 = vpack.c.b16 %v1952, %v1936
    %v2369 = vpack.c.b16 %v1953, %v1937
    %v2370 = vpack.c.b16 %v1954, %v1938
    %v2371 = vpack.c.b16 %v1955, %v1939
    %v2372 = vpack.c.b16 %v1956, %v1940
    %v2373 = vpack.c.b16 %v1973, %v1957
    %v2374 = vpack.c.b16 %v1974, %v1958
    %v2375 = vpack.c.b16 %v1975, %v1959
    %v2376 = vpack.c.b16 %v1976, %v1960
    %v2377 = vpack.c.b16 %v1977, %v1961
    %v2378 = vpack.c.b16 %v1978, %v1962
    %v2379 = vpack.c.b16 %v1979, %v1963
    %v2380 = vpack.c.b16 %v1980, %v1964
    %v2381 = vpack.c.b16 %v1981, %v1965
    %v2382 = vpack.c.b16 %v1982, %v1966
    %v2383 = vpack.c.b16 %v1983, %v1967
    %v2384 = vpack.c.b16 %v1984, %v1968
    %v2385 = vpack.c.b16 %v1985, %v1969
    %v2386 = vpack.c.b16 %v1986, %v1970
    %v2387 = vpack.c.b16 %v1987, %v1971
    %v2388 = vpack.c.b16 %v1988, %v1972
    %v2389 = vpack.c.b16 %v2005, %v1989
    %v2390 = vpack.c.b16 %v2006, %v1990
    %v2391 = vpack.c.b16 %v2007, %v1991
    %v2392 = vpack.c.b16 %v2008, %v1992
    %v2393 = vpack.c.b16 %v2009, %v1993
    %v2394 = vpack.c.b16 %v2010, %v1994
    %v2395 = vpack.c.b16 %v2011, %v1995
    %v2396 = vpack.c.b16 %v2012, %v1996
    %v2397 = vpack.c.b16 %v2013, %v1997
    %v2398 = vpack.c.b16 %v2014, %v1998
    %v2399 = vpack.c.b16 %v2015, %v1999
    %v2400 = vpack.c.b16 %v2016, %v2000
    %v2401 = vpack.c.b16 %v2017, %v2001
    %v2402 = vpack.c.b16 %v2018, %v2002
    %v2403 = vpack.c.b16 %v2019, %v2003
    %v2404 = vpack.c.b16 %v2020, %v2004
    %v2405 = vpack.c.b16 %v2037, %v2021
    %v2406 = vpack.c.b16 %v2038, %v2022
    %v2407 = vpack.c.b16 %v2039, %v2023
    %v2408 = vpack.c.b16 %v2040, %v2024
    %v2409 = vpack.c.b16 %v2041, %v2025
    %v2410 = vpack.c.b16 %v2042, %v2026
    %v2411 = vpack.c.b16 %v2043, %v2027
    %v2412 = vpack.c.b16 %v2044, %v2028
    %v2413 = vpack.c.b16 %v2045, %v2029
    %v2414 = vpack.c.b16 %v2046, %v2030
    %v2415 = vpack.c.b16 %v2047, %v2031
    %v2416 = vpack.c.b16 %v2048, %v2032
    %v2417 = vpack.c.b16 %v2049, %v2033
    %v2418 = vpack.c.b16 %v2050, %v2034
    %v2419 = vpack.c.b16 %v2051, %v2035
    %v2420 = vpack.c.b16 %v2052, %v2036
    %v2421 = vpack.c.b16 %v2069, %v2053
    %v2422 = vpack.c.b16 %v2070, %v2054
    %v2423 = vpack.c.b16 %v2071, %v2055
    %v2424 = vpack.c.b16 %v2072, %v2056
    %v2425 = vpack.c.b16 %v2073, %v2057
    %v2426 = vpack.c.b16 %v2074, %v2058
    %v2427 = vpack.c.b16 %v2075, %v2059
    %v2428 = vpack.c.b16 %v2076, %v2060
    %v2429 = vpack.c.b16 %v2077, %v2061
    %v2430 = vpack.c.b16 %v2078, %v2062
    %v2431 = vpack.c.b16 %v2079, %v2063
    %v2432 = vpack.c.b16 %v2080, %v2064
    %v2433 = vpack.c.b16 %v2081, %v2065
    %v2434 = vpack.c.b16 %v2082, %v2066
    %v2435 = vpack.c.b16 %v2083, %v2067
    %v2436 = vpack.c.b16 %v2084, %v2068
    %v2437 = vpack.c.b16 %v2101, %v2085
    %v2438 = vpack.c.b16 %v2102, %v2086
    %v2439 = vpack.c.b16 %v2103, %v2087
    %v2440 = vpack.c.b16 %v2104, %v2088
    %v2441 = vpack.c.b16 %v2105, %v2089
    %v2442 = vpack.c.b16 %v2106, %v2090
    %v2443 = vpack.c.b16 %v2107, %v2091
    %v2444 = vpack.c.b16 %v2108, %v2092
    %v2445 = vpack.c.b16 %v2109, %v2093
    %v2446 = vpack.c.b16 %v2110, %v2094
    %v2447 = vpack.c.b16 %v2111, %v2095
    %v2448 = vpack.c.b16 %v2112, %v2096
    %v2449 = vpack.c.b16 %v2113, %v2097
    %v2450 = vpack.c.b16 %v2114, %v2098
    %v2451 = vpack.c.b16 %v2115, %v2099
    %v2452 = vpack.c.b16 %v2116, %v2100
    %v2453 = vpack.c.b16 %v2133, %v2117
    %v2454 = vpack.c.b16 %v2134, %v2118
    %v2455 = vpack.c.b16 %v2135, %v2119
    %v2456 = vpack.c.b16 %v2136, %v2120
    %v2457 = vpack.c.b16 %v2137, %v2121
    %v2458 = vpack.c.b16 %v2138, %v2122
    %v2459 = vpack.c.b16 %v2139, %v2123
    %v2460 = vpack.c.b16 %v2140, %v2124
    %v2461 = vpack.c.b16 %v2141, %v2125
    %v2462 = vpack.c.b16 %v2142, %v2126
    %v2463 = vpack.c.b16 %v2143, %v2127
    %v2464 = vpack.c.b16 %v2144, %v2128
    %v2465 = vpack.c.b16 %v2145, %v2129
    %v2466 = vpack.c.b16 %v2146, %v2130
    %v2467 = vpack.c.b16 %v2147, %v2131
    %v2468 = vpack.c.b16 %v2148, %v2132
    %v2469 = vpack.c.b16 %v2165, %v2149
    %v2470 = vpack.c.b16 %v2166, %v2150
    %v2471 = vpack.c.b16 %v2167, %v2151
    %v2472 = vpack.c.b16 %v2168, %v2152
    %v2473 = vpack.c.b16 %v2169, %v2153
    %v2474 = vpack.c.b16 %v2170, %v2154
    %v2475 = vpack.c.b16 %v2171, %v2155
    %v2476 = vpack.c.b16 %v2172, %v2156
    %v2477 = vpack.c.b16 %v2173, %v2157
    %v2478 = vpack.c.b16 %v2174, %v2158
    %v2479 = vpack.c.b16 %v2175, %v2159
    %v2480 = vpack.c.b16 %v2176, %v2160
    %v2481 = vpack.c.b16 %v2177, %v2161
    %v2482 = vpack.c.b16 %v2178, %v2162
    %v2483 = vpack.c.b16 %v2179, %v2163
    %v2484 = vpack.c.b16 %v2180, %v2164
    %v2485 = vpack.c.b16 %v2197, %v2181
    %v2486 = vpack.c.b16 %v2198, %v2182
    %v2487 = vpack.c.b16 %v2199, %v2183
    %v2488 = vpack.c.b16 %v2200, %v2184
    %v2489 = vpack.c.b16 %v2201, %v2185
    %v2490 = vpack.c.b16 %v2202, %v2186
    %v2491 = vpack.c.b16 %v2203, %v2187
    %v2492 = vpack.c.b16 %v2204, %v2188
    %v2493 = vpack.c.b16 %v2205, %v2189
    %v2494 = vpack.c.b16 %v2206, %v2190
    %v2495 = vpack.c.b16 %v2207, %v2191
    %v2496 = vpack.c.b16 %v2208, %v2192
    %v2497 = vpack.c.b16 %v2209, %v2193
    %v2498 = vpack.c.b16 %v2210, %v2194
    %v2499 = vpack.c.b16 %v2211, %v2195
    %v2500 = vpack.c.b16 %v2212, %v2196
    %v2501 = vpack.c.b16 %v2229, %v2213
    %v2502 = vpack.c.b16 %v2230, %v2214
    %v2503 = vpack.c.b16 %v2231, %v2215
    %v2504 = vpack.c.b16 %v2232, %v2216
    %v2505 = vpack.c.b16 %v2233, %v2217
    %v2506 = vpack.c.b16 %v2234, %v2218
    %v2507 = vpack.c.b16 %v2235, %v2219
    %v2508 = vpack.c.b16 %v2236, %v2220
    %v2509 = vpack.c.b16 %v2237, %v2221
    %v2510 = vpack.c.b16 %v2238, %v2222
    %v2511 = vpack.c.b16 %v2239, %v2223
    %v2512 = vpack.c.b16 %v2240, %v2224
    %v2513 = vpack.c.b16 %v2241, %v2225
    %v2514 = vpack.c.b16 %v2242, %v2226
    %v2515 = vpack.c.b16 %v2243, %v2227
    %v2516 = vpack.c.b16 %v2244, %v2228
    %v2517 = vpack.c.b16 %v2261, %v2245
    %v2518 = vpack.c.b16 %v2262, %v2246
    %v2519 = vpack.c.b16 %v2263, %v2247
    %v2520 = vpack.c.b16 %v2264, %v2248
    %v2521 = vpack.c.b16 %v2265, %v2249
    %v2522 = vpack.c.b16 %v2266, %v2250
    %v2523 = vpack.c.b16 %v2267, %v2251
    %v2524 = vpack.c.b16 %v2268, %v2252
    %v2525 = vpack.c.b16 %v2269, %v2253
    %v2526 = vpack.c.b16 %v2270, %v2254
    %v2527 = vpack.c.b16 %v2271, %v2255
    %v2528 = vpack.c.b16 %v2272, %v2256
    %v2529 = vpack.c.b16 %v2273, %v2257
    %v2530 = vpack.c.b16 %v2274, %v2258
    %v2531 = vpack.c.b16 %v2275, %v2259
    %v2532 = vpack.c.b16 %v2276, %v2260
    %2789 = vmatprep.subr.bf16.mxu0 %v2278
    %2790 = vmatpush1.bf16.msra.mxu0 %v2277
    %2791 = vmatprep.subr.bf16.mxu0 %v2294
    %2792 = vmatpush1.bf16.msra.mxu0 %v2293
    %2793 = vmatprep.subr.bf16.mxu0 %v2310
    %2794 = vmatpush1.bf16.msra.mxu0 %v2309
    %2795 = vmatprep.subr.bf16.mxu0 %v2326
    %2796 = vmatpush1.bf16.msra.mxu0 %v2325
    %2797 = vmatprep.subr.bf16.mxu0 %v2342
    %2798 = vmatpush1.bf16.msra.mxu0 %v2341
    %2799 = vmatprep.subr.bf16.mxu0 %v2358
    %2800 = vmatpush1.bf16.msra.mxu0 %v2357
    %2801 = vmatprep.subr.bf16.mxu0 %v2374
    %2802 = vmatpush1.bf16.msra.mxu0 %v2373
    %2803 = vmatprep.subr.bf16.mxu0 %v2390
    %2804 = vmatpush1.bf16.msra.mxu0 %v2389
    %2805 = vmatprep.subr.bf16.mxu0 %v2406
    %2806 = vmatpush1.bf16.msra.mxu0 %v2405
    %2807 = vmatprep.subr.bf16.mxu0 %v2422
    %2808 = vmatpush1.bf16.msra.mxu0 %v2421
    %2809 = vmatprep.subr.bf16.mxu0 %v2438
    %2810 = vmatpush1.bf16.msra.mxu0 %v2437
    %2811 = vmatprep.subr.bf16.mxu0 %v2454
    %2812 = vmatpush1.bf16.msra.mxu0 %v2453
    %2813 = vmatprep.subr.bf16.mxu0 %v2470
    %2814 = vmatpush1.bf16.msra.mxu0 %v2469
    %2815 = vmatprep.subr.bf16.mxu0 %v2486
    %2816 = vmatpush1.bf16.msra.mxu0 %v2485
    %2817 = vmatprep.subr.bf16.mxu0 %v2502
    %2818 = vmatpush1.bf16.msra.mxu0 %v2501
    %2819 = vmatprep.subr.bf16.mxu0 %v2518
    %2820 = vmatpush1.bf16.msra.mxu0 %v2517
    %2821 = vmatprep.mubr.bf16.mxu0 %v1424
    %2822 = vmatmul.mubr.bf16.gmra.mrb[0].mxu0 %v1423
    %v2823 = vpop.f32.mrb[0].mxu0
    %v2824 = vadd.f32 %v1432, %v2823
    %v2825 = vpop.f32.mrb[0].mxu0
    %v2826 = vadd.f32 %v1436, %v2825
    %v2827 = vpop.f32.mrb[0].mxu0
    %v2828 = vpop.f32.mrb[0].mxu0
    %2829 = vdwg.mxu0
    %2830 = vmatprep.subr.bf16.mxu0 %v2280
    %2831 = vmatpush1.bf16.msra.mxu0 %v2279
    %2832 = vmatprep.subr.bf16.mxu0 %v2296
    %2833 = vmatpush1.bf16.msra.mxu0 %v2295
    %2834 = vmatprep.subr.bf16.mxu0 %v2312
    %2835 = vmatpush1.bf16.msra.mxu0 %v2311
    %2836 = vmatprep.subr.bf16.mxu0 %v2328
    %2837 = vmatpush1.bf16.msra.mxu0 %v2327
    %2838 = vmatprep.subr.bf16.mxu0 %v2344
    %2839 = vmatpush1.bf16.msra.mxu0 %v2343
    %2840 = vmatprep.subr.bf16.mxu0 %v2360
    %2841 = vmatpush1.bf16.msra.mxu0 %v2359
    %2842 = vmatprep.subr.bf16.mxu0 %v2376
    %2843 = vmatpush1.bf16.msra.mxu0 %v2375
    %2844 = vmatprep.subr.bf16.mxu0 %v2392
    %2845 = vmatpush1.bf16.msra.mxu0 %v2391
    %2846 = vmatprep.subr.bf16.mxu0 %v2408
    %2847 = vmatpush1.bf16.msra.mxu0 %v2407
    %2848 = vmatprep.subr.bf16.mxu0 %v2424
    %2849 = vmatpush1.bf16.msra.mxu0 %v2423
    %2850 = vmatprep.subr.bf16.mxu0 %v2440
    %2851 = vmatpush1.bf16.msra.mxu0 %v2439
    %2852 = vmatprep.subr.bf16.mxu0 %v2456
    %2853 = vmatpush1.bf16.msra.mxu0 %v2455
    %2854 = vmatprep.subr.bf16.mxu0 %v2472
    %2855 = vmatpush1.bf16.msra.mxu0 %v2471
    %2856 = vmatprep.subr.bf16.mxu0 %v2488
    %2857 = vmatpush1.bf16.msra.mxu0 %v2487
    %2858 = vmatprep.subr.bf16.mxu0 %v2504
    %2859 = vmatpush1.bf16.msra.mxu0 %v2503
    %2860 = vmatprep.subr.bf16.mxu0 %v2520
    %2861 = vmatpush1.bf16.msra.mxu0 %v2519
    %2862 = vmatprep.mubr.bf16.mxu0 %v1424
    %2863 = vmatmul.mubr.bf16.gmra.mrb[0].mxu0 %v1423
    %v2864 = vpop.f32.mrb[0].mxu0
    %v2865 = vadd.f32 %v1440, %v2864
    %v2866 = vpop.f32.mrb[0].mxu0
    %v2867 = vadd.f32 %v1444, %v2866
    %v2868 = vpop.f32.mrb[0].mxu0
    %v2869 = vpop.f32.mrb[0].mxu0
    %2870 = vdwg.mxu0
    %2871 = vmatprep.subr.bf16.mxu0 %v2282
    %2872 = vmatpush1.bf16.msra.mxu0 %v2281
    %2873 = vmatprep.subr.bf16.mxu0 %v2298
    %2874 = vmatpush1.bf16.msra.mxu0 %v2297
    %2875 = vmatprep.subr.bf16.mxu0 %v2314
    %2876 = vmatpush1.bf16.msra.mxu0 %v2313
    %2877 = vmatprep.subr.bf16.mxu0 %v2330
    %2878 = vmatpush1.bf16.msra.mxu0 %v2329
    %2879 = vmatprep.subr.bf16.mxu0 %v2346
    %2880 = vmatpush1.bf16.msra.mxu0 %v2345
    %2881 = vmatprep.subr.bf16.mxu0 %v2362
    %2882 = vmatpush1.bf16.msra.mxu0 %v2361
    %2883 = vmatprep.subr.bf16.mxu0 %v2378
    %2884 = vmatpush1.bf16.msra.mxu0 %v2377
    %2885 = vmatprep.subr.bf16.mxu0 %v2394
    %2886 = vmatpush1.bf16.msra.mxu0 %v2393
    %2887 = vmatprep.subr.bf16.mxu0 %v2410
    %2888 = vmatpush1.bf16.msra.mxu0 %v2409
    %2889 = vmatprep.subr.bf16.mxu0 %v2426
    %2890 = vmatpush1.bf16.msra.mxu0 %v2425
    %2891 = vmatprep.subr.bf16.mxu0 %v2442
    %2892 = vmatpush1.bf16.msra.mxu0 %v2441
    %2893 = vmatprep.subr.bf16.mxu0 %v2458
    %2894 = vmatpush1.bf16.msra.mxu0 %v2457
    %2895 = vmatprep.subr.bf16.mxu0 %v2474
    %2896 = vmatpush1.bf16.msra.mxu0 %v2473
    %2897 = vmatprep.subr.bf16.mxu0 %v2490
    %2898 = vmatpush1.bf16.msra.mxu0 %v2489
    %2899 = vmatprep.subr.bf16.mxu0 %v2506
    %2900 = vmatpush1.bf16.msra.mxu0 %v2505
    %2901 = vmatprep.subr.bf16.mxu0 %v2522
    %2902 = vmatpush1.bf16.msra.mxu0 %v2521
    %2903 = vmatprep.mubr.bf16.mxu0 %v1424
    %2904 = vmatmul.mubr.bf16.gmra.mrb[0].mxu0 %v1423
    %v2905 = vpop.f32.mrb[0].mxu0
    %v2906 = vadd.f32 %v1448, %v2905
    %v2907 = vpop.f32.mrb[0].mxu0
    %v2908 = vadd.f32 %v1452, %v2907
    %v2909 = vpop.f32.mrb[0].mxu0
    %v2910 = vpop.f32.mrb[0].mxu0
    %2911 = vdwg.mxu0
    %2912 = vmatprep.subr.bf16.mxu0 %v2284
    %2913 = vmatpush1.bf16.msra.mxu0 %v2283
    %2914 = vmatprep.subr.bf16.mxu0 %v2300
    %2915 = vmatpush1.bf16.msra.mxu0 %v2299
    %2916 = vmatprep.subr.bf16.mxu0 %v2316
    %2917 = vmatpush1.bf16.msra.mxu0 %v2315
    %2918 = vmatprep.subr.bf16.mxu0 %v2332
    %2919 = vmatpush1.bf16.msra.mxu0 %v2331
    %2920 = vmatprep.subr.bf16.mxu0 %v2348
    %2921 = vmatpush1.bf16.msra.mxu0 %v2347
    %2922 = vmatprep.subr.bf16.mxu0 %v2364
    %2923 = vmatpush1.bf16.msra.mxu0 %v2363
    %2924 = vmatprep.subr.bf16.mxu0 %v2380
    %2925 = vmatpush1.bf16.msra.mxu0 %v2379
    %2926 = vmatprep.subr.bf16.mxu0 %v2396
    %2927 = vmatpush1.bf16.msra.mxu0 %v2395
    %2928 = vmatprep.subr.bf16.mxu0 %v2412
    %2929 = vmatpush1.bf16.msra.mxu0 %v2411
    %2930 = vmatprep.subr.bf16.mxu0 %v2428
    %2931 = vmatpush1.bf16.msra.mxu0 %v2427
    %2932 = vmatprep.subr.bf16.mxu0 %v2444
    %2933 = vmatpush1.bf16.msra.mxu0 %v2443
    %2934 = vmatprep.subr.bf16.mxu0 %v2460
    %2935 = vmatpush1.bf16.msra.mxu0 %v2459
    %2936 = vmatprep.subr.bf16.mxu0 %v2476
    %2937 = vmatpush1.bf16.msra.mxu0 %v2475
    %2938 = vmatprep.subr.bf16.mxu0 %v2492
    %2939 = vmatpush1.bf16.msra.mxu0 %v2491
    %2940 = vmatprep.subr.bf16.mxu0 %v2508
    %2941 = vmatpush1.bf16.msra.mxu0 %v2507
    %2942 = vmatprep.subr.bf16.mxu0 %v2524
    %2943 = vmatpush1.bf16.msra.mxu0 %v2523
    %2944 = vmatprep.mubr.bf16.mxu0 %v1424
    %2945 = vmatmul.mubr.bf16.gmra.mrb[0].mxu0 %v1423
    %v2946 = vpop.f32.mrb[0].mxu0
    %v2947 = vadd.f32 %v1456, %v2946
    %v2948 = vpop.f32.mrb[0].mxu0
    %v2949 = vadd.f32 %v1460, %v2948
    %v2950 = vpop.f32.mrb[0].mxu0
    %v2951 = vpop.f32.mrb[0].mxu0
    %2952 = vdwg.mxu0
    %2953 = vmatprep.subr.bf16.mxu0 %v2286
    %2954 = vmatpush1.bf16.msra.mxu0 %v2285
    %2955 = vmatprep.subr.bf16.mxu0 %v2302
    %2956 = vmatpush1.bf16.msra.mxu0 %v2301
    %2957 = vmatprep.subr.bf16.mxu0 %v2318
    %2958 = vmatpush1.bf16.msra.mxu0 %v2317
    %2959 = vmatprep.subr.bf16.mxu0 %v2334
    %2960 = vmatpush1.bf16.msra.mxu0 %v2333
    %2961 = vmatprep.subr.bf16.mxu0 %v2350
    %2962 = vmatpush1.bf16.msra.mxu0 %v2349
    %2963 = vmatprep.subr.bf16.mxu0 %v2366
    %2964 = vmatpush1.bf16.msra.mxu0 %v2365
    %2965 = vmatprep.subr.bf16.mxu0 %v2382
    %2966 = vmatpush1.bf16.msra.mxu0 %v2381
    %2967 = vmatprep.subr.bf16.mxu0 %v2398
    %2968 = vmatpush1.bf16.msra.mxu0 %v2397
    %2969 = vmatprep.subr.bf16.mxu0 %v2414
    %2970 = vmatpush1.bf16.msra.mxu0 %v2413
    %2971 = vmatprep.subr.bf16.mxu0 %v2430
    %2972 = vmatpush1.bf16.msra.mxu0 %v2429
    %2973 = vmatprep.subr.bf16.mxu0 %v2446
    %2974 = vmatpush1.bf16.msra.mxu0 %v2445
    %2975 = vmatprep.subr.bf16.mxu0 %v2462
    %2976 = vmatpush1.bf16.msra.mxu0 %v2461
    %2977 = vmatprep.subr.bf16.mxu0 %v2478
    %2978 = vmatpush1.bf16.msra.mxu0 %v2477
    %2979 = vmatprep.subr.bf16.mxu0 %v2494
    %2980 = vmatpush1.bf16.msra.mxu0 %v2493
    %2981 = vmatprep.subr.bf16.mxu0 %v2510
    %2982 = vmatpush1.bf16.msra.mxu0 %v2509
    %2983 = vmatprep.subr.bf16.mxu0 %v2526
    %2984 = vmatpush1.bf16.msra.mxu0 %v2525
    %2985 = vmatprep.mubr.bf16.mxu0 %v1424
    %2986 = vmatmul.mubr.bf16.gmra.mrb[0].mxu0 %v1423
    %v2987 = vpop.f32.mrb[0].mxu0
    %v2988 = vadd.f32 %v1464, %v2987
    %v2989 = vpop.f32.mrb[0].mxu0
    %v2990 = vadd.f32 %v1468, %v2989
    %v2991 = vpop.f32.mrb[0].mxu0
    %v2992 = vpop.f32.mrb[0].mxu0
    %2993 = vdwg.mxu0
    %2994 = vmatprep.subr.bf16.mxu0 %v2288
    %2995 = vmatpush1.bf16.msra.mxu0 %v2287
    %2996 = vmatprep.subr.bf16.mxu0 %v2304
    %2997 = vmatpush1.bf16.msra.mxu0 %v2303
    %2998 = vmatprep.subr.bf16.mxu0 %v2320
    %2999 = vmatpush1.bf16.msra.mxu0 %v2319
    %3000 = vmatprep.subr.bf16.mxu0 %v2336
    %3001 = vmatpush1.bf16.msra.mxu0 %v2335
    %3002 = vmatprep.subr.bf16.mxu0 %v2352
    %3003 = vmatpush1.bf16.msra.mxu0 %v2351
    %3004 = vmatprep.subr.bf16.mxu0 %v2368
    %3005 = vmatpush1.bf16.msra.mxu0 %v2367
    %3006 = vmatprep.subr.bf16.mxu0 %v2384
    %3007 = vmatpush1.bf16.msra.mxu0 %v2383
    %3008 = vmatprep.subr.bf16.mxu0 %v2400
    %3009 = vmatpush1.bf16.msra.mxu0 %v2399
    %3010 = vmatprep.subr.bf16.mxu0 %v2416
    %3011 = vmatpush1.bf16.msra.mxu0 %v2415
    %3012 = vmatprep.subr.bf16.mxu0 %v2432
    %3013 = vmatpush1.bf16.msra.mxu0 %v2431
    %3014 = vmatprep.subr.bf16.mxu0 %v2448
    %3015 = vmatpush1.bf16.msra.mxu0 %v2447
    %3016 = vmatprep.subr.bf16.mxu0 %v2464
    %3017 = vmatpush1.bf16.msra.mxu0 %v2463
    %3018 = vmatprep.subr.bf16.mxu0 %v2480
    %3019 = vmatpush1.bf16.msra.mxu0 %v2479
    %3020 = vmatprep.subr.bf16.mxu0 %v2496
    %3021 = vmatpush1.bf16.msra.mxu0 %v2495
    %3022 = vmatprep.subr.bf16.mxu0 %v2512
    %3023 = vmatpush1.bf16.msra.mxu0 %v2511
    %3024 = vmatprep.subr.bf16.mxu0 %v2528
    %3025 = vmatpush1.bf16.msra.mxu0 %v2527
    %3026 = vmatprep.mubr.bf16.mxu0 %v1424
    %3027 = vmatmul.mubr.bf16.gmra.mrb[0].mxu0 %v1423
    %v3028 = vpop.f32.mrb[0].mxu0
    %v3029 = vadd.f32 %v1472, %v3028
    %v3030 = vpop.f32.mrb[0].mxu0
    %v3031 = vadd.f32 %v1476, %v3030
    %v3032 = vpop.f32.mrb[0].mxu0
    %v3033 = vpop.f32.mrb[0].mxu0
    %3034 = vdwg.mxu0
    %3035 = vmatprep.subr.bf16.mxu0 %v2290
    %3036 = vmatpush1.bf16.msra.mxu0 %v2289
    %3037 = vmatprep.subr.bf16.mxu0 %v2306
    %3038 = vmatpush1.bf16.msra.mxu0 %v2305
    %3039 = vmatprep.subr.bf16.mxu0 %v2322
    %3040 = vmatpush1.bf16.msra.mxu0 %v2321
    %3041 = vmatprep.subr.bf16.mxu0 %v2338
    %3042 = vmatpush1.bf16.msra.mxu0 %v2337
    %3043 = vmatprep.subr.bf16.mxu0 %v2354
    %3044 = vmatpush1.bf16.msra.mxu0 %v2353
    %3045 = vmatprep.subr.bf16.mxu0 %v2370
    %3046 = vmatpush1.bf16.msra.mxu0 %v2369
    %3047 = vmatprep.subr.bf16.mxu0 %v2386
    %3048 = vmatpush1.bf16.msra.mxu0 %v2385
    %3049 = vmatprep.subr.bf16.mxu0 %v2402
    %3050 = vmatpush1.bf16.msra.mxu0 %v2401
    %3051 = vmatprep.subr.bf16.mxu0 %v2418
    %3052 = vmatpush1.bf16.msra.mxu0 %v2417
    %3053 = vmatprep.subr.bf16.mxu0 %v2434
    %3054 = vmatpush1.bf16.msra.mxu0 %v2433
    %3055 = vmatprep.subr.bf16.mxu0 %v2450
    %3056 = vmatpush1.bf16.msra.mxu0 %v2449
    %3057 = vmatprep.subr.bf16.mxu0 %v2466
    %3058 = vmatpush1.bf16.msra.mxu0 %v2465
    %3059 = vmatprep.subr.bf16.mxu0 %v2482
    %3060 = vmatpush1.bf16.msra.mxu0 %v2481
    %3061 = vmatprep.subr.bf16.mxu0 %v2498
    %3062 = vmatpush1.bf16.msra.mxu0 %v2497
    %3063 = vmatprep.subr.bf16.mxu0 %v2514
    %3064 = vmatpush1.bf16.msra.mxu0 %v2513
    %3065 = vmatprep.subr.bf16.mxu0 %v2530
    %3066 = vmatpush1.bf16.msra.mxu0 %v2529
    %3067 = vmatprep.mubr.bf16.mxu0 %v1424
    %3068 = vmatmul.mubr.bf16.gmra.mrb[0].mxu0 %v1423
    %v3069 = vpop.f32.mrb[0].mxu0
    %v3070 = vadd.f32 %v1480, %v3069
    %v3071 = vpop.f32.mrb[0].mxu0
    %v3072 = vadd.f32 %v1484, %v3071
    %v3073 = vpop.f32.mrb[0].mxu0
    %v3074 = vpop.f32.mrb[0].mxu0
    %3075 = vdwg.mxu0
    %3076 = vmatprep.subr.bf16.mxu0 %v2292
    %3077 = vmatpush1.bf16.msra.mxu0 %v2291
    %3078 = vmatprep.subr.bf16.mxu0 %v2308
    %3079 = vmatpush1.bf16.msra.mxu0 %v2307
    %3080 = vmatprep.subr.bf16.mxu0 %v2324
    %3081 = vmatpush1.bf16.msra.mxu0 %v2323
    %3082 = vmatprep.subr.bf16.mxu0 %v2340
    %3083 = vmatpush1.bf16.msra.mxu0 %v2339
    %3084 = vmatprep.subr.bf16.mxu0 %v2356
    %3085 = vmatpush1.bf16.msra.mxu0 %v2355
    %3086 = vmatprep.subr.bf16.mxu0 %v2372
    %3087 = vmatpush1.bf16.msra.mxu0 %v2371
    %3088 = vmatprep.subr.bf16.mxu0 %v2388
    %3089 = vmatpush1.bf16.msra.mxu0 %v2387
    %3090 = vmatprep.subr.bf16.mxu0 %v2404
    %3091 = vmatpush1.bf16.msra.mxu0 %v2403
    %3092 = vmatprep.subr.bf16.mxu0 %v2420
    %3093 = vmatpush1.bf16.msra.mxu0 %v2419
    %3094 = vmatprep.subr.bf16.mxu0 %v2436
    %3095 = vmatpush1.bf16.msra.mxu0 %v2435
    %3096 = vmatprep.subr.bf16.mxu0 %v2452
    %3097 = vmatpush1.bf16.msra.mxu0 %v2451
    %3098 = vmatprep.subr.bf16.mxu0 %v2468
    %3099 = vmatpush1.bf16.msra.mxu0 %v2467
    %3100 = vmatprep.subr.bf16.mxu0 %v2484
    %3101 = vmatpush1.bf16.msra.mxu0 %v2483
    %3102 = vmatprep.subr.bf16.mxu0 %v2500
    %3103 = vmatpush1.bf16.msra.mxu0 %v2499
    %3104 = vmatprep.subr.bf16.mxu0 %v2516
    %3105 = vmatpush1.bf16.msra.mxu0 %v2515
    %3106 = vmatprep.subr.bf16.mxu0 %v2532
    %3107 = vmatpush1.bf16.msra.mxu0 %v2531
    %3108 = vmatprep.mubr.bf16.mxu0 %v1424
    %3109 = vmatmul.mubr.bf16.gmra.mrb[0].mxu0 %v1423
    %v3110 = vpop.f32.mrb[0].mxu0
    %v3111 = vadd.f32 %v1488, %v3110
    %v3112 = vpop.f32.mrb[0].mxu0
    %v3113 = vadd.f32 %v1492, %v3112
    %v3114 = vpop.f32.mrb[0].mxu0
    %v3115 = vpop.f32.mrb[0].mxu0
    %3116 = vdwg.mxu0
    %3117 = vst [vmem:[#allocation2] sm:$0x3] %v2824
    %3118 = vst [vmem:[#allocation2 + $0x8] sm:$0x3] %v2826
    %v3121 = vrot.slane %v2865, 4
    %v3122 = vrot.slane %v2867, 4
    %3125 = vst [vmem:[#allocation2] sm:$0x30] %v3121
    %3126 = vst [vmem:[#allocation2 + $0x8] sm:$0x30] %v3122
    %3127 = vst [vmem:[#allocation2 + $0x10] sm:$0x3] %v2906
    %3128 = vst [vmem:[#allocation2 + $0x18] sm:$0x3] %v2908
    %v3131 = vrot.slane %v2947, 4
    %v3132 = vrot.slane %v2949, 4
    %3135 = vst [vmem:[#allocation2 + $0x10] sm:$0x30] %v3131
    %3136 = vst [vmem:[#allocation2 + $0x18] sm:$0x30] %v3132
    %3137 = vst [vmem:[#allocation2 + $0x20] sm:$0x3] %v2988
    %3138 = vst [vmem:[#allocation2 + $0x28] sm:$0x3] %v2990
    %v3141 = vrot.slane %v3029, 4
    %v3142 = vrot.slane %v3031, 4
    %3145 = vst [vmem:[#allocation2 + $0x20] sm:$0x30] %v3141
    %3146 = vst [vmem:[#allocation2 + $0x28] sm:$0x30] %v3142
    %3147 = vst [vmem:[#allocation2 + $0x30] sm:$0x3] %v3070
    %3148 = vst [vmem:[#allocation2 + $0x38] sm:$0x3] %v3072
    %v3151 = vrot.slane %v3111, 4
    %v3152 = vrot.slane %v3113, 4
    %3155 = vst [vmem:[#allocation2 + $0x30] sm:$0x30] %v3151
    %3156 = vst [vmem:[#allocation2 + $0x38] sm:$0x30] %v3152
    %v3157 = vld [vmem:[#allocation5 + $0x6c] sm:$0xff]
    %v3158 = vld [vmem:[#allocation5 + $0x74] sm:$0xff]
    %v3159 = vld [vmem:[#allocation5 + $0x7c] sm:$0xff]
    %v3160 = vld [vmem:[#allocation5 + $0x84] sm:$0xff]
    %v3161 = vld [vmem:[#allocation5 + $0x8c] sm:$0xff]
    %v3162 = vld [vmem:[#allocation5 + $0x94] sm:$0xff]
    %v3163 = vld [vmem:[#allocation5 + $0x9c] sm:$0xff]
    %v3164 = vld [vmem:[#allocation5 + $0xa4] sm:$0xff]
    %v3165 = vld [vmem:[#allocation5 + $0x118] sm:$0xff]
    %v3166 = vld [vmem:[#allocation5 + $0x120] sm:$0xff]
    %v3167 = vld [vmem:[#allocation5 + $0x128] sm:$0xff]
    %v3168 = vld [vmem:[#allocation5 + $0x130] sm:$0xff]
    %v3169 = vld [vmem:[#allocation5 + $0x138] sm:$0xff]
    %v3170 = vld [vmem:[#allocation5 + $0x140] sm:$0xff]
    %v3171 = vld [vmem:[#allocation5 + $0x148] sm:$0xff]
    %v3172 = vld [vmem:[#allocation5 + $0x150] sm:$0xff]
    %v3173 = vld [vmem:[#allocation5 + $0x1c4] sm:$0xff]
    %v3174 = vld [vmem:[#allocation5 + $0x1cc] sm:$0xff]
    %v3175 = vld [vmem:[#allocation5 + $0x1d4] sm:$0xff]
    %v3176 = vld [vmem:[#allocation5 + $0x1dc] sm:$0xff]
    %v3177 = vld [vmem:[#allocation5 + $0x1e4] sm:$0xff]
    %v3178 = vld [vmem:[#allocation5 + $0x1ec] sm:$0xff]
    %v3179 = vld [vmem:[#allocation5 + $0x1f4] sm:$0xff]
    %v3180 = vld [vmem:[#allocation5 + $0x1fc] sm:$0xff]
    %v3181 = vld [vmem:[#allocation5 + $0x270] sm:$0xff]
    %v3182 = vld [vmem:[#allocation5 + $0x278] sm:$0xff]
    %v3183 = vld [vmem:[#allocation5 + $0x280] sm:$0xff]
    %v3184 = vld [vmem:[#allocation5 + $0x288] sm:$0xff]
    %v3185 = vld [vmem:[#allocation5 + $0x290] sm:$0xff]
    %v3186 = vld [vmem:[#allocation5 + $0x298] sm:$0xff]
    %v3187 = vld [vmem:[#allocation5 + $0x2a0] sm:$0xff]
    %v3188 = vld [vmem:[#allocation5 + $0x2a8] sm:$0xff]
    %v3189 = vld [vmem:[#allocation5 + $0x31c] sm:$0xff]
    %v3190 = vld [vmem:[#allocation5 + $0x324] sm:$0xff]
    %v3191 = vld [vmem:[#allocation5 + $0x32c] sm:$0xff]
    %v3192 = vld [vmem:[#allocation5 + $0x334] sm:$0xff]
    %v3193 = vld [vmem:[#allocation5 + $0x33c] sm:$0xff]
    %v3194 = vld [vmem:[#allocation5 + $0x344] sm:$0xff]
    %v3195 = vld [vmem:[#allocation5 + $0x34c] sm:$0xff]
    %v3196 = vld [vmem:[#allocation5 + $0x354] sm:$0xff]
    %v3197 = vld [vmem:[#allocation5 + $0x3c8] sm:$0xff]
    %v3198 = vld [vmem:[#allocation5 + $0x3d0] sm:$0xff]
    %v3199 = vld [vmem:[#allocation5 + $0x3d8] sm:$0xff]
    %v3200 = vld [vmem:[#allocation5 + $0x3e0] sm:$0xff]
    %v3201 = vld [vmem:[#allocation5 + $0x3e8] sm:$0xff]
    %v3202 = vld [vmem:[#allocation5 + $0x3f0] sm:$0xff]
    %v3203 = vld [vmem:[#allocation5 + $0x3f8] sm:$0xff]
    %v3204 = vld [vmem:[#allocation5 + $0x400] sm:$0xff]
    %v3205 = vld [vmem:[#allocation5 + $0x474] sm:$0xff]
    %v3206 = vld [vmem:[#allocation5 + $0x47c] sm:$0xff]
    %v3207 = vld [vmem:[#allocation5 + $0x484] sm:$0xff]
    %v3208 = vld [vmem:[#allocation5 + $0x48c] sm:$0xff]
    %v3209 = vld [vmem:[#allocation5 + $0x494] sm:$0xff]
    %v3210 = vld [vmem:[#allocation5 + $0x49c] sm:$0xff]
    %v3211 = vld [vmem:[#allocation5 + $0x4a4] sm:$0xff]
    %v3212 = vld [vmem:[#allocation5 + $0x4ac] sm:$0xff]
    %v3213 = vld [vmem:[#allocation5 + $0x520] sm:$0xff]
    %v3214 = vld [vmem:[#allocation5 + $0x528] sm:$0xff]
    %v3215 = vld [vmem:[#allocation5 + $0x530] sm:$0xff]
    %v3216 = vld [vmem:[#allocation5 + $0x538] sm:$0xff]
    %v3217 = vld [vmem:[#allocation5 + $0x540] sm:$0xff]
    %v3218 = vld [vmem:[#allocation5 + $0x548] sm:$0xff]
    %v3219 = vld [vmem:[#allocation5 + $0x550] sm:$0xff]
    %v3220 = vld [vmem:[#allocation5 + $0x558] sm:$0xff]
    %v3221 = vld [vmem:[#allocation5 + $0x5cc] sm:$0xff]
    %v3222 = vld [vmem:[#allocation5 + $0x5d4] sm:$0xff]
    %v3223 = vld [vmem:[#allocation5 + $0x5dc] sm:$0xff]
    %v3224 = vld [vmem:[#allocation5 + $0x5e4] sm:$0xff]
    %v3225 = vld [vmem:[#allocation5 + $0x5ec] sm:$0xff]
    %v3226 = vld [vmem:[#allocation5 + $0x5f4] sm:$0xff]
    %v3227 = vld [vmem:[#allocation5 + $0x5fc] sm:$0xff]
    %v3228 = vld [vmem:[#allocation5 + $0x604] sm:$0xff]
    %v3229 = vld [vmem:[#allocation5 + $0x678] sm:$0xff]
    %v3230 = vld [vmem:[#allocation5 + $0x680] sm:$0xff]
    %v3231 = vld [vmem:[#allocation5 + $0x688] sm:$0xff]
    %v3232 = vld [vmem:[#allocation5 + $0x690] sm:$0xff]
    %v3233 = vld [vmem:[#allocation5 + $0x698] sm:$0xff]
    %v3234 = vld [vmem:[#allocation5 + $0x6a0] sm:$0xff]
    %v3235 = vld [vmem:[#allocation5 + $0x6a8] sm:$0xff]
    %v3236 = vld [vmem:[#allocation5 + $0x6b0] sm:$0xff]
    %v3237 = vld [vmem:[#allocation5 + $0x724] sm:$0xff]
    %v3238 = vld [vmem:[#allocation5 + $0x72c] sm:$0xff]
    %v3239 = vld [vmem:[#allocation5 + $0x734] sm:$0xff]
    %v3240 = vld [vmem:[#allocation5 + $0x73c] sm:$0xff]
    %v3241 = vld [vmem:[#allocation5 + $0x744] sm:$0xff]
    %v3242 = vld [vmem:[#allocation5 + $0x74c] sm:$0xff]
    %v3243 = vld [vmem:[#allocation5 + $0x754] sm:$0xff]
    %v3244 = vld [vmem:[#allocation5 + $0x75c] sm:$0xff]
    %v3245 = vld [vmem:[#allocation5 + $0x7d0] sm:$0xff]
    %v3246 = vld [vmem:[#allocation5 + $0x7d8] sm:$0xff]
    %v3247 = vld [vmem:[#allocation5 + $0x7e0] sm:$0xff]
    %v3248 = vld [vmem:[#allocation5 + $0x7e8] sm:$0xff]
    %v3249 = vld [vmem:[#allocation5 + $0x7f0] sm:$0xff]
    %v3250 = vld [vmem:[#allocation5 + $0x7f8] sm:$0xff]
    %v3251 = vld [vmem:[#allocation5 + $0x800] sm:$0xff]
    %v3252 = vld [vmem:[#allocation5 + $0x808] sm:$0xff]
    %v3253 = vld [vmem:[#allocation5 + $0x87c] sm:$0xff]
    %v3254 = vld [vmem:[#allocation5 + $0x884] sm:$0xff]
    %v3255 = vld [vmem:[#allocation5 + $0x88c] sm:$0xff]
    %v3256 = vld [vmem:[#allocation5 + $0x894] sm:$0xff]
    %v3257 = vld [vmem:[#allocation5 + $0x89c] sm:$0xff]
    %v3258 = vld [vmem:[#allocation5 + $0x8a4] sm:$0xff]
    %v3259 = vld [vmem:[#allocation5 + $0x8ac] sm:$0xff]
    %v3260 = vld [vmem:[#allocation5 + $0x8b4] sm:$0xff]
    %v3261 = vld [vmem:[#allocation5 + $0x928] sm:$0xff]
    %v3262 = vld [vmem:[#allocation5 + $0x930] sm:$0xff]
    %v3263 = vld [vmem:[#allocation5 + $0x938] sm:$0xff]
    %v3264 = vld [vmem:[#allocation5 + $0x940] sm:$0xff]
    %v3265 = vld [vmem:[#allocation5 + $0x948] sm:$0xff]
    %v3266 = vld [vmem:[#allocation5 + $0x950] sm:$0xff]
    %v3267 = vld [vmem:[#allocation5 + $0x958] sm:$0xff]
    %v3268 = vld [vmem:[#allocation5 + $0x960] sm:$0xff]
    %v3269 = vld [vmem:[#allocation5 + $0x9d4] sm:$0xff]
    %v3270 = vld [vmem:[#allocation5 + $0x9dc] sm:$0xff]
    %v3271 = vld [vmem:[#allocation5 + $0x9e4] sm:$0xff]
    %v3272 = vld [vmem:[#allocation5 + $0x9ec] sm:$0xff]
    %v3273 = vld [vmem:[#allocation5 + $0x9f4] sm:$0xff]
    %v3274 = vld [vmem:[#allocation5 + $0x9fc] sm:$0xff]
    %v3275 = vld [vmem:[#allocation5 + $0xa04] sm:$0xff]
    %v3276 = vld [vmem:[#allocation5 + $0xa0c] sm:$0xff]
    %v3277 = vld [vmem:[#allocation5 + $0xa80] sm:$0xff]
    %v3278 = vld [vmem:[#allocation5 + $0xa88] sm:$0xff]
    %v3279 = vld [vmem:[#allocation5 + $0xa90] sm:$0xff]
    %v3280 = vld [vmem:[#allocation5 + $0xa98] sm:$0xff]
    %v3281 = vld [vmem:[#allocation5 + $0xaa0] sm:$0xff]
    %v3282 = vld [vmem:[#allocation5 + $0xaa8] sm:$0xff]
    %v3283 = vld [vmem:[#allocation5 + $0xab0] sm:$0xff]
    %v3284 = vld [vmem:[#allocation5 + $0xab8] sm:$0xff]
    %v3285 = vld [vmem:[#allocation5 + $0xb2c] sm:$0xff]
    %v3286 = vld [vmem:[#allocation5 + $0xb34] sm:$0xff]
    %v3287 = vld [vmem:[#allocation5 + $0xb3c] sm:$0xff]
    %v3288 = vld [vmem:[#allocation5 + $0xb44] sm:$0xff]
    %v3289 = vld [vmem:[#allocation5 + $0xb4c] sm:$0xff]
    %v3290 = vld [vmem:[#allocation5 + $0xb54] sm:$0xff]
    %v3291 = vld [vmem:[#allocation5 + $0xb5c] sm:$0xff]
    %v3292 = vld [vmem:[#allocation5 + $0xb64] sm:$0xff]
    %v3293 = vld [vmem:[#allocation5 + $0xbd8] sm:$0xff]
    %v3294 = vld [vmem:[#allocation5 + $0xbe0] sm:$0xff]
    %v3295 = vld [vmem:[#allocation5 + $0xbe8] sm:$0xff]
    %v3296 = vld [vmem:[#allocation5 + $0xbf0] sm:$0xff]
    %v3297 = vld [vmem:[#allocation5 + $0xbf8] sm:$0xff]
    %v3298 = vld [vmem:[#allocation5 + $0xc00] sm:$0xff]
    %v3299 = vld [vmem:[#allocation5 + $0xc08] sm:$0xff]
    %v3300 = vld [vmem:[#allocation5 + $0xc10] sm:$0xff]
    %v3301 = vld [vmem:[#allocation5 + $0xc84] sm:$0xff]
    %v3302 = vld [vmem:[#allocation5 + $0xc8c] sm:$0xff]
    %v3303 = vld [vmem:[#allocation5 + $0xc94] sm:$0xff]
    %v3304 = vld [vmem:[#allocation5 + $0xc9c] sm:$0xff]
    %v3305 = vld [vmem:[#allocation5 + $0xca4] sm:$0xff]
    %v3306 = vld [vmem:[#allocation5 + $0xcac] sm:$0xff]
    %v3307 = vld [vmem:[#allocation5 + $0xcb4] sm:$0xff]
    %v3308 = vld [vmem:[#allocation5 + $0xcbc] sm:$0xff]
    %v3309 = vld [vmem:[#allocation5 + $0xd30] sm:$0xff]
    %v3310 = vld [vmem:[#allocation5 + $0xd38] sm:$0xff]
    %v3311 = vld [vmem:[#allocation5 + $0xd40] sm:$0xff]
    %v3312 = vld [vmem:[#allocation5 + $0xd48] sm:$0xff]
    %v3313 = vld [vmem:[#allocation5 + $0xd50] sm:$0xff]
    %v3314 = vld [vmem:[#allocation5 + $0xd58] sm:$0xff]
    %v3315 = vld [vmem:[#allocation5 + $0xd60] sm:$0xff]
    %v3316 = vld [vmem:[#allocation5 + $0xd68] sm:$0xff]
    %v3317 = vld [vmem:[#allocation5 + $0xddc] sm:$0xff]
    %v3318 = vld [vmem:[#allocation5 + $0xde4] sm:$0xff]
    %v3319 = vld [vmem:[#allocation5 + $0xdec] sm:$0xff]
    %v3320 = vld [vmem:[#allocation5 + $0xdf4] sm:$0xff]
    %v3321 = vld [vmem:[#allocation5 + $0xdfc] sm:$0xff]
    %v3322 = vld [vmem:[#allocation5 + $0xe04] sm:$0xff]
    %v3323 = vld [vmem:[#allocation5 + $0xe0c] sm:$0xff]
    %v3324 = vld [vmem:[#allocation5 + $0xe14] sm:$0xff]
    %v3325 = vld [vmem:[#allocation5 + $0xe88] sm:$0xff]
    %v3326 = vld [vmem:[#allocation5 + $0xe90] sm:$0xff]
    %v3327 = vld [vmem:[#allocation5 + $0xe98] sm:$0xff]
    %v3328 = vld [vmem:[#allocation5 + $0xea0] sm:$0xff]
    %v3329 = vld [vmem:[#allocation5 + $0xea8] sm:$0xff]
    %v3330 = vld [vmem:[#allocation5 + $0xeb0] sm:$0xff]
    %v3331 = vld [vmem:[#allocation5 + $0xeb8] sm:$0xff]
    %v3332 = vld [vmem:[#allocation5 + $0xec0] sm:$0xff]
    %v3333 = vld [vmem:[#allocation5 + $0xf34] sm:$0xff]
    %v3334 = vld [vmem:[#allocation5 + $0xf3c] sm:$0xff]
    %v3335 = vld [vmem:[#allocation5 + $0xf44] sm:$0xff]
    %v3336 = vld [vmem:[#allocation5 + $0xf4c] sm:$0xff]
    %v3337 = vld [vmem:[#allocation5 + $0xf54] sm:$0xff]
    %v3338 = vld [vmem:[#allocation5 + $0xf5c] sm:$0xff]
    %v3339 = vld [vmem:[#allocation5 + $0xf64] sm:$0xff]
    %v3340 = vld [vmem:[#allocation5 + $0xf6c] sm:$0xff]
    %v3341 = vld [vmem:[#allocation5 + $0xfe0] sm:$0xff]
    %v3342 = vld [vmem:[#allocation5 + $0xfe8] sm:$0xff]
    %v3343 = vld [vmem:[#allocation5 + $0xff0] sm:$0xff]
    %v3344 = vld [vmem:[#allocation5 + $0xff8] sm:$0xff]
    %v3345 = vld [vmem:[#allocation5 + $0x1000] sm:$0xff]
    %v3346 = vld [vmem:[#allocation5 + $0x1008] sm:$0xff]
    %v3347 = vld [vmem:[#allocation5 + $0x1010] sm:$0xff]
    %v3348 = vld [vmem:[#allocation5 + $0x1018] sm:$0xff]
    %v3349 = vld [vmem:[#allocation5 + $0x108c] sm:$0xff]
    %v3350 = vld [vmem:[#allocation5 + $0x1094] sm:$0xff]
    %v3351 = vld [vmem:[#allocation5 + $0x109c] sm:$0xff]
    %v3352 = vld [vmem:[#allocation5 + $0x10a4] sm:$0xff]
    %v3353 = vld [vmem:[#allocation5 + $0x10ac] sm:$0xff]
    %v3354 = vld [vmem:[#allocation5 + $0x10b4] sm:$0xff]
    %v3355 = vld [vmem:[#allocation5 + $0x10bc] sm:$0xff]
    %v3356 = vld [vmem:[#allocation5 + $0x10c4] sm:$0xff]
    %v3357 = vld [vmem:[#allocation5 + $0x1138] sm:$0xff]
    %v3358 = vld [vmem:[#allocation5 + $0x1140] sm:$0xff]
    %v3359 = vld [vmem:[#allocation5 + $0x1148] sm:$0xff]
    %v3360 = vld [vmem:[#allocation5 + $0x1150] sm:$0xff]
    %v3361 = vld [vmem:[#allocation5 + $0x1158] sm:$0xff]
    %v3362 = vld [vmem:[#allocation5 + $0x1160] sm:$0xff]
    %v3363 = vld [vmem:[#allocation5 + $0x1168] sm:$0xff]
    %v3364 = vld [vmem:[#allocation5 + $0x1170] sm:$0xff]
    %v3365 = vld [vmem:[#allocation5 + $0x11e4] sm:$0xff]
    %v3366 = vld [vmem:[#allocation5 + $0x11ec] sm:$0xff]
    %v3367 = vld [vmem:[#allocation5 + $0x11f4] sm:$0xff]
    %v3368 = vld [vmem:[#allocation5 + $0x11fc] sm:$0xff]
    %v3369 = vld [vmem:[#allocation5 + $0x1204] sm:$0xff]
    %v3370 = vld [vmem:[#allocation5 + $0x120c] sm:$0xff]
    %v3371 = vld [vmem:[#allocation5 + $0x1214] sm:$0xff]
    %v3372 = vld [vmem:[#allocation5 + $0x121c] sm:$0xff]
    %v3373 = vld [vmem:[#allocation5 + $0x1290] sm:$0xff]
    %v3374 = vld [vmem:[#allocation5 + $0x1298] sm:$0xff]
    %v3375 = vld [vmem:[#allocation5 + $0x12a0] sm:$0xff]
    %v3376 = vld [vmem:[#allocation5 + $0x12a8] sm:$0xff]
    %v3377 = vld [vmem:[#allocation5 + $0x12b0] sm:$0xff]
    %v3378 = vld [vmem:[#allocation5 + $0x12b8] sm:$0xff]
    %v3379 = vld [vmem:[#allocation5 + $0x12c0] sm:$0xff]
    %v3380 = vld [vmem:[#allocation5 + $0x12c8] sm:$0xff]
    %v3381 = vld [vmem:[#allocation5 + $0x133c] sm:$0xff]
    %v3382 = vld [vmem:[#allocation5 + $0x1344] sm:$0xff]
    %v3383 = vld [vmem:[#allocation5 + $0x134c] sm:$0xff]
    %v3384 = vld [vmem:[#allocation5 + $0x1354] sm:$0xff]
    %v3385 = vld [vmem:[#allocation5 + $0x135c] sm:$0xff]
    %v3386 = vld [vmem:[#allocation5 + $0x1364] sm:$0xff]
    %v3387 = vld [vmem:[#allocation5 + $0x136c] sm:$0xff]
    %v3388 = vld [vmem:[#allocation5 + $0x1374] sm:$0xff]
    %v3389 = vld [vmem:[#allocation5 + $0x13e8] sm:$0xff]
    %v3390 = vld [vmem:[#allocation5 + $0x13f0] sm:$0xff]
    %v3391 = vld [vmem:[#allocation5 + $0x13f8] sm:$0xff]
    %v3392 = vld [vmem:[#allocation5 + $0x1400] sm:$0xff]
    %v3393 = vld [vmem:[#allocation5 + $0x1408] sm:$0xff]
    %v3394 = vld [vmem:[#allocation5 + $0x1410] sm:$0xff]
    %v3395 = vld [vmem:[#allocation5 + $0x1418] sm:$0xff]
    %v3396 = vld [vmem:[#allocation5 + $0x1420] sm:$0xff]
    %v3397 = vld [vmem:[#allocation5 + $0x1494] sm:$0xff]
    %v3398 = vld [vmem:[#allocation5 + $0x149c] sm:$0xff]
    %v3399 = vld [vmem:[#allocation5 + $0x14a4] sm:$0xff]
    %v3400 = vld [vmem:[#allocation5 + $0x14ac] sm:$0xff]
    %v3401 = vld [vmem:[#allocation5 + $0x14b4] sm:$0xff]
    %v3402 = vld [vmem:[#allocation5 + $0x14bc] sm:$0xff]
    %v3403 = vld [vmem:[#allocation5 + $0x14c4] sm:$0xff]
    %v3404 = vld [vmem:[#allocation5 + $0x14cc] sm:$0xff]
    %v3405 = vld [vmem:[#allocation5 + $0x1540] sm:$0xff]
    %v3406 = vld [vmem:[#allocation5 + $0x1548] sm:$0xff]
    %v3407 = vld [vmem:[#allocation5 + $0x1550] sm:$0xff]
    %v3408 = vld [vmem:[#allocation5 + $0x1558] sm:$0xff]
    %v3409 = vld [vmem:[#allocation5 + $0x1560] sm:$0xff]
    %v3410 = vld [vmem:[#allocation5 + $0x1568] sm:$0xff]
    %v3411 = vld [vmem:[#allocation5 + $0x1570] sm:$0xff]
    %v3412 = vld [vmem:[#allocation5 + $0x1578] sm:$0xff]
    %v3413 = vpack.c.bf16 %v1165, %v1165
    %v3414 = vpack.c.bf16 %v1166, %v1166
    %v3415 = vld [vmem:[#allocation8 + $0x2d] sm:$0xff]
    %v3416 = vld [vmem:[#allocation8 + $0x35] sm:$0xff]
    %v3419 = vlaneseq
    %v3420 = vshrl.u32 %v3419, 7
    %v3421 = vsub.s32 0, %v3420
    %v3422 = vrot.slane %v3415, %v3421
    %v3423 = vlaneseq
    %v3424 = vshrl.u32 %v3423, 7
    %v3425 = vsub.s32 1, %v3424
    %v3426 = vrot.slane %v3415, %v3425
    %v3427 = vlaneseq
    %v3428 = vshrl.u32 %v3427, 7
    %v3429 = vsub.s32 2, %v3428
    %v3430 = vrot.slane %v3415, %v3429
    %v3431 = vlaneseq
    %v3432 = vshrl.u32 %v3431, 7
    %v3433 = vsub.s32 3, %v3432
    %v3434 = vrot.slane %v3415, %v3433
    %v3435 = vlaneseq
    %v3436 = vshrl.u32 %v3435, 7
    %v3437 = vsub.s32 4, %v3436
    %v3438 = vrot.slane %v3415, %v3437
    %v3439 = vlaneseq
    %v3440 = vshrl.u32 %v3439, 7
    %v3441 = vsub.s32 5, %v3440
    %v3442 = vrot.slane %v3415, %v3441
    %v3443 = vlaneseq
    %v3444 = vshrl.u32 %v3443, 7
    %v3445 = vsub.s32 6, %v3444
    %v3446 = vrot.slane %v3415, %v3445
    %v3447 = vlaneseq
    %v3448 = vshrl.u32 %v3447, 7
    %v3449 = vsub.s32 7, %v3448
    %v3450 = vrot.slane %v3415, %v3449
    %v3451 = vlaneseq
    %v3452 = vshrl.u32 %v3451, 7
    %v3453 = vsub.s32 0, %v3452
    %v3454 = vrot.slane %v3416, %v3453
    %v3455 = vlaneseq
    %v3456 = vshrl.u32 %v3455, 7
    %v3457 = vsub.s32 1, %v3456
    %v3458 = vrot.slane %v3416, %v3457
    %v3459 = vlaneseq
    %v3460 = vshrl.u32 %v3459, 7
    %v3461 = vsub.s32 2, %v3460
    %v3462 = vrot.slane %v3416, %v3461
    %v3463 = vlaneseq
    %v3464 = vshrl.u32 %v3463, 7
    %v3465 = vsub.s32 3, %v3464
    %v3466 = vrot.slane %v3416, %v3465
    %v3467 = vlaneseq
    %v3468 = vshrl.u32 %v3467, 7
    %v3469 = vsub.s32 4, %v3468
    %v3470 = vrot.slane %v3416, %v3469
    %v3471 = vlaneseq
    %v3472 = vshrl.u32 %v3471, 7
    %v3473 = vsub.s32 5, %v3472
    %v3474 = vrot.slane %v3416, %v3473
    %v3475 = vlaneseq
    %v3476 = vshrl.u32 %v3475, 7
    %v3477 = vsub.s32 6, %v3476
    %v3478 = vrot.slane %v3416, %v3477
    %v3479 = vlaneseq
    %v3480 = vshrl.u32 %v3479, 7
    %v3481 = vsub.s32 7, %v3480
    %v3482 = vrot.slane %v3416, %v3481
    %v3755 = vunpack.c.l.b16 %v3157
    %v3756 = vunpack.c.h.b16 %v3157
    %v3757 = vunpack.c.l.b16 %v3158
    %v3758 = vunpack.c.h.b16 %v3158
    %v3759 = vunpack.c.l.b16 %v3159
    %v3760 = vunpack.c.h.b16 %v3159
    %v3761 = vunpack.c.l.b16 %v3160
    %v3762 = vunpack.c.h.b16 %v3160
    %v3763 = vunpack.c.l.b16 %v3161
    %v3764 = vunpack.c.h.b16 %v3161
    %v3765 = vunpack.c.l.b16 %v3162
    %v3766 = vunpack.c.h.b16 %v3162
    %v3767 = vunpack.c.l.b16 %v3163
    %v3768 = vunpack.c.h.b16 %v3163
    %v3769 = vunpack.c.l.b16 %v3164
    %v3770 = vunpack.c.h.b16 %v3164
    %v3771 = vunpack.c.l.b16 %v3165
    %v3772 = vunpack.c.h.b16 %v3165
    %v3773 = vunpack.c.l.b16 %v3166
    %v3774 = vunpack.c.h.b16 %v3166
    %v3775 = vunpack.c.l.b16 %v3167
    %v3776 = vunpack.c.h.b16 %v3167
    %v3777 = vunpack.c.l.b16 %v3168
    %v3778 = vunpack.c.h.b16 %v3168
    %v3779 = vunpack.c.l.b16 %v3169
    %v3780 = vunpack.c.h.b16 %v3169
    %v3781 = vunpack.c.l.b16 %v3170
    %v3782 = vunpack.c.h.b16 %v3170
    %v3783 = vunpack.c.l.b16 %v3171
    %v3784 = vunpack.c.h.b16 %v3171
    %v3785 = vunpack.c.l.b16 %v3172
    %v3786 = vunpack.c.h.b16 %v3172
    %v3787 = vunpack.c.l.b16 %v3173
    %v3788 = vunpack.c.h.b16 %v3173
    %v3789 = vunpack.c.l.b16 %v3174
    %v3790 = vunpack.c.h.b16 %v3174
    %v3791 = vunpack.c.l.b16 %v3175
    %v3792 = vunpack.c.h.b16 %v3175
    %v3793 = vunpack.c.l.b16 %v3176
    %v3794 = vunpack.c.h.b16 %v3176
    %v3795 = vunpack.c.l.b16 %v3177
    %v3796 = vunpack.c.h.b16 %v3177
    %v3797 = vunpack.c.l.b16 %v3178
    %v3798 = vunpack.c.h.b16 %v3178
    %v3799 = vunpack.c.l.b16 %v3179
    %v3800 = vunpack.c.h.b16 %v3179
    %v3801 = vunpack.c.l.b16 %v3180
    %v3802 = vunpack.c.h.b16 %v3180
    %v3803 = vunpack.c.l.b16 %v3181
    %v3804 = vunpack.c.h.b16 %v3181
    %v3805 = vunpack.c.l.b16 %v3182
    %v3806 = vunpack.c.h.b16 %v3182
    %v3807 = vunpack.c.l.b16 %v3183
    %v3808 = vunpack.c.h.b16 %v3183
    %v3809 = vunpack.c.l.b16 %v3184
    %v3810 = vunpack.c.h.b16 %v3184
    %v3811 = vunpack.c.l.b16 %v3185
    %v3812 = vunpack.c.h.b16 %v3185
    %v3813 = vunpack.c.l.b16 %v3186
    %v3814 = vunpack.c.h.b16 %v3186
    %v3815 = vunpack.c.l.b16 %v3187
    %v3816 = vunpack.c.h.b16 %v3187
    %v3817 = vunpack.c.l.b16 %v3188
    %v3818 = vunpack.c.h.b16 %v3188
    %v3819 = vunpack.c.l.b16 %v3189
    %v3820 = vunpack.c.h.b16 %v3189
    %v3821 = vunpack.c.l.b16 %v3190
    %v3822 = vunpack.c.h.b16 %v3190
    %v3823 = vunpack.c.l.b16 %v3191
    %v3824 = vunpack.c.h.b16 %v3191
    %v3825 = vunpack.c.l.b16 %v3192
    %v3826 = vunpack.c.h.b16 %v3192
    %v3827 = vunpack.c.l.b16 %v3193
    %v3828 = vunpack.c.h.b16 %v3193
    %v3829 = vunpack.c.l.b16 %v3194
    %v3830 = vunpack.c.h.b16 %v3194
    %v3831 = vunpack.c.l.b16 %v3195
    %v3832 = vunpack.c.h.b16 %v3195
    %v3833 = vunpack.c.l.b16 %v3196
    %v3834 = vunpack.c.h.b16 %v3196
    %v3835 = vunpack.c.l.b16 %v3197
    %v3836 = vunpack.c.h.b16 %v3197
    %v3837 = vunpack.c.l.b16 %v3198
    %v3838 = vunpack.c.h.b16 %v3198
    %v3839 = vunpack.c.l.b16 %v3199
    %v3840 = vunpack.c.h.b16 %v3199
    %v3841 = vunpack.c.l.b16 %v3200
    %v3842 = vunpack.c.h.b16 %v3200
    %v3843 = vunpack.c.l.b16 %v3201
    %v3844 = vunpack.c.h.b16 %v3201
    %v3845 = vunpack.c.l.b16 %v3202
    %v3846 = vunpack.c.h.b16 %v3202
    %v3847 = vunpack.c.l.b16 %v3203
    %v3848 = vunpack.c.h.b16 %v3203
    %v3849 = vunpack.c.l.b16 %v3204
    %v3850 = vunpack.c.h.b16 %v3204
    %v3851 = vunpack.c.l.b16 %v3205
    %v3852 = vunpack.c.h.b16 %v3205
    %v3853 = vunpack.c.l.b16 %v3206
    %v3854 = vunpack.c.h.b16 %v3206
    %v3855 = vunpack.c.l.b16 %v3207
    %v3856 = vunpack.c.h.b16 %v3207
    %v3857 = vunpack.c.l.b16 %v3208
    %v3858 = vunpack.c.h.b16 %v3208
    %v3859 = vunpack.c.l.b16 %v3209
    %v3860 = vunpack.c.h.b16 %v3209
    %v3861 = vunpack.c.l.b16 %v3210
    %v3862 = vunpack.c.h.b16 %v3210
    %v3863 = vunpack.c.l.b16 %v3211
    %v3864 = vunpack.c.h.b16 %v3211
    %v3865 = vunpack.c.l.b16 %v3212
    %v3866 = vunpack.c.h.b16 %v3212
    %v3867 = vunpack.c.l.b16 %v3213
    %v3868 = vunpack.c.h.b16 %v3213
    %v3869 = vunpack.c.l.b16 %v3214
    %v3870 = vunpack.c.h.b16 %v3214
    %v3871 = vunpack.c.l.b16 %v3215
    %v3872 = vunpack.c.h.b16 %v3215
    %v3873 = vunpack.c.l.b16 %v3216
    %v3874 = vunpack.c.h.b16 %v3216
    %v3875 = vunpack.c.l.b16 %v3217
    %v3876 = vunpack.c.h.b16 %v3217
    %v3877 = vunpack.c.l.b16 %v3218
    %v3878 = vunpack.c.h.b16 %v3218
    %v3879 = vunpack.c.l.b16 %v3219
    %v3880 = vunpack.c.h.b16 %v3219
    %v3881 = vunpack.c.l.b16 %v3220
    %v3882 = vunpack.c.h.b16 %v3220
    %v3883 = vunpack.c.l.b16 %v3221
    %v3884 = vunpack.c.h.b16 %v3221
    %v3885 = vunpack.c.l.b16 %v3222
    %v3886 = vunpack.c.h.b16 %v3222
    %v3887 = vunpack.c.l.b16 %v3223
    %v3888 = vunpack.c.h.b16 %v3223
    %v3889 = vunpack.c.l.b16 %v3224
    %v3890 = vunpack.c.h.b16 %v3224
    %v3891 = vunpack.c.l.b16 %v3225
    %v3892 = vunpack.c.h.b16 %v3225
    %v3893 = vunpack.c.l.b16 %v3226
    %v3894 = vunpack.c.h.b16 %v3226
    %v3895 = vunpack.c.l.b16 %v3227
    %v3896 = vunpack.c.h.b16 %v3227
    %v3897 = vunpack.c.l.b16 %v3228
    %v3898 = vunpack.c.h.b16 %v3228
    %v3899 = vunpack.c.l.b16 %v3229
    %v3900 = vunpack.c.h.b16 %v3229
    %v3901 = vunpack.c.l.b16 %v3230
    %v3902 = vunpack.c.h.b16 %v3230
    %v3903 = vunpack.c.l.b16 %v3231
    %v3904 = vunpack.c.h.b16 %v3231
    %v3905 = vunpack.c.l.b16 %v3232
    %v3906 = vunpack.c.h.b16 %v3232
    %v3907 = vunpack.c.l.b16 %v3233
    %v3908 = vunpack.c.h.b16 %v3233
    %v3909 = vunpack.c.l.b16 %v3234
    %v3910 = vunpack.c.h.b16 %v3234
    %v3911 = vunpack.c.l.b16 %v3235
    %v3912 = vunpack.c.h.b16 %v3235
    %v3913 = vunpack.c.l.b16 %v3236
    %v3914 = vunpack.c.h.b16 %v3236
    %v3915 = vunpack.c.l.b16 %v3237
    %v3916 = vunpack.c.h.b16 %v3237
    %v3917 = vunpack.c.l.b16 %v3238
    %v3918 = vunpack.c.h.b16 %v3238
    %v3919 = vunpack.c.l.b16 %v3239
    %v3920 = vunpack.c.h.b16 %v3239
    %v3921 = vunpack.c.l.b16 %v3240
    %v3922 = vunpack.c.h.b16 %v3240
    %v3923 = vunpack.c.l.b16 %v3241
    %v3924 = vunpack.c.h.b16 %v3241
    %v3925 = vunpack.c.l.b16 %v3242
    %v3926 = vunpack.c.h.b16 %v3242
    %v3927 = vunpack.c.l.b16 %v3243
    %v3928 = vunpack.c.h.b16 %v3243
    %v3929 = vunpack.c.l.b16 %v3244
    %v3930 = vunpack.c.h.b16 %v3244
    %v3931 = vunpack.c.l.b16 %v3245
    %v3932 = vunpack.c.h.b16 %v3245
    %v3933 = vunpack.c.l.b16 %v3246
    %v3934 = vunpack.c.h.b16 %v3246
    %v3935 = vunpack.c.l.b16 %v3247
    %v3936 = vunpack.c.h.b16 %v3247
    %v3937 = vunpack.c.l.b16 %v3248
    %v3938 = vunpack.c.h.b16 %v3248
    %v3939 = vunpack.c.l.b16 %v3249
    %v3940 = vunpack.c.h.b16 %v3249
    %v3941 = vunpack.c.l.b16 %v3250
    %v3942 = vunpack.c.h.b16 %v3250
    %v3943 = vunpack.c.l.b16 %v3251
    %v3944 = vunpack.c.h.b16 %v3251
    %v3945 = vunpack.c.l.b16 %v3252
    %v3946 = vunpack.c.h.b16 %v3252
    %v3947 = vunpack.c.l.b16 %v3253
    %v3948 = vunpack.c.h.b16 %v3253
    %v3949 = vunpack.c.l.b16 %v3254
    %v3950 = vunpack.c.h.b16 %v3254
    %v3951 = vunpack.c.l.b16 %v3255
    %v3952 = vunpack.c.h.b16 %v3255
    %v3953 = vunpack.c.l.b16 %v3256
    %v3954 = vunpack.c.h.b16 %v3256
    %v3955 = vunpack.c.l.b16 %v3257
    %v3956 = vunpack.c.h.b16 %v3257
    %v3957 = vunpack.c.l.b16 %v3258
    %v3958 = vunpack.c.h.b16 %v3258
    %v3959 = vunpack.c.l.b16 %v3259
    %v3960 = vunpack.c.h.b16 %v3259
    %v3961 = vunpack.c.l.b16 %v3260
    %v3962 = vunpack.c.h.b16 %v3260
    %v3963 = vunpack.c.l.b16 %v3261
    %v3964 = vunpack.c.h.b16 %v3261
    %v3965 = vunpack.c.l.b16 %v3262
    %v3966 = vunpack.c.h.b16 %v3262
    %v3967 = vunpack.c.l.b16 %v3263
    %v3968 = vunpack.c.h.b16 %v3263
    %v3969 = vunpack.c.l.b16 %v3264
    %v3970 = vunpack.c.h.b16 %v3264
    %v3971 = vunpack.c.l.b16 %v3265
    %v3972 = vunpack.c.h.b16 %v3265
    %v3973 = vunpack.c.l.b16 %v3266
    %v3974 = vunpack.c.h.b16 %v3266
    %v3975 = vunpack.c.l.b16 %v3267
    %v3976 = vunpack.c.h.b16 %v3267
    %v3977 = vunpack.c.l.b16 %v3268
    %v3978 = vunpack.c.h.b16 %v3268
    %v3979 = vunpack.c.l.b16 %v3269
    %v3980 = vunpack.c.h.b16 %v3269
    %v3981 = vunpack.c.l.b16 %v3270
    %v3982 = vunpack.c.h.b16 %v3270
    %v3983 = vunpack.c.l.b16 %v3271
    %v3984 = vunpack.c.h.b16 %v3271
    %v3985 = vunpack.c.l.b16 %v3272
    %v3986 = vunpack.c.h.b16 %v3272
    %v3987 = vunpack.c.l.b16 %v3273
    %v3988 = vunpack.c.h.b16 %v3273
    %v3989 = vunpack.c.l.b16 %v3274
    %v3990 = vunpack.c.h.b16 %v3274
    %v3991 = vunpack.c.l.b16 %v3275
    %v3992 = vunpack.c.h.b16 %v3275
    %v3993 = vunpack.c.l.b16 %v3276
    %v3994 = vunpack.c.h.b16 %v3276
    %v3995 = vunpack.c.l.b16 %v3277
    %v3996 = vunpack.c.h.b16 %v3277
    %v3997 = vunpack.c.l.b16 %v3278
    %v3998 = vunpack.c.h.b16 %v3278
    %v3999 = vunpack.c.l.b16 %v3279
    %v4000 = vunpack.c.h.b16 %v3279
    %v4001 = vunpack.c.l.b16 %v3280
    %v4002 = vunpack.c.h.b16 %v3280
    %v4003 = vunpack.c.l.b16 %v3281
    %v4004 = vunpack.c.h.b16 %v3281
    %v4005 = vunpack.c.l.b16 %v3282
    %v4006 = vunpack.c.h.b16 %v3282
    %v4007 = vunpack.c.l.b16 %v3283
    %v4008 = vunpack.c.h.b16 %v3283
    %v4009 = vunpack.c.l.b16 %v3284
    %v4010 = vunpack.c.h.b16 %v3284
    %v4011 = vunpack.c.l.b16 %v3285
    %v4012 = vunpack.c.h.b16 %v3285
    %v4013 = vunpack.c.l.b16 %v3286
    %v4014 = vunpack.c.h.b16 %v3286
    %v4015 = vunpack.c.l.b16 %v3287
    %v4016 = vunpack.c.h.b16 %v3287
    %v4017 = vunpack.c.l.b16 %v3288
    %v4018 = vunpack.c.h.b16 %v3288
    %v4019 = vunpack.c.l.b16 %v3289
    %v4020 = vunpack.c.h.b16 %v3289
    %v4021 = vunpack.c.l.b16 %v3290
    %v4022 = vunpack.c.h.b16 %v3290
    %v4023 = vunpack.c.l.b16 %v3291
    %v4024 = vunpack.c.h.b16 %v3291
    %v4025 = vunpack.c.l.b16 %v3292
    %v4026 = vunpack.c.h.b16 %v3292
    %v4027 = vunpack.c.l.b16 %v3293
    %v4028 = vunpack.c.h.b16 %v3293
    %v4029 = vunpack.c.l.b16 %v3294
    %v4030 = vunpack.c.h.b16 %v3294
    %v4031 = vunpack.c.l.b16 %v3295
    %v4032 = vunpack.c.h.b16 %v3295
    %v4033 = vunpack.c.l.b16 %v3296
    %v4034 = vunpack.c.h.b16 %v3296
    %v4035 = vunpack.c.l.b16 %v3297
    %v4036 = vunpack.c.h.b16 %v3297
    %v4037 = vunpack.c.l.b16 %v3298
    %v4038 = vunpack.c.h.b16 %v3298
    %v4039 = vunpack.c.l.b16 %v3299
    %v4040 = vunpack.c.h.b16 %v3299
    %v4041 = vunpack.c.l.b16 %v3300
    %v4042 = vunpack.c.h.b16 %v3300
    %v4043 = vunpack.c.l.b16 %v3301
    %v4044 = vunpack.c.h.b16 %v3301
    %v4045 = vunpack.c.l.b16 %v3302
    %v4046 = vunpack.c.h.b16 %v3302
    %v4047 = vunpack.c.l.b16 %v3303
    %v4048 = vunpack.c.h.b16 %v3303
    %v4049 = vunpack.c.l.b16 %v3304
    %v4050 = vunpack.c.h.b16 %v3304
    %v4051 = vunpack.c.l.b16 %v3305
    %v4052 = vunpack.c.h.b16 %v3305
    %v4053 = vunpack.c.l.b16 %v3306
    %v4054 = vunpack.c.h.b16 %v3306
    %v4055 = vunpack.c.l.b16 %v3307
    %v4056 = vunpack.c.h.b16 %v3307
    %v4057 = vunpack.c.l.b16 %v3308
    %v4058 = vunpack.c.h.b16 %v3308
    %v4059 = vunpack.c.l.b16 %v3309
    %v4060 = vunpack.c.h.b16 %v3309
    %v4061 = vunpack.c.l.b16 %v3310
    %v4062 = vunpack.c.h.b16 %v3310
    %v4063 = vunpack.c.l.b16 %v3311
    %v4064 = vunpack.c.h.b16 %v3311
    %v4065 = vunpack.c.l.b16 %v3312
    %v4066 = vunpack.c.h.b16 %v3312
    %v4067 = vunpack.c.l.b16 %v3313
    %v4068 = vunpack.c.h.b16 %v3313
    %v4069 = vunpack.c.l.b16 %v3314
    %v4070 = vunpack.c.h.b16 %v3314
    %v4071 = vunpack.c.l.b16 %v3315
    %v4072 = vunpack.c.h.b16 %v3315
    %v4073 = vunpack.c.l.b16 %v3316
    %v4074 = vunpack.c.h.b16 %v3316
    %v4075 = vunpack.c.l.b16 %v3317
    %v4076 = vunpack.c.h.b16 %v3317
    %v4077 = vunpack.c.l.b16 %v3318
    %v4078 = vunpack.c.h.b16 %v3318
    %v4079 = vunpack.c.l.b16 %v3319
    %v4080 = vunpack.c.h.b16 %v3319
    %v4081 = vunpack.c.l.b16 %v3320
    %v4082 = vunpack.c.h.b16 %v3320
    %v4083 = vunpack.c.l.b16 %v3321
    %v4084 = vunpack.c.h.b16 %v3321
    %v4085 = vunpack.c.l.b16 %v3322
    %v4086 = vunpack.c.h.b16 %v3322
    %v4087 = vunpack.c.l.b16 %v3323
    %v4088 = vunpack.c.h.b16 %v3323
    %v4089 = vunpack.c.l.b16 %v3324
    %v4090 = vunpack.c.h.b16 %v3324
    %v4091 = vunpack.c.l.b16 %v3325
    %v4092 = vunpack.c.h.b16 %v3325
    %v4093 = vunpack.c.l.b16 %v3326
    %v4094 = vunpack.c.h.b16 %v3326
    %v4095 = vunpack.c.l.b16 %v3327
    %v4096 = vunpack.c.h.b16 %v3327
    %v4097 = vunpack.c.l.b16 %v3328
    %v4098 = vunpack.c.h.b16 %v3328
    %v4099 = vunpack.c.l.b16 %v3329
    %v4100 = vunpack.c.h.b16 %v3329
    %v4101 = vunpack.c.l.b16 %v3330
    %v4102 = vunpack.c.h.b16 %v3330
    %v4103 = vunpack.c.l.b16 %v3331
    %v4104 = vunpack.c.h.b16 %v3331
    %v4105 = vunpack.c.l.b16 %v3332
    %v4106 = vunpack.c.h.b16 %v3332
    %v4107 = vunpack.c.l.b16 %v3333
    %v4108 = vunpack.c.h.b16 %v3333
    %v4109 = vunpack.c.l.b16 %v3334
    %v4110 = vunpack.c.h.b16 %v3334
    %v4111 = vunpack.c.l.b16 %v3335
    %v4112 = vunpack.c.h.b16 %v3335
    %v4113 = vunpack.c.l.b16 %v3336
    %v4114 = vunpack.c.h.b16 %v3336
    %v4115 = vunpack.c.l.b16 %v3337
    %v4116 = vunpack.c.h.b16 %v3337
    %v4117 = vunpack.c.l.b16 %v3338
    %v4118 = vunpack.c.h.b16 %v3338
    %v4119 = vunpack.c.l.b16 %v3339
    %v4120 = vunpack.c.h.b16 %v3339
    %v4121 = vunpack.c.l.b16 %v3340
    %v4122 = vunpack.c.h.b16 %v3340
    %v4123 = vunpack.c.l.b16 %v3341
    %v4124 = vunpack.c.h.b16 %v3341
    %v4125 = vunpack.c.l.b16 %v3342
    %v4126 = vunpack.c.h.b16 %v3342
    %v4127 = vunpack.c.l.b16 %v3343
    %v4128 = vunpack.c.h.b16 %v3343
    %v4129 = vunpack.c.l.b16 %v3344
    %v4130 = vunpack.c.h.b16 %v3344
    %v4131 = vunpack.c.l.b16 %v3345
    %v4132 = vunpack.c.h.b16 %v3345
    %v4133 = vunpack.c.l.b16 %v3346
    %v4134 = vunpack.c.h.b16 %v3346
    %v4135 = vunpack.c.l.b16 %v3347
    %v4136 = vunpack.c.h.b16 %v3347
    %v4137 = vunpack.c.l.b16 %v3348
    %v4138 = vunpack.c.h.b16 %v3348
    %v4139 = vunpack.c.l.b16 %v3349
    %v4140 = vunpack.c.h.b16 %v3349
    %v4141 = vunpack.c.l.b16 %v3350
    %v4142 = vunpack.c.h.b16 %v3350
    %v4143 = vunpack.c.l.b16 %v3351
    %v4144 = vunpack.c.h.b16 %v3351
    %v4145 = vunpack.c.l.b16 %v3352
    %v4146 = vunpack.c.h.b16 %v3352
    %v4147 = vunpack.c.l.b16 %v3353
    %v4148 = vunpack.c.h.b16 %v3353
    %v4149 = vunpack.c.l.b16 %v3354
    %v4150 = vunpack.c.h.b16 %v3354
    %v4151 = vunpack.c.l.b16 %v3355
    %v4152 = vunpack.c.h.b16 %v3355
    %v4153 = vunpack.c.l.b16 %v3356
    %v4154 = vunpack.c.h.b16 %v3356
    %v4155 = vunpack.c.l.b16 %v3357
    %v4156 = vunpack.c.h.b16 %v3357
    %v4157 = vunpack.c.l.b16 %v3358
    %v4158 = vunpack.c.h.b16 %v3358
    %v4159 = vunpack.c.l.b16 %v3359
    %v4160 = vunpack.c.h.b16 %v3359
    %v4161 = vunpack.c.l.b16 %v3360
    %v4162 = vunpack.c.h.b16 %v3360
    %v4163 = vunpack.c.l.b16 %v3361
    %v4164 = vunpack.c.h.b16 %v3361
    %v4165 = vunpack.c.l.b16 %v3362
    %v4166 = vunpack.c.h.b16 %v3362
    %v4167 = vunpack.c.l.b16 %v3363
    %v4168 = vunpack.c.h.b16 %v3363
    %v4169 = vunpack.c.l.b16 %v3364
    %v4170 = vunpack.c.h.b16 %v3364
    %v4171 = vunpack.c.l.b16 %v3365
    %v4172 = vunpack.c.h.b16 %v3365
    %v4173 = vunpack.c.l.b16 %v3366
    %v4174 = vunpack.c.h.b16 %v3366
    %v4175 = vunpack.c.l.b16 %v3367
    %v4176 = vunpack.c.h.b16 %v3367
    %v4177 = vunpack.c.l.b16 %v3368
    %v4178 = vunpack.c.h.b16 %v3368
    %v4179 = vunpack.c.l.b16 %v3369
    %v4180 = vunpack.c.h.b16 %v3369
    %v4181 = vunpack.c.l.b16 %v3370
    %v4182 = vunpack.c.h.b16 %v3370
    %v4183 = vunpack.c.l.b16 %v3371
    %v4184 = vunpack.c.h.b16 %v3371
    %v4185 = vunpack.c.l.b16 %v3372
    %v4186 = vunpack.c.h.b16 %v3372
    %v4187 = vunpack.c.l.b16 %v3373
    %v4188 = vunpack.c.h.b16 %v3373
    %v4189 = vunpack.c.l.b16 %v3374
    %v4190 = vunpack.c.h.b16 %v3374
    %v4191 = vunpack.c.l.b16 %v3375
    %v4192 = vunpack.c.h.b16 %v3375
    %v4193 = vunpack.c.l.b16 %v3376
    %v4194 = vunpack.c.h.b16 %v3376
    %v4195 = vunpack.c.l.b16 %v3377
    %v4196 = vunpack.c.h.b16 %v3377
    %v4197 = vunpack.c.l.b16 %v3378
    %v4198 = vunpack.c.h.b16 %v3378
    %v4199 = vunpack.c.l.b16 %v3379
    %v4200 = vunpack.c.h.b16 %v3379
    %v4201 = vunpack.c.l.b16 %v3380
    %v4202 = vunpack.c.h.b16 %v3380
    %v4203 = vunpack.c.l.b16 %v3381
    %v4204 = vunpack.c.h.b16 %v3381
    %v4205 = vunpack.c.l.b16 %v3382
    %v4206 = vunpack.c.h.b16 %v3382
    %v4207 = vunpack.c.l.b16 %v3383
    %v4208 = vunpack.c.h.b16 %v3383
    %v4209 = vunpack.c.l.b16 %v3384
    %v4210 = vunpack.c.h.b16 %v3384
    %v4211 = vunpack.c.l.b16 %v3385
    %v4212 = vunpack.c.h.b16 %v3385
    %v4213 = vunpack.c.l.b16 %v3386
    %v4214 = vunpack.c.h.b16 %v3386
    %v4215 = vunpack.c.l.b16 %v3387
    %v4216 = vunpack.c.h.b16 %v3387
    %v4217 = vunpack.c.l.b16 %v3388
    %v4218 = vunpack.c.h.b16 %v3388
    %v4219 = vunpack.c.l.b16 %v3389
    %v4220 = vunpack.c.h.b16 %v3389
    %v4221 = vunpack.c.l.b16 %v3390
    %v4222 = vunpack.c.h.b16 %v3390
    %v4223 = vunpack.c.l.b16 %v3391
    %v4224 = vunpack.c.h.b16 %v3391
    %v4225 = vunpack.c.l.b16 %v3392
    %v4226 = vunpack.c.h.b16 %v3392
    %v4227 = vunpack.c.l.b16 %v3393
    %v4228 = vunpack.c.h.b16 %v3393
    %v4229 = vunpack.c.l.b16 %v3394
    %v4230 = vunpack.c.h.b16 %v3394
    %v4231 = vunpack.c.l.b16 %v3395
    %v4232 = vunpack.c.h.b16 %v3395
    %v4233 = vunpack.c.l.b16 %v3396
    %v4234 = vunpack.c.h.b16 %v3396
    %v4235 = vunpack.c.l.b16 %v3397
    %v4236 = vunpack.c.h.b16 %v3397
    %v4237 = vunpack.c.l.b16 %v3398
    %v4238 = vunpack.c.h.b16 %v3398
    %v4239 = vunpack.c.l.b16 %v3399
    %v4240 = vunpack.c.h.b16 %v3399
    %v4241 = vunpack.c.l.b16 %v3400
    %v4242 = vunpack.c.h.b16 %v3400
    %v4243 = vunpack.c.l.b16 %v3401
    %v4244 = vunpack.c.h.b16 %v3401
    %v4245 = vunpack.c.l.b16 %v3402
    %v4246 = vunpack.c.h.b16 %v3402
    %v4247 = vunpack.c.l.b16 %v3403
    %v4248 = vunpack.c.h.b16 %v3403
    %v4249 = vunpack.c.l.b16 %v3404
    %v4250 = vunpack.c.h.b16 %v3404
    %v4251 = vunpack.c.l.b16 %v3405
    %v4252 = vunpack.c.h.b16 %v3405
    %v4253 = vunpack.c.l.b16 %v3406
    %v4254 = vunpack.c.h.b16 %v3406
    %v4255 = vunpack.c.l.b16 %v3407
    %v4256 = vunpack.c.h.b16 %v3407
    %v4257 = vunpack.c.l.b16 %v3408
    %v4258 = vunpack.c.h.b16 %v3408
    %v4259 = vunpack.c.l.b16 %v3409
    %v4260 = vunpack.c.h.b16 %v3409
    %v4261 = vunpack.c.l.b16 %v3410
    %v4262 = vunpack.c.h.b16 %v3410
    %v4263 = vunpack.c.l.b16 %v3411
    %v4264 = vunpack.c.h.b16 %v3411
    %v4265 = vunpack.c.l.b16 %v3412
    %v4266 = vunpack.c.h.b16 %v3412
    %v4267 = vpack.c.b16 %v3771, %v3755
    %v4268 = vpack.c.b16 %v3772, %v3756
    %v4269 = vpack.c.b16 %v3773, %v3757
    %v4270 = vpack.c.b16 %v3774, %v3758
    %v4271 = vpack.c.b16 %v3775, %v3759
    %v4272 = vpack.c.b16 %v3776, %v3760
    %v4273 = vpack.c.b16 %v3777, %v3761
    %v4274 = vpack.c.b16 %v3778, %v3762
    %v4275 = vpack.c.b16 %v3779, %v3763
    %v4276 = vpack.c.b16 %v3780, %v3764
    %v4277 = vpack.c.b16 %v3781, %v3765
    %v4278 = vpack.c.b16 %v3782, %v3766
    %v4279 = vpack.c.b16 %v3783, %v3767
    %v4280 = vpack.c.b16 %v3784, %v3768
    %v4281 = vpack.c.b16 %v3785, %v3769
    %v4282 = vpack.c.b16 %v3786, %v3770
    %v4283 = vpack.c.b16 %v3803, %v3787
    %v4284 = vpack.c.b16 %v3804, %v3788
    %v4285 = vpack.c.b16 %v3805, %v3789
    %v4286 = vpack.c.b16 %v3806, %v3790
    %v4287 = vpack.c.b16 %v3807, %v3791
    %v4288 = vpack.c.b16 %v3808, %v3792
    %v4289 = vpack.c.b16 %v3809, %v3793
    %v4290 = vpack.c.b16 %v3810, %v3794
    %v4291 = vpack.c.b16 %v3811, %v3795
    %v4292 = vpack.c.b16 %v3812, %v3796
    %v4293 = vpack.c.b16 %v3813, %v3797
    %v4294 = vpack.c.b16 %v3814, %v3798
    %v4295 = vpack.c.b16 %v3815, %v3799
    %v4296 = vpack.c.b16 %v3816, %v3800
    %v4297 = vpack.c.b16 %v3817, %v3801
    %v4298 = vpack.c.b16 %v3818, %v3802
    %v4299 = vpack.c.b16 %v3835, %v3819
    %v4300 = vpack.c.b16 %v3836, %v3820
    %v4301 = vpack.c.b16 %v3837, %v3821
    %v4302 = vpack.c.b16 %v3838, %v3822
    %v4303 = vpack.c.b16 %v3839, %v3823
    %v4304 = vpack.c.b16 %v3840, %v3824
    %v4305 = vpack.c.b16 %v3841, %v3825
    %v4306 = vpack.c.b16 %v3842, %v3826
    %v4307 = vpack.c.b16 %v3843, %v3827
    %v4308 = vpack.c.b16 %v3844, %v3828
    %v4309 = vpack.c.b16 %v3845, %v3829
    %v4310 = vpack.c.b16 %v3846, %v3830
    %v4311 = vpack.c.b16 %v3847, %v3831
    %v4312 = vpack.c.b16 %v3848, %v3832
    %v4313 = vpack.c.b16 %v3849, %v3833
    %v4314 = vpack.c.b16 %v3850, %v3834
    %v4315 = vpack.c.b16 %v3867, %v3851
    %v4316 = vpack.c.b16 %v3868, %v3852
    %v4317 = vpack.c.b16 %v3869, %v3853
    %v4318 = vpack.c.b16 %v3870, %v3854
    %v4319 = vpack.c.b16 %v3871, %v3855
    %v4320 = vpack.c.b16 %v3872, %v3856
    %v4321 = vpack.c.b16 %v3873, %v3857
    %v4322 = vpack.c.b16 %v3874, %v3858
    %v4323 = vpack.c.b16 %v3875, %v3859
    %v4324 = vpack.c.b16 %v3876, %v3860
    %v4325 = vpack.c.b16 %v3877, %v3861
    %v4326 = vpack.c.b16 %v3878, %v3862
    %v4327 = vpack.c.b16 %v3879, %v3863
    %v4328 = vpack.c.b16 %v3880, %v3864
    %v4329 = vpack.c.b16 %v3881, %v3865
    %v4330 = vpack.c.b16 %v3882, %v3866
    %v4331 = vpack.c.b16 %v3899, %v3883
    %v4332 = vpack.c.b16 %v3900, %v3884
    %v4333 = vpack.c.b16 %v3901, %v3885
    %v4334 = vpack.c.b16 %v3902, %v3886
    %v4335 = vpack.c.b16 %v3903, %v3887
    %v4336 = vpack.c.b16 %v3904, %v3888
    %v4337 = vpack.c.b16 %v3905, %v3889
    %v4338 = vpack.c.b16 %v3906, %v3890
    %v4339 = vpack.c.b16 %v3907, %v3891
    %v4340 = vpack.c.b16 %v3908, %v3892
    %v4341 = vpack.c.b16 %v3909, %v3893
    %v4342 = vpack.c.b16 %v3910, %v3894
    %v4343 = vpack.c.b16 %v3911, %v3895
    %v4344 = vpack.c.b16 %v3912, %v3896
    %v4345 = vpack.c.b16 %v3913, %v3897
    %v4346 = vpack.c.b16 %v3914, %v3898
    %v4347 = vpack.c.b16 %v3931, %v3915
    %v4348 = vpack.c.b16 %v3932, %v3916
    %v4349 = vpack.c.b16 %v3933, %v3917
    %v4350 = vpack.c.b16 %v3934, %v3918
    %v4351 = vpack.c.b16 %v3935, %v3919
    %v4352 = vpack.c.b16 %v3936, %v3920
    %v4353 = vpack.c.b16 %v3937, %v3921
    %v4354 = vpack.c.b16 %v3938, %v3922
    %v4355 = vpack.c.b16 %v3939, %v3923
    %v4356 = vpack.c.b16 %v3940, %v3924
    %v4357 = vpack.c.b16 %v3941, %v3925
    %v4358 = vpack.c.b16 %v3942, %v3926
    %v4359 = vpack.c.b16 %v3943, %v3927
    %v4360 = vpack.c.b16 %v3944, %v3928
    %v4361 = vpack.c.b16 %v3945, %v3929
    %v4362 = vpack.c.b16 %v3946, %v3930
    %v4363 = vpack.c.b16 %v3963, %v3947
    %v4364 = vpack.c.b16 %v3964, %v3948
    %v4365 = vpack.c.b16 %v3965, %v3949
    %v4366 = vpack.c.b16 %v3966, %v3950
    %v4367 = vpack.c.b16 %v3967, %v3951
    %v4368 = vpack.c.b16 %v3968, %v3952
    %v4369 = vpack.c.b16 %v3969, %v3953
    %v4370 = vpack.c.b16 %v3970, %v3954
    %v4371 = vpack.c.b16 %v3971, %v3955
    %v4372 = vpack.c.b16 %v3972, %v3956
    %v4373 = vpack.c.b16 %v3973, %v3957
    %v4374 = vpack.c.b16 %v3974, %v3958
    %v4375 = vpack.c.b16 %v3975, %v3959
    %v4376 = vpack.c.b16 %v3976, %v3960
    %v4377 = vpack.c.b16 %v3977, %v3961
    %v4378 = vpack.c.b16 %v3978, %v3962
    %v4379 = vpack.c.b16 %v3995, %v3979
    %v4380 = vpack.c.b16 %v3996, %v3980
    %v4381 = vpack.c.b16 %v3997, %v3981
    %v4382 = vpack.c.b16 %v3998, %v3982
    %v4383 = vpack.c.b16 %v3999, %v3983
    %v4384 = vpack.c.b16 %v4000, %v3984
    %v4385 = vpack.c.b16 %v4001, %v3985
    %v4386 = vpack.c.b16 %v4002, %v3986
    %v4387 = vpack.c.b16 %v4003, %v3987
    %v4388 = vpack.c.b16 %v4004, %v3988
    %v4389 = vpack.c.b16 %v4005, %v3989
    %v4390 = vpack.c.b16 %v4006, %v3990
    %v4391 = vpack.c.b16 %v4007, %v3991
    %v4392 = vpack.c.b16 %v4008, %v3992
    %v4393 = vpack.c.b16 %v4009, %v3993
    %v4394 = vpack.c.b16 %v4010, %v3994
    %v4395 = vpack.c.b16 %v4027, %v4011
    %v4396 = vpack.c.b16 %v4028, %v4012
    %v4397 = vpack.c.b16 %v4029, %v4013
    %v4398 = vpack.c.b16 %v4030, %v4014
    %v4399 = vpack.c.b16 %v4031, %v4015
    %v4400 = vpack.c.b16 %v4032, %v4016
    %v4401 = vpack.c.b16 %v4033, %v4017
    %v4402 = vpack.c.b16 %v4034, %v4018
    %v4403 = vpack.c.b16 %v4035, %v4019
    %v4404 = vpack.c.b16 %v4036, %v4020
    %v4405 = vpack.c.b16 %v4037, %v4021
    %v4406 = vpack.c.b16 %v4038, %v4022
    %v4407 = vpack.c.b16 %v4039, %v4023
    %v4408 = vpack.c.b16 %v4040, %v4024
    %v4409 = vpack.c.b16 %v4041, %v4025
    %v4410 = vpack.c.b16 %v4042, %v4026
    %v4411 = vpack.c.b16 %v4059, %v4043
    %v4412 = vpack.c.b16 %v4060, %v4044
    %v4413 = vpack.c.b16 %v4061, %v4045
    %v4414 = vpack.c.b16 %v4062, %v4046
    %v4415 = vpack.c.b16 %v4063, %v4047
    %v4416 = vpack.c.b16 %v4064, %v4048
    %v4417 = vpack.c.b16 %v4065, %v4049
    %v4418 = vpack.c.b16 %v4066, %v4050
    %v4419 = vpack.c.b16 %v4067, %v4051
    %v4420 = vpack.c.b16 %v4068, %v4052
    %v4421 = vpack.c.b16 %v4069, %v4053
    %v4422 = vpack.c.b16 %v4070, %v4054
    %v4423 = vpack.c.b16 %v4071, %v4055
    %v4424 = vpack.c.b16 %v4072, %v4056
    %v4425 = vpack.c.b16 %v4073, %v4057
    %v4426 = vpack.c.b16 %v4074, %v4058
    %v4427 = vpack.c.b16 %v4091, %v4075
    %v4428 = vpack.c.b16 %v4092, %v4076
    %v4429 = vpack.c.b16 %v4093, %v4077
    %v4430 = vpack.c.b16 %v4094, %v4078
    %v4431 = vpack.c.b16 %v4095, %v4079
    %v4432 = vpack.c.b16 %v4096, %v4080
    %v4433 = vpack.c.b16 %v4097, %v4081
    %v4434 = vpack.c.b16 %v4098, %v4082
    %v4435 = vpack.c.b16 %v4099, %v4083
    %v4436 = vpack.c.b16 %v4100, %v4084
    %v4437 = vpack.c.b16 %v4101, %v4085
    %v4438 = vpack.c.b16 %v4102, %v4086
    %v4439 = vpack.c.b16 %v4103, %v4087
    %v4440 = vpack.c.b16 %v4104, %v4088
    %v4441 = vpack.c.b16 %v4105, %v4089
    %v4442 = vpack.c.b16 %v4106, %v4090
    %v4443 = vpack.c.b16 %v4123, %v4107
    %v4444 = vpack.c.b16 %v4124, %v4108
    %v4445 = vpack.c.b16 %v4125, %v4109
    %v4446 = vpack.c.b16 %v4126, %v4110
    %v4447 = vpack.c.b16 %v4127, %v4111
    %v4448 = vpack.c.b16 %v4128, %v4112
    %v4449 = vpack.c.b16 %v4129, %v4113
    %v4450 = vpack.c.b16 %v4130, %v4114
    %v4451 = vpack.c.b16 %v4131, %v4115
    %v4452 = vpack.c.b16 %v4132, %v4116
    %v4453 = vpack.c.b16 %v4133, %v4117
    %v4454 = vpack.c.b16 %v4134, %v4118
    %v4455 = vpack.c.b16 %v4135, %v4119
    %v4456 = vpack.c.b16 %v4136, %v4120
    %v4457 = vpack.c.b16 %v4137, %v4121
    %v4458 = vpack.c.b16 %v4138, %v4122
    %v4459 = vpack.c.b16 %v4155, %v4139
    %v4460 = vpack.c.b16 %v4156, %v4140
    %v4461 = vpack.c.b16 %v4157, %v4141
    %v4462 = vpack.c.b16 %v4158, %v4142
    %v4463 = vpack.c.b16 %v4159, %v4143
    %v4464 = vpack.c.b16 %v4160, %v4144
    %v4465 = vpack.c.b16 %v4161, %v4145
    %v4466 = vpack.c.b16 %v4162, %v4146
    %v4467 = vpack.c.b16 %v4163, %v4147
    %v4468 = vpack.c.b16 %v4164, %v4148
    %v4469 = vpack.c.b16 %v4165, %v4149
    %v4470 = vpack.c.b16 %v4166, %v4150
    %v4471 = vpack.c.b16 %v4167, %v4151
    %v4472 = vpack.c.b16 %v4168, %v4152
    %v4473 = vpack.c.b16 %v4169, %v4153
    %v4474 = vpack.c.b16 %v4170, %v4154
    %v4475 = vpack.c.b16 %v4187, %v4171
    %v4476 = vpack.c.b16 %v4188, %v4172
    %v4477 = vpack.c.b16 %v4189, %v4173
    %v4478 = vpack.c.b16 %v4190, %v4174
    %v4479 = vpack.c.b16 %v4191, %v4175
    %v4480 = vpack.c.b16 %v4192, %v4176
    %v4481 = vpack.c.b16 %v4193, %v4177
    %v4482 = vpack.c.b16 %v4194, %v4178
    %v4483 = vpack.c.b16 %v4195, %v4179
    %v4484 = vpack.c.b16 %v4196, %v4180
    %v4485 = vpack.c.b16 %v4197, %v4181
    %v4486 = vpack.c.b16 %v4198, %v4182
    %v4487 = vpack.c.b16 %v4199, %v4183
    %v4488 = vpack.c.b16 %v4200, %v4184
    %v4489 = vpack.c.b16 %v4201, %v4185
    %v4490 = vpack.c.b16 %v4202, %v4186
    %v4491 = vpack.c.b16 %v4219, %v4203
    %v4492 = vpack.c.b16 %v4220, %v4204
    %v4493 = vpack.c.b16 %v4221, %v4205
    %v4494 = vpack.c.b16 %v4222, %v4206
    %v4495 = vpack.c.b16 %v4223, %v4207
    %v4496 = vpack.c.b16 %v4224, %v4208
    %v4497 = vpack.c.b16 %v4225, %v4209
    %v4498 = vpack.c.b16 %v4226, %v4210
    %v4499 = vpack.c.b16 %v4227, %v4211
    %v4500 = vpack.c.b16 %v4228, %v4212
    %v4501 = vpack.c.b16 %v4229, %v4213
    %v4502 = vpack.c.b16 %v4230, %v4214
    %v4503 = vpack.c.b16 %v4231, %v4215
    %v4504 = vpack.c.b16 %v4232, %v4216
    %v4505 = vpack.c.b16 %v4233, %v4217
    %v4506 = vpack.c.b16 %v4234, %v4218
    %v4507 = vpack.c.b16 %v4251, %v4235
    %v4508 = vpack.c.b16 %v4252, %v4236
    %v4509 = vpack.c.b16 %v4253, %v4237
    %v4510 = vpack.c.b16 %v4254, %v4238
    %v4511 = vpack.c.b16 %v4255, %v4239
    %v4512 = vpack.c.b16 %v4256, %v4240
    %v4513 = vpack.c.b16 %v4257, %v4241
    %v4514 = vpack.c.b16 %v4258, %v4242
    %v4515 = vpack.c.b16 %v4259, %v4243
    %v4516 = vpack.c.b16 %v4260, %v4244
    %v4517 = vpack.c.b16 %v4261, %v4245
    %v4518 = vpack.c.b16 %v4262, %v4246
    %v4519 = vpack.c.b16 %v4263, %v4247
    %v4520 = vpack.c.b16 %v4264, %v4248
    %v4521 = vpack.c.b16 %v4265, %v4249
    %v4522 = vpack.c.b16 %v4266, %v4250
    %4779 = vmatprep.subr.bf16.mxu0 %v4268
    %4780 = vmatpush1.bf16.msra.mxu0 %v4267
    %4781 = vmatprep.subr.bf16.mxu0 %v4284
    %4782 = vmatpush1.bf16.msra.mxu0 %v4283
    %4783 = vmatprep.subr.bf16.mxu0 %v4300
    %4784 = vmatpush1.bf16.msra.mxu0 %v4299
    %4785 = vmatprep.subr.bf16.mxu0 %v4316
    %4786 = vmatpush1.bf16.msra.mxu0 %v4315
    %4787 = vmatprep.subr.bf16.mxu0 %v4332
    %4788 = vmatpush1.bf16.msra.mxu0 %v4331
    %4789 = vmatprep.subr.bf16.mxu0 %v4348
    %4790 = vmatpush1.bf16.msra.mxu0 %v4347
    %4791 = vmatprep.subr.bf16.mxu0 %v4364
    %4792 = vmatpush1.bf16.msra.mxu0 %v4363
    %4793 = vmatprep.subr.bf16.mxu0 %v4380
    %4794 = vmatpush1.bf16.msra.mxu0 %v4379
    %4795 = vmatprep.subr.bf16.mxu0 %v4396
    %4796 = vmatpush1.bf16.msra.mxu0 %v4395
    %4797 = vmatprep.subr.bf16.mxu0 %v4412
    %4798 = vmatpush1.bf16.msra.mxu0 %v4411
    %4799 = vmatprep.subr.bf16.mxu0 %v4428
    %4800 = vmatpush1.bf16.msra.mxu0 %v4427
    %4801 = vmatprep.subr.bf16.mxu0 %v4444
    %4802 = vmatpush1.bf16.msra.mxu0 %v4443
    %4803 = vmatprep.subr.bf16.mxu0 %v4460
    %4804 = vmatpush1.bf16.msra.mxu0 %v4459
    %4805 = vmatprep.subr.bf16.mxu0 %v4476
    %4806 = vmatpush1.bf16.msra.mxu0 %v4475
    %4807 = vmatprep.subr.bf16.mxu0 %v4492
    %4808 = vmatpush1.bf16.msra.mxu0 %v4491
    %4809 = vmatprep.subr.bf16.mxu0 %v4508
    %4810 = vmatpush1.bf16.msra.mxu0 %v4507
    %4811 = vmatprep.mubr.bf16.mxu0 %v3414
    %4812 = vmatmul.mubr.bf16.gmra.mrb[0].mxu0 %v3413
    %v4813 = vpop.f32.mrb[0].mxu0
    %v4814 = vadd.f32 %v3422, %v4813
    %v4815 = vpop.f32.mrb[0].mxu0
    %v4816 = vadd.f32 %v3426, %v4815
    %v4817 = vpop.f32.mrb[0].mxu0
    %v4818 = vpop.f32.mrb[0].mxu0
    %4819 = vdwg.mxu0
    %4820 = vmatprep.subr.bf16.mxu0 %v4270
    %4821 = vmatpush1.bf16.msra.mxu0 %v4269
    %4822 = vmatprep.subr.bf16.mxu0 %v4286
    %4823 = vmatpush1.bf16.msra.mxu0 %v4285
    %4824 = vmatprep.subr.bf16.mxu0 %v4302
    %4825 = vmatpush1.bf16.msra.mxu0 %v4301
    %4826 = vmatprep.subr.bf16.mxu0 %v4318
    %4827 = vmatpush1.bf16.msra.mxu0 %v4317
    %4828 = vmatprep.subr.bf16.mxu0 %v4334
    %4829 = vmatpush1.bf16.msra.mxu0 %v4333
    %4830 = vmatprep.subr.bf16.mxu0 %v4350
    %4831 = vmatpush1.bf16.msra.mxu0 %v4349
    %4832 = vmatprep.subr.bf16.mxu0 %v4366
    %4833 = vmatpush1.bf16.msra.mxu0 %v4365
    %4834 = vmatprep.subr.bf16.mxu0 %v4382
    %4835 = vmatpush1.bf16.msra.mxu0 %v4381
    %4836 = vmatprep.subr.bf16.mxu0 %v4398
    %4837 = vmatpush1.bf16.msra.mxu0 %v4397
    %4838 = vmatprep.subr.bf16.mxu0 %v4414
    %4839 = vmatpush1.bf16.msra.mxu0 %v4413
    %4840 = vmatprep.subr.bf16.mxu0 %v4430
    %4841 = vmatpush1.bf16.msra.mxu0 %v4429
    %4842 = vmatprep.subr.bf16.mxu0 %v4446
    %4843 = vmatpush1.bf16.msra.mxu0 %v4445
    %4844 = vmatprep.subr.bf16.mxu0 %v4462
    %4845 = vmatpush1.bf16.msra.mxu0 %v4461
    %4846 = vmatprep.subr.bf16.mxu0 %v4478
    %4847 = vmatpush1.bf16.msra.mxu0 %v4477
    %4848 = vmatprep.subr.bf16.mxu0 %v4494
    %4849 = vmatpush1.bf16.msra.mxu0 %v4493
    %4850 = vmatprep.subr.bf16.mxu0 %v4510
    %4851 = vmatpush1.bf16.msra.mxu0 %v4509
    %4852 = vmatprep.mubr.bf16.mxu0 %v3414
    %4853 = vmatmul.mubr.bf16.gmra.mrb[0].mxu0 %v3413
    %v4854 = vpop.f32.mrb[0].mxu0
    %v4855 = vadd.f32 %v3430, %v4854
    %v4856 = vpop.f32.mrb[0].mxu0
    %v4857 = vadd.f32 %v3434, %v4856
    %v4858 = vpop.f32.mrb[0].mxu0
    %v4859 = vpop.f32.mrb[0].mxu0
    %4860 = vdwg.mxu0
    %4861 = vmatprep.subr.bf16.mxu0 %v4272
    %4862 = vmatpush1.bf16.msra.mxu0 %v4271
    %4863 = vmatprep.subr.bf16.mxu0 %v4288
    %4864 = vmatpush1.bf16.msra.mxu0 %v4287
    %4865 = vmatprep.subr.bf16.mxu0 %v4304
    %4866 = vmatpush1.bf16.msra.mxu0 %v4303
    %4867 = vmatprep.subr.bf16.mxu0 %v4320
    %4868 = vmatpush1.bf16.msra.mxu0 %v4319
    %4869 = vmatprep.subr.bf16.mxu0 %v4336
    %4870 = vmatpush1.bf16.msra.mxu0 %v4335
    %4871 = vmatprep.subr.bf16.mxu0 %v4352
    %4872 = vmatpush1.bf16.msra.mxu0 %v4351
    %4873 = vmatprep.subr.bf16.mxu0 %v4368
    %4874 = vmatpush1.bf16.msra.mxu0 %v4367
    %4875 = vmatprep.subr.bf16.mxu0 %v4384
    %4876 = vmatpush1.bf16.msra.mxu0 %v4383
    %4877 = vmatprep.subr.bf16.mxu0 %v4400
    %4878 = vmatpush1.bf16.msra.mxu0 %v4399
    %4879 = vmatprep.subr.bf16.mxu0 %v4416
    %4880 = vmatpush1.bf16.msra.mxu0 %v4415
    %4881 = vmatprep.subr.bf16.mxu0 %v4432
    %4882 = vmatpush1.bf16.msra.mxu0 %v4431
    %4883 = vmatprep.subr.bf16.mxu0 %v4448
    %4884 = vmatpush1.bf16.msra.mxu0 %v4447
    %4885 = vmatprep.subr.bf16.mxu0 %v4464
    %4886 = vmatpush1.bf16.msra.mxu0 %v4463
    %4887 = vmatprep.subr.bf16.mxu0 %v4480
    %4888 = vmatpush1.bf16.msra.mxu0 %v4479
    %4889 = vmatprep.subr.bf16.mxu0 %v4496
    %4890 = vmatpush1.bf16.msra.mxu0 %v4495
    %4891 = vmatprep.subr.bf16.mxu0 %v4512
    %4892 = vmatpush1.bf16.msra.mxu0 %v4511
    %4893 = vmatprep.mubr.bf16.mxu0 %v3414
    %4894 = vmatmul.mubr.bf16.gmra.mrb[0].mxu0 %v3413
    %v4895 = vpop.f32.mrb[0].mxu0
    %v4896 = vadd.f32 %v3438, %v4895
    %v4897 = vpop.f32.mrb[0].mxu0
    %v4898 = vadd.f32 %v3442, %v4897
    %v4899 = vpop.f32.mrb[0].mxu0
    %v4900 = vpop.f32.mrb[0].mxu0
    %4901 = vdwg.mxu0
    %4902 = vmatprep.subr.bf16.mxu0 %v4274
    %4903 = vmatpush1.bf16.msra.mxu0 %v4273
    %4904 = vmatprep.subr.bf16.mxu0 %v4290
    %4905 = vmatpush1.bf16.msra.mxu0 %v4289
    %4906 = vmatprep.subr.bf16.mxu0 %v4306
    %4907 = vmatpush1.bf16.msra.mxu0 %v4305
    %4908 = vmatprep.subr.bf16.mxu0 %v4322
    %4909 = vmatpush1.bf16.msra.mxu0 %v4321
    %4910 = vmatprep.subr.bf16.mxu0 %v4338
    %4911 = vmatpush1.bf16.msra.mxu0 %v4337
    %4912 = vmatprep.subr.bf16.mxu0 %v4354
    %4913 = vmatpush1.bf16.msra.mxu0 %v4353
    %4914 = vmatprep.subr.bf16.mxu0 %v4370
    %4915 = vmatpush1.bf16.msra.mxu0 %v4369
    %4916 = vmatprep.subr.bf16.mxu0 %v4386
    %4917 = vmatpush1.bf16.msra.mxu0 %v4385
    %4918 = vmatprep.subr.bf16.mxu0 %v4402
    %4919 = vmatpush1.bf16.msra.mxu0 %v4401
    %4920 = vmatprep.subr.bf16.mxu0 %v4418
    %4921 = vmatpush1.bf16.msra.mxu0 %v4417
    %4922 = vmatprep.subr.bf16.mxu0 %v4434
    %4923 = vmatpush1.bf16.msra.mxu0 %v4433
    %4924 = vmatprep.subr.bf16.mxu0 %v4450
    %4925 = vmatpush1.bf16.msra.mxu0 %v4449
    %4926 = vmatprep.subr.bf16.mxu0 %v4466
    %4927 = vmatpush1.bf16.msra.mxu0 %v4465
    %4928 = vmatprep.subr.bf16.mxu0 %v4482
    %4929 = vmatpush1.bf16.msra.mxu0 %v4481
    %4930 = vmatprep.subr.bf16.mxu0 %v4498
    %4931 = vmatpush1.bf16.msra.mxu0 %v4497
    %4932 = vmatprep.subr.bf16.mxu0 %v4514
    %4933 = vmatpush1.bf16.msra.mxu0 %v4513
    %4934 = vmatprep.mubr.bf16.mxu0 %v3414
    %4935 = vmatmul.mubr.bf16.gmra.mrb[0].mxu0 %v3413
    %v4936 = vpop.f32.mrb[0].mxu0
    %v4937 = vadd.f32 %v3446, %v4936
    %v4938 = vpop.f32.mrb[0].mxu0
    %v4939 = vadd.f32 %v3450, %v4938
    %v4940 = vpop.f32.mrb[0].mxu0
    %v4941 = vpop.f32.mrb[0].mxu0
    %4942 = vdwg.mxu0
    %4943 = vmatprep.subr.bf16.mxu0 %v4276
    %4944 = vmatpush1.bf16.msra.mxu0 %v4275
    %4945 = vmatprep.subr.bf16.mxu0 %v4292
    %4946 = vmatpush1.bf16.msra.mxu0 %v4291
    %4947 = vmatprep.subr.bf16.mxu0 %v4308
    %4948 = vmatpush1.bf16.msra.mxu0 %v4307
    %4949 = vmatprep.subr.bf16.mxu0 %v4324
    %4950 = vmatpush1.bf16.msra.mxu0 %v4323
    %4951 = vmatprep.subr.bf16.mxu0 %v4340
    %4952 = vmatpush1.bf16.msra.mxu0 %v4339
    %4953 = vmatprep.subr.bf16.mxu0 %v4356
    %4954 = vmatpush1.bf16.msra.mxu0 %v4355
    %4955 = vmatprep.subr.bf16.mxu0 %v4372
    %4956 = vmatpush1.bf16.msra.mxu0 %v4371
    %4957 = vmatprep.subr.bf16.mxu0 %v4388
    %4958 = vmatpush1.bf16.msra.mxu0 %v4387
    %4959 = vmatprep.subr.bf16.mxu0 %v4404
    %4960 = vmatpush1.bf16.msra.mxu0 %v4403
    %4961 = vmatprep.subr.bf16.mxu0 %v4420
    %4962 = vmatpush1.bf16.msra.mxu0 %v4419
    %4963 = vmatprep.subr.bf16.mxu0 %v4436
    %4964 = vmatpush1.bf16.msra.mxu0 %v4435
    %4965 = vmatprep.subr.bf16.mxu0 %v4452
    %4966 = vmatpush1.bf16.msra.mxu0 %v4451
    %4967 = vmatprep.subr.bf16.mxu0 %v4468
    %4968 = vmatpush1.bf16.msra.mxu0 %v4467
    %4969 = vmatprep.subr.bf16.mxu0 %v4484
    %4970 = vmatpush1.bf16.msra.mxu0 %v4483
    %4971 = vmatprep.subr.bf16.mxu0 %v4500
    %4972 = vmatpush1.bf16.msra.mxu0 %v4499
    %4973 = vmatprep.subr.bf16.mxu0 %v4516
    %4974 = vmatpush1.bf16.msra.mxu0 %v4515
    %4975 = vmatprep.mubr.bf16.mxu0 %v3414
    %4976 = vmatmul.mubr.bf16.gmra.mrb[0].mxu0 %v3413
    %v4977 = vpop.f32.mrb[0].mxu0
    %v4978 = vadd.f32 %v3454, %v4977
    %v4979 = vpop.f32.mrb[0].mxu0
    %v4980 = vadd.f32 %v3458, %v4979
    %v4981 = vpop.f32.mrb[0].mxu0
    %v4982 = vpop.f32.mrb[0].mxu0
    %4983 = vdwg.mxu0
    %4984 = vmatprep.subr.bf16.mxu0 %v4278
    %4985 = vmatpush1.bf16.msra.mxu0 %v4277
    %4986 = vmatprep.subr.bf16.mxu0 %v4294
    %4987 = vmatpush1.bf16.msra.mxu0 %v4293
    %4988 = vmatprep.subr.bf16.mxu0 %v4310
    %4989 = vmatpush1.bf16.msra.mxu0 %v4309
    %4990 = vmatprep.subr.bf16.mxu0 %v4326
    %4991 = vmatpush1.bf16.msra.mxu0 %v4325
    %4992 = vmatprep.subr.bf16.mxu0 %v4342
    %4993 = vmatpush1.bf16.msra.mxu0 %v4341
    %4994 = vmatprep.subr.bf16.mxu0 %v4358
    %4995 = vmatpush1.bf16.msra.mxu0 %v4357
    %4996 = vmatprep.subr.bf16.mxu0 %v4374
    %4997 = vmatpush1.bf16.msra.mxu0 %v4373
    %4998 = vmatprep.subr.bf16.mxu0 %v4390
    %4999 = vmatpush1.bf16.msra.mxu0 %v4389
    %5000 = vmatprep.subr.bf16.mxu0 %v4406
    %5001 = vmatpush1.bf16.msra.mxu0 %v4405
    %5002 = vmatprep.subr.bf16.mxu0 %v4422
    %5003 = vmatpush1.bf16.msra.mxu0 %v4421
    %5004 = vmatprep.subr.bf16.mxu0 %v4438
    %5005 = vmatpush1.bf16.msra.mxu0 %v4437
    %5006 = vmatprep.subr.bf16.mxu0 %v4454
    %5007 = vmatpush1.bf16.msra.mxu0 %v4453
    %5008 = vmatprep.subr.bf16.mxu0 %v4470
    %5009 = vmatpush1.bf16.msra.mxu0 %v4469
    %5010 = vmatprep.subr.bf16.mxu0 %v4486
    %5011 = vmatpush1.bf16.msra.mxu0 %v4485
    %5012 = vmatprep.subr.bf16.mxu0 %v4502
    %5013 = vmatpush1.bf16.msra.mxu0 %v4501
    %5014 = vmatprep.subr.bf16.mxu0 %v4518
    %5015 = vmatpush1.bf16.msra.mxu0 %v4517
    %5016 = vmatprep.mubr.bf16.mxu0 %v3414
    %5017 = vmatmul.mubr.bf16.gmra.mrb[0].mxu0 %v3413
    %v5018 = vpop.f32.mrb[0].mxu0
    %v5019 = vadd.f32 %v3462, %v5018
    %v5020 = vpop.f32.mrb[0].mxu0
    %v5021 = vadd.f32 %v3466, %v5020
    %v5022 = vpop.f32.mrb[0].mxu0
    %v5023 = vpop.f32.mrb[0].mxu0
    %5024 = vdwg.mxu0
    %5025 = vmatprep.subr.bf16.mxu0 %v4280
    %5026 = vmatpush1.bf16.msra.mxu0 %v4279
    %5027 = vmatprep.subr.bf16.mxu0 %v4296
    %5028 = vmatpush1.bf16.msra.mxu0 %v4295
    %5029 = vmatprep.subr.bf16.mxu0 %v4312
    %5030 = vmatpush1.bf16.msra.mxu0 %v4311
    %5031 = vmatprep.subr.bf16.mxu0 %v4328
    %5032 = vmatpush1.bf16.msra.mxu0 %v4327
    %5033 = vmatprep.subr.bf16.mxu0 %v4344
    %5034 = vmatpush1.bf16.msra.mxu0 %v4343
    %5035 = vmatprep.subr.bf16.mxu0 %v4360
    %5036 = vmatpush1.bf16.msra.mxu0 %v4359
    %5037 = vmatprep.subr.bf16.mxu0 %v4376
    %5038 = vmatpush1.bf16.msra.mxu0 %v4375
    %5039 = vmatprep.subr.bf16.mxu0 %v4392
    %5040 = vmatpush1.bf16.msra.mxu0 %v4391
    %5041 = vmatprep.subr.bf16.mxu0 %v4408
    %5042 = vmatpush1.bf16.msra.mxu0 %v4407
    %5043 = vmatprep.subr.bf16.mxu0 %v4424
    %5044 = vmatpush1.bf16.msra.mxu0 %v4423
    %5045 = vmatprep.subr.bf16.mxu0 %v4440
    %5046 = vmatpush1.bf16.msra.mxu0 %v4439
    %5047 = vmatprep.subr.bf16.mxu0 %v4456
    %5048 = vmatpush1.bf16.msra.mxu0 %v4455
    %5049 = vmatprep.subr.bf16.mxu0 %v4472
    %5050 = vmatpush1.bf16.msra.mxu0 %v4471
    %5051 = vmatprep.subr.bf16.mxu0 %v4488
    %5052 = vmatpush1.bf16.msra.mxu0 %v4487
    %5053 = vmatprep.subr.bf16.mxu0 %v4504
    %5054 = vmatpush1.bf16.msra.mxu0 %v4503
    %5055 = vmatprep.subr.bf16.mxu0 %v4520
    %5056 = vmatpush1.bf16.msra.mxu0 %v4519
    %5057 = vmatprep.mubr.bf16.mxu0 %v3414
    %5058 = vmatmul.mubr.bf16.gmra.mrb[0].mxu0 %v3413
    %v5059 = vpop.f32.mrb[0].mxu0
    %v5060 = vadd.f32 %v3470, %v5059
    %v5061 = vpop.f32.mrb[0].mxu0
    %v5062 = vadd.f32 %v3474, %v5061
    %v5063 = vpop.f32.mrb[0].mxu0
    %v5064 = vpop.f32.mrb[0].mxu0
    %5065 = vdwg.mxu0
    %5066 = vmatprep.subr.bf16.mxu0 %v4282
    %5067 = vmatpush1.bf16.msra.mxu0 %v4281
    %5068 = vmatprep.subr.bf16.mxu0 %v4298
    %5069 = vmatpush1.bf16.msra.mxu0 %v4297
    %5070 = vmatprep.subr.bf16.mxu0 %v4314
    %5071 = vmatpush1.bf16.msra.mxu0 %v4313
    %5072 = vmatprep.subr.bf16.mxu0 %v4330
    %5073 = vmatpush1.bf16.msra.mxu0 %v4329
    %5074 = vmatprep.subr.bf16.mxu0 %v4346
    %5075 = vmatpush1.bf16.msra.mxu0 %v4345
    %5076 = vmatprep.subr.bf16.mxu0 %v4362
    %5077 = vmatpush1.bf16.msra.mxu0 %v4361
    %5078 = vmatprep.subr.bf16.mxu0 %v4378
    %5079 = vmatpush1.bf16.msra.mxu0 %v4377
    %5080 = vmatprep.subr.bf16.mxu0 %v4394
    %5081 = vmatpush1.bf16.msra.mxu0 %v4393
    %5082 = vmatprep.subr.bf16.mxu0 %v4410
    %5083 = vmatpush1.bf16.msra.mxu0 %v4409
    %5084 = vmatprep.subr.bf16.mxu0 %v4426
    %5085 = vmatpush1.bf16.msra.mxu0 %v4425
    %5086 = vmatprep.subr.bf16.mxu0 %v4442
    %5087 = vmatpush1.bf16.msra.mxu0 %v4441
    %5088 = vmatprep.subr.bf16.mxu0 %v4458
    %5089 = vmatpush1.bf16.msra.mxu0 %v4457
    %5090 = vmatprep.subr.bf16.mxu0 %v4474
    %5091 = vmatpush1.bf16.msra.mxu0 %v4473
    %5092 = vmatprep.subr.bf16.mxu0 %v4490
    %5093 = vmatpush1.bf16.msra.mxu0 %v4489
    %5094 = vmatprep.subr.bf16.mxu0 %v4506
    %5095 = vmatpush1.bf16.msra.mxu0 %v4505
    %5096 = vmatprep.subr.bf16.mxu0 %v4522
    %5097 = vmatpush1.bf16.msra.mxu0 %v4521
    %5098 = vmatprep.mubr.bf16.mxu0 %v3414
    %5099 = vmatmul.mubr.bf16.gmra.mrb[0].mxu0 %v3413
    %v5100 = vpop.f32.mrb[0].mxu0
    %v5101 = vadd.f32 %v3478, %v5100
    %v5102 = vpop.f32.mrb[0].mxu0
    %v5103 = vadd.f32 %v3482, %v5102
    %v5104 = vpop.f32.mrb[0].mxu0
    %v5105 = vpop.f32.mrb[0].mxu0
    %5106 = vdwg.mxu0
    %v5109 = vrot.slane %v4814, 6
    %v5110 = vrot.slane %v4816, 6
    %5113 = vst [vmem:[#allocation2] sm:$0xc] %v5109
    %5114 = vst [vmem:[#allocation2 + $0x8] sm:$0xc] %v5110
    %v5117 = vrot.slane %v4855, 2
    %v5118 = vrot.slane %v4857, 2
    %5121 = vst [vmem:[#allocation2] sm:$0xc0] %v5117
    %5122 = vst [vmem:[#allocation2 + $0x8] sm:$0xc0] %v5118
    %v5125 = vrot.slane %v4896, 6
    %v5126 = vrot.slane %v4898, 6
    %5129 = vst [vmem:[#allocation2 + $0x10] sm:$0xc] %v5125
    %5130 = vst [vmem:[#allocation2 + $0x18] sm:$0xc] %v5126
    %v5133 = vrot.slane %v4937, 2
    %v5134 = vrot.slane %v4939, 2
    %5137 = vst [vmem:[#allocation2 + $0x10] sm:$0xc0] %v5133
    %5138 = vst [vmem:[#allocation2 + $0x18] sm:$0xc0] %v5134
    %v5141 = vrot.slane %v4978, 6
    %v5142 = vrot.slane %v4980, 6
    %5145 = vst [vmem:[#allocation2 + $0x20] sm:$0xc] %v5141
    %5146 = vst [vmem:[#allocation2 + $0x28] sm:$0xc] %v5142
    %v5149 = vrot.slane %v5019, 2
    %v5150 = vrot.slane %v5021, 2
    %5153 = vst [vmem:[#allocation2 + $0x20] sm:$0xc0] %v5149
    %5154 = vst [vmem:[#allocation2 + $0x28] sm:$0xc0] %v5150
    %v5157 = vrot.slane %v5060, 6
    %v5158 = vrot.slane %v5062, 6
    %5161 = vst [vmem:[#allocation2 + $0x30] sm:$0xc] %v5157
    %5162 = vst [vmem:[#allocation2 + $0x38] sm:$0xc] %v5158
    %v5165 = vrot.slane %v5101, 2
    %v5166 = vrot.slane %v5103, 2
    %5169 = vst [vmem:[#allocation2 + $0x30] sm:$0xc0] %v5165
    %5170 = vst [vmem:[#allocation2 + $0x38] sm:$0xc0] %v5166
    %v5171 = vld [vmem:[#allocation2] sm:$0xff]
    %v5172 = vld [vmem:[#allocation2 + $0x8] sm:$0xff]
    %v5173 = vld [vmem:[#allocation2 + $0x10] sm:$0xff]
    %v5174 = vld [vmem:[#allocation2 + $0x18] sm:$0xff]
    %v5175 = vld [vmem:[#allocation2 + $0x20] sm:$0xff]
    %v5176 = vld [vmem:[#allocation2 + $0x28] sm:$0xff]
    %v5177 = vld [vmem:[#allocation2 + $0x30] sm:$0xff]
    %v5178 = vld [vmem:[#allocation2 + $0x38] sm:$0xff]
    %v5179 = vld [vmem:[#allocation5 + $0xc] sm:$0xff]
    %v5180 = vld [vmem:[#allocation5 + $0x14] sm:$0xff]
    %v5181 = vld [vmem:[#allocation5 + $0x1c] sm:$0xff]
    %v5182 = vld [vmem:[#allocation5 + $0xb8] sm:$0xff]
    %v5183 = vld [vmem:[#allocation5 + $0xc0] sm:$0xff]
    %v5184 = vld [vmem:[#allocation5 + $0xc8] sm:$0xff]
    %v5185 = vld [vmem:[#allocation5 + $0x164] sm:$0xff]
    %v5186 = vld [vmem:[#allocation5 + $0x16c] sm:$0xff]
    %v5187 = vld [vmem:[#allocation5 + $0x174] sm:$0xff]
    %v5188 = vld [vmem:[#allocation5 + $0x210] sm:$0xff]
    %v5189 = vld [vmem:[#allocation5 + $0x218] sm:$0xff]
    %v5190 = vld [vmem:[#allocation5 + $0x220] sm:$0xff]
    %v5191 = vld [vmem:[#allocation5 + $0x2bc] sm:$0xff]
    %v5192 = vld [vmem:[#allocation5 + $0x2c4] sm:$0xff]
    %v5193 = vld [vmem:[#allocation5 + $0x2cc] sm:$0xff]
    %v5194 = vld [vmem:[#allocation5 + $0x368] sm:$0xff]
    %v5195 = vld [vmem:[#allocation5 + $0x370] sm:$0xff]
    %v5196 = vld [vmem:[#allocation5 + $0x378] sm:$0xff]
    %v5197 = vld [vmem:[#allocation5 + $0x414] sm:$0xff]
    %v5198 = vld [vmem:[#allocation5 + $0x41c] sm:$0xff]
    %v5199 = vld [vmem:[#allocation5 + $0x424] sm:$0xff]
    %v5200 = vld [vmem:[#allocation5 + $0x4c0] sm:$0xff]
    %v5201 = vld [vmem:[#allocation5 + $0x4c8] sm:$0xff]
    %v5202 = vld [vmem:[#allocation5 + $0x4d0] sm:$0xff]
    %v5203 = vld [vmem:[#allocation5 + $0x56c] sm:$0xff]
    %v5204 = vld [vmem:[#allocation5 + $0x574] sm:$0xff]
    %v5205 = vld [vmem:[#allocation5 + $0x57c] sm:$0xff]
    %v5206 = vld [vmem:[#allocation5 + $0x618] sm:$0xff]
    %v5207 = vld [vmem:[#allocation5 + $0x620] sm:$0xff]
    %v5208 = vld [vmem:[#allocation5 + $0x628] sm:$0xff]
    %v5209 = vld [vmem:[#allocation5 + $0x6c4] sm:$0xff]
    %v5210 = vld [vmem:[#allocation5 + $0x6cc] sm:$0xff]
    %v5211 = vld [vmem:[#allocation5 + $0x6d4] sm:$0xff]
    %v5212 = vld [vmem:[#allocation5 + $0x770] sm:$0xff]
    %v5213 = vld [vmem:[#allocation5 + $0x778] sm:$0xff]
    %v5214 = vld [vmem:[#allocation5 + $0x780] sm:$0xff]
    %v5215 = vld [vmem:[#allocation5 + $0x81c] sm:$0xff]
    %v5216 = vld [vmem:[#allocation5 + $0x824] sm:$0xff]
    %v5217 = vld [vmem:[#allocation5 + $0x82c] sm:$0xff]
    %v5218 = vld [vmem:[#allocation5 + $0x8c8] sm:$0xff]
    %v5219 = vld [vmem:[#allocation5 + $0x8d0] sm:$0xff]
    %v5220 = vld [vmem:[#allocation5 + $0x8d8] sm:$0xff]
    %v5221 = vld [vmem:[#allocation5 + $0x974] sm:$0xff]
    %v5222 = vld [vmem:[#allocation5 + $0x97c] sm:$0xff]
    %v5223 = vld [vmem:[#allocation5 + $0x984] sm:$0xff]
    %v5224 = vld [vmem:[#allocation5 + $0xa20] sm:$0xff]
    %v5225 = vld [vmem:[#allocation5 + $0xa28] sm:$0xff]
    %v5226 = vld [vmem:[#allocation5 + $0xa30] sm:$0xff]
    %v5227 = vld [vmem:[#allocation5 + $0xacc] sm:$0xff]
    %v5228 = vld [vmem:[#allocation5 + $0xad4] sm:$0xff]
    %v5229 = vld [vmem:[#allocation5 + $0xadc] sm:$0xff]
    %v5230 = vld [vmem:[#allocation5 + $0xb78] sm:$0xff]
    %v5231 = vld [vmem:[#allocation5 + $0xb80] sm:$0xff]
    %v5232 = vld [vmem:[#allocation5 + $0xb88] sm:$0xff]
    %v5233 = vld [vmem:[#allocation5 + $0xc24] sm:$0xff]
    %v5234 = vld [vmem:[#allocation5 + $0xc2c] sm:$0xff]
    %v5235 = vld [vmem:[#allocation5 + $0xc34] sm:$0xff]
    %v5236 = vld [vmem:[#allocation5 + $0xcd0] sm:$0xff]
    %v5237 = vld [vmem:[#allocation5 + $0xcd8] sm:$0xff]
    %v5238 = vld [vmem:[#allocation5 + $0xce0] sm:$0xff]
    %v5239 = vld [vmem:[#allocation5 + $0xd7c] sm:$0xff]
    %v5240 = vld [vmem:[#allocation5 + $0xd84] sm:$0xff]
    %v5241 = vld [vmem:[#allocation5 + $0xd8c] sm:$0xff]
    %v5242 = vld [vmem:[#allocation5 + $0xe28] sm:$0xff]
    %v5243 = vld [vmem:[#allocation5 + $0xe30] sm:$0xff]
    %v5244 = vld [vmem:[#allocation5 + $0xe38] sm:$0xff]
    %v5245 = vld [vmem:[#allocation5 + $0xed4] sm:$0xff]
    %v5246 = vld [vmem:[#allocation5 + $0xedc] sm:$0xff]
    %v5247 = vld [vmem:[#allocation5 + $0xee4] sm:$0xff]
    %v5248 = vld [vmem:[#allocation5 + $0xf80] sm:$0xff]
    %v5249 = vld [vmem:[#allocation5 + $0xf88] sm:$0xff]
    %v5250 = vld [vmem:[#allocation5 + $0xf90] sm:$0xff]
    %v5251 = vld [vmem:[#allocation5 + $0x102c] sm:$0xff]
    %v5252 = vld [vmem:[#allocation5 + $0x1034] sm:$0xff]
    %v5253 = vld [vmem:[#allocation5 + $0x103c] sm:$0xff]
    %v5254 = vld [vmem:[#allocation5 + $0x10d8] sm:$0xff]
    %v5255 = vld [vmem:[#allocation5 + $0x10e0] sm:$0xff]
    %v5256 = vld [vmem:[#allocation5 + $0x10e8] sm:$0xff]
    %v5257 = vld [vmem:[#allocation5 + $0x1184] sm:$0xff]
    %v5258 = vld [vmem:[#allocation5 + $0x118c] sm:$0xff]
    %v5259 = vld [vmem:[#allocation5 + $0x1194] sm:$0xff]
    %v5260 = vld [vmem:[#allocation5 + $0x1230] sm:$0xff]
    %v5261 = vld [vmem:[#allocation5 + $0x1238] sm:$0xff]
    %v5262 = vld [vmem:[#allocation5 + $0x1240] sm:$0xff]
    %v5263 = vld [vmem:[#allocation5 + $0x12dc] sm:$0xff]
    %v5264 = vld [vmem:[#allocation5 + $0x12e4] sm:$0xff]
    %v5265 = vld [vmem:[#allocation5 + $0x12ec] sm:$0xff]
    %v5266 = vld [vmem:[#allocation5 + $0x1388] sm:$0xff]
    %v5267 = vld [vmem:[#allocation5 + $0x1390] sm:$0xff]
    %v5268 = vld [vmem:[#allocation5 + $0x1398] sm:$0xff]
    %v5269 = vld [vmem:[#allocation5 + $0x1434] sm:$0xff]
    %v5270 = vld [vmem:[#allocation5 + $0x143c] sm:$0xff]
    %v5271 = vld [vmem:[#allocation5 + $0x1444] sm:$0xff]
    %v5272 = vld [vmem:[#allocation5 + $0x14e0] sm:$0xff]
    %v5273 = vld [vmem:[#allocation5 + $0x14e8] sm:$0xff]
    %v5274 = vld [vmem:[#allocation5 + $0x14f0] sm:$0xff]
    %v5275 = vpack.c.bf16 %v5173, %v5171
    %v5276 = vpack.c.bf16 %v5174, %v5172
    %v5277 = vpack.c.bf16 %v5177, %v5175
    %v5278 = vpack.c.bf16 %v5178, %v5176
    %v5279 = vld [vmem:[#allocation8 + $0x15] sm:$0x3f]
    %v5281 = vlaneseq
    %v5282 = vshrl.u32 %v5281, 7
    %v5283 = vsub.s32 0, %v5282
    %v5284 = vrot.slane %v5279, %v5283
    %v5285 = vlaneseq
    %v5286 = vshrl.u32 %v5285, 7
    %v5287 = vsub.s32 1, %v5286
    %v5288 = vrot.slane %v5279, %v5287
    %v5289 = vlaneseq
    %v5290 = vshrl.u32 %v5289, 7
    %v5291 = vsub.s32 2, %v5290
    %v5292 = vrot.slane %v5279, %v5291
    %v5293 = vlaneseq
    %v5294 = vshrl.u32 %v5293, 7
    %v5295 = vsub.s32 3, %v5294
    %v5296 = vrot.slane %v5279, %v5295
    %v5297 = vlaneseq
    %v5298 = vshrl.u32 %v5297, 7
    %v5299 = vsub.s32 4, %v5298
    %v5300 = vrot.slane %v5279, %v5299
    %v5301 = vlaneseq
    %v5302 = vshrl.u32 %v5301, 7
    %v5303 = vsub.s32 5, %v5302
    %v5304 = vrot.slane %v5279, %v5303
    %v5407 = vunpack.c.l.b16 %v5179
    %v5408 = vunpack.c.h.b16 %v5179
    %v5409 = vunpack.c.l.b16 %v5180
    %v5410 = vunpack.c.h.b16 %v5180
    %v5411 = vunpack.c.l.b16 %v5181
    %v5412 = vunpack.c.h.b16 %v5181
    %v5413 = vunpack.c.l.b16 %v5182
    %v5414 = vunpack.c.h.b16 %v5182
    %v5415 = vunpack.c.l.b16 %v5183
    %v5416 = vunpack.c.h.b16 %v5183
    %v5417 = vunpack.c.l.b16 %v5184
    %v5418 = vunpack.c.h.b16 %v5184
    %v5419 = vunpack.c.l.b16 %v5185
    %v5420 = vunpack.c.h.b16 %v5185
    %v5421 = vunpack.c.l.b16 %v5186
    %v5422 = vunpack.c.h.b16 %v5186
    %v5423 = vunpack.c.l.b16 %v5187
    %v5424 = vunpack.c.h.b16 %v5187
    %v5425 = vunpack.c.l.b16 %v5188
    %v5426 = vunpack.c.h.b16 %v5188
    %v5427 = vunpack.c.l.b16 %v5189
    %v5428 = vunpack.c.h.b16 %v5189
    %v5429 = vunpack.c.l.b16 %v5190
    %v5430 = vunpack.c.h.b16 %v5190
    %v5431 = vunpack.c.l.b16 %v5191
    %v5432 = vunpack.c.h.b16 %v5191
    %v5433 = vunpack.c.l.b16 %v5192
    %v5434 = vunpack.c.h.b16 %v5192
    %v5435 = vunpack.c.l.b16 %v5193
    %v5436 = vunpack.c.h.b16 %v5193
    %v5437 = vunpack.c.l.b16 %v5194
    %v5438 = vunpack.c.h.b16 %v5194
    %v5439 = vunpack.c.l.b16 %v5195
    %v5440 = vunpack.c.h.b16 %v5195
    %v5441 = vunpack.c.l.b16 %v5196
    %v5442 = vunpack.c.h.b16 %v5196
    %v5443 = vunpack.c.l.b16 %v5197
    %v5444 = vunpack.c.h.b16 %v5197
    %v5445 = vunpack.c.l.b16 %v5198
    %v5446 = vunpack.c.h.b16 %v5198
    %v5447 = vunpack.c.l.b16 %v5199
    %v5448 = vunpack.c.h.b16 %v5199
    %v5449 = vunpack.c.l.b16 %v5200
    %v5450 = vunpack.c.h.b16 %v5200
    %v5451 = vunpack.c.l.b16 %v5201
    %v5452 = vunpack.c.h.b16 %v5201
    %v5453 = vunpack.c.l.b16 %v5202
    %v5454 = vunpack.c.h.b16 %v5202
    %v5455 = vunpack.c.l.b16 %v5203
    %v5456 = vunpack.c.h.b16 %v5203
    %v5457 = vunpack.c.l.b16 %v5204
    %v5458 = vunpack.c.h.b16 %v5204
    %v5459 = vunpack.c.l.b16 %v5205
    %v5460 = vunpack.c.h.b16 %v5205
    %v5461 = vunpack.c.l.b16 %v5206
    %v5462 = vunpack.c.h.b16 %v5206
    %v5463 = vunpack.c.l.b16 %v5207
    %v5464 = vunpack.c.h.b16 %v5207
    %v5465 = vunpack.c.l.b16 %v5208
    %v5466 = vunpack.c.h.b16 %v5208
    %v5467 = vunpack.c.l.b16 %v5209
    %v5468 = vunpack.c.h.b16 %v5209
    %v5469 = vunpack.c.l.b16 %v5210
    %v5470 = vunpack.c.h.b16 %v5210
    %v5471 = vunpack.c.l.b16 %v5211
    %v5472 = vunpack.c.h.b16 %v5211
    %v5473 = vunpack.c.l.b16 %v5212
    %v5474 = vunpack.c.h.b16 %v5212
    %v5475 = vunpack.c.l.b16 %v5213
    %v5476 = vunpack.c.h.b16 %v5213
    %v5477 = vunpack.c.l.b16 %v5214
    %v5478 = vunpack.c.h.b16 %v5214
    %v5479 = vunpack.c.l.b16 %v5215
    %v5480 = vunpack.c.h.b16 %v5215
    %v5481 = vunpack.c.l.b16 %v5216
    %v5482 = vunpack.c.h.b16 %v5216
    %v5483 = vunpack.c.l.b16 %v5217
    %v5484 = vunpack.c.h.b16 %v5217
    %v5485 = vunpack.c.l.b16 %v5218
    %v5486 = vunpack.c.h.b16 %v5218
    %v5487 = vunpack.c.l.b16 %v5219
    %v5488 = vunpack.c.h.b16 %v5219
    %v5489 = vunpack.c.l.b16 %v5220
    %v5490 = vunpack.c.h.b16 %v5220
    %v5491 = vunpack.c.l.b16 %v5221
    %v5492 = vunpack.c.h.b16 %v5221
    %v5493 = vunpack.c.l.b16 %v5222
    %v5494 = vunpack.c.h.b16 %v5222
    %v5495 = vunpack.c.l.b16 %v5223
    %v5496 = vunpack.c.h.b16 %v5223
    %v5497 = vunpack.c.l.b16 %v5224
    %v5498 = vunpack.c.h.b16 %v5224
    %v5499 = vunpack.c.l.b16 %v5225
    %v5500 = vunpack.c.h.b16 %v5225
    %v5501 = vunpack.c.l.b16 %v5226
    %v5502 = vunpack.c.h.b16 %v5226
    %v5503 = vunpack.c.l.b16 %v5227
    %v5504 = vunpack.c.h.b16 %v5227
    %v5505 = vunpack.c.l.b16 %v5228
    %v5506 = vunpack.c.h.b16 %v5228
    %v5507 = vunpack.c.l.b16 %v5229
    %v5508 = vunpack.c.h.b16 %v5229
    %v5509 = vunpack.c.l.b16 %v5230
    %v5510 = vunpack.c.h.b16 %v5230
    %v5511 = vunpack.c.l.b16 %v5231
    %v5512 = vunpack.c.h.b16 %v5231
    %v5513 = vunpack.c.l.b16 %v5232
    %v5514 = vunpack.c.h.b16 %v5232
    %v5515 = vunpack.c.l.b16 %v5233
    %v5516 = vunpack.c.h.b16 %v5233
    %v5517 = vunpack.c.l.b16 %v5234
    %v5518 = vunpack.c.h.b16 %v5234
    %v5519 = vunpack.c.l.b16 %v5235
    %v5520 = vunpack.c.h.b16 %v5235
    %v5521 = vunpack.c.l.b16 %v5236
    %v5522 = vunpack.c.h.b16 %v5236
    %v5523 = vunpack.c.l.b16 %v5237
    %v5524 = vunpack.c.h.b16 %v5237
    %v5525 = vunpack.c.l.b16 %v5238
    %v5526 = vunpack.c.h.b16 %v5238
    %v5527 = vunpack.c.l.b16 %v5239
    %v5528 = vunpack.c.h.b16 %v5239
    %v5529 = vunpack.c.l.b16 %v5240
    %v5530 = vunpack.c.h.b16 %v5240
    %v5531 = vunpack.c.l.b16 %v5241
    %v5532 = vunpack.c.h.b16 %v5241
    %v5533 = vunpack.c.l.b16 %v5242
    %v5534 = vunpack.c.h.b16 %v5242
    %v5535 = vunpack.c.l.b16 %v5243
    %v5536 = vunpack.c.h.b16 %v5243
    %v5537 = vunpack.c.l.b16 %v5244
    %v5538 = vunpack.c.h.b16 %v5244
    %v5539 = vunpack.c.l.b16 %v5245
    %v5540 = vunpack.c.h.b16 %v5245
    %v5541 = vunpack.c.l.b16 %v5246
    %v5542 = vunpack.c.h.b16 %v5246
    %v5543 = vunpack.c.l.b16 %v5247
    %v5544 = vunpack.c.h.b16 %v5247
    %v5545 = vunpack.c.l.b16 %v5248
    %v5546 = vunpack.c.h.b16 %v5248
    %v5547 = vunpack.c.l.b16 %v5249
    %v5548 = vunpack.c.h.b16 %v5249
    %v5549 = vunpack.c.l.b16 %v5250
    %v5550 = vunpack.c.h.b16 %v5250
    %v5551 = vunpack.c.l.b16 %v5251
    %v5552 = vunpack.c.h.b16 %v5251
    %v5553 = vunpack.c.l.b16 %v5252
    %v5554 = vunpack.c.h.b16 %v5252
    %v5555 = vunpack.c.l.b16 %v5253
    %v5556 = vunpack.c.h.b16 %v5253
    %v5557 = vunpack.c.l.b16 %v5254
    %v5558 = vunpack.c.h.b16 %v5254
    %v5559 = vunpack.c.l.b16 %v5255
    %v5560 = vunpack.c.h.b16 %v5255
    %v5561 = vunpack.c.l.b16 %v5256
    %v5562 = vunpack.c.h.b16 %v5256
    %v5563 = vunpack.c.l.b16 %v5257
    %v5564 = vunpack.c.h.b16 %v5257
    %v5565 = vunpack.c.l.b16 %v5258
    %v5566 = vunpack.c.h.b16 %v5258
    %v5567 = vunpack.c.l.b16 %v5259
    %v5568 = vunpack.c.h.b16 %v5259
    %v5569 = vunpack.c.l.b16 %v5260
    %v5570 = vunpack.c.h.b16 %v5260
    %v5571 = vunpack.c.l.b16 %v5261
    %v5572 = vunpack.c.h.b16 %v5261
    %v5573 = vunpack.c.l.b16 %v5262
    %v5574 = vunpack.c.h.b16 %v5262
    %v5575 = vunpack.c.l.b16 %v5263
    %v5576 = vunpack.c.h.b16 %v5263
    %v5577 = vunpack.c.l.b16 %v5264
    %v5578 = vunpack.c.h.b16 %v5264
    %v5579 = vunpack.c.l.b16 %v5265
    %v5580 = vunpack.c.h.b16 %v5265
    %v5581 = vunpack.c.l.b16 %v5266
    %v5582 = vunpack.c.h.b16 %v5266
    %v5583 = vunpack.c.l.b16 %v5267
    %v5584 = vunpack.c.h.b16 %v5267
    %v5585 = vunpack.c.l.b16 %v5268
    %v5586 = vunpack.c.h.b16 %v5268
    %v5587 = vunpack.c.l.b16 %v5269
    %v5588 = vunpack.c.h.b16 %v5269
    %v5589 = vunpack.c.l.b16 %v5270
    %v5590 = vunpack.c.h.b16 %v5270
    %v5591 = vunpack.c.l.b16 %v5271
    %v5592 = vunpack.c.h.b16 %v5271
    %v5593 = vunpack.c.l.b16 %v5272
    %v5594 = vunpack.c.h.b16 %v5272
    %v5595 = vunpack.c.l.b16 %v5273
    %v5596 = vunpack.c.h.b16 %v5273
    %v5597 = vunpack.c.l.b16 %v5274
    %v5598 = vunpack.c.h.b16 %v5274
    %v5599 = vpack.c.b16 %v5413, %v5407
    %v5600 = vpack.c.b16 %v5414, %v5408
    %v5601 = vpack.c.b16 %v5415, %v5409
    %v5602 = vpack.c.b16 %v5416, %v5410
    %v5603 = vpack.c.b16 %v5417, %v5411
    %v5604 = vpack.c.b16 %v5418, %v5412
    %v5605 = vpack.c.b16 %v5425, %v5419
    %v5606 = vpack.c.b16 %v5426, %v5420
    %v5607 = vpack.c.b16 %v5427, %v5421
    %v5608 = vpack.c.b16 %v5428, %v5422
    %v5609 = vpack.c.b16 %v5429, %v5423
    %v5610 = vpack.c.b16 %v5430, %v5424
    %v5611 = vpack.c.b16 %v5437, %v5431
    %v5612 = vpack.c.b16 %v5438, %v5432
    %v5613 = vpack.c.b16 %v5439, %v5433
    %v5614 = vpack.c.b16 %v5440, %v5434
    %v5615 = vpack.c.b16 %v5441, %v5435
    %v5616 = vpack.c.b16 %v5442, %v5436
    %v5617 = vpack.c.b16 %v5449, %v5443
    %v5618 = vpack.c.b16 %v5450, %v5444
    %v5619 = vpack.c.b16 %v5451, %v5445
    %v5620 = vpack.c.b16 %v5452, %v5446
    %v5621 = vpack.c.b16 %v5453, %v5447
    %v5622 = vpack.c.b16 %v5454, %v5448
    %v5623 = vpack.c.b16 %v5461, %v5455
    %v5624 = vpack.c.b16 %v5462, %v5456
    %v5625 = vpack.c.b16 %v5463, %v5457
    %v5626 = vpack.c.b16 %v5464, %v5458
    %v5627 = vpack.c.b16 %v5465, %v5459
    %v5628 = vpack.c.b16 %v5466, %v5460
    %v5629 = vpack.c.b16 %v5473, %v5467
    %v5630 = vpack.c.b16 %v5474, %v5468
    %v5631 = vpack.c.b16 %v5475, %v5469
    %v5632 = vpack.c.b16 %v5476, %v5470
    %v5633 = vpack.c.b16 %v5477, %v5471
    %v5634 = vpack.c.b16 %v5478, %v5472
    %v5635 = vpack.c.b16 %v5485, %v5479
    %v5636 = vpack.c.b16 %v5486, %v5480
    %v5637 = vpack.c.b16 %v5487, %v5481
    %v5638 = vpack.c.b16 %v5488, %v5482
    %v5639 = vpack.c.b16 %v5489, %v5483
    %v5640 = vpack.c.b16 %v5490, %v5484
    %v5641 = vpack.c.b16 %v5497, %v5491
    %v5642 = vpack.c.b16 %v5498, %v5492
    %v5643 = vpack.c.b16 %v5499, %v5493
    %v5644 = vpack.c.b16 %v5500, %v5494
    %v5645 = vpack.c.b16 %v5501, %v5495
    %v5646 = vpack.c.b16 %v5502, %v5496
    %v5647 = vpack.c.b16 %v5509, %v5503
    %v5648 = vpack.c.b16 %v5510, %v5504
    %v5649 = vpack.c.b16 %v5511, %v5505
    %v5650 = vpack.c.b16 %v5512, %v5506
    %v5651 = vpack.c.b16 %v5513, %v5507
    %v5652 = vpack.c.b16 %v5514, %v5508
    %v5653 = vpack.c.b16 %v5521, %v5515
    %v5654 = vpack.c.b16 %v5522, %v5516
    %v5655 = vpack.c.b16 %v5523, %v5517
    %v5656 = vpack.c.b16 %v5524, %v5518
    %v5657 = vpack.c.b16 %v5525, %v5519
    %v5658 = vpack.c.b16 %v5526, %v5520
    %v5659 = vpack.c.b16 %v5533, %v5527
    %v5660 = vpack.c.b16 %v5534, %v5528
    %v5661 = vpack.c.b16 %v5535, %v5529
    %v5662 = vpack.c.b16 %v5536, %v5530
    %v5663 = vpack.c.b16 %v5537, %v5531
    %v5664 = vpack.c.b16 %v5538, %v5532
    %v5665 = vpack.c.b16 %v5545, %v5539
    %v5666 = vpack.c.b16 %v5546, %v5540
    %v5667 = vpack.c.b16 %v5547, %v5541
    %v5668 = vpack.c.b16 %v5548, %v5542
    %v5669 = vpack.c.b16 %v5549, %v5543
    %v5670 = vpack.c.b16 %v5550, %v5544
    %v5671 = vpack.c.b16 %v5557, %v5551
    %v5672 = vpack.c.b16 %v5558, %v5552
    %v5673 = vpack.c.b16 %v5559, %v5553
    %v5674 = vpack.c.b16 %v5560, %v5554
    %v5675 = vpack.c.b16 %v5561, %v5555
    %v5676 = vpack.c.b16 %v5562, %v5556
    %v5677 = vpack.c.b16 %v5569, %v5563
    %v5678 = vpack.c.b16 %v5570, %v5564
    %v5679 = vpack.c.b16 %v5571, %v5565
    %v5680 = vpack.c.b16 %v5572, %v5566
    %v5681 = vpack.c.b16 %v5573, %v5567
    %v5682 = vpack.c.b16 %v5574, %v5568
    %v5683 = vpack.c.b16 %v5581, %v5575
    %v5684 = vpack.c.b16 %v5582, %v5576
    %v5685 = vpack.c.b16 %v5583, %v5577
    %v5686 = vpack.c.b16 %v5584, %v5578
    %v5687 = vpack.c.b16 %v5585, %v5579
    %v5688 = vpack.c.b16 %v5586, %v5580
    %v5689 = vpack.c.b16 %v5593, %v5587
    %v5690 = vpack.c.b16 %v5594, %v5588
    %v5691 = vpack.c.b16 %v5595, %v5589
    %v5692 = vpack.c.b16 %v5596, %v5590
    %v5693 = vpack.c.b16 %v5597, %v5591
    %v5694 = vpack.c.b16 %v5598, %v5592
    %5791 = vmatprep.subr.bf16.mxu0 %v5600
    %5792 = vmatpush1.bf16.msra.mxu0 %v5599
    %5793 = vmatprep.subr.bf16.mxu0 %v5606
    %5794 = vmatpush1.bf16.msra.mxu0 %v5605
    %5795 = vmatprep.subr.bf16.mxu0 %v5612
    %5796 = vmatpush1.bf16.msra.mxu0 %v5611
    %5797 = vmatprep.subr.bf16.mxu0 %v5618
    %5798 = vmatpush1.bf16.msra.mxu0 %v5617
    %5799 = vmatprep.subr.bf16.mxu0 %v5624
    %5800 = vmatpush1.bf16.msra.mxu0 %v5623
    %5801 = vmatprep.subr.bf16.mxu0 %v5630
    %5802 = vmatpush1.bf16.msra.mxu0 %v5629
    %5803 = vmatprep.subr.bf16.mxu0 %v5636
    %5804 = vmatpush1.bf16.msra.mxu0 %v5635
    %5805 = vmatprep.subr.bf16.mxu0 %v5642
    %5806 = vmatpush1.bf16.msra.mxu0 %v5641
    %5807 = vmatprep.subr.bf16.mxu0 %v5648
    %5808 = vmatpush1.bf16.msra.mxu0 %v5647
    %5809 = vmatprep.subr.bf16.mxu0 %v5654
    %5810 = vmatpush1.bf16.msra.mxu0 %v5653
    %5811 = vmatprep.subr.bf16.mxu0 %v5660
    %5812 = vmatpush1.bf16.msra.mxu0 %v5659
    %5813 = vmatprep.subr.bf16.mxu0 %v5666
    %5814 = vmatpush1.bf16.msra.mxu0 %v5665
    %5815 = vmatprep.subr.bf16.mxu0 %v5672
    %5816 = vmatpush1.bf16.msra.mxu0 %v5671
    %5817 = vmatprep.subr.bf16.mxu0 %v5678
    %5818 = vmatpush1.bf16.msra.mxu0 %v5677
    %5819 = vmatprep.subr.bf16.mxu0 %v5684
    %5820 = vmatpush1.bf16.msra.mxu0 %v5683
    %5821 = vmatprep.subr.bf16.mxu0 %v5690
    %5822 = vmatpush1.bf16.msra.mxu0 %v5689
    %5823 = vmatprep.mubr.bf16.mxu0 %v5276
    %5824 = vmatmul.mubr.bf16.gmra.mrb[0].mxu0 %v5275
    %v5825 = vpop.f32.mrb[0].mxu0
    %v5826 = vadd.f32 %v5284, %v5825
    %v5827 = vpop.f32.mrb[0].mxu0
    %v5828 = vadd.f32 %v5288, %v5827
    %v5829 = vpop.f32.mrb[0].mxu0
    %v5830 = vadd.f32 %v5284, %v5829
    %v5831 = vpop.f32.mrb[0].mxu0
    %v5832 = vadd.f32 %v5288, %v5831
    %5833 = vmatprep.mubr.bf16.mxu0 %v5278
    %5834 = vmatmul.mubr.bf16.gmra.mrb[0].mxu0 %v5277
    %v5835 = vpop.f32.mrb[0].mxu0
    %v5836 = vadd.f32 %v5284, %v5835
    %v5837 = vpop.f32.mrb[0].mxu0
    %v5838 = vadd.f32 %v5288, %v5837
    %v5839 = vpop.f32.mrb[0].mxu0
    %v5840 = vadd.f32 %v5284, %v5839
    %v5841 = vpop.f32.mrb[0].mxu0
    %v5842 = vadd.f32 %v5288, %v5841
    %5843 = vdwg.mxu0
    %5844 = vmatprep.subr.bf16.mxu0 %v5602
    %5845 = vmatpush1.bf16.msra.mxu0 %v5601
    %5846 = vmatprep.subr.bf16.mxu0 %v5608
    %5847 = vmatpush1.bf16.msra.mxu0 %v5607
    %5848 = vmatprep.subr.bf16.mxu0 %v5614
    %5849 = vmatpush1.bf16.msra.mxu0 %v5613
    %5850 = vmatprep.subr.bf16.mxu0 %v5620
    %5851 = vmatpush1.bf16.msra.mxu0 %v5619
    %5852 = vmatprep.subr.bf16.mxu0 %v5626
    %5853 = vmatpush1.bf16.msra.mxu0 %v5625
    %5854 = vmatprep.subr.bf16.mxu0 %v5632
    %5855 = vmatpush1.bf16.msra.mxu0 %v5631
    %5856 = vmatprep.subr.bf16.mxu0 %v5638
    %5857 = vmatpush1.bf16.msra.mxu0 %v5637
    %5858 = vmatprep.subr.bf16.mxu0 %v5644
    %5859 = vmatpush1.bf16.msra.mxu0 %v5643
    %5860 = vmatprep.subr.bf16.mxu0 %v5650
    %5861 = vmatpush1.bf16.msra.mxu0 %v5649
    %5862 = vmatprep.subr.bf16.mxu0 %v5656
    %5863 = vmatpush1.bf16.msra.mxu0 %v5655
    %5864 = vmatprep.subr.bf16.mxu0 %v5662
    %5865 = vmatpush1.bf16.msra.mxu0 %v5661
    %5866 = vmatprep.subr.bf16.mxu0 %v5668
    %5867 = vmatpush1.bf16.msra.mxu0 %v5667
    %5868 = vmatprep.subr.bf16.mxu0 %v5674
    %5869 = vmatpush1.bf16.msra.mxu0 %v5673
    %5870 = vmatprep.subr.bf16.mxu0 %v5680
    %5871 = vmatpush1.bf16.msra.mxu0 %v5679
    %5872 = vmatprep.subr.bf16.mxu0 %v5686
    %5873 = vmatpush1.bf16.msra.mxu0 %v5685
    %5874 = vmatprep.subr.bf16.mxu0 %v5692
    %5875 = vmatpush1.bf16.msra.mxu0 %v5691
    %5876 = vmatprep.mubr.bf16.mxu0 %v5276
    %5877 = vmatmul.mubr.bf16.gmra.mrb[0].mxu0 %v5275
    %v5878 = vpop.f32.mrb[0].mxu0
    %v5879 = vadd.f32 %v5292, %v5878
    %v5880 = vpop.f32.mrb[0].mxu0
    %v5881 = vadd.f32 %v5296, %v5880
    %v5882 = vpop.f32.mrb[0].mxu0
    %v5883 = vadd.f32 %v5292, %v5882
    %v5884 = vpop.f32.mrb[0].mxu0
    %v5885 = vadd.f32 %v5296, %v5884
    %5886 = vmatprep.mubr.bf16.mxu0 %v5278
    %5887 = vmatmul.mubr.bf16.gmra.mrb[0].mxu0 %v5277
    %v5888 = vpop.f32.mrb[0].mxu0
    %v5889 = vadd.f32 %v5292, %v5888
    %v5890 = vpop.f32.mrb[0].mxu0
    %v5891 = vadd.f32 %v5296, %v5890
    %v5892 = vpop.f32.mrb[0].mxu0
    %v5893 = vadd.f32 %v5292, %v5892
    %v5894 = vpop.f32.mrb[0].mxu0
    %v5895 = vadd.f32 %v5296, %v5894
    %5896 = vdwg.mxu0
    %5897 = vmatprep.subr.bf16.mxu0 %v5604
    %5898 = vmatpush1.bf16.msra.mxu0 %v5603
    %5899 = vmatprep.subr.bf16.mxu0 %v5610
    %5900 = vmatpush1.bf16.msra.mxu0 %v5609
    %5901 = vmatprep.subr.bf16.mxu0 %v5616
    %5902 = vmatpush1.bf16.msra.mxu0 %v5615
    %5903 = vmatprep.subr.bf16.mxu0 %v5622
    %5904 = vmatpush1.bf16.msra.mxu0 %v5621
    %5905 = vmatprep.subr.bf16.mxu0 %v5628
    %5906 = vmatpush1.bf16.msra.mxu0 %v5627
    %5907 = vmatprep.subr.bf16.mxu0 %v5634
    %5908 = vmatpush1.bf16.msra.mxu0 %v5633
    %5909 = vmatprep.subr.bf16.mxu0 %v5640
    %5910 = vmatpush1.bf16.msra.mxu0 %v5639
    %5911 = vmatprep.subr.bf16.mxu0 %v5646
    %5912 = vmatpush1.bf16.msra.mxu0 %v5645
    %5913 = vmatprep.subr.bf16.mxu0 %v5652
    %5914 = vmatpush1.bf16.msra.mxu0 %v5651
    %5915 = vmatprep.subr.bf16.mxu0 %v5658
    %5916 = vmatpush1.bf16.msra.mxu0 %v5657
    %5917 = vmatprep.subr.bf16.mxu0 %v5664
    %5918 = vmatpush1.bf16.msra.mxu0 %v5663
    %5919 = vmatprep.subr.bf16.mxu0 %v5670
    %5920 = vmatpush1.bf16.msra.mxu0 %v5669
    %5921 = vmatprep.subr.bf16.mxu0 %v5676
    %5922 = vmatpush1.bf16.msra.mxu0 %v5675
    %5923 = vmatprep.subr.bf16.mxu0 %v5682
    %5924 = vmatpush1.bf16.msra.mxu0 %v5681
    %5925 = vmatprep.subr.bf16.mxu0 %v5688
    %5926 = vmatpush1.bf16.msra.mxu0 %v5687
    %5927 = vmatprep.subr.bf16.mxu0 %v5694
    %5928 = vmatpush1.bf16.msra.mxu0 %v5693
    %5929 = vmatprep.mubr.bf16.mxu0 %v5276
    %5930 = vmatmul.mubr.bf16.gmra.mrb[0].mxu0 %v5275
    %v5931 = vpop.f32.mrb[0].mxu0
    %v5932 = vadd.f32 %v5300, %v5931
    %v5933 = vpop.f32.mrb[0].mxu0
    %v5934 = vadd.f32 %v5304, %v5933
    %v5935 = vpop.f32.mrb[0].mxu0
    %v5936 = vadd.f32 %v5300, %v5935
    %v5937 = vpop.f32.mrb[0].mxu0
    %v5938 = vadd.f32 %v5304, %v5937
    %5939 = vmatprep.mubr.bf16.mxu0 %v5278
    %5940 = vmatmul.mubr.bf16.gmra.mrb[0].mxu0 %v5277
    %v5941 = vpop.f32.mrb[0].mxu0
    %v5942 = vadd.f32 %v5300, %v5941
    %v5943 = vpop.f32.mrb[0].mxu0
    %v5944 = vadd.f32 %v5304, %v5943
    %v5945 = vpop.f32.mrb[0].mxu0
    %v5946 = vadd.f32 %v5300, %v5945
    %v5947 = vpop.f32.mrb[0].mxu0
    %v5948 = vadd.f32 %v5304, %v5947
    %5949 = vdwg.mxu0
    %5954 = vrot.lane.b32.xlu0 %v5826, 64
    %v5955 = vpop.permute.xlu0 %5954
    %5956 = vrot.lane.b32.xlu0 %v5830, 64
    %v5957 = vpop.permute.xlu0 %5956
    %5958 = vrot.lane.b32.xlu0 %v5836, 64
    %v5959 = vpop.permute.xlu0 %5958
    %5960 = vrot.lane.b32.xlu0 %v5840, 64
    %v5961 = vpop.permute.xlu0 %5960
    %5966 = vrot.lane.b32.xlu0 %v5828, 64
    %v5967 = vpop.permute.xlu0 %5966
    %5968 = vrot.lane.b32.xlu0 %v5832, 64
    %v5969 = vpop.permute.xlu0 %5968
    %5970 = vrot.lane.b32.xlu0 %v5838, 64
    %v5971 = vpop.permute.xlu0 %5970
    %5972 = vrot.lane.b32.xlu0 %v5842, 64
    %v5973 = vpop.permute.xlu0 %5972
    %5978 = vrot.lane.b32.xlu0 %v5879, 64
    %v5979 = vpop.permute.xlu0 %5978
    %5980 = vrot.lane.b32.xlu0 %v5883, 64
    %v5981 = vpop.permute.xlu0 %5980
    %5982 = vrot.lane.b32.xlu0 %v5889, 64
    %v5983 = vpop.permute.xlu0 %5982
    %5984 = vrot.lane.b32.xlu0 %v5893, 64
    %v5985 = vpop.permute.xlu0 %5984
    %5990 = vrot.lane.b32.xlu0 %v5881, 64
    %v5991 = vpop.permute.xlu0 %5990
    %5992 = vrot.lane.b32.xlu0 %v5885, 64
    %v5993 = vpop.permute.xlu0 %5992
    %5994 = vrot.lane.b32.xlu0 %v5891, 64
    %v5995 = vpop.permute.xlu0 %5994
    %5996 = vrot.lane.b32.xlu0 %v5895, 64
    %v5997 = vpop.permute.xlu0 %5996
    %6002 = vrot.lane.b32.xlu0 %v5932, 64
    %v6003 = vpop.permute.xlu0 %6002
    %6004 = vrot.lane.b32.xlu0 %v5936, 64
    %v6005 = vpop.permute.xlu0 %6004
    %6006 = vrot.lane.b32.xlu0 %v5942, 64
    %v6007 = vpop.permute.xlu0 %6006
    %6008 = vrot.lane.b32.xlu0 %v5946, 64
    %v6009 = vpop.permute.xlu0 %6008
    %6018 = vrot.lane.b32.xlu0 %v5934, 64
    %v6019 = vpop.permute.xlu0 %6018
    %6020 = vrot.lane.b32.xlu0 %v5938, 64
    %v6021 = vpop.permute.xlu0 %6020
    %6022 = vrot.lane.b32.xlu0 %v5944, 64
    %v6023 = vpop.permute.xlu0 %6022
    %6024 = vrot.lane.b32.xlu0 %v5948, 64
    %v6025 = vpop.permute.xlu0 %6024
    %vm6030 = vcmask 523264
    %v6031 = vsel %vm6030, %v5826, 0
    %v6033 = vsel %vm6030, %v5830, 0
    %v6035 = vsel %vm6030, %v5836, 0
    %v6037 = vsel %vm6030, %v5840, 0
    %v6039 = vsel %vm6030, %v5955, 0
    %v6041 = vsel %vm6030, %v5957, 0
    %v6043 = vsel %vm6030, %v5959, 0
    %v6045 = vsel %vm6030, %v5961, 0
    %v6047 = vsel %vm6030, %v5828, 0
    %v6049 = vsel %vm6030, %v5832, 0
    %v6051 = vsel %vm6030, %v5838, 0
    %v6053 = vsel %vm6030, %v5842, 0
    %v6055 = vsel %vm6030, %v5967, 0
    %v6057 = vsel %vm6030, %v5969, 0
    %v6059 = vsel %vm6030, %v5971, 0
    %v6061 = vsel %vm6030, %v5973, 0
    %v6063 = vsel %vm6030, %v5879, 0
    %v6065 = vsel %vm6030, %v5883, 0
    %v6067 = vsel %vm6030, %v5889, 0
    %v6069 = vsel %vm6030, %v5893, 0
    %v6071 = vsel %vm6030, %v5979, 0
    %v6073 = vsel %vm6030, %v5981, 0
    %v6075 = vsel %vm6030, %v5983, 0
    %v6077 = vsel %vm6030, %v5985, 0
    %v6079 = vsel %vm6030, %v5881, 0
    %v6081 = vsel %vm6030, %v5885, 0
    %v6083 = vsel %vm6030, %v5891, 0
    %v6085 = vsel %vm6030, %v5895, 0
    %v6087 = vsel %vm6030, %v5991, 0
    %v6089 = vsel %vm6030, %v5993, 0
    %v6091 = vsel %vm6030, %v5995, 0
    %v6093 = vsel %vm6030, %v5997, 0
    %6095 = vmatprep.subr.mxu0 0.0
    %6096 = vmatpush1.xpose.msra.mxu0 %v6063
    %6097 = vmatprep.subr.mxu0 0.0
    %6098 = vmatpush1.xpose.msra.mxu0 %v6065
    %6099 = vmatprep.subr.mxu0 0.0
    %6100 = vmatpush1.xpose.msra.mxu0 %v6067
    %6101 = vmatprep.subr.mxu0 0.0
    %6102 = vmatpush1.xpose.msra.mxu0 %v6069
    %6103 = vmatprep.subr.mxu0 0.0
    %6104 = vmatpush1.xpose.msra.mxu0 %v6071
    %6105 = vmatprep.subr.mxu0 0.0
    %6106 = vmatpush1.xpose.msra.mxu0 %v6073
    %6107 = vmatprep.subr.mxu0 0.0
    %6108 = vmatpush1.xpose.msra.mxu0 %v6075
    %6109 = vmatprep.subr.mxu0 0.0
    %6110 = vmatpush1.xpose.msra.mxu0 %v6077
    %6111 = vmatprep.subr.mxu0 0.0
    %6112 = vmatpush1.xpose.msra.mxu0 %v6079
    %6113 = vmatprep.subr.mxu0 0.0
    %6114 = vmatpush1.xpose.msra.mxu0 %v6081
    %6115 = vmatprep.subr.mxu0 0.0
    %6116 = vmatpush1.xpose.msra.mxu0 %v6083
    %6117 = vmatprep.subr.mxu0 0.0
    %6118 = vmatpush1.xpose.msra.mxu0 %v6085
    %6119 = vmatprep.subr.mxu0 0.0
    %6120 = vmatpush1.xpose.msra.mxu0 %v6087
    %6121 = vmatprep.subr.mxu0 0.0
    %6122 = vmatpush1.xpose.msra.mxu0 %v6089
    %6123 = vmatprep.subr.mxu0 0.0
    %6124 = vmatpush1.xpose.msra.mxu0 %v6091
    %6125 = vmatprep.subr.mxu0 0.0
    %6126 = vmatpush1.xpose.msra.mxu0 %v6093
    %6127 = vmatprep.subr.mxu0 0.0
    %6128 = vmatpush1.xpose.msra.mxu0 0.0
    %6129 = vmatprep.subr.mxu0 0.0
    %6130 = vmatpush1.xpose.msra.mxu0 0.0
    %6131 = vmatprep.subr.mxu0 0.0
    %6132 = vmatpush1.xpose.msra.mxu0 0.0
    %6133 = vmatprep.subr.mxu0 0.0
    %6134 = vmatpush1.xpose.msra.mxu0 0.0
    %6135 = vmatprep.subr.mxu0 0.0
    %6136 = vmatpush1.xpose.msra.mxu0 0.0
    %6137 = vmatprep.subr.mxu0 0.0
    %6138 = vmatpush1.xpose.msra.mxu0 0.0
    %6139 = vmatprep.subr.mxu0 0.0
    %6140 = vmatpush1.xpose.msra.mxu0 0.0
    %6141 = vmatprep.subr.mxu0 0.0
    %6142 = vmatpush1.xpose.msra.mxu0 0.0
    %6143 = vmatprep.subr.mxu0 0.0
    %6144 = vmatpush1.xpose.msra.mxu0 0.0
    %6145 = vmatprep.subr.mxu0 0.0
    %6146 = vmatpush1.xpose.msra.mxu0 0.0
    %6147 = vmatprep.subr.mxu0 0.0
    %6148 = vmatpush1.xpose.msra.mxu0 0.0
    %6149 = vmatprep.subr.mxu0 0.0
    %6150 = vmatpush1.xpose.msra.mxu0 0.0
    %6151 = vmatprep.subr.mxu0 0.0
    %6152 = vmatpush1.xpose.msra.mxu0 0.0
    %6153 = vmatprep.subr.mxu0 0.0
    %6154 = vmatpush1.xpose.msra.mxu0 0.0
    %6155 = vmatprep.subr.mxu0 0.0
    %6156 = vmatpush1.xpose.msra.mxu0 0.0
    %6157 = vmatprep.subr.mxu0 0.0
    %6158 = vmatpush1.xpose.msra.mxu0 0.0
    %6159 = vmatprep.mubr.f32.mxu0 0.0
    %6160 = vmatmul.mubr.f32.gmra.mrb[0].mxu0 %v6031
    %v6161 = vpop.f32.mrb[0].mxu0
    %v6162 = vadd.f32 0.0, %v6161
    %v6163 = vpop.f32.mrb[0].mxu0
    %6164 = vmatprep.mubr.f32.mxu0 0.0
    %6165 = vmatmul.mubr.f32.gmra.mrb[0].mxu0 %v6033
    %v6166 = vpop.f32.mrb[0].mxu0
    %v6167 = vadd.f32 0.0, %v6166
    %v6168 = vpop.f32.mrb[0].mxu0
    %6169 = vmatprep.mubr.f32.mxu0 0.0
    %6170 = vmatmul.mubr.f32.gmra.mrb[0].mxu0 %v6035
    %v6171 = vpop.f32.mrb[0].mxu0
    %v6172 = vadd.f32 0.0, %v6171
    %v6173 = vpop.f32.mrb[0].mxu0
    %6174 = vmatprep.mubr.f32.mxu0 0.0
    %6175 = vmatmul.mubr.f32.gmra.mrb[0].mxu0 %v6037
    %v6176 = vpop.f32.mrb[0].mxu0
    %v6177 = vadd.f32 0.0, %v6176
    %v6178 = vpop.f32.mrb[0].mxu0
    %6179 = vmatprep.mubr.f32.mxu0 0.0
    %6180 = vmatmul.mubr.f32.gmra.mrb[0].mxu0 %v6039
    %v6181 = vpop.f32.mrb[0].mxu0
    %v6182 = vadd.f32 0.0, %v6181
    %v6183 = vpop.f32.mrb[0].mxu0
    %6184 = vmatprep.mubr.f32.mxu0 0.0
    %6185 = vmatmul.mubr.f32.gmra.mrb[0].mxu0 %v6041
    %v6186 = vpop.f32.mrb[0].mxu0
    %v6187 = vadd.f32 0.0, %v6186
    %v6188 = vpop.f32.mrb[0].mxu0
    %6189 = vmatprep.mubr.f32.mxu0 0.0
    %6190 = vmatmul.mubr.f32.gmra.mrb[0].mxu0 %v6043
    %v6191 = vpop.f32.mrb[0].mxu0
    %v6192 = vadd.f32 0.0, %v6191
    %v6193 = vpop.f32.mrb[0].mxu0
    %6194 = vmatprep.mubr.f32.mxu0 0.0
    %6195 = vmatmul.mubr.f32.gmra.mrb[0].mxu0 %v6045
    %v6196 = vpop.f32.mrb[0].mxu0
    %v6197 = vadd.f32 0.0, %v6196
    %v6198 = vpop.f32.mrb[0].mxu0
    %6199 = vmatprep.mubr.f32.mxu0 0.0
    %6200 = vmatmul.mubr.f32.gmra.mrb[0].mxu0 %v6047
    %v6201 = vpop.f32.mrb[0].mxu0
    %v6202 = vadd.f32 0.0, %v6201
    %v6203 = vpop.f32.mrb[0].mxu0
    %6204 = vmatprep.mubr.f32.mxu0 0.0
    %6205 = vmatmul.mubr.f32.gmra.mrb[0].mxu0 %v6049
    %v6206 = vpop.f32.mrb[0].mxu0
    %v6207 = vadd.f32 0.0, %v6206
    %v6208 = vpop.f32.mrb[0].mxu0
    %6209 = vmatprep.mubr.f32.mxu0 0.0
    %6210 = vmatmul.mubr.f32.gmra.mrb[0].mxu0 %v6051
    %v6211 = vpop.f32.mrb[0].mxu0
    %v6212 = vadd.f32 0.0, %v6211
    %v6213 = vpop.f32.mrb[0].mxu0
    %6214 = vmatprep.mubr.f32.mxu0 0.0
    %6215 = vmatmul.mubr.f32.gmra.mrb[0].mxu0 %v6053
    %v6216 = vpop.f32.mrb[0].mxu0
    %v6217 = vadd.f32 0.0, %v6216
    %v6218 = vpop.f32.mrb[0].mxu0
    %6219 = vmatprep.mubr.f32.mxu0 0.0
    %6220 = vmatmul.mubr.f32.gmra.mrb[0].mxu0 %v6055
    %v6221 = vpop.f32.mrb[0].mxu0
    %v6222 = vadd.f32 0.0, %v6221
    %v6223 = vpop.f32.mrb[0].mxu0
    %6224 = vmatprep.mubr.f32.mxu0 0.0
    %6225 = vmatmul.mubr.f32.gmra.mrb[0].mxu0 %v6057
    %v6226 = vpop.f32.mrb[0].mxu0
    %v6227 = vadd.f32 0.0, %v6226
    %v6228 = vpop.f32.mrb[0].mxu0
    %6229 = vmatprep.mubr.f32.mxu0 0.0
    %6230 = vmatmul.mubr.f32.gmra.mrb[0].mxu0 %v6059
    %v6231 = vpop.f32.mrb[0].mxu0
    %v6232 = vadd.f32 0.0, %v6231
    %v6233 = vpop.f32.mrb[0].mxu0
    %6234 = vmatprep.mubr.f32.mxu0 0.0
    %6235 = vmatmul.mubr.f32.gmra.mrb[0].mxu0 %v6061
    %v6236 = vpop.f32.mrb[0].mxu0
    %v6237 = vadd.f32 0.0, %v6236
    %v6238 = vpop.f32.mrb[0].mxu0
    %6239 = vdwg.mxu0
    %v6240 = vmul.f32 %v6162, 0.125
    %v6241 = vmul.f32 %v6167, 0.125
    %v6242 = vmul.f32 %v6172, 0.125
    %v6243 = vmul.f32 %v6177, 0.125
    %v6244 = vmul.f32 %v6182, 0.125
    %v6245 = vmul.f32 %v6187, 0.125
    %v6246 = vmul.f32 %v6192, 0.125
    %v6247 = vmul.f32 %v6197, 0.125
    %v6248 = vmul.f32 %v6202, 0.125
    %v6249 = vmul.f32 %v6207, 0.125
    %v6250 = vmul.f32 %v6212, 0.125
    %v6251 = vmul.f32 %v6217, 0.125
    %v6252 = vmul.f32 %v6222, 0.125
    %v6253 = vmul.f32 %v6227, 0.125
    %v6254 = vmul.f32 %v6232, 0.125
    %v6255 = vmul.f32 %v6237, 0.125
    %v6256 = vlaneseq
    %v6257 = vshrl.u32 %v6256, 7
    %v6258 = vadd.s32 %v6257, 8
    %v6259 = vadd.s32 %v6257, 16
    %v6260 = vadd.s32 %v6257, 24
    %v6261 = vadd.s32 %v6257, 32
    %v6262 = vadd.s32 %v6257, 40
    %v6263 = vadd.s32 %v6257, 48
    %v6264 = vadd.s32 %v6257, 56
    %v6265 = vadd.s32 %v6257, 64
    %v6266 = vadd.s32 %v6257, 72
    %v6267 = vadd.s32 %v6257, 80
    %v6268 = vadd.s32 %v6257, 88
    %v6269 = vadd.s32 %v6257, 96
    %v6270 = vadd.s32 %v6257, 104
    %v6271 = vadd.s32 %v6257, 112
    %v6272 = vadd.s32 %v6257, 120
    %v6273 = vlaneseq
    %v6274 = vand.u32 %v6273, 127
    %v6275 = vshra.s32 %v6257, 5
    %v6276 = vshra.s32 %v6258, 5
    %v6277 = vshra.s32 %v6259, 5
    %v6278 = vshra.s32 %v6260, 5
    %v6279 = vshra.s32 %v6261, 5
    %v6280 = vshra.s32 %v6262, 5
    %v6281 = vshra.s32 %v6263, 5
    %v6282 = vshra.s32 %v6264, 5
    %v6283 = vshra.s32 %v6265, 5
    %v6284 = vshra.s32 %v6266, 5
    %v6285 = vshra.s32 %v6267, 5
    %v6286 = vshra.s32 %v6268, 5
    %v6287 = vshra.s32 %v6269, 5
    %v6288 = vshra.s32 %v6270, 5
    %v6289 = vshra.s32 %v6271, 5
    %v6290 = vshra.s32 %v6272, 5
    %v6291 = vshra.s32 %v6274, 5
    %vm6292 = vcmp.eq.s32.totalorder %v6275, %v6291
    %vm6293 = vcmp.eq.s32.totalorder %v6276, %v6291
    %vm6294 = vcmp.eq.s32.totalorder %v6277, %v6291
    %vm6295 = vcmp.eq.s32.totalorder %v6278, %v6291
    %vm6296 = vcmp.eq.s32.totalorder %v6279, %v6291
    %vm6297 = vcmp.eq.s32.totalorder %v6280, %v6291
    %vm6298 = vcmp.eq.s32.totalorder %v6281, %v6291
    %vm6299 = vcmp.eq.s32.totalorder %v6282, %v6291
    %vm6300 = vcmp.eq.s32.totalorder %v6283, %v6291
    %vm6301 = vcmp.eq.s32.totalorder %v6284, %v6291
    %vm6302 = vcmp.eq.s32.totalorder %v6285, %v6291
    %vm6303 = vcmp.eq.s32.totalorder %v6286, %v6291
    %vm6304 = vcmp.eq.s32.totalorder %v6287, %v6291
    %vm6305 = vcmp.eq.s32.totalorder %v6288, %v6291
    %vm6306 = vcmp.eq.s32.totalorder %v6289, %v6291
    %vm6307 = vcmp.eq.s32.totalorder %v6290, %v6291
    %v6308 = vand.u32 %v6257, 3
    %v6309 = vand.u32 %v6258, 3
    %v6310 = vand.u32 %v6259, 3
    %v6311 = vand.u32 %v6260, 3
    %v6312 = vand.u32 %v6261, 3
    %v6313 = vand.u32 %v6262, 3
    %v6314 = vand.u32 %v6263, 3
    %v6315 = vand.u32 %v6264, 3
    %v6316 = vand.u32 %v6265, 3
    %v6317 = vand.u32 %v6266, 3
    %v6318 = vand.u32 %v6267, 3
    %v6319 = vand.u32 %v6268, 3
    %v6320 = vand.u32 %v6269, 3
    %v6321 = vand.u32 %v6270, 3
    %v6322 = vand.u32 %v6271, 3
    %v6323 = vand.u32 %v6272, 3
    %v6324 = vand.u32 %v6274, 3
    %vm6325 = vcmp.eq.s32.totalorder %v6308, %v6324
    %vm6326 = vcmp.eq.s32.totalorder %v6309, %v6324
    %vm6327 = vcmp.eq.s32.totalorder %v6310, %v6324
    %vm6328 = vcmp.eq.s32.totalorder %v6311, %v6324
    %vm6329 = vcmp.eq.s32.totalorder %v6312, %v6324
    %vm6330 = vcmp.eq.s32.totalorder %v6313, %v6324
    %vm6331 = vcmp.eq.s32.totalorder %v6314, %v6324
    %vm6332 = vcmp.eq.s32.totalorder %v6315, %v6324
    %vm6333 = vcmp.eq.s32.totalorder %v6316, %v6324
    %vm6334 = vcmp.eq.s32.totalorder %v6317, %v6324
    %vm6335 = vcmp.eq.s32.totalorder %v6318, %v6324
    %vm6336 = vcmp.eq.s32.totalorder %v6319, %v6324
    %vm6337 = vcmp.eq.s32.totalorder %v6320, %v6324
    %vm6338 = vcmp.eq.s32.totalorder %v6321, %v6324
    %vm6339 = vcmp.eq.s32.totalorder %v6322, %v6324
    %vm6340 = vcmp.eq.s32.totalorder %v6323, %v6324
    %vm6341 = vmand %vm6292, %vm6325
    %vm6342 = vmand %vm6293, %vm6326
    %vm6343 = vmand %vm6294, %vm6327
    %vm6344 = vmand %vm6295, %vm6328
    %vm6345 = vmand %vm6296, %vm6329
    %vm6346 = vmand %vm6297, %vm6330
    %vm6347 = vmand %vm6298, %vm6331
    %vm6348 = vmand %vm6299, %vm6332
    %vm6349 = vmand %vm6300, %vm6333
    %vm6350 = vmand %vm6301, %vm6334
    %vm6351 = vmand %vm6302, %vm6335
    %vm6352 = vmand %vm6303, %vm6336
    %vm6353 = vmand %vm6304, %vm6337
    %vm6354 = vmand %vm6305, %vm6338
    %vm6355 = vmand %vm6306, %vm6339
    %vm6356 = vmand %vm6307, %vm6340
    %v6357 = vsel %vm6341, %v6240, -1e+30
    %v6358 = vsel %vm6342, %v6241, -1e+30
    %v6359 = vsel %vm6343, %v6242, -1e+30
    %v6360 = vsel %vm6344, %v6243, -1e+30
    %v6361 = vsel %vm6345, %v6244, -1e+30
    %v6362 = vsel %vm6346, %v6245, -1e+30
    %v6363 = vsel %vm6347, %v6246, -1e+30
    %v6364 = vsel %vm6348, %v6247, -1e+30
    %v6365 = vsel %vm6349, %v6248, -1e+30
    %v6366 = vsel %vm6350, %v6249, -1e+30
    %v6367 = vsel %vm6351, %v6250, -1e+30
    %v6368 = vsel %vm6352, %v6251, -1e+30
    %v6369 = vsel %vm6353, %v6252, -1e+30
    %v6370 = vsel %vm6354, %v6253, -1e+30
    %v6371 = vsel %vm6355, %v6254, -1e+30
    %v6372 = vsel %vm6356, %v6255, -1e+30
    %6373 = vmax.xlane.f32.xlu0 %v6357
    %v6374 = vpop.xlane.xlu0 %6373
    %6375 = vmax.xlane.f32.xlu0 %v6358
    %v6376 = vpop.xlane.xlu0 %6375
    %6377 = vmax.xlane.f32.xlu0 %v6359
    %v6378 = vpop.xlane.xlu0 %6377
    %6379 = vmax.xlane.f32.xlu0 %v6360
    %v6380 = vpop.xlane.xlu0 %6379
    %6381 = vmax.xlane.f32.xlu0 %v6361
    %v6382 = vpop.xlane.xlu0 %6381
    %6383 = vmax.xlane.f32.xlu0 %v6362
    %v6384 = vpop.xlane.xlu0 %6383
    %6385 = vmax.xlane.f32.xlu0 %v6363
    %v6386 = vpop.xlane.xlu0 %6385
    %6387 = vmax.xlane.f32.xlu0 %v6364
    %v6388 = vpop.xlane.xlu0 %6387
    %6389 = vmax.xlane.f32.xlu0 %v6365
    %v6390 = vpop.xlane.xlu0 %6389
    %6391 = vmax.xlane.f32.xlu0 %v6366
    %v6392 = vpop.xlane.xlu0 %6391
    %6393 = vmax.xlane.f32.xlu0 %v6367
    %v6394 = vpop.xlane.xlu0 %6393
    %6395 = vmax.xlane.f32.xlu0 %v6368
    %v6396 = vpop.xlane.xlu0 %6395
    %6397 = vmax.xlane.f32.xlu0 %v6369
    %v6398 = vpop.xlane.xlu0 %6397
    %6399 = vmax.xlane.f32.xlu0 %v6370
    %v6400 = vpop.xlane.xlu0 %6399
    %6401 = vmax.xlane.f32.xlu0 %v6371
    %v6402 = vpop.xlane.xlu0 %6401
    %6403 = vmax.xlane.f32.xlu0 %v6372
    %v6404 = vpop.xlane.xlu0 %6403
    %v6405 = vsub.f32 %v6357, %v6374
    %v6406 = vsub.f32 %v6358, %v6376
    %v6407 = vsub.f32 %v6359, %v6378
    %v6408 = vsub.f32 %v6360, %v6380
    %v6409 = vsub.f32 %v6361, %v6382
    %v6410 = vsub.f32 %v6362, %v6384
    %v6411 = vsub.f32 %v6363, %v6386
    %v6412 = vsub.f32 %v6364, %v6388
    %v6413 = vsub.f32 %v6365, %v6390
    %v6414 = vsub.f32 %v6366, %v6392
    %v6415 = vsub.f32 %v6367, %v6394
    %v6416 = vsub.f32 %v6368, %v6396
    %v6417 = vsub.f32 %v6369, %v6398
    %v6418 = vsub.f32 %v6370, %v6400
    %v6419 = vsub.f32 %v6371, %v6402
    %v6420 = vsub.f32 %v6372, %v6404
    %v6421 = vmul.f32 %v6405, 1.442695
    %v6422 = vpow.pop %v6421
    %v6423 = vmul.f32 %v6406, 1.442695
    %v6424 = vpow.pop %v6423
    %v6425 = vmul.f32 %v6407, 1.442695
    %v6426 = vpow.pop %v6425
    %v6427 = vmul.f32 %v6408, 1.442695
    %v6428 = vpow.pop %v6427
    %v6429 = vmul.f32 %v6409, 1.442695
    %v6430 = vpow.pop %v6429
    %v6431 = vmul.f32 %v6410, 1.442695
    %v6432 = vpow.pop %v6431
    %v6433 = vmul.f32 %v6411, 1.442695
    %v6434 = vpow.pop %v6433
    %v6435 = vmul.f32 %v6412, 1.442695
    %v6436 = vpow.pop %v6435
    %v6437 = vmul.f32 %v6413, 1.442695
    %v6438 = vpow.pop %v6437
    %v6439 = vmul.f32 %v6414, 1.442695
    %v6440 = vpow.pop %v6439
    %v6441 = vmul.f32 %v6415, 1.442695
    %v6442 = vpow.pop %v6441
    %v6443 = vmul.f32 %v6416, 1.442695
    %v6444 = vpow.pop %v6443
    %v6445 = vmul.f32 %v6417, 1.442695
    %v6446 = vpow.pop %v6445
    %v6447 = vmul.f32 %v6418, 1.442695
    %v6448 = vpow.pop %v6447
    %v6449 = vmul.f32 %v6419, 1.442695
    %v6450 = vpow.pop %v6449
    %v6451 = vmul.f32 %v6420, 1.442695
    %v6452 = vpow.pop %v6451
    %6453 = vadd.xlane.f32.xlu0 %v6422
    %v6454 = vpop.xlane.xlu0 %6453
    %6455 = vadd.xlane.f32.xlu0 %v6424
    %v6456 = vpop.xlane.xlu0 %6455
    %6457 = vadd.xlane.f32.xlu0 %v6426
    %v6458 = vpop.xlane.xlu0 %6457
    %6459 = vadd.xlane.f32.xlu0 %v6428
    %v6460 = vpop.xlane.xlu0 %6459
    %6461 = vadd.xlane.f32.xlu0 %v6430
    %v6462 = vpop.xlane.xlu0 %6461
    %6463 = vadd.xlane.f32.xlu0 %v6432
    %v6464 = vpop.xlane.xlu0 %6463
    %6465 = vadd.xlane.f32.xlu0 %v6434
    %v6466 = vpop.xlane.xlu0 %6465
    %6467 = vadd.xlane.f32.xlu0 %v6436
    %v6468 = vpop.xlane.xlu0 %6467
    %6469 = vadd.xlane.f32.xlu0 %v6438
    %v6470 = vpop.xlane.xlu0 %6469
    %6471 = vadd.xlane.f32.xlu0 %v6440
    %v6472 = vpop.xlane.xlu0 %6471
    %6473 = vadd.xlane.f32.xlu0 %v6442
    %v6474 = vpop.xlane.xlu0 %6473
    %6475 = vadd.xlane.f32.xlu0 %v6444
    %v6476 = vpop.xlane.xlu0 %6475
    %6477 = vadd.xlane.f32.xlu0 %v6446
    %v6478 = vpop.xlane.xlu0 %6477
    %6479 = vadd.xlane.f32.xlu0 %v6448
    %v6480 = vpop.xlane.xlu0 %6479
    %6481 = vadd.xlane.f32.xlu0 %v6450
    %v6482 = vpop.xlane.xlu0 %6481
    %6483 = vadd.xlane.f32.xlu0 %v6452
    %v6484 = vpop.xlane.xlu0 %6483
    %v6485 = vrcp.pop %v6454
    %v6486 = vrcp.pop %v6456
    %v6487 = vrcp.pop %v6458
    %v6488 = vrcp.pop %v6460
    %v6489 = vrcp.pop %v6462
    %v6490 = vrcp.pop %v6464
    %v6491 = vrcp.pop %v6466
    %v6492 = vrcp.pop %v6468
    %v6493 = vrcp.pop %v6470
    %v6494 = vrcp.pop %v6472
    %v6495 = vrcp.pop %v6474
    %v6496 = vrcp.pop %v6476
    %v6497 = vrcp.pop %v6478
    %v6498 = vrcp.pop %v6480
    %v6499 = vrcp.pop %v6482
    %v6500 = vrcp.pop %v6484
    %v6501 = vmul.f32 %v6422, %v6485
    %v6502 = vmul.f32 %v6424, %v6486
    %v6503 = vmul.f32 %v6426, %v6487
    %v6504 = vmul.f32 %v6428, %v6488
    %v6505 = vmul.f32 %v6430, %v6489
    %v6506 = vmul.f32 %v6432, %v6490
    %v6507 = vmul.f32 %v6434, %v6491
    %v6508 = vmul.f32 %v6436, %v6492
    %v6509 = vmul.f32 %v6438, %v6493
    %v6510 = vmul.f32 %v6440, %v6494
    %v6511 = vmul.f32 %v6442, %v6495
    %v6512 = vmul.f32 %v6444, %v6496
    %v6513 = vmul.f32 %v6446, %v6497
    %v6514 = vmul.f32 %v6448, %v6498
    %v6515 = vmul.f32 %v6450, %v6499
    %v6516 = vmul.f32 %v6452, %v6500
    %6517 = vmatprep.subr.mxu0 0.0
    %6518 = vmatpush1.msra.mxu0 %v5932
    %6519 = vmatprep.subr.mxu0 0.0
    %6520 = vmatpush1.msra.mxu0 %v5936
    %6521 = vmatprep.subr.mxu0 0.0
    %6522 = vmatpush1.msra.mxu0 %v5942
    %6523 = vmatprep.subr.mxu0 0.0
    %6524 = vmatpush1.msra.mxu0 %v5946
    %6525 = vmatprep.subr.mxu0 0.0
    %6526 = vmatpush1.msra.mxu0 %v6003
    %6527 = vmatprep.subr.mxu0 0.0
    %6528 = vmatpush1.msra.mxu0 %v6005
    %6529 = vmatprep.subr.mxu0 0.0
    %6530 = vmatpush1.msra.mxu0 %v6007
    %6531 = vmatprep.subr.mxu0 0.0
    %6532 = vmatpush1.msra.mxu0 %v6009
    %6533 = vmatprep.subr.mxu0 0.0
    %6534 = vmatpush1.msra.mxu0 %v5934
    %6535 = vmatprep.subr.mxu0 0.0
    %6536 = vmatpush1.msra.mxu0 %v5938
    %6537 = vmatprep.subr.mxu0 0.0
    %6538 = vmatpush1.msra.mxu0 %v5944
    %6539 = vmatprep.subr.mxu0 0.0
    %6540 = vmatpush1.msra.mxu0 %v5948
    %6541 = vmatprep.subr.mxu0 0.0
    %6542 = vmatpush1.msra.mxu0 %v6019
    %6543 = vmatprep.subr.mxu0 0.0
    %6544 = vmatpush1.msra.mxu0 %v6021
    %6545 = vmatprep.subr.mxu0 0.0
    %6546 = vmatpush1.msra.mxu0 %v6023
    %6547 = vmatprep.subr.mxu0 0.0
    %6548 = vmatpush1.msra.mxu0 %v6025
    %6549 = vmatprep.subr.mxu0 0.0
    %6550 = vmatpush1.msra.mxu0 0.0
    %6551 = vmatprep.subr.mxu0 0.0
    %6552 = vmatpush1.msra.mxu0 0.0
    %6553 = vmatprep.subr.mxu0 0.0
    %6554 = vmatpush1.msra.mxu0 0.0
    %6555 = vmatprep.subr.mxu0 0.0
    %6556 = vmatpush1.msra.mxu0 0.0
    %6557 = vmatprep.subr.mxu0 0.0
    %6558 = vmatpush1.msra.mxu0 0.0
    %6559 = vmatprep.subr.mxu0 0.0
    %6560 = vmatpush1.msra.mxu0 0.0
    %6561 = vmatprep.subr.mxu0 0.0
    %6562 = vmatpush1.msra.mxu0 0.0
    %6563 = vmatprep.subr.mxu0 0.0
    %6564 = vmatpush1.msra.mxu0 0.0
    %6565 = vmatprep.subr.mxu0 0.0
    %6566 = vmatpush1.msra.mxu0 0.0
    %6567 = vmatprep.subr.mxu0 0.0
    %6568 = vmatpush1.msra.mxu0 0.0
    %6569 = vmatprep.subr.mxu0 0.0
    %6570 = vmatpush1.msra.mxu0 0.0
    %6571 = vmatprep.subr.mxu0 0.0
    %6572 = vmatpush1.msra.mxu0 0.0
    %6573 = vmatprep.subr.mxu0 0.0
    %6574 = vmatpush1.msra.mxu0 0.0
    %6575 = vmatprep.subr.mxu0 0.0
    %6576 = vmatpush1.msra.mxu0 0.0
    %6577 = vmatprep.subr.mxu0 0.0
    %6578 = vmatpush1.msra.mxu0 0.0
    %6579 = vmatprep.subr.mxu0 0.0
    %6580 = vmatpush1.msra.mxu0 0.0
    %6581 = vmatprep.mubr.f32.mxu0 0.0
    %6582 = vmatmul.mubr.f32.gmra.mrb[0].mxu0 %v6501
    %v6583 = vpop.f32.mrb[0].mxu0
    %v6584 = vadd.f32 0.0, %v6583
    %v6585 = vpop.f32.mrb[0].mxu0
    %6586 = vmatprep.mubr.f32.mxu0 0.0
    %6587 = vmatmul.mubr.f32.gmra.mrb[0].mxu0 %v6502
    %v6588 = vpop.f32.mrb[0].mxu0
    %v6589 = vadd.f32 0.0, %v6588
    %v6590 = vpop.f32.mrb[0].mxu0
    %6591 = vmatprep.mubr.f32.mxu0 0.0
    %6592 = vmatmul.mubr.f32.gmra.mrb[0].mxu0 %v6503
    %v6593 = vpop.f32.mrb[0].mxu0
    %v6594 = vadd.f32 0.0, %v6593
    %v6595 = vpop.f32.mrb[0].mxu0
    %6596 = vmatprep.mubr.f32.mxu0 0.0
    %6597 = vmatmul.mubr.f32.gmra.mrb[0].mxu0 %v6504
    %v6598 = vpop.f32.mrb[0].mxu0
    %v6599 = vadd.f32 0.0, %v6598
    %v6600 = vpop.f32.mrb[0].mxu0
    %6601 = vmatprep.mubr.f32.mxu0 0.0
    %6602 = vmatmul.mubr.f32.gmra.mrb[0].mxu0 %v6505
    %v6603 = vpop.f32.mrb[0].mxu0
    %v6604 = vadd.f32 0.0, %v6603
    %v6605 = vpop.f32.mrb[0].mxu0
    %6606 = vmatprep.mubr.f32.mxu0 0.0
    %6607 = vmatmul.mubr.f32.gmra.mrb[0].mxu0 %v6506
    %v6608 = vpop.f32.mrb[0].mxu0
    %v6609 = vadd.f32 0.0, %v6608
    %v6610 = vpop.f32.mrb[0].mxu0
    %6611 = vmatprep.mubr.f32.mxu0 0.0
    %6612 = vmatmul.mubr.f32.gmra.mrb[0].mxu0 %v6507
    %v6613 = vpop.f32.mrb[0].mxu0
    %v6614 = vadd.f32 0.0, %v6613
    %v6615 = vpop.f32.mrb[0].mxu0
    %6616 = vmatprep.mubr.f32.mxu0 0.0
    %6617 = vmatmul.mubr.f32.gmra.mrb[0].mxu0 %v6508
    %v6618 = vpop.f32.mrb[0].mxu0
    %v6619 = vadd.f32 0.0, %v6618
    %v6620 = vpop.f32.mrb[0].mxu0
    %6621 = vmatprep.mubr.f32.mxu0 0.0
    %6622 = vmatmul.mubr.f32.gmra.mrb[0].mxu0 %v6509
    %v6623 = vpop.f32.mrb[0].mxu0
    %v6624 = vadd.f32 0.0, %v6623
    %v6625 = vpop.f32.mrb[0].mxu0
    %6626 = vmatprep.mubr.f32.mxu0 0.0
    %6627 = vmatmul.mubr.f32.gmra.mrb[0].mxu0 %v6510
    %v6628 = vpop.f32.mrb[0].mxu0
    %v6629 = vadd.f32 0.0, %v6628
    %v6630 = vpop.f32.mrb[0].mxu0
    %6631 = vmatprep.mubr.f32.mxu0 0.0
    %6632 = vmatmul.mubr.f32.gmra.mrb[0].mxu0 %v6511
    %v6633 = vpop.f32.mrb[0].mxu0
    %v6634 = vadd.f32 0.0, %v6633
    %v6635 = vpop.f32.mrb[0].mxu0
    %6636 = vmatprep.mubr.f32.mxu0 0.0
    %6637 = vmatmul.mubr.f32.gmra.mrb[0].mxu0 %v6512
    %v6638 = vpop.f32.mrb[0].mxu0
    %v6639 = vadd.f32 0.0, %v6638
    %v6640 = vpop.f32.mrb[0].mxu0
    %6641 = vmatprep.mubr.f32.mxu0 0.0
    %6642 = vmatmul.mubr.f32.gmra.mrb[0].mxu0 %v6513
    %v6643 = vpop.f32.mrb[0].mxu0
    %v6644 = vadd.f32 0.0, %v6643
    %v6645 = vpop.f32.mrb[0].mxu0
    %6646 = vmatprep.mubr.f32.mxu0 0.0
    %6647 = vmatmul.mubr.f32.gmra.mrb[0].mxu0 %v6514
    %v6648 = vpop.f32.mrb[0].mxu0
    %v6649 = vadd.f32 0.0, %v6648
    %v6650 = vpop.f32.mrb[0].mxu0
    %6651 = vmatprep.mubr.f32.mxu0 0.0
    %6652 = vmatmul.mubr.f32.gmra.mrb[0].mxu0 %v6515
    %v6653 = vpop.f32.mrb[0].mxu0
    %v6654 = vadd.f32 0.0, %v6653
    %v6655 = vpop.f32.mrb[0].mxu0
    %6656 = vmatprep.mubr.f32.mxu0 0.0
    %6657 = vmatmul.mubr.f32.gmra.mrb[0].mxu0 %v6516
    %v6658 = vpop.f32.mrb[0].mxu0
    %v6659 = vadd.f32 0.0, %v6658
    %v6660 = vpop.f32.mrb[0].mxu0
    %6661 = vdwg.mxu0
    %v6662 = vld [vmem:[#allocation8 + $0x1b] sm:$0x3]
    %v6664 = vlaneseq
    %v6665 = vshrl.u32 %v6664, 7
    %v6666 = vsub.s32 0, %v6665
    %v6667 = vrot.slane %v6662, %v6666
    %v6668 = vlaneseq
    %v6669 = vshrl.u32 %v6668, 7
    %v6670 = vsub.s32 1, %v6669
    %v6671 = vrot.slane %v6662, %v6670
    %v6674 = vadd.f32 %v5171, %v6667
    %v6675 = vadd.f32 %v5172, %v6671
    %v6676 = vadd.f32 %v5173, %v6667
    %v6677 = vadd.f32 %v5174, %v6671
    %v6678 = vadd.f32 %v5175, %v6667
    %v6679 = vadd.f32 %v5176, %v6671
    %v6680 = vadd.f32 %v5177, %v6667
    %v6681 = vadd.f32 %v5178, %v6671
    %v6682 = vld [vmem:[#allocation5 + $0x24] sm:$0xff]
    %v6683 = vld [vmem:[#allocation5 + $0xd0] sm:$0xff]
    %v6684 = vld [vmem:[#allocation5 + $0x17c] sm:$0xff]
    %v6685 = vld [vmem:[#allocation5 + $0x228] sm:$0xff]
    %v6686 = vld [vmem:[#allocation5 + $0x2d4] sm:$0xff]
    %v6687 = vld [vmem:[#allocation5 + $0x380] sm:$0xff]
    %v6688 = vld [vmem:[#allocation5 + $0x42c] sm:$0xff]
    %v6689 = vld [vmem:[#allocation5 + $0x4d8] sm:$0xff]
    %v6690 = vpack.c.bf16 %v6589, %v6584
    %v6691 = vpack.c.bf16 %v6599, %v6594
    %v6700 = vunpack.c.l.b16 %v6682
    %v6701 = vunpack.c.h.b16 %v6682
    %v6702 = vunpack.c.l.b16 %v6683
    %v6703 = vunpack.c.h.b16 %v6683
    %v6704 = vunpack.c.l.b16 %v6684
    %v6705 = vunpack.c.h.b16 %v6684
    %v6706 = vunpack.c.l.b16 %v6685
    %v6707 = vunpack.c.h.b16 %v6685
    %v6708 = vunpack.c.l.b16 %v6686
    %v6709 = vunpack.c.h.b16 %v6686
    %v6710 = vunpack.c.l.b16 %v6687
    %v6711 = vunpack.c.h.b16 %v6687
    %v6712 = vunpack.c.l.b16 %v6688
    %v6713 = vunpack.c.h.b16 %v6688
    %v6714 = vunpack.c.l.b16 %v6689
    %v6715 = vunpack.c.h.b16 %v6689
    %v6716 = vpack.c.b16 %v6702, %v6700
    %v6717 = vpack.c.b16 %v6703, %v6701
    %v6718 = vpack.c.b16 %v6706, %v6704
    %v6719 = vpack.c.b16 %v6707, %v6705
    %v6720 = vpack.c.b16 %v6710, %v6708
    %v6721 = vpack.c.b16 %v6711, %v6709
    %v6722 = vpack.c.b16 %v6714, %v6712
    %v6723 = vpack.c.b16 %v6715, %v6713
    %v6733 = vsel %vm6030, %v6690, 0
    %v6736 = vsel %vm6030, %v6691, 0
    %6738 = vmatprep.subr.bf16.mxu0 %v6717
    %6739 = vmatpush1.bf16.msra.mxu0 %v6716
    %6740 = vmatprep.subr.bf16.mxu0 %v6719
    %6741 = vmatpush1.bf16.msra.mxu0 %v6718
    %6742 = vmatprep.subr.bf16.mxu0 %v6721
    %6743 = vmatpush1.bf16.msra.mxu0 %v6720
    %6744 = vmatprep.subr.bf16.mxu0 %v6723
    %6745 = vmatpush1.bf16.msra.mxu0 %v6722
    %6746 = vmatprep.subr.bf16.mxu0 0
    %6747 = vmatpush1.bf16.msra.mxu0 0
    %6748 = vmatprep.subr.bf16.mxu0 0
    %6749 = vmatpush1.bf16.msra.mxu0 0
    %6750 = vmatprep.subr.bf16.mxu0 0
    %6751 = vmatpush1.bf16.msra.mxu0 0
    %6752 = vmatprep.subr.bf16.mxu0 0
    %6753 = vmatpush1.bf16.msra.mxu0 0
    %6754 = vmatprep.subr.bf16.mxu0 0
    %6755 = vmatpush1.bf16.msra.mxu0 0
    %6756 = vmatprep.subr.bf16.mxu0 0
    %6757 = vmatpush1.bf16.msra.mxu0 0
    %6758 = vmatprep.subr.bf16.mxu0 0
    %6759 = vmatpush1.bf16.msra.mxu0 0
    %6760 = vmatprep.subr.bf16.mxu0 0
    %6761 = vmatpush1.bf16.msra.mxu0 0
    %6762 = vmatprep.subr.bf16.mxu0 0
    %6763 = vmatpush1.bf16.msra.mxu0 0
    %6764 = vmatprep.subr.bf16.mxu0 0
    %6765 = vmatpush1.bf16.msra.mxu0 0
    %6766 = vmatprep.subr.bf16.mxu0 0
    %6767 = vmatpush1.bf16.msra.mxu0 0
    %6768 = vmatprep.subr.bf16.mxu0 0
    %6769 = vmatpush1.bf16.msra.mxu0 0
    %6770 = vmatprep.mubr.bf16.mxu0 0
    %6771 = vmatmul.mubr.bf16.gmra.mrb[0].mxu0 %v6733
    %v6772 = vpop.f32.mrb[0].mxu0
    %v6773 = vadd.f32 0.0, %v6772
    %v6774 = vpop.f32.mrb[0].mxu0
    %v6775 = vadd.f32 0.0, %v6774
    %v6776 = vpop.f32.mrb[0].mxu0
    %v6777 = vadd.f32 0.0, %v6776
    %v6778 = vpop.f32.mrb[0].mxu0
    %v6779 = vadd.f32 0.0, %v6778
    %6780 = vmatprep.mubr.bf16.mxu0 0
    %6781 = vmatmul.mubr.bf16.gmra.mrb[0].mxu0 %v6736
    %v6782 = vpop.f32.mrb[0].mxu0
    %v6783 = vadd.f32 0.0, %v6782
    %v6784 = vpop.f32.mrb[0].mxu0
    %v6785 = vadd.f32 0.0, %v6784
    %v6786 = vpop.f32.mrb[0].mxu0
    %v6787 = vadd.f32 0.0, %v6786
    %v6788 = vpop.f32.mrb[0].mxu0
    %v6789 = vadd.f32 0.0, %v6788
    %6790 = vdwg.mxu0
    %v6791 = vadd.f32 %v6674, %v6773
    %v6792 = vadd.f32 %v6675, %v6775
    %v6793 = vadd.f32 %v6676, %v6777
    %v6794 = vadd.f32 %v6677, %v6779
    %v6795 = vadd.f32 %v6678, %v6783
    %v6796 = vadd.f32 %v6679, %v6785
    %v6797 = vadd.f32 %v6680, %v6787
    %v6798 = vadd.f32 %v6681, %v6789
    %v6799 = vld [vmem:[#allocation5 + $0x584] sm:$0xff]
    %v6800 = vld [vmem:[#allocation5 + $0x630] sm:$0xff]
    %v6801 = vld [vmem:[#allocation5 + $0x6dc] sm:$0xff]
    %v6802 = vld [vmem:[#allocation5 + $0x788] sm:$0xff]
    %v6803 = vld [vmem:[#allocation5 + $0x834] sm:$0xff]
    %v6804 = vld [vmem:[#allocation5 + $0x8e0] sm:$0xff]
    %v6805 = vld [vmem:[#allocation5 + $0x98c] sm:$0xff]
    %v6806 = vld [vmem:[#allocation5 + $0xa38] sm:$0xff]
    %v6807 = vpack.c.bf16 %v6609, %v6604
    %v6808 = vpack.c.bf16 %v6619, %v6614
    %v6817 = vunpack.c.l.b16 %v6799
    %v6818 = vunpack.c.h.b16 %v6799
    %v6819 = vunpack.c.l.b16 %v6800
    %v6820 = vunpack.c.h.b16 %v6800
    %v6821 = vunpack.c.l.b16 %v6801
    %v6822 = vunpack.c.h.b16 %v6801
    %v6823 = vunpack.c.l.b16 %v6802
    %v6824 = vunpack.c.h.b16 %v6802
    %v6825 = vunpack.c.l.b16 %v6803
    %v6826 = vunpack.c.h.b16 %v6803
    %v6827 = vunpack.c.l.b16 %v6804
    %v6828 = vunpack.c.h.b16 %v6804
    %v6829 = vunpack.c.l.b16 %v6805
    %v6830 = vunpack.c.h.b16 %v6805
    %v6831 = vunpack.c.l.b16 %v6806
    %v6832 = vunpack.c.h.b16 %v6806
    %v6833 = vpack.c.b16 %v6819, %v6817
    %v6834 = vpack.c.b16 %v6820, %v6818
    %v6835 = vpack.c.b16 %v6823, %v6821
    %v6836 = vpack.c.b16 %v6824, %v6822
    %v6837 = vpack.c.b16 %v6827, %v6825
    %v6838 = vpack.c.b16 %v6828, %v6826
    %v6839 = vpack.c.b16 %v6831, %v6829
    %v6840 = vpack.c.b16 %v6832, %v6830
    %v6850 = vsel %vm6030, %v6807, 0
    %v6853 = vsel %vm6030, %v6808, 0
    %6855 = vmatprep.subr.bf16.mxu0 %v6834
    %6856 = vmatpush1.bf16.msra.mxu0 %v6833
    %6857 = vmatprep.subr.bf16.mxu0 %v6836
    %6858 = vmatpush1.bf16.msra.mxu0 %v6835
    %6859 = vmatprep.subr.bf16.mxu0 %v6838
    %6860 = vmatpush1.bf16.msra.mxu0 %v6837
    %6861 = vmatprep.subr.bf16.mxu0 %v6840
    %6862 = vmatpush1.bf16.msra.mxu0 %v6839
    %6863 = vmatprep.subr.bf16.mxu0 0
    %6864 = vmatpush1.bf16.msra.mxu0 0
    %6865 = vmatprep.subr.bf16.mxu0 0
    %6866 = vmatpush1.bf16.msra.mxu0 0
    %6867 = vmatprep.subr.bf16.mxu0 0
    %6868 = vmatpush1.bf16.msra.mxu0 0
    %6869 = vmatprep.subr.bf16.mxu0 0
    %6870 = vmatpush1.bf16.msra.mxu0 0
    %6871 = vmatprep.subr.bf16.mxu0 0
    %6872 = vmatpush1.bf16.msra.mxu0 0
    %6873 = vmatprep.subr.bf16.mxu0 0
    %6874 = vmatpush1.bf16.msra.mxu0 0
    %6875 = vmatprep.subr.bf16.mxu0 0
    %6876 = vmatpush1.bf16.msra.mxu0 0
    %6877 = vmatprep.subr.bf16.mxu0 0
    %6878 = vmatpush1.bf16.msra.mxu0 0
    %6879 = vmatprep.subr.bf16.mxu0 0
    %6880 = vmatpush1.bf16.msra.mxu0 0
    %6881 = vmatprep.subr.bf16.mxu0 0
    %6882 = vmatpush1.bf16.msra.mxu0 0
    %6883 = vmatprep.subr.bf16.mxu0 0
    %6884 = vmatpush1.bf16.msra.mxu0 0
    %6885 = vmatprep.subr.bf16.mxu0 0
    %6886 = vmatpush1.bf16.msra.mxu0 0
    %6887 = vmatprep.mubr.bf16.mxu0 0
    %6888 = vmatmul.mubr.bf16.gmra.mrb[0].mxu0 %v6850
    %v6889 = vpop.f32.mrb[0].mxu0
    %v6890 = vadd.f32 0.0, %v6889
    %v6891 = vpop.f32.mrb[0].mxu0
    %v6892 = vadd.f32 0.0, %v6891
    %v6893 = vpop.f32.mrb[0].mxu0
    %v6894 = vadd.f32 0.0, %v6893
    %v6895 = vpop.f32.mrb[0].mxu0
    %v6896 = vadd.f32 0.0, %v6895
    %6897 = vmatprep.mubr.bf16.mxu0 0
    %6898 = vmatmul.mubr.bf16.gmra.mrb[0].mxu0 %v6853
    %v6899 = vpop.f32.mrb[0].mxu0
    %v6900 = vadd.f32 0.0, %v6899
    %v6901 = vpop.f32.mrb[0].mxu0
    %v6902 = vadd.f32 0.0, %v6901
    %v6903 = vpop.f32.mrb[0].mxu0
    %v6904 = vadd.f32 0.0, %v6903
    %v6905 = vpop.f32.mrb[0].mxu0
    %v6906 = vadd.f32 0.0, %v6905
    %6907 = vdwg.mxu0
    %v6908 = vadd.f32 %v6791, %v6890
    %v6909 = vadd.f32 %v6792, %v6892
    %v6910 = vadd.f32 %v6793, %v6894
    %v6911 = vadd.f32 %v6794, %v6896
    %v6912 = vadd.f32 %v6795, %v6900
    %v6913 = vadd.f32 %v6796, %v6902
    %v6914 = vadd.f32 %v6797, %v6904
    %v6915 = vadd.f32 %v6798, %v6906
    %v6916 = vld [vmem:[#allocation5 + $0xae4] sm:$0xff]
    %v6917 = vld [vmem:[#allocation5 + $0xb90] sm:$0xff]
    %v6918 = vld [vmem:[#allocation5 + $0xc3c] sm:$0xff]
    %v6919 = vld [vmem:[#allocation5 + $0xce8] sm:$0xff]
    %v6920 = vld [vmem:[#allocation5 + $0xd94] sm:$0xff]
    %v6921 = vld [vmem:[#allocation5 + $0xe40] sm:$0xff]
    %v6922 = vld [vmem:[#allocation5 + $0xeec] sm:$0xff]
    %v6923 = vld [vmem:[#allocation5 + $0xf98] sm:$0xff]
    %v6924 = vpack.c.bf16 %v6629, %v6624
    %v6925 = vpack.c.bf16 %v6639, %v6634
    %v6934 = vunpack.c.l.b16 %v6916
    %v6935 = vunpack.c.h.b16 %v6916
    %v6936 = vunpack.c.l.b16 %v6917
    %v6937 = vunpack.c.h.b16 %v6917
    %v6938 = vunpack.c.l.b16 %v6918
    %v6939 = vunpack.c.h.b16 %v6918
    %v6940 = vunpack.c.l.b16 %v6919
    %v6941 = vunpack.c.h.b16 %v6919
    %v6942 = vunpack.c.l.b16 %v6920
    %v6943 = vunpack.c.h.b16 %v6920
    %v6944 = vunpack.c.l.b16 %v6921
    %v6945 = vunpack.c.h.b16 %v6921
    %v6946 = vunpack.c.l.b16 %v6922
    %v6947 = vunpack.c.h.b16 %v6922
    %v6948 = vunpack.c.l.b16 %v6923
    %v6949 = vunpack.c.h.b16 %v6923
    %v6950 = vpack.c.b16 %v6936, %v6934
    %v6951 = vpack.c.b16 %v6937, %v6935
    %v6952 = vpack.c.b16 %v6940, %v6938
    %v6953 = vpack.c.b16 %v6941, %v6939
    %v6954 = vpack.c.b16 %v6944, %v6942
    %v6955 = vpack.c.b16 %v6945, %v6943
    %v6956 = vpack.c.b16 %v6948, %v6946
    %v6957 = vpack.c.b16 %v6949, %v6947
    %v6967 = vsel %vm6030, %v6924, 0
    %v6970 = vsel %vm6030, %v6925, 0
    %6972 = vmatprep.subr.bf16.mxu0 %v6951
    %6973 = vmatpush1.bf16.msra.mxu0 %v6950
    %6974 = vmatprep.subr.bf16.mxu0 %v6953
    %6975 = vmatpush1.bf16.msra.mxu0 %v6952
    %6976 = vmatprep.subr.bf16.mxu0 %v6955
    %6977 = vmatpush1.bf16.msra.mxu0 %v6954
    %6978 = vmatprep.subr.bf16.mxu0 %v6957
    %6979 = vmatpush1.bf16.msra.mxu0 %v6956
    %6980 = vmatprep.subr.bf16.mxu0 0
    %6981 = vmatpush1.bf16.msra.mxu0 0
    %6982 = vmatprep.subr.bf16.mxu0 0
    %6983 = vmatpush1.bf16.msra.mxu0 0
    %6984 = vmatprep.subr.bf16.mxu0 0
    %6985 = vmatpush1.bf16.msra.mxu0 0
    %6986 = vmatprep.subr.bf16.mxu0 0
    %6987 = vmatpush1.bf16.msra.mxu0 0
    %6988 = vmatprep.subr.bf16.mxu0 0
    %6989 = vmatpush1.bf16.msra.mxu0 0
    %6990 = vmatprep.subr.bf16.mxu0 0
    %6991 = vmatpush1.bf16.msra.mxu0 0
    %6992 = vmatprep.subr.bf16.mxu0 0
    %6993 = vmatpush1.bf16.msra.mxu0 0
    %6994 = vmatprep.subr.bf16.mxu0 0
    %6995 = vmatpush1.bf16.msra.mxu0 0
    %6996 = vmatprep.subr.bf16.mxu0 0
    %6997 = vmatpush1.bf16.msra.mxu0 0
    %6998 = vmatprep.subr.bf16.mxu0 0
    %6999 = vmatpush1.bf16.msra.mxu0 0
    %7000 = vmatprep.subr.bf16.mxu0 0
    %7001 = vmatpush1.bf16.msra.mxu0 0
    %7002 = vmatprep.subr.bf16.mxu0 0
    %7003 = vmatpush1.bf16.msra.mxu0 0
    %7004 = vmatprep.mubr.bf16.mxu0 0
    %7005 = vmatmul.mubr.bf16.gmra.mrb[0].mxu0 %v6967
    %v7006 = vpop.f32.mrb[0].mxu0
    %v7007 = vadd.f32 0.0, %v7006
    %v7008 = vpop.f32.mrb[0].mxu0
    %v7009 = vadd.f32 0.0, %v7008
    %v7010 = vpop.f32.mrb[0].mxu0
    %v7011 = vadd.f32 0.0, %v7010
    %v7012 = vpop.f32.mrb[0].mxu0
    %v7013 = vadd.f32 0.0, %v7012
    %7014 = vmatprep.mubr.bf16.mxu0 0
    %7015 = vmatmul.mubr.bf16.gmra.mrb[0].mxu0 %v6970
    %v7016 = vpop.f32.mrb[0].mxu0
    %v7017 = vadd.f32 0.0, %v7016
    %v7018 = vpop.f32.mrb[0].mxu0
    %v7019 = vadd.f32 0.0, %v7018
    %v7020 = vpop.f32.mrb[0].mxu0
    %v7021 = vadd.f32 0.0, %v7020
    %v7022 = vpop.f32.mrb[0].mxu0
    %v7023 = vadd.f32 0.0, %v7022
    %7024 = vdwg.mxu0
    %v7025 = vadd.f32 %v6908, %v7007
    %v7026 = vadd.f32 %v6909, %v7009
    %v7027 = vadd.f32 %v6910, %v7011
    %v7028 = vadd.f32 %v6911, %v7013
    %v7029 = vadd.f32 %v6912, %v7017
    %v7030 = vadd.f32 %v6913, %v7019
    %v7031 = vadd.f32 %v6914, %v7021
    %v7032 = vadd.f32 %v6915, %v7023
    %v7033 = vld [vmem:[#allocation5 + $0x1044] sm:$0xff]
    %v7034 = vld [vmem:[#allocation5 + $0x10f0] sm:$0xff]
    %v7035 = vld [vmem:[#allocation5 + $0x119c] sm:$0xff]
    %v7036 = vld [vmem:[#allocation5 + $0x1248] sm:$0xff]
    %v7037 = vld [vmem:[#allocation5 + $0x12f4] sm:$0xff]
    %v7038 = vld [vmem:[#allocation5 + $0x13a0] sm:$0xff]
    %v7039 = vld [vmem:[#allocation5 + $0x144c] sm:$0xff]
    %v7040 = vld [vmem:[#allocation5 + $0x14f8] sm:$0xff]
    %v7041 = vpack.c.bf16 %v6649, %v6644
    %v7042 = vpack.c.bf16 %v6659, %v6654
    %v7051 = vunpack.c.l.b16 %v7033
    %v7052 = vunpack.c.h.b16 %v7033
    %v7053 = vunpack.c.l.b16 %v7034
    %v7054 = vunpack.c.h.b16 %v7034
    %v7055 = vunpack.c.l.b16 %v7035
    %v7056 = vunpack.c.h.b16 %v7035
    %v7057 = vunpack.c.l.b16 %v7036
    %v7058 = vunpack.c.h.b16 %v7036
    %v7059 = vunpack.c.l.b16 %v7037
    %v7060 = vunpack.c.h.b16 %v7037
    %v7061 = vunpack.c.l.b16 %v7038
    %v7062 = vunpack.c.h.b16 %v7038
    %v7063 = vunpack.c.l.b16 %v7039
    %v7064 = vunpack.c.h.b16 %v7039
    %v7065 = vunpack.c.l.b16 %v7040
    %v7066 = vunpack.c.h.b16 %v7040
    %v7067 = vpack.c.b16 %v7053, %v7051
    %v7068 = vpack.c.b16 %v7054, %v7052
    %v7069 = vpack.c.b16 %v7057, %v7055
    %v7070 = vpack.c.b16 %v7058, %v7056
    %v7071 = vpack.c.b16 %v7061, %v7059
    %v7072 = vpack.c.b16 %v7062, %v7060
    %v7073 = vpack.c.b16 %v7065, %v7063
    %v7074 = vpack.c.b16 %v7066, %v7064
    %v7084 = vsel %vm6030, %v7041, 0
    %v7087 = vsel %vm6030, %v7042, 0
    %7089 = vmatprep.subr.bf16.mxu0 %v7068
    %7090 = vmatpush1.bf16.msra.mxu0 %v7067
    %7091 = vmatprep.subr.bf16.mxu0 %v7070
    %7092 = vmatpush1.bf16.msra.mxu0 %v7069
    %7093 = vmatprep.subr.bf16.mxu0 %v7072
    %7094 = vmatpush1.bf16.msra.mxu0 %v7071
    %7095 = vmatprep.subr.bf16.mxu0 %v7074
    %7096 = vmatpush1.bf16.msra.mxu0 %v7073
    %7097 = vmatprep.subr.bf16.mxu0 0
    %7098 = vmatpush1.bf16.msra.mxu0 0
    %7099 = vmatprep.subr.bf16.mxu0 0
    %7100 = vmatpush1.bf16.msra.mxu0 0
    %7101 = vmatprep.subr.bf16.mxu0 0
    %7102 = vmatpush1.bf16.msra.mxu0 0
    %7103 = vmatprep.subr.bf16.mxu0 0
    %7104 = vmatpush1.bf16.msra.mxu0 0
    %7105 = vmatprep.subr.bf16.mxu0 0
    %7106 = vmatpush1.bf16.msra.mxu0 0
    %7107 = vmatprep.subr.bf16.mxu0 0
    %7108 = vmatpush1.bf16.msra.mxu0 0
    %7109 = vmatprep.subr.bf16.mxu0 0
    %7110 = vmatpush1.bf16.msra.mxu0 0
    %7111 = vmatprep.subr.bf16.mxu0 0
    %7112 = vmatpush1.bf16.msra.mxu0 0
    %7113 = vmatprep.subr.bf16.mxu0 0
    %7114 = vmatpush1.bf16.msra.mxu0 0
    %7115 = vmatprep.subr.bf16.mxu0 0
    %7116 = vmatpush1.bf16.msra.mxu0 0
    %7117 = vmatprep.subr.bf16.mxu0 0
    %7118 = vmatpush1.bf16.msra.mxu0 0
    %7119 = vmatprep.subr.bf16.mxu0 0
    %7120 = vmatpush1.bf16.msra.mxu0 0
    %7121 = vmatprep.mubr.bf16.mxu0 0
    %7122 = vmatmul.mubr.bf16.gmra.mrb[0].mxu0 %v7084
    %v7123 = vpop.f32.mrb[0].mxu0
    %v7124 = vadd.f32 0.0, %v7123
    %v7125 = vpop.f32.mrb[0].mxu0
    %v7126 = vadd.f32 0.0, %v7125
    %v7127 = vpop.f32.mrb[0].mxu0
    %v7128 = vadd.f32 0.0, %v7127
    %v7129 = vpop.f32.mrb[0].mxu0
    %v7130 = vadd.f32 0.0, %v7129
    %7131 = vmatprep.mubr.bf16.mxu0 0
    %7132 = vmatmul.mubr.bf16.gmra.mrb[0].mxu0 %v7087
    %v7133 = vpop.f32.mrb[0].mxu0
    %v7134 = vadd.f32 0.0, %v7133
    %v7135 = vpop.f32.mrb[0].mxu0
    %v7136 = vadd.f32 0.0, %v7135
    %v7137 = vpop.f32.mrb[0].mxu0
    %v7138 = vadd.f32 0.0, %v7137
    %v7139 = vpop.f32.mrb[0].mxu0
    %v7140 = vadd.f32 0.0, %v7139
    %7141 = vdwg.mxu0
    %v7142 = vadd.f32 %v7025, %v7124
    %v7143 = vadd.f32 %v7026, %v7126
    %v7144 = vadd.f32 %v7027, %v7128
    %v7145 = vadd.f32 %v7028, %v7130
    %v7146 = vadd.f32 %v7029, %v7134
    %v7147 = vadd.f32 %v7030, %v7136
    %v7148 = vadd.f32 %v7031, %v7138
    %v7149 = vadd.f32 %v7032, %v7140
    %v7150 = vmul.f32 %v7142, %v7142
    %v7151 = vmul.f32 %v7143, %v7143
    %v7152 = vmul.f32 %v7144, %v7144
    %v7153 = vmul.f32 %v7145, %v7145
    %v7154 = vmul.f32 %v7146, %v7146
    %v7155 = vmul.f32 %v7147, %v7147
    %v7156 = vmul.f32 %v7148, %v7148
    %v7157 = vmul.f32 %v7149, %v7149
    %v7158 = vadd.f32 %v7150, %v7151
    %7159 = vadd.xlane.f32.xlu0 %v7158
    %v7160 = vpop.xlane.xlu0 %7159
    %v7161 = vadd.f32 %v7152, %v7153
    %7162 = vadd.xlane.f32.xlu0 %v7161
    %v7163 = vpop.xlane.xlu0 %7162
    %v7164 = vadd.f32 %v7154, %v7155
    %7165 = vadd.xlane.f32.xlu0 %v7164
    %v7166 = vpop.xlane.xlu0 %7165
    %v7167 = vadd.f32 %v7156, %v7157
    %7168 = vadd.xlane.f32.xlu0 %v7167
    %v7169 = vpop.xlane.xlu0 %7168
    %v7170 = vmax.f32 %v7160, 1e-24
    %v7171 = vmax.f32 %v7163, 1e-24
    %v7172 = vmax.f32 %v7166, 1e-24
    %v7173 = vmax.f32 %v7169, 1e-24
    %v7174 = vrsqrt.pop %v7170
    %v7175 = vrsqrt.pop %v7171
    %v7176 = vrsqrt.pop %v7172
    %v7177 = vrsqrt.pop %v7173
    %v7178 = vmul.f32 %v7142, %v7174
    %v7179 = vmul.f32 %v7143, %v7174
    %v7180 = vmul.f32 %v7144, %v7175
    %v7181 = vmul.f32 %v7145, %v7175
    %v7182 = vmul.f32 %v7146, %v7176
    %v7183 = vmul.f32 %v7147, %v7176
    %v7184 = vmul.f32 %v7148, %v7177
    %v7185 = vmul.f32 %v7149, %v7177
    %7186 = vst [vmem:[%s4] sm:$0xff] %v7178
    %7187 = vst [vmem:[%s4 + $0x8] sm:$0xff] %v7179
    %7188 = vst [vmem:[%s4 + $0x10] sm:$0xff] %v7180
    %7189 = vst [vmem:[%s4 + $0x18] sm:$0xff] %v7181
    %7190 = vst [vmem:[%s4 + $0x20] sm:$0xff] %v7182
    %7191 = vst [vmem:[%s4 + $0x28] sm:$0xff] %v7183
    %7192 = vst [vmem:[%s4 + $0x30] sm:$0xff] %v7184
    %7193 = vst [vmem:[%s4 + $0x38] sm:$0xff] %v7185
    // Predicated region
    $region34: #{prompt_generation_forward.1} parent=1 // pred_check
      _
    $region35: #{prompt_generation_forward.1} parent=1 // pred_check_branch
      %7195 = sbr.rel (0) target = $region37
    $region36: #{prompt_generation_forward.1} parent=1 // pred_region
      _
    $region37: #{prompt_generation_forward.1} parent=1 // pred_fallthru
      _
    // Predicated region
    $region38: #{prompt_generation_forward.1} parent=1 // pred_check
      _
    $region39: #{prompt_generation_forward.1} parent=1 // pred_check_branch
      %7197 = sbr.rel (0) target = $region41
    $region40: #{prompt_generation_forward.1} parent=1 // pred_region
      _
    $region41: #{prompt_generation_forward.1} parent=1 // pred_fallthru
      _
    %7198 = vsyncpa [#allocation4], 1
    %7199 = vsyncpa [#allocation6], 1
    %7200 = vsyncpa [#allocation9], 1

</llo_original>
